<compile_context>
chip_gen: v6e
topology: v6e:2x2x1
jax: 0.10.0
libtpu: 0.0.40
codegen_flags: <defaults>
</compile_context>

<pallas_src>
import functools
import math

import jax
import jax.numpy as jnp
import numpy as np
from jax.experimental import pallas as pl
from jax.experimental.pallas import tpu as pltpu

VMEM_LIMIT = 40 * 1024 * 1024


# ----------------------------------------------------------------------------
# Helpers shared by the kernels and the pure-JAX reference.
# ----------------------------------------------------------------------------
def _erf(x):
    """Abramowitz & Stegun 7.1.26 erf approximation (|err| < 1.5e-7)."""
    p = 0.3275911
    a1, a2, a3, a4, a5 = (0.254829592, -0.284496736, 1.421413741,
                          -1.453152027, 1.061405429)
    s = jnp.where(x >= 0.0, 1.0, -1.0)
    ax = x * s
    t = 1.0 / (1.0 + p * ax)
    poly = ((((a5 * t + a4) * t + a3) * t + a2) * t + a1) * t
    return s * (1.0 - poly * jnp.exp(-ax * ax))


def _gelu_exact(x):
    """nn.GELU() default (erf formulation), evaluated in f32."""
    return 0.5 * x * (1.0 + _erf(x * (1.0 / math.sqrt(2.0))))


def _layernorm(x, gamma, beta, eps=1e-6):
    mu = jnp.mean(x, axis=-1, keepdims=True)
    xc = x - mu
    var = jnp.mean(xc * xc, axis=-1, keepdims=True)
    return xc * jax.lax.rsqrt(var + eps) * gamma + beta


# ----------------------------------------------------------------------------
# Kernel 1: patch embedding.
#   out[:, 0]        = cls + pos[0]                    (written from the bias)
#   out[:, 1:N+1]    = patches @ Wp + (pos[1:] + conv_bias)
#   out[:, N+1:S]    = 0                               (sequence padding rows)
# Batch is folded into the matmul M dimension (Bt*N rows).
# ----------------------------------------------------------------------------
def _embed_kernel(tok_ref, wp_ref, bias_ref, o_ref):
    Bt, N, P = tok_ref.shape
    S, D = bias_ref.shape
    tok = tok_ref[...].reshape(Bt * N, P)                       # bf16, (Bt*N, P)
    emb = jnp.dot(tok, wp_ref[...], preferred_element_type=jnp.float32)
    emb = emb.reshape(Bt, N, D) + bias_ref[1:N + 1, :][None]
    o_ref[:, 0:1, :] = jnp.broadcast_to(bias_ref[0:1, :][None], (Bt, 1, D))
    o_ref[:, 1:N + 1, :] = emb
    o_ref[:, N + 1:, :] = jnp.zeros((Bt, S - N - 1, D), jnp.float32)


def embed_pallas(patches, wp, embed_bias, *, bt):
    B, N, P = patches.shape
    S, D = embed_bias.shape
    return pl.pallas_call(
        _embed_kernel,
        out_shape=jax.ShapeDtypeStruct((B, S, D), jnp.float32),
        grid=(B // bt,),
        in_specs=[
            pl.BlockSpec((bt, N, P), lambda b: (b, 0, 0)),
            pl.BlockSpec((P, D), lambda b: (0, 0)),
            pl.BlockSpec((S, D), lambda b: (0, 0)),
        ],
        out_specs=pl.BlockSpec((bt, S, D), lambda b: (b, 0, 0)),
        compiler_params=pltpu.CompilerParams(
            dimension_semantics=("parallel",),
            vmem_limit_bytes=VMEM_LIMIT,
        ),
    )(patches, wp, embed_bias)


# ----------------------------------------------------------------------------
# Kernel 2: fused encoder.  grid = (batch_tiles, L); the running activation is
# resident in a VMEM scratch across the layer axis (loaded at l==0, stored at
# l==L-1).  All weights are per-layer blocks of stacked (L, ...) bf16 arrays,
# so layer l+1 weights are prefetched by the BlockSpec pipeline.
# ----------------------------------------------------------------------------
def _encoder_kernel(x_ref,
                    ln1g_ref, ln1b_ref, wqkv_ref, bqkv_ref, wo_ref, bo_ref,
                    ln2g_ref, ln2b_ref, w1_ref, b1_ref, w2_ref, b2_ref,
                    o_ref,
                    x_scr, ctx_scr,
                    *, num_heads, s_real):
    l = pl.program_id(1)
    Bt, S, D = x_ref.shape
    R = Bt * S
    dh = D // num_heads

    @pl.when(l == 0)
    def _():
        x_scr[...] = x_ref[...].reshape(R, D)

    x = x_scr[...]                                              # (R, D) f32

    # --- multi-head self-attention (pre-norm) ---
    h = _layernorm(x, ln1g_ref[0], ln1b_ref[0])
    qkv = jnp.dot(h.astype(jnp.bfloat16), wqkv_ref[0],
                  preferred_element_type=jnp.float32) + bqkv_ref[0]   # (R, 3D)
    # 1/sqrt(dh) is already folded into Wq / bq at parameter-build time.
    q = qkv[:, 0:D].reshape(Bt, S, D).astype(jnp.bfloat16)
    k = qkv[:, D:2 * D].reshape(Bt, S, D).astype(jnp.bfloat16)
    v = qkv[:, 2 * D:3 * D].reshape(Bt, S, D).astype(jnp.bfloat16)

    # Mask (additive bias) that removes the zero-padded key rows (>= s_real).
    key_ids = jax.lax.broadcasted_iota(jnp.int32, (S, S), 1)
    mask_b = jnp.where(key_ids < s_real, 0.0, -1e30).astype(jnp.float32)[None]

    for hh in range(num_heads):
        sl = slice(hh * dh, (hh + 1) * dh)
        scores = jnp.einsum("bqd,bkd->bqk", q[:, :, sl], k[:, :, sl],
                            preferred_element_type=jnp.float32)       # (Bt,S,S)
        scores = scores + mask_b
        scores = scores - jnp.max(scores, axis=-1, keepdims=True)
        e = jnp.exp(scores)
        probs = e / jnp.sum(e, axis=-1, keepdims=True)                # exact
        ctx = jnp.einsum("bqk,bkd->bqd", probs.astype(jnp.bfloat16),
                         v[:, :, sl],
                         preferred_element_type=jnp.float32)          # (Bt,S,dh)
        ctx_scr[:, :, sl] = ctx           # contiguous (Bt,S,D) ctx for one dot

    attn = jnp.dot(ctx_scr[...].reshape(R, D).astype(jnp.bfloat16), wo_ref[0],
                   preferred_element_type=jnp.float32) + bo_ref[0]
    x1 = x + attn                                                # residual 1

    # --- MLP (pre-norm) ---
    h2 = _layernorm(x1, ln2g_ref[0], ln2b_ref[0])
    m = jnp.dot(h2.astype(jnp.bfloat16), w1_ref[0],
                preferred_element_type=jnp.float32) + b1_ref[0]
    m = _gelu_exact(m)
    mlp = jnp.dot(m.astype(jnp.bfloat16), w2_ref[0],
                  preferred_element_type=jnp.float32) + b2_ref[0]
    x2 = x1 + mlp                                                # residual 2

    x_scr[...] = x2

    @pl.when(l == pl.num_programs(1) - 1)
    def _():
        o_ref[...] = x2.reshape(Bt, S, D)


def encoder_pallas(x, kp, *, num_heads, s_real, bt):
    B, S, D = x.shape
    L = kp["wqkv"].shape[0]
    M = kp["w1"].shape[2]

    def wspec(d1, d2):
        return pl.BlockSpec((1, d1, d2), lambda b, l: (l, 0, 0))

    kern = functools.partial(_encoder_kernel, num_heads=num_heads, s_real=s_real)
    return pl.pallas_call(
        kern,
        out_shape=jax.ShapeDtypeStruct((B, S, D), jnp.float32),
        grid=(B // bt, L),
        in_specs=[
            pl.BlockSpec((bt, S, D), lambda b, l: (b, 0, 0)),    # activations
            wspec(1, D), wspec(1, D),                            # ln1 g / b
            wspec(D, 3 * D), wspec(1, 3 * D),                    # Wqkv / bqkv
            wspec(D, D), wspec(1, D),                            # Wo / bo
            wspec(1, D), wspec(1, D),                            # ln2 g / b
            wspec(D, M), wspec(1, M),                            # W1 / b1
            wspec(M, D), wspec(1, D),                            # W2 / b2
        ],
        out_specs=pl.BlockSpec((bt, S, D), lambda b, l: (b, 0, 0)),
        scratch_shapes=[
            pltpu.VMEM((bt * S, D), jnp.float32),   # resident activation
            pltpu.VMEM((bt, S, D), jnp.float32),    # per-head ctx assembly
        ],
        compiler_params=pltpu.CompilerParams(
            dimension_semantics=("parallel", "arbitrary"),
            vmem_limit_bytes=VMEM_LIMIT,
        ),
    )(x,
      kp["ln1_g"], kp["ln1_b"], kp["wqkv"], kp["bqkv"], kp["wo"], kp["bo"],
      kp["ln2_g"], kp["ln2_b"], kp["w1"], kp["b1"], kp["w2"], kp["b2"])


# ----------------------------------------------------------------------------
# Kernel 3: final LayerNorm on the CLS token + classification head.
# Head weight is padded to 128 output lanes (lane-dense store); wrapper slices.
# ----------------------------------------------------------------------------
def _head_kernel(cls_ref, g_ref, b_ref, wh_ref, bh_ref, o_ref):
    h = _layernorm(cls_ref[...], g_ref[...], b_ref[...])
    o_ref[...] = (jnp.dot(h.astype(jnp.bfloat16), wh_ref[...],
                          preferred_element_type=jnp.float32) + bh_ref[...])


def head_pallas(cls_x, g, b, wh, bh):
    B, _ = cls_x.shape
    Cp = wh.shape[1]
    return pl.pallas_call(
        _head_kernel,
        out_shape=jax.ShapeDtypeStruct((B, Cp), jnp.float32),
        in_specs=[pl.BlockSpec(memory_space=pltpu.MemorySpace.VMEM)] * 5,
        out_specs=pl.BlockSpec(memory_space=pltpu.MemorySpace.VMEM),
    )(cls_x, g, b, wh, bh)


# ----------------------------------------------------------------------------
# Forward wrapper (jitted) and pure-JAX f32 reference.
# ----------------------------------------------------------------------------
def _patchify(x, patch):
    B, C, H, W = x.shape
    gh, gw = H // patch, W // patch
    x = x.reshape(B, C, gh, patch, gw, patch)
    x = x.transpose(0, 2, 4, 1, 3, 5)               # (B, gh, gw, C, ph, pw)
    return x.reshape(B, gh * gw, C * patch * patch)


@functools.partial(jax.jit, static_argnames=("num_heads", "patch", "n_classes"))
def vit_forward(kparams, x, *, num_heads, patch, n_classes):
    B = x.shape[0]
    patches = _patchify(x.astype(jnp.float32), patch).astype(jnp.bfloat16)
    n_patches = patches.shape[1]
    s_real = n_patches + 1
    # Fold up to 8 batch items into the matmul M dimension per grid step.
    bt = 1
    for cand in (8, 4, 2, 1):
        if B % cand == 0:
            bt = cand
            break
    h = embed_pallas(patches, kparams["wp"], kparams["embed_bias"], bt=bt)
    # Dropout(0.1) after embeddings / inside Mlp: inference-mode identity.
    h = encoder_pallas(h, kparams, num_heads=num_heads, s_real=s_real, bt=bt)
    cls_x = h[:, 0, :]
    logits = head_pallas(cls_x, kparams["norm_g"], kparams["norm_b"],
                         kparams["head_w"], kparams["head_b"])
    return logits[:, :n_classes]


def vit_reference(params, x, *, num_heads, patch):
    """Pure-JAX f32 mirror of the PyTorch forward (verification only)."""
    x = x.astype(jnp.float32)
    B = x.shape[0]
    D = params["wconv"].shape[0]
    y = jax.lax.conv_general_dilated(
        x, params["wconv"], window_strides=(patch, patch), padding="VALID",
        dimension_numbers=("NCHW", "OIHW", "NCHW"))              # (B, D, gh, gw)
    y = y.reshape(B, D, -1).transpose(0, 2, 1) + params["bp"]    # (B, N, D)
    cls = jnp.broadcast_to(params["cls"][None], (B, 1, D))
    h = jnp.concatenate([cls, y], axis=1) + params["pos"]
    for blk in params["blocks"]:
        S = h.shape[1]
        dh = D // num_heads
        hn = _layernorm(h, blk["ln1_g"], blk["ln1_b"])
        q = hn @ blk["wq"] + blk["bq"]
        k = hn @ blk["wk"] + blk["bk"]
        v = hn @ blk["wv"] + blk["bv"]
        split = lambda t: t.reshape(B, S, num_heads, dh).transpose(0, 2, 1, 3)
        qh, kh, vh = split(q), split(k), split(v)
        scores = jnp.einsum("bhsd,bhtd->bhst", qh, kh) / math.sqrt(dh)
        probs = jax.nn.softmax(scores, axis=-1)
        ctx = jnp.einsum("bhst,bhtd->bhsd", probs, vh)
        ctx = ctx.transpose(0, 2, 1, 3).reshape(B, S, D)
        h = h + (ctx @ blk["wo"] + blk["bo"])
        hn = _layernorm(h, blk["ln2_g"], blk["ln2_b"])
        m = jax.nn.gelu(hn @ blk["w1"] + blk["b1"], approximate=False)
        h = h + (m @ blk["w2"] + blk["b2"])
    hn = _layernorm(h, params["norm_g"], params["norm_b"])
    return hn[:, 0, :] @ params["head_w"] + params["head_b"]


# ----------------------------------------------------------------------------
# Parameters: f32 "PyTorch-like" params + pre-packed kernel params.
# ----------------------------------------------------------------------------
def init_params(key, *, img_size, patch, in_ch, d, mlp, layers, classes):
    n_patches = (img_size // patch) ** 2
    keys = jax.random.split(key, 8 + layers)

    def nrm(k, shape, scale):
        return scale * jax.random.normal(k, shape, dtype=jnp.float32)

    params = {
        "wconv": nrm(keys[0], (d, in_ch, patch, patch), 0.05),
        "bp": nrm(keys[1], (1, d), 0.02),
        "cls": nrm(keys[2], (1, d), 0.02),
        "pos": nrm(keys[3], (n_patches + 1, d), 0.02),
        "norm_g": 1.0 + nrm(keys[4], (1, d), 0.02),
        "norm_b": nrm(keys[5], (1, d), 0.02),
        "head_w": nrm(keys[6], (d, classes), 1.0 / math.sqrt(d)),
        "head_b": nrm(keys[7], (1, classes), 0.02),
    }
    blocks = []
    for i in range(layers):
        kk = jax.random.split(keys[8 + i], 16)
        s_d, s_m = 1.0 / math.sqrt(d), 1.0 / math.sqrt(mlp)
        blocks.append({
            "ln1_g": 1.0 + nrm(kk[0], (1, d), 0.02),
            "ln1_b": nrm(kk[1], (1, d), 0.02),
            "wq": nrm(kk[2], (d, d), s_d), "bq": nrm(kk[3], (1, d), 0.02),
            "wk": nrm(kk[4], (d, d), s_d), "bk": nrm(kk[5], (1, d), 0.02),
            "wv": nrm(kk[6], (d, d), s_d), "bv": nrm(kk[7], (1, d), 0.02),
            "wo": nrm(kk[8], (d, d), s_d), "bo": nrm(kk[9], (1, d), 0.02),
            "ln2_g": 1.0 + nrm(kk[10], (1, d), 0.02),
            "ln2_b": nrm(kk[11], (1, d), 0.02),
            "w1": nrm(kk[12], (d, mlp), s_d), "b1": nrm(kk[13], (1, mlp), 0.02),
            "w2": nrm(kk[14], (mlp, d), s_m), "b2": nrm(kk[15], (1, d), 0.02),
        })
    params["blocks"] = blocks
    return params


def build_kernel_params(p, *, d, heads, s_pad, class_pad=128):
    """Hoisted static packing: conv->matmul weight, folded embed bias, fused
    QKV (with 1/sqrt(dh) folded into Wq), stacked bf16 per-layer weights,
    lane-padded head."""
    bf16 = jnp.bfloat16
    n_patches = p["pos"].shape[0] - 1
    dh = d // heads
    scale = 1.0 / math.sqrt(dh)

    wp = p["wconv"].transpose(1, 2, 3, 0).reshape(-1, d)
    embed_bias = jnp.concatenate(
        [p["cls"] + p["pos"][0:1],
         p["pos"][1:] + p["bp"],
         jnp.zeros((s_pad - (n_patches + 1), d), jnp.float32)], axis=0)

    def stack(name):
        return jnp.stack([blk[name] for blk in p["blocks"]])

    wq = jnp.stack([blk["wq"] * scale for blk in p["blocks"]])
    bq = jnp.stack([blk["bq"] * scale for blk in p["blocks"]])
    wqkv = jnp.concatenate([wq, stack("wk"), stack("wv")], axis=-1)
    bqkv = jnp.concatenate([bq, stack("bk"), stack("bv")], axis=-1)

    n_cls = p["head_w"].shape[1]
    head_w = jnp.zeros((d, class_pad), jnp.float32).at[:, :n_cls].set(p["head_w"])
    head_b = jnp.zeros((1, class_pad), jnp.float32).at[:, :n_cls].set(p["head_b"])

    return {
        "wp": wp.astype(bf16), "embed_bias": embed_bias,
        "ln1_g": stack("ln1_g"), "ln1_b": stack("ln1_b"),
        "wqkv": wqkv.astype(bf16), "bqkv": bqkv,
        "wo": stack("wo").astype(bf16), "bo": stack("bo"),
        "ln2_g": stack("ln2_g"), "ln2_b": stack("ln2_b"),
        "w1": stack("w1").astype(bf16), "b1": stack("b1"),
        "w2": stack("w2").astype(bf16), "b2": stack("b2"),
        "norm_g": p["norm_g"], "norm_b": p["norm_b"],
        "head_w": head_w.astype(bf16), "head_b": head_b,
    }


if __name__ == "__main__":
    # Scaled-down ViT (same structure as the ViT-B/16 PyTorch module, smaller
    # dims for a quick test): 64x64 image, 16x16 patches -> 16 patches + cls.
    IMG, PATCH, IN_CH = 64, 16, 3
    D, MLP, LAYERS, HEADS, CLASSES = 256, 1024, 2, 4, 10
    B = 2
    S_REAL = (IMG // PATCH) ** 2 + 1               # 17
    S_PAD = ((S_REAL + 7) // 8) * 8                # 24 (multiple of 8)

    key = jax.random.PRNGKey(0)
    kparam_key, kx = jax.random.split(key)
    params = init_params(kparam_key, img_size=IMG, patch=PATCH, in_ch=IN_CH,
                         d=D, mlp=MLP, layers=LAYERS, classes=CLASSES)
    kparams = build_kernel_params(params, d=D, heads=HEADS, s_pad=S_PAD)
    x = jax.random.normal(kx, (B, IN_CH, IMG, IMG), dtype=jnp.float32)

    logits = jax.block_until_ready(
        vit_forward(kparams, x, num_heads=HEADS, patch=PATCH,
                    n_classes=CLASSES))
    ref = jax.block_until_ready(
        vit_reference(params, x, num_heads=HEADS, patch=PATCH))

    assert logits.shape == (B, CLASSES), logits.shape
    # bf16 matmul inputs (f32 accumulation) vs. the f32 reference -> looser tol.
    np.testing.assert_allclose(np.asarray(logits), np.asarray(ref),
                               rtol=8e-2, atol=8e-2)
    print("KERNEL_OK")
</pallas_src>

<mosaic_0001>
module attributes {stable_mosaic.version = 11 : i64} {
  func.func @_embed_kernel(%arg0: i32, %arg1: memref<2x16x768xbf16, #tpu.memory_space<vmem>>, %arg2: memref<768x256xbf16, #tpu.memory_space<vmem>>, %arg3: memref<24x256xf32, #tpu.memory_space<vmem>>, %arg4: memref<2x24x256xf32, #tpu.memory_space<vmem>>) attributes {dimension_semantics = [#tpu.dimension_semantics<parallel>], iteration_bounds = array<i64: 1>, scalar_prefetch = 0 : i64, scratch_operands = 0 : i64, tpu.core_type = #tpu.core_type<tc>, window_params = [{transform_indices = @transform_0, window_bounds = array<i64: 2, 16, 768>}, {pipeline_mode = #tpu.pipeline_mode<synchronous>, transform_indices = @transform_1, window_bounds = array<i64: 768, 256>}, {pipeline_mode = #tpu.pipeline_mode<synchronous>, transform_indices = @transform_2, window_bounds = array<i64: 24, 256>}, {transform_indices = @transform_3, window_bounds = array<i64: 2, 24, 256>}]} {
    %c0 = arith.constant 0 : index
    %c0_0 = arith.constant 0 : index
    %c0_1 = arith.constant 0 : index
    %0 = vector.load %arg1[%c0, %c0_0, %c0_1] : memref<2x16x768xbf16, #tpu.memory_space<vmem>>, vector<2x16x768xbf16>
    %1 = vector.shape_cast %0 : vector<2x16x768xbf16> to vector<32x768xbf16>
    %c0_2 = arith.constant 0 : index
    %c0_3 = arith.constant 0 : index
    %2 = vector.load %arg2[%c0_2, %c0_3] : memref<768x256xbf16, #tpu.memory_space<vmem>>, vector<768x256xbf16>
    %cst = arith.constant dense<0.000000e+00> : vector<32x256xf32>
    %3 = tpu.matmul %1, %2, %cst {dimension_numbers = #tpu.dot_dimension_numbers<[1], [0], [0], [1], [0, 0, 1, 1], [], []>} : vector<32x768xbf16>, vector<768x256xbf16>, vector<32x256xf32> -> vector<32x256xf32>
    %4 = vector.shape_cast %3 : vector<32x256xf32> to vector<2x16x256xf32>
    %c1 = arith.constant 1 : index
    %c0_4 = arith.constant 0 : index
    %5 = vector.load %arg3[%c1, %c0_4] : memref<24x256xf32, #tpu.memory_space<vmem>>, vector<16x256xf32>
    %6 = vector.shape_cast %5 : vector<16x256xf32> to vector<1x16x256xf32>
    %7 = vector.broadcast %6 : vector<1x16x256xf32> to vector<2x16x256xf32>
    %8 = arith.addf %4, %7 : vector<2x16x256xf32>
    %c0_5 = arith.constant 0 : index
    %c0_6 = arith.constant 0 : index
    %9 = vector.load %arg3[%c0_5, %c0_6] : memref<24x256xf32, #tpu.memory_space<vmem>>, vector<1x256xf32>
    %10 = vector.shape_cast %9 : vector<1x256xf32> to vector<1x1x256xf32>
    %11 = vector.shape_cast %10 : vector<1x1x256xf32> to vector<1x1x256xf32>
    %12 = vector.broadcast %11 : vector<1x1x256xf32> to vector<2x1x256xf32>
    %c0_7 = arith.constant 0 : index
    %c0_8 = arith.constant 0 : index
    %c0_9 = arith.constant 0 : index
    %13 = vector.load %arg4[%c0_7, %c0_8, %c0_9] : memref<2x24x256xf32, #tpu.memory_space<vmem>>, vector<2x1x256xf32>
    tpu.vector_store %arg4[%c0_7, %c0_8, %c0_9], %12 {strides = array<i32>} : memref<2x24x256xf32, #tpu.memory_space<vmem>>, vector<2x1x256xf32>,
    %c0_10 = arith.constant 0 : index
    %c1_11 = arith.constant 1 : index
    %c0_12 = arith.constant 0 : index
    %14 = vector.load %arg4[%c0_10, %c1_11, %c0_12] : memref<2x24x256xf32, #tpu.memory_space<vmem>>, vector<2x16x256xf32>
    tpu.vector_store %arg4[%c0_10, %c1_11, %c0_12], %8 {strides = array<i32>} : memref<2x24x256xf32, #tpu.memory_space<vmem>>, vector<2x16x256xf32>,
    %cst_13 = arith.constant 0.000000e+00 : f32
    %15 = vector.broadcast %cst_13 : f32 to vector<2x7x256xf32>
    %c0_14 = arith.constant 0 : index
    %c17 = arith.constant 17 : index
    %c0_15 = arith.constant 0 : index
    %16 = vector.load %arg4[%c0_14, %c17, %c0_15] : memref<2x24x256xf32, #tpu.memory_space<vmem>>, vector<2x7x256xf32>
    tpu.vector_store %arg4[%c0_14, %c17, %c0_15], %15 {strides = array<i32>} : memref<2x24x256xf32, #tpu.memory_space<vmem>>, vector<2x7x256xf32>,
    return
  }
  func.func @transform_0(%arg0: i32) -> (i32, i32, i32) {
    %c0_i32 = arith.constant 0 : i32
    %c0_i32_0 = arith.constant 0 : i32
    %c0_i32_1 = arith.constant 0 : i32
    return %arg0, %c0_i32, %c0_i32_0 : i32, i32, i32
  }
  func.func @transform_1(%arg0: i32) -> (i32, i32) {
    %c0_i32 = arith.constant 0 : i32
    %c0_i32_0 = arith.constant 0 : i32
    %c0_i32_1 = arith.constant 0 : i32
    return %c0_i32, %c0_i32_0 : i32, i32
  }
  func.func @transform_2(%arg0: i32) -> (i32, i32) {
    %c0_i32 = arith.constant 0 : i32
    %c0_i32_0 = arith.constant 0 : i32
    %c0_i32_1 = arith.constant 0 : i32
    return %c0_i32, %c0_i32_0 : i32, i32
  }
  func.func @transform_3(%arg0: i32) -> (i32, i32, i32) {
    %c0_i32 = arith.constant 0 : i32
    %c0_i32_0 = arith.constant 0 : i32
    %c0_i32_1 = arith.constant 0 : i32
    return %arg0, %c0_i32, %c0_i32_0 : i32, i32, i32
  }
}

module attributes {stable_mosaic.version = 11 : i64} {
  func.func @_head_kernel(%arg0: memref<2x256xf32, #tpu.memory_space<vmem>>, %arg1: memref<1x256xf32, #tpu.memory_space<vmem>>, %arg2: memref<1x256xf32, #tpu.memory_space<vmem>>, %arg3: memref<256x128xbf16, #tpu.memory_space<vmem>>, %arg4: memref<1x128xf32, #tpu.memory_space<vmem>>, %arg5: memref<2x128xf32, #tpu.memory_space<vmem>>) attributes {dimension_semantics = [], scalar_prefetch = 0 : i64, scratch_operands = 0 : i64, tpu.core_type = #tpu.core_type<tc>} {
    %c0 = arith.constant 0 : index
    %c0_0 = arith.constant 0 : index
    %0 = vector.load %arg0[%c0, %c0_0] : memref<2x256xf32, #tpu.memory_space<vmem>>, vector<2x256xf32>
    %c0_1 = arith.constant 0 : index
    %c0_2 = arith.constant 0 : index
    %1 = vector.load %arg1[%c0_1, %c0_2] : memref<1x256xf32, #tpu.memory_space<vmem>>, vector<1x256xf32>
    %c0_3 = arith.constant 0 : index
    %c0_4 = arith.constant 0 : index
    %2 = vector.load %arg2[%c0_3, %c0_4] : memref<1x256xf32, #tpu.memory_space<vmem>>, vector<1x256xf32>
    %cst = arith.constant dense<0.000000e+00> : vector<2xf32>
    %3 = vector.multi_reduction <add>, %0, %cst [1] : vector<2x256xf32> to vector<2xf32>
    %4 = vector.shape_cast %3 : vector<2xf32> to vector<2x1xf32>
    %cst_5 = arith.constant 2.560000e+02 : f32
    %5 = vector.broadcast %cst_5 : f32 to vector<2x1xf32>
    %6 = arith.divf %4, %5 : vector<2x1xf32>
    %7 = vector.broadcast %6 : vector<2x1xf32> to vector<2x256xf32>
    %8 = arith.subf %0, %7 : vector<2x256xf32>
    %9 = arith.mulf %8, %8 : vector<2x256xf32>
    %cst_6 = arith.constant dense<0.000000e+00> : vector<2xf32>
    %10 = vector.multi_reduction <add>, %9, %cst_6 [1] : vector<2x256xf32> to vector<2xf32>
    %11 = vector.shape_cast %10 : vector<2xf32> to vector<2x1xf32>
    %cst_7 = arith.constant 2.560000e+02 : f32
    %12 = vector.broadcast %cst_7 : f32 to vector<2x1xf32>
    %13 = arith.divf %11, %12 : vector<2x1xf32>
    %cst_8 = arith.constant 9.99999997E-7 : f32
    %14 = vector.broadcast %cst_8 : f32 to vector<2x1xf32>
    %15 = arith.addf %13, %14 : vector<2x1xf32>
    %16 = math.rsqrt %15 : vector<2x1xf32>
    %17 = vector.broadcast %16 : vector<2x1xf32> to vector<2x256xf32>
    %18 = arith.mulf %8, %17 : vector<2x256xf32>
    %19 = vector.broadcast %1 : vector<1x256xf32> to vector<2x256xf32>
    %20 = arith.mulf %18, %19 : vector<2x256xf32>
    %21 = vector.broadcast %2 : vector<1x256xf32> to vector<2x256xf32>
    %22 = arith.addf %20, %21 : vector<2x256xf32>
    %23 = arith.truncf %22 : vector<2x256xf32> to vector<2x256xbf16>
    %c0_9 = arith.constant 0 : index
    %c0_10 = arith.constant 0 : index
    %24 = vector.load %arg3[%c0_9, %c0_10] : memref<256x128xbf16, #tpu.memory_space<vmem>>, vector<256x128xbf16>
    %cst_11 = arith.constant dense<0.000000e+00> : vector<2x128xf32>
    %25 = tpu.matmul %23, %24, %cst_11 {dimension_numbers = #tpu.dot_dimension_numbers<[1], [0], [0], [1], [0, 0, 1, 1], [], []>} : vector<2x256xbf16>, vector<256x128xbf16>, vector<2x128xf32> -> vector<2x128xf32>
    %c0_12 = arith.constant 0 : index
    %c0_13 = arith.constant 0 : index
    %26 = vector.load %arg4[%c0_12, %c0_13] : memref<1x128xf32, #tpu.memory_space<vmem>>, vector<1x128xf32>
    %27 = vector.broadcast %26 : vector<1x128xf32> to vector<2x128xf32>
    %28 = arith.addf %25, %27 : vector<2x128xf32>
    %c0_14 = arith.constant 0 : index
    %c0_15 = arith.constant 0 : index
    %29 = vector.load %arg5[%c0_14, %c0_15] : memref<2x128xf32, #tpu.memory_space<vmem>>, vector<2x128xf32>
    tpu.vector_store %arg5[%c0_14, %c0_15], %28 {strides = array<i32>} : memref<2x128xf32, #tpu.memory_space<vmem>>, vector<2x128xf32>,
    return
  }
}

module attributes {stable_mosaic.version = 11 : i64} {
  func.func @_encoder_kernel(%arg0: i32, %arg1: i32, %arg2: memref<2x24x256xf32, #tpu.memory_space<vmem>>, %arg3: memref<1x1x256xf32, #tpu.memory_space<vmem>>, %arg4: memref<1x1x256xf32, #tpu.memory_space<vmem>>, %arg5: memref<1x256x768xbf16, #tpu.memory_space<vmem>>, %arg6: memref<1x1x768xf32, #tpu.memory_space<vmem>>, %arg7: memref<1x256x256xbf16, #tpu.memory_space<vmem>>, %arg8: memref<1x1x256xf32, #tpu.memory_space<vmem>>, %arg9: memref<1x1x256xf32, #tpu.memory_space<vmem>>, %arg10: memref<1x1x256xf32, #tpu.memory_space<vmem>>, %arg11: memref<1x256x1024xbf16, #tpu.memory_space<vmem>>, %arg12: memref<1x1x1024xf32, #tpu.memory_space<vmem>>, %arg13: memref<1x1024x256xbf16, #tpu.memory_space<vmem>>, %arg14: memref<1x1x256xf32, #tpu.memory_space<vmem>>, %arg15: memref<2x24x256xf32, #tpu.memory_space<vmem>>, %arg16: memref<48x256xf32, #tpu.memory_space<vmem>>, %arg17: memref<2x24x256xf32, #tpu.memory_space<vmem>>) attributes {dimension_semantics = [#tpu.dimension_semantics<parallel>, #tpu.dimension_semantics<arbitrary>], iteration_bounds = array<i64: 1, 2>, scalar_prefetch = 0 : i64, scratch_operands = 2 : i64, tpu.core_type = #tpu.core_type<tc>, window_params = [{transform_indices = @transform_0, window_bounds = array<i64: 2, 24, 256>}, {transform_indices = @transform_1, window_bounds = array<i64: 1, 1, 256>}, {transform_indices = @transform_2, window_bounds = array<i64: 1, 1, 256>}, {transform_indices = @transform_3, window_bounds = array<i64: 1, 256, 768>}, {transform_indices = @transform_4, window_bounds = array<i64: 1, 1, 768>}, {transform_indices = @transform_5, window_bounds = array<i64: 1, 256, 256>}, {transform_indices = @transform_6, window_bounds = array<i64: 1, 1, 256>}, {transform_indices = @transform_7, window_bounds = array<i64: 1, 1, 256>}, {transform_indices = @transform_8, window_bounds = array<i64: 1, 1, 256>}, {transform_indices = @transform_9, window_bounds = array<i64: 1, 256, 1024>}, {transform_indices = @transform_10, window_bounds = array<i64: 1, 1, 1024>}, {transform_indices = @transform_11, window_bounds = array<i64: 1, 1024, 256>}, {transform_indices = @transform_12, window_bounds = array<i64: 1, 1, 256>}, {transform_indices = @transform_13, window_bounds = array<i64: 2, 24, 256>}]} {
    %c0_i32 = arith.constant 0 : i32
    %0 = arith.cmpi eq, %arg1, %c0_i32 : i32
    %1 = arith.extui %0 : i1 to i32
    %c0_i32_0 = arith.constant 0 : i32
    %2 = arith.cmpi ne, %1, %c0_i32_0 : i32
    scf.if %2 {
      %c0_100 = arith.constant 0 : index
      %c0_101 = arith.constant 0 : index
      %c0_102 = arith.constant 0 : index
      %221 = vector.load %arg2[%c0_100, %c0_101, %c0_102] : memref<2x24x256xf32, #tpu.memory_space<vmem>>, vector<2x24x256xf32>
      %222 = vector.shape_cast %221 : vector<2x24x256xf32> to vector<48x256xf32>
      %c0_103 = arith.constant 0 : index
      %c0_104 = arith.constant 0 : index
      %223 = vector.load %arg16[%c0_103, %c0_104] : memref<48x256xf32, #tpu.memory_space<vmem>>, vector<48x256xf32>
      tpu.vector_store %arg16[%c0_103, %c0_104], %222 {strides = array<i32>} : memref<48x256xf32, #tpu.memory_space<vmem>>, vector<48x256xf32>,
    } else {
    }
    %c0 = arith.constant 0 : index
    %c0_1 = arith.constant 0 : index
    %3 = vector.load %arg16[%c0, %c0_1] : memref<48x256xf32, #tpu.memory_space<vmem>>, vector<48x256xf32>
    %c0_2 = arith.constant 0 : index
    %c0_3 = arith.constant 0 : index
    %c0_4 = arith.constant 0 : index
    %4 = vector.load %arg3[%c0_2, %c0_3, %c0_4] : memref<1x1x256xf32, #tpu.memory_space<vmem>>, vector<1x1x256xf32>
    %5 = vector.shape_cast %4 : vector<1x1x256xf32> to vector<1x256xf32>
    %c0_5 = arith.constant 0 : index
    %c0_6 = arith.constant 0 : index
    %c0_7 = arith.constant 0 : index
    %6 = vector.load %arg4[%c0_5, %c0_6, %c0_7] : memref<1x1x256xf32, #tpu.memory_space<vmem>>, vector<1x1x256xf32>
    %7 = vector.shape_cast %6 : vector<1x1x256xf32> to vector<1x256xf32>
    %cst = arith.constant dense<0.000000e+00> : vector<48xf32>
    %8 = vector.multi_reduction <add>, %3, %cst [1] : vector<48x256xf32> to vector<48xf32>
    %9 = vector.shape_cast %8 : vector<48xf32> to vector<48x1xf32>
    %cst_8 = arith.constant 2.560000e+02 : f32
    %10 = vector.broadcast %cst_8 : f32 to vector<48x1xf32>
    %11 = arith.divf %9, %10 : vector<48x1xf32>
    %12 = vector.broadcast %11 : vector<48x1xf32> to vector<48x256xf32>
    %13 = arith.subf %3, %12 : vector<48x256xf32>
    %14 = arith.mulf %13, %13 : vector<48x256xf32>
    %cst_9 = arith.constant dense<0.000000e+00> : vector<48xf32>
    %15 = vector.multi_reduction <add>, %14, %cst_9 [1] : vector<48x256xf32> to vector<48xf32>
    %16 = vector.shape_cast %15 : vector<48xf32> to vector<48x1xf32>
    %cst_10 = arith.constant 2.560000e+02 : f32
    %17 = vector.broadcast %cst_10 : f32 to vector<48x1xf32>
    %18 = arith.divf %16, %17 : vector<48x1xf32>
    %cst_11 = arith.constant 9.99999997E-7 : f32
    %19 = vector.broadcast %cst_11 : f32 to vector<48x1xf32>
    %20 = arith.addf %18, %19 : vector<48x1xf32>
    %21 = math.rsqrt %20 : vector<48x1xf32>
    %22 = vector.broadcast %21 : vector<48x1xf32> to vector<48x256xf32>
    %23 = arith.mulf %13, %22 : vector<48x256xf32>
    %24 = vector.broadcast %5 : vector<1x256xf32> to vector<48x256xf32>
    %25 = arith.mulf %23, %24 : vector<48x256xf32>
    %26 = vector.broadcast %7 : vector<1x256xf32> to vector<48x256xf32>
    %27 = arith.addf %25, %26 : vector<48x256xf32>
    %28 = arith.truncf %27 : vector<48x256xf32> to vector<48x256xbf16>
    %c0_12 = arith.constant 0 : index
    %c0_13 = arith.constant 0 : index
    %c0_14 = arith.constant 0 : index
    %29 = vector.load %arg5[%c0_12, %c0_13, %c0_14] : memref<1x256x768xbf16, #tpu.memory_space<vmem>>, vector<1x256x768xbf16>
    %30 = vector.shape_cast %29 : vector<1x256x768xbf16> to vector<256x768xbf16>
    %cst_15 = arith.constant dense<0.000000e+00> : vector<48x768xf32>
    %31 = tpu.matmul %28, %30, %cst_15 {dimension_numbers = #tpu.dot_dimension_numbers<[1], [0], [0], [1], [0, 0, 1, 1], [], []>} : vector<48x256xbf16>, vector<256x768xbf16>, vector<48x768xf32> -> vector<48x768xf32>
    %c0_16 = arith.constant 0 : index
    %c0_17 = arith.constant 0 : index
    %c0_18 = arith.constant 0 : index
    %32 = vector.load %arg6[%c0_16, %c0_17, %c0_18] : memref<1x1x768xf32, #tpu.memory_space<vmem>>, vector<1x1x768xf32>
    %33 = vector.shape_cast %32 : vector<1x1x768xf32> to vector<1x768xf32>
    %34 = vector.broadcast %33 : vector<1x768xf32> to vector<48x768xf32>
    %35 = arith.addf %31, %34 : vector<48x768xf32>
    %36 = vector.extract_strided_slice %35 {offsets = [0, 0], sizes = [48, 256], strides = [1, 1]} : vector<48x768xf32> to vector<48x256xf32>
    %37 = vector.shape_cast %36 : vector<48x256xf32> to vector<2x24x256xf32>
    %38 = arith.truncf %37 : vector<2x24x256xf32> to vector<2x24x256xbf16>
    %39 = vector.extract_strided_slice %35 {offsets = [0, 256], sizes = [48, 256], strides = [1, 1]} : vector<48x768xf32> to vector<48x256xf32>
    %40 = vector.shape_cast %39 : vector<48x256xf32> to vector<2x24x256xf32>
    %41 = arith.truncf %40 : vector<2x24x256xf32> to vector<2x24x256xbf16>
    %42 = vector.extract_strided_slice %35 {offsets = [0, 512], sizes = [48, 256], strides = [1, 1]} : vector<48x768xf32> to vector<48x256xf32>
    %43 = vector.shape_cast %42 : vector<48x256xf32> to vector<2x24x256xf32>
    %44 = arith.truncf %43 : vector<2x24x256xf32> to vector<2x24x256xbf16>
    %45 = tpu.iota {dimensions = array<i32: 1>} : vector<24x24xi32>
    %c17_i32 = arith.constant 17 : i32
    %46 = vector.broadcast %c17_i32 : i32 to vector<24x24xi32>
    %47 = arith.cmpi slt, %45, %46 : vector<24x24xi32>
    %cst_19 = arith.constant 0.000000e+00 : f32
    %cst_20 = arith.constant -1.000000e+30 : f32
    %48 = vector.broadcast %cst_19 : f32 to vector<24x24xf32>
    %49 = vector.broadcast %cst_20 : f32 to vector<24x24xf32>
    %50 = arith.select %47, %48, %49 : vector<24x24xi1>, vector<24x24xf32>
    %51 = vector.shape_cast %50 : vector<24x24xf32> to vector<1x24x24xf32>
    %52 = vector.extract_strided_slice %38 {offsets = [0, 0, 0], sizes = [2, 24, 64], strides = [1, 1, 1]} : vector<2x24x256xbf16> to vector<2x24x64xbf16>
    %53 = vector.extract_strided_slice %41 {offsets = [0, 0, 0], sizes = [2, 24, 64], strides = [1, 1, 1]} : vector<2x24x256xbf16> to vector<2x24x64xbf16>
    "tpu.trace_start"() <{level = 10 : i32, message = "bqd,bkd->bqk"}> : () -> ()
    %cst_21 = arith.constant dense<0.000000e+00> : vector<2x24x24xf32>
    %54 = tpu.matmul %52, %53, %cst_21 {dimension_numbers = #tpu.dot_dimension_numbers<[2], [2], [1], [1], [0, 0, 0, 1, 1, 1], [0], [0]>} : vector<2x24x64xbf16>, vector<2x24x64xbf16>, vector<2x24x24xf32> -> vector<2x24x24xf32>
    "tpu.trace_stop"() : () -> ()
    %55 = vector.broadcast %51 : vector<1x24x24xf32> to vector<2x24x24xf32>
    %56 = arith.addf %54, %55 : vector<2x24x24xf32>
    %cst_22 = arith.constant dense<0xFF800000> : vector<2x24xf32>
    %57 = vector.multi_reduction <maximumf>, %56, %cst_22 [2] : vector<2x24x24xf32> to vector<2x24xf32>
    %58 = vector.shape_cast %57 : vector<2x24xf32> to vector<2x24x1xf32>
    %59 = vector.broadcast %58 : vector<2x24x1xf32> to vector<2x24x24xf32>
    %60 = arith.subf %56, %59 : vector<2x24x24xf32>
    %61 = math.exp %60 : vector<2x24x24xf32>
    %cst_23 = arith.constant dense<0.000000e+00> : vector<2x24xf32>
    %62 = vector.multi_reduction <add>, %61, %cst_23 [2] : vector<2x24x24xf32> to vector<2x24xf32>
    %63 = vector.shape_cast %62 : vector<2x24xf32> to vector<2x24x1xf32>
    %64 = vector.broadcast %63 : vector<2x24x1xf32> to vector<2x24x24xf32>
    %65 = arith.divf %61, %64 : vector<2x24x24xf32>
    %66 = arith.truncf %65 : vector<2x24x24xf32> to vector<2x24x24xbf16>
    %67 = vector.extract_strided_slice %44 {offsets = [0, 0, 0], sizes = [2, 24, 64], strides = [1, 1, 1]} : vector<2x24x256xbf16> to vector<2x24x64xbf16>
    "tpu.trace_start"() <{level = 10 : i32, message = "bqk,bkd->bqd"}> : () -> ()
    %cst_24 = arith.constant dense<0.000000e+00> : vector<2x24x64xf32>
    %68 = tpu.matmul %66, %67, %cst_24 {dimension_numbers = #tpu.dot_dimension_numbers<[2], [1], [1], [2], [0, 0, 0, 1, 1, 2], [0], [0]>} : vector<2x24x24xbf16>, vector<2x24x64xbf16>, vector<2x24x64xf32> -> vector<2x24x64xf32>
    "tpu.trace_stop"() : () -> ()
    %c0_25 = arith.constant 0 : index
    %c0_26 = arith.constant 0 : index
    %c0_27 = arith.constant 0 : index
    %69 = vector.load %arg17[%c0_25, %c0_26, %c0_27] : memref<2x24x256xf32, #tpu.memory_space<vmem>>, vector<2x24x64xf32>
    tpu.vector_store %arg17[%c0_25, %c0_26, %c0_27], %68 {strides = array<i32>} : memref<2x24x256xf32, #tpu.memory_space<vmem>>, vector<2x24x64xf32>,
    %70 = vector.extract_strided_slice %38 {offsets = [0, 0, 64], sizes = [2, 24, 64], strides = [1, 1, 1]} : vector<2x24x256xbf16> to vector<2x24x64xbf16>
    %71 = vector.extract_strided_slice %41 {offsets = [0, 0, 64], sizes = [2, 24, 64], strides = [1, 1, 1]} : vector<2x24x256xbf16> to vector<2x24x64xbf16>
    "tpu.trace_start"() <{level = 10 : i32, message = "bqd,bkd->bqk"}> : () -> ()
    %cst_28 = arith.constant dense<0.000000e+00> : vector<2x24x24xf32>
    %72 = tpu.matmul %70, %71, %cst_28 {dimension_numbers = #tpu.dot_dimension_numbers<[2], [2], [1], [1], [0, 0, 0, 1, 1, 1], [0], [0]>} : vector<2x24x64xbf16>, vector<2x24x64xbf16>, vector<2x24x24xf32> -> vector<2x24x24xf32>
    "tpu.trace_stop"() : () -> ()
    %73 = vector.broadcast %51 : vector<1x24x24xf32> to vector<2x24x24xf32>
    %74 = arith.addf %72, %73 : vector<2x24x24xf32>
    %cst_29 = arith.constant dense<0xFF800000> : vector<2x24xf32>
    %75 = vector.multi_reduction <maximumf>, %74, %cst_29 [2] : vector<2x24x24xf32> to vector<2x24xf32>
    %76 = vector.shape_cast %75 : vector<2x24xf32> to vector<2x24x1xf32>
    %77 = vector.broadcast %76 : vector<2x24x1xf32> to vector<2x24x24xf32>
    %78 = arith.subf %74, %77 : vector<2x24x24xf32>
    %79 = math.exp %78 : vector<2x24x24xf32>
    %cst_30 = arith.constant dense<0.000000e+00> : vector<2x24xf32>
    %80 = vector.multi_reduction <add>, %79, %cst_30 [2] : vector<2x24x24xf32> to vector<2x24xf32>
    %81 = vector.shape_cast %80 : vector<2x24xf32> to vector<2x24x1xf32>
    %82 = vector.broadcast %81 : vector<2x24x1xf32> to vector<2x24x24xf32>
    %83 = arith.divf %79, %82 : vector<2x24x24xf32>
    %84 = arith.truncf %83 : vector<2x24x24xf32> to vector<2x24x24xbf16>
    %85 = vector.extract_strided_slice %44 {offsets = [0, 0, 64], sizes = [2, 24, 64], strides = [1, 1, 1]} : vector<2x24x256xbf16> to vector<2x24x64xbf16>
    "tpu.trace_start"() <{level = 10 : i32, message = "bqk,bkd->bqd"}> : () -> ()
    %cst_31 = arith.constant dense<0.000000e+00> : vector<2x24x64xf32>
    %86 = tpu.matmul %84, %85, %cst_31 {dimension_numbers = #tpu.dot_dimension_numbers<[2], [1], [1], [2], [0, 0, 0, 1, 1, 2], [0], [0]>} : vector<2x24x24xbf16>, vector<2x24x64xbf16>, vector<2x24x64xf32> -> vector<2x24x64xf32>
    "tpu.trace_stop"() : () -> ()
    %c0_32 = arith.constant 0 : index
    %c0_33 = arith.constant 0 : index
    %c64 = arith.constant 64 : index
    %87 = vector.load %arg17[%c0_32, %c0_33, %c64] : memref<2x24x256xf32, #tpu.memory_space<vmem>>, vector<2x24x64xf32>
    tpu.vector_store %arg17[%c0_32, %c0_33, %c64], %86 {strides = array<i32>} : memref<2x24x256xf32, #tpu.memory_space<vmem>>, vector<2x24x64xf32>,
    %88 = vector.extract_strided_slice %38 {offsets = [0, 0, 128], sizes = [2, 24, 64], strides = [1, 1, 1]} : vector<2x24x256xbf16> to vector<2x24x64xbf16>
    %89 = vector.extract_strided_slice %41 {offsets = [0, 0, 128], sizes = [2, 24, 64], strides = [1, 1, 1]} : vector<2x24x256xbf16> to vector<2x24x64xbf16>
    "tpu.trace_start"() <{level = 10 : i32, message = "bqd,bkd->bqk"}> : () -> ()
    %cst_34 = arith.constant dense<0.000000e+00> : vector<2x24x24xf32>
    %90 = tpu.matmul %88, %89, %cst_34 {dimension_numbers = #tpu.dot_dimension_numbers<[2], [2], [1], [1], [0, 0, 0, 1, 1, 1], [0], [0]>} : vector<2x24x64xbf16>, vector<2x24x64xbf16>, vector<2x24x24xf32> -> vector<2x24x24xf32>
    "tpu.trace_stop"() : () -> ()
    %91 = vector.broadcast %51 : vector<1x24x24xf32> to vector<2x24x24xf32>
    %92 = arith.addf %90, %91 : vector<2x24x24xf32>
    %cst_35 = arith.constant dense<0xFF800000> : vector<2x24xf32>
    %93 = vector.multi_reduction <maximumf>, %92, %cst_35 [2] : vector<2x24x24xf32> to vector<2x24xf32>
    %94 = vector.shape_cast %93 : vector<2x24xf32> to vector<2x24x1xf32>
    %95 = vector.broadcast %94 : vector<2x24x1xf32> to vector<2x24x24xf32>
    %96 = arith.subf %92, %95 : vector<2x24x24xf32>
    %97 = math.exp %96 : vector<2x24x24xf32>
    %cst_36 = arith.constant dense<0.000000e+00> : vector<2x24xf32>
    %98 = vector.multi_reduction <add>, %97, %cst_36 [2] : vector<2x24x24xf32> to vector<2x24xf32>
    %99 = vector.shape_cast %98 : vector<2x24xf32> to vector<2x24x1xf32>
    %100 = vector.broadcast %99 : vector<2x24x1xf32> to vector<2x24x24xf32>
    %101 = arith.divf %97, %100 : vector<2x24x24xf32>
    %102 = arith.truncf %101 : vector<2x24x24xf32> to vector<2x24x24xbf16>
    %103 = vector.extract_strided_slice %44 {offsets = [0, 0, 128], sizes = [2, 24, 64], strides = [1, 1, 1]} : vector<2x24x256xbf16> to vector<2x24x64xbf16>
    "tpu.trace_start"() <{level = 10 : i32, message = "bqk,bkd->bqd"}> : () -> ()
    %cst_37 = arith.constant dense<0.000000e+00> : vector<2x24x64xf32>
    %104 = tpu.matmul %102, %103, %cst_37 {dimension_numbers = #tpu.dot_dimension_numbers<[2], [1], [1], [2], [0, 0, 0, 1, 1, 2], [0], [0]>} : vector<2x24x24xbf16>, vector<2x24x64xbf16>, vector<2x24x64xf32> -> vector<2x24x64xf32>
    "tpu.trace_stop"() : () -> ()
    %c0_38 = arith.constant 0 : index
    %c0_39 = arith.constant 0 : index
    %c128 = arith.constant 128 : index
    %105 = vector.load %arg17[%c0_38, %c0_39, %c128] : memref<2x24x256xf32, #tpu.memory_space<vmem>>, vector<2x24x64xf32>
    tpu.vector_store %arg17[%c0_38, %c0_39, %c128], %104 {strides = array<i32>} : memref<2x24x256xf32, #tpu.memory_space<vmem>>, vector<2x24x64xf32>,
    %106 = vector.extract_strided_slice %38 {offsets = [0, 0, 192], sizes = [2, 24, 64], strides = [1, 1, 1]} : vector<2x24x256xbf16> to vector<2x24x64xbf16>
    %107 = vector.extract_strided_slice %41 {offsets = [0, 0, 192], sizes = [2, 24, 64], strides = [1, 1, 1]} : vector<2x24x256xbf16> to vector<2x24x64xbf16>
    "tpu.trace_start"() <{level = 10 : i32, message = "bqd,bkd->bqk"}> : () -> ()
    %cst_40 = arith.constant dense<0.000000e+00> : vector<2x24x24xf32>
    %108 = tpu.matmul %106, %107, %cst_40 {dimension_numbers = #tpu.dot_dimension_numbers<[2], [2], [1], [1], [0, 0, 0, 1, 1, 1], [0], [0]>} : vector<2x24x64xbf16>, vector<2x24x64xbf16>, vector<2x24x24xf32> -> vector<2x24x24xf32>
    "tpu.trace_stop"() : () -> ()
    %109 = vector.broadcast %51 : vector<1x24x24xf32> to vector<2x24x24xf32>
    %110 = arith.addf %108, %109 : vector<2x24x24xf32>
    %cst_41 = arith.constant dense<0xFF800000> : vector<2x24xf32>
    %111 = vector.multi_reduction <maximumf>, %110, %cst_41 [2] : vector<2x24x24xf32> to vector<2x24xf32>
    %112 = vector.shape_cast %111 : vector<2x24xf32> to vector<2x24x1xf32>
    %113 = vector.broadcast %112 : vector<2x24x1xf32> to vector<2x24x24xf32>
    %114 = arith.subf %110, %113 : vector<2x24x24xf32>
    %115 = math.exp %114 : vector<2x24x24xf32>
    %cst_42 = arith.constant dense<0.000000e+00> : vector<2x24xf32>
    %116 = vector.multi_reduction <add>, %115, %cst_42 [2] : vector<2x24x24xf32> to vector<2x24xf32>
    %117 = vector.shape_cast %116 : vector<2x24xf32> to vector<2x24x1xf32>
    %118 = vector.broadcast %117 : vector<2x24x1xf32> to vector<2x24x24xf32>
    %119 = arith.divf %115, %118 : vector<2x24x24xf32>
    %120 = arith.truncf %119 : vector<2x24x24xf32> to vector<2x24x24xbf16>
    %121 = vector.extract_strided_slice %44 {offsets = [0, 0, 192], sizes = [2, 24, 64], strides = [1, 1, 1]} : vector<2x24x256xbf16> to vector<2x24x64xbf16>
    "tpu.trace_start"() <{level = 10 : i32, message = "bqk,bkd->bqd"}> : () -> ()
    %cst_43 = arith.constant dense<0.000000e+00> : vector<2x24x64xf32>
    %122 = tpu.matmul %120, %121, %cst_43 {dimension_numbers = #tpu.dot_dimension_numbers<[2], [1], [1], [2], [0, 0, 0, 1, 1, 2], [0], [0]>} : vector<2x24x24xbf16>, vector<2x24x64xbf16>, vector<2x24x64xf32> -> vector<2x24x64xf32>
    "tpu.trace_stop"() : () -> ()
    %c0_44 = arith.constant 0 : index
    %c0_45 = arith.constant 0 : index
    %c192 = arith.constant 192 : index
    %123 = vector.load %arg17[%c0_44, %c0_45, %c192] : memref<2x24x256xf32, #tpu.memory_space<vmem>>, vector<2x24x64xf32>
    tpu.vector_store %arg17[%c0_44, %c0_45, %c192], %122 {strides = array<i32>} : memref<2x24x256xf32, #tpu.memory_space<vmem>>, vector<2x24x64xf32>,
    %c0_46 = arith.constant 0 : index
    %c0_47 = arith.constant 0 : index
    %c0_48 = arith.constant 0 : index
    %124 = vector.load %arg17[%c0_46, %c0_47, %c0_48] : memref<2x24x256xf32, #tpu.memory_space<vmem>>, vector<2x24x256xf32>
    %125 = vector.shape_cast %124 : vector<2x24x256xf32> to vector<48x256xf32>
    %126 = arith.truncf %125 : vector<48x256xf32> to vector<48x256xbf16>
    %c0_49 = arith.constant 0 : index
    %c0_50 = arith.constant 0 : index
    %c0_51 = arith.constant 0 : index
    %127 = vector.load %arg7[%c0_49, %c0_50, %c0_51] : memref<1x256x256xbf16, #tpu.memory_space<vmem>>, vector<1x256x256xbf16>
    %128 = vector.shape_cast %127 : vector<1x256x256xbf16> to vector<256x256xbf16>
    %cst_52 = arith.constant dense<0.000000e+00> : vector<48x256xf32>
    %129 = tpu.matmul %126, %128, %cst_52 {dimension_numbers = #tpu.dot_dimension_numbers<[1], [0], [0], [1], [0, 0, 1, 1], [], []>} : vector<48x256xbf16>, vector<256x256xbf16>, vector<48x256xf32> -> vector<48x256xf32>
    %c0_53 = arith.constant 0 : index
    %c0_54 = arith.constant 0 : index
    %c0_55 = arith.constant 0 : index
    %130 = vector.load %arg8[%c0_53, %c0_54, %c0_55] : memref<1x1x256xf32, #tpu.memory_space<vmem>>, vector<1x1x256xf32>
    %131 = vector.shape_cast %130 : vector<1x1x256xf32> to vector<1x256xf32>
    %132 = vector.broadcast %131 : vector<1x256xf32> to vector<48x256xf32>
    %133 = arith.addf %129, %132 : vector<48x256xf32>
    %134 = arith.addf %3, %133 : vector<48x256xf32>
    %c0_56 = arith.constant 0 : index
    %c0_57 = arith.constant 0 : index
    %c0_58 = arith.constant 0 : index
    %135 = vector.load %arg9[%c0_56, %c0_57, %c0_58] : memref<1x1x256xf32, #tpu.memory_space<vmem>>, vector<1x1x256xf32>
    %136 = vector.shape_cast %135 : vector<1x1x256xf32> to vector<1x256xf32>
    %c0_59 = arith.constant 0 : index
    %c0_60 = arith.constant 0 : index
    %c0_61 = arith.constant 0 : index
    %137 = vector.load %arg10[%c0_59, %c0_60, %c0_61] : memref<1x1x256xf32, #tpu.memory_space<vmem>>, vector<1x1x256xf32>
    %138 = vector.shape_cast %137 : vector<1x1x256xf32> to vector<1x256xf32>
    %cst_62 = arith.constant dense<0.000000e+00> : vector<48xf32>
    %139 = vector.multi_reduction <add>, %134, %cst_62 [1] : vector<48x256xf32> to vector<48xf32>
    %140 = vector.shape_cast %139 : vector<48xf32> to vector<48x1xf32>
    %cst_63 = arith.constant 2.560000e+02 : f32
    %141 = vector.broadcast %cst_63 : f32 to vector<48x1xf32>
    %142 = arith.divf %140, %141 : vector<48x1xf32>
    %143 = vector.broadcast %142 : vector<48x1xf32> to vector<48x256xf32>
    %144 = arith.subf %134, %143 : vector<48x256xf32>
    %145 = arith.mulf %144, %144 : vector<48x256xf32>
    %cst_64 = arith.constant dense<0.000000e+00> : vector<48xf32>
    %146 = vector.multi_reduction <add>, %145, %cst_64 [1] : vector<48x256xf32> to vector<48xf32>
    %147 = vector.shape_cast %146 : vector<48xf32> to vector<48x1xf32>
    %cst_65 = arith.constant 2.560000e+02 : f32
    %148 = vector.broadcast %cst_65 : f32 to vector<48x1xf32>
    %149 = arith.divf %147, %148 : vector<48x1xf32>
    %cst_66 = arith.constant 9.99999997E-7 : f32
    %150 = vector.broadcast %cst_66 : f32 to vector<48x1xf32>
    %151 = arith.addf %149, %150 : vector<48x1xf32>
    %152 = math.rsqrt %151 : vector<48x1xf32>
    %153 = vector.broadcast %152 : vector<48x1xf32> to vector<48x256xf32>
    %154 = arith.mulf %144, %153 : vector<48x256xf32>
    %155 = vector.broadcast %136 : vector<1x256xf32> to vector<48x256xf32>
    %156 = arith.mulf %154, %155 : vector<48x256xf32>
    %157 = vector.broadcast %138 : vector<1x256xf32> to vector<48x256xf32>
    %158 = arith.addf %156, %157 : vector<48x256xf32>
    %159 = arith.truncf %158 : vector<48x256xf32> to vector<48x256xbf16>
    %c0_67 = arith.constant 0 : index
    %c0_68 = arith.constant 0 : index
    %c0_69 = arith.constant 0 : index
    %160 = vector.load %arg11[%c0_67, %c0_68, %c0_69] : memref<1x256x1024xbf16, #tpu.memory_space<vmem>>, vector<1x256x1024xbf16>
    %161 = vector.shape_cast %160 : vector<1x256x1024xbf16> to vector<256x1024xbf16>
    %cst_70 = arith.constant dense<0.000000e+00> : vector<48x1024xf32>
    %162 = tpu.matmul %159, %161, %cst_70 {dimension_numbers = #tpu.dot_dimension_numbers<[1], [0], [0], [1], [0, 0, 1, 1], [], []>} : vector<48x256xbf16>, vector<256x1024xbf16>, vector<48x1024xf32> -> vector<48x1024xf32>
    %c0_71 = arith.constant 0 : index
    %c0_72 = arith.constant 0 : index
    %c0_73 = arith.constant 0 : index
    %163 = vector.load %arg12[%c0_71, %c0_72, %c0_73] : memref<1x1x1024xf32, #tpu.memory_space<vmem>>, vector<1x1x1024xf32>
    %164 = vector.shape_cast %163 : vector<1x1x1024xf32> to vector<1x1024xf32>
    %165 = vector.broadcast %164 : vector<1x1024xf32> to vector<48x1024xf32>
    %166 = arith.addf %162, %165 : vector<48x1024xf32>
    %cst_74 = arith.constant 5.000000e-01 : f32
    %167 = vector.broadcast %cst_74 : f32 to vector<48x1024xf32>
    %168 = arith.mulf %167, %166 : vector<48x1024xf32>
    %cst_75 = arith.constant 0.707106769 : f32
    %169 = vector.broadcast %cst_75 : f32 to vector<48x1024xf32>
    %170 = arith.mulf %166, %169 : vector<48x1024xf32>
    %cst_76 = arith.constant 0.000000e+00 : f32
    %171 = vector.broadcast %cst_76 : f32 to vector<48x1024xf32>
    %172 = arith.cmpf oge, %170, %171 : vector<48x1024xf32>
    %cst_77 = arith.constant 1.000000e+00 : f32
    %cst_78 = arith.constant -1.000000e+00 : f32
    %173 = vector.broadcast %cst_77 : f32 to vector<48x1024xf32>
    %174 = vector.broadcast %cst_78 : f32 to vector<48x1024xf32>
    %175 = arith.select %172, %173, %174 : vector<48x1024xi1>, vector<48x1024xf32>
    %176 = arith.mulf %170, %175 : vector<48x1024xf32>
    %cst_79 = arith.constant 0.327591091 : f32
    %177 = vector.broadcast %cst_79 : f32 to vector<48x1024xf32>
    %178 = arith.mulf %177, %176 : vector<48x1024xf32>
    %cst_80 = arith.constant 1.000000e+00 : f32
    %179 = vector.broadcast %cst_80 : f32 to vector<48x1024xf32>
    %180 = arith.addf %179, %178 : vector<48x1024xf32>
    %cst_81 = arith.constant 1.000000e+00 : f32
    %181 = vector.broadcast %cst_81 : f32 to vector<48x1024xf32>
    %182 = arith.divf %181, %180 : vector<48x1024xf32>
    %cst_82 = arith.constant 1.06140542 : f32
    %183 = vector.broadcast %cst_82 : f32 to vector<48x1024xf32>
    %184 = arith.mulf %183, %182 : vector<48x1024xf32>
    %cst_83 = arith.constant -1.45315206 : f32
    %185 = vector.broadcast %cst_83 : f32 to vector<48x1024xf32>
    %186 = arith.addf %184, %185 : vector<48x1024xf32>
    %187 = arith.mulf %186, %182 : vector<48x1024xf32>
    %cst_84 = arith.constant 1.42141378 : f32
    %188 = vector.broadcast %cst_84 : f32 to vector<48x1024xf32>
    %189 = arith.addf %187, %188 : vector<48x1024xf32>
    %190 = arith.mulf %189, %182 : vector<48x1024xf32>
    %cst_85 = arith.constant -0.284496725 : f32
    %191 = vector.broadcast %cst_85 : f32 to vector<48x1024xf32>
    %192 = arith.addf %190, %191 : vector<48x1024xf32>
    %193 = arith.mulf %192, %182 : vector<48x1024xf32>
    %cst_86 = arith.constant 0.254829586 : f32
    %194 = vector.broadcast %cst_86 : f32 to vector<48x1024xf32>
    %195 = arith.addf %193, %194 : vector<48x1024xf32>
    %196 = arith.mulf %195, %182 : vector<48x1024xf32>
    %cst_87 = arith.constant 0.000000e+00 : f32
    %197 = vector.broadcast %cst_87 : f32 to vector<48x1024xf32>
    %198 = arith.subf %197, %176 : vector<48x1024xf32>
    %199 = arith.mulf %198, %176 : vector<48x1024xf32>
    %200 = math.exp %199 : vector<48x1024xf32>
    %201 = arith.mulf %196, %200 : vector<48x1024xf32>
    %cst_88 = arith.constant 1.000000e+00 : f32
    %202 = vector.broadcast %cst_88 : f32 to vector<48x1024xf32>
    %203 = arith.subf %202, %201 : vector<48x1024xf32>
    %204 = arith.mulf %175, %203 : vector<48x1024xf32>
    %cst_89 = arith.constant 1.000000e+00 : f32
    %205 = vector.broadcast %cst_89 : f32 to vector<48x1024xf32>
    %206 = arith.addf %205, %204 : vector<48x1024xf32>
    %207 = arith.mulf %168, %206 : vector<48x1024xf32>
    %208 = arith.truncf %207 : vector<48x1024xf32> to vector<48x1024xbf16>
    %c0_90 = arith.constant 0 : index
    %c0_91 = arith.constant 0 : index
    %c0_92 = arith.constant 0 : index
    %209 = vector.load %arg13[%c0_90, %c0_91, %c0_92] : memref<1x1024x256xbf16, #tpu.memory_space<vmem>>, vector<1x1024x256xbf16>
    %210 = vector.shape_cast %209 : vector<1x1024x256xbf16> to vector<1024x256xbf16>
    %cst_93 = arith.constant dense<0.000000e+00> : vector<48x256xf32>
    %211 = tpu.matmul %208, %210, %cst_93 {dimension_numbers = #tpu.dot_dimension_numbers<[1], [0], [0], [1], [0, 0, 1, 1], [], []>} : vector<48x1024xbf16>, vector<1024x256xbf16>, vector<48x256xf32> -> vector<48x256xf32>
    %c0_94 = arith.constant 0 : index
    %c0_95 = arith.constant 0 : index
    %c0_96 = arith.constant 0 : index
    %212 = vector.load %arg14[%c0_94, %c0_95, %c0_96] : memref<1x1x256xf32, #tpu.memory_space<vmem>>, vector<1x1x256xf32>
    %213 = vector.shape_cast %212 : vector<1x1x256xf32> to vector<1x256xf32>
    %214 = vector.broadcast %213 : vector<1x256xf32> to vector<48x256xf32>
    %215 = arith.addf %211, %214 : vector<48x256xf32>
    %216 = arith.addf %134, %215 : vector<48x256xf32>
    %c0_97 = arith.constant 0 : index
    %c0_98 = arith.constant 0 : index
    %217 = vector.load %arg16[%c0_97, %c0_98] : memref<48x256xf32, #tpu.memory_space<vmem>>, vector<48x256xf32>
    tpu.vector_store %arg16[%c0_97, %c0_98], %216 {strides = array<i32>} : memref<48x256xf32, #tpu.memory_space<vmem>>, vector<48x256xf32>,
    %c1_i32 = arith.constant 1 : i32
    %218 = arith.cmpi eq, %arg1, %c1_i32 : i32
    %219 = arith.extui %218 : i1 to i32
    %c0_i32_99 = arith.constant 0 : i32
    %220 = arith.cmpi ne, %219, %c0_i32_99 : i32
    scf.if %220 {
      %221 = vector.shape_cast %216 : vector<48x256xf32> to vector<2x24x256xf32>
      %c0_100 = arith.constant 0 : index
      %c0_101 = arith.constant 0 : index
      %c0_102 = arith.constant 0 : index
      %222 = vector.load %arg15[%c0_100, %c0_101, %c0_102] : memref<2x24x256xf32, #tpu.memory_space<vmem>>, vector<2x24x256xf32>
      tpu.vector_store %arg15[%c0_100, %c0_101, %c0_102], %221 {strides = array<i32>} : memref<2x24x256xf32, #tpu.memory_space<vmem>>, vector<2x24x256xf32>,
    } else {
    }
    return
  }
  func.func @transform_0(%arg0: i32, %arg1: i32) -> (i32, i32, i32) {
    %c0_i32 = arith.constant 0 : i32
    %c0_i32_0 = arith.constant 0 : i32
    %c0_i32_1 = arith.constant 0 : i32
    return %arg0, %c0_i32, %c0_i32_0 : i32, i32, i32
  }
  func.func @transform_1(%arg0: i32, %arg1: i32) -> (i32, i32, i32) {
    %c0_i32 = arith.constant 0 : i32
    %c0_i32_0 = arith.constant 0 : i32
    %c0_i32_1 = arith.constant 0 : i32
    return %arg1, %c0_i32, %c0_i32_0 : i32, i32, i32
  }
  func.func @transform_2(%arg0: i32, %arg1: i32) -> (i32, i32, i32) {
    %c0_i32 = arith.constant 0 : i32
    %c0_i32_0 = arith.constant 0 : i32
    %c0_i32_1 = arith.constant 0 : i32
    return %arg1, %c0_i32, %c0_i32_0 : i32, i32, i32
  }
  func.func @transform_3(%arg0: i32, %arg1: i32) -> (i32, i32, i32) {
    %c0_i32 = arith.constant 0 : i32
    %c0_i32_0 = arith.constant 0 : i32
    %c0_i32_1 = arith.constant 0 : i32
    return %arg1, %c0_i32, %c0_i32_0 : i32, i32, i32
  }
  func.func @transform_4(%arg0: i32, %arg1: i32) -> (i32, i32, i32) {
    %c0_i32 = arith.constant 0 : i32
    %c0_i32_0 = arith.constant 0 : i32
    %c0_i32_1 = arith.constant 0 : i32
    return %arg1, %c0_i32, %c0_i32_0 : i32, i32, i32
  }
  func.func @transform_5(%arg0: i32, %arg1: i32) -> (i32, i32, i32) {
    %c0_i32 = arith.constant 0 : i32
    %c0_i32_0 = arith.constant 0 : i32
    %c0_i32_1 = arith.constant 0 : i32
    return %arg1, %c0_i32, %c0_i32_0 : i32, i32, i32
  }
  func.func @transform_6(%arg0: i32, %arg1: i32) -> (i32, i32, i32) {
    %c0_i32 = arith.constant 0 : i32
    %c0_i32_0 = arith.constant 0 : i32
    %c0_i32_1 = arith.constant 0 : i32
    return %arg1, %c0_i32, %c0_i32_0 : i32, i32, i32
  }
  func.func @transform_7(%arg0: i32, %arg1: i32) -> (i32, i32, i32) {
    %c0_i32 = arith.constant 0 : i32
    %c0_i32_0 = arith.constant 0 : i32
    %c0_i32_1 = arith.constant 0 : i32
    return %arg1, %c0_i32, %c0_i32_0 : i32, i32, i32
  }
  func.func @transform_8(%arg0: i32, %arg1: i32) -> (i32, i32, i32) {
    %c0_i32 = arith.constant 0 : i32
    %c0_i32_0 = arith.constant 0 : i32
    %c0_i32_1 = arith.constant 0 : i32
    return %arg1, %c0_i32, %c0_i32_0 : i32, i32, i32
  }
  func.func @transform_9(%arg0: i32, %arg1: i32) -> (i32, i32, i32) {
    %c0_i32 = arith.constant 0 : i32
    %c0_i32_0 = arith.constant 0 : i32
    %c0_i32_1 = arith.constant 0 : i32
    return %arg1, %c0_i32, %c0_i32_0 : i32, i32, i32
  }
  func.func @transform_10(%arg0: i32, %arg1: i32) -> (i32, i32, i32) {
    %c0_i32 = arith.constant 0 : i32
    %c0_i32_0 = arith.constant 0 : i32
    %c0_i32_1 = arith.constant 0 : i32
    return %arg1, %c0_i32, %c0_i32_0 : i32, i32, i32
  }
  func.func @transform_11(%arg0: i32, %arg1: i32) -> (i32, i32, i32) {
    %c0_i32 = arith.constant 0 : i32
    %c0_i32_0 = arith.constant 0 : i32
    %c0_i32_1 = arith.constant 0 : i32
    return %arg1, %c0_i32, %c0_i32_0 : i32, i32, i32
  }
  func.func @transform_12(%arg0: i32, %arg1: i32) -> (i32, i32, i32) {
    %c0_i32 = arith.constant 0 : i32
    %c0_i32_0 = arith.constant 0 : i32
    %c0_i32_1 = arith.constant 0 : i32
    return %arg1, %c0_i32, %c0_i32_0 : i32, i32, i32
  }
  func.func @transform_13(%arg0: i32, %arg1: i32) -> (i32, i32, i32) {
    %c0_i32 = arith.constant 0 : i32
    %c0_i32_0 = arith.constant 0 : i32
    %c0_i32_1 = arith.constant 0 : i32
    return %arg0, %c0_i32, %c0_i32_0 : i32, i32, i32
  }
}

</mosaic_0001>

<llo_original>
// kernel: vit_forward.3
$region0: #{vit_forward.3}
  #allocation0 [shape = 'u32[]', space=smem, size = 0x4, offset = 0x4, fixed_abs, tag = 'smem constant byte address 0x4 - core index']
  #allocation1 [shape = 'u32[144,128]{1,0:T(1,128)}', space=vmem, size = 0x12000, scoped, tag = 'internal scratch']
  %s0 = inlined_call_operand.vmem [shape: bf16[2,16,768], index: 0, kind: input, shape index: {}]
  %s1 = inlined_call_operand.vmem [shape: bf16[768,256], index: 1, kind: input, shape index: {}]
  %s2 = inlined_call_operand.vmem [shape: f32[24,256], index: 2, kind: input, shape index: {}]
  %s3 = inlined_call_operand.vmem [shape: f32[2,24,256], index: 3, kind: output, shape index: {}]
  %s4 = sld [smem:[#allocation0]]
  $region22: #{vit_forward.3} parent=0
    _
  %s6 = ssub.s32 1, %s4
  %s7 = scalar_select 0, %s6, %s4
  // Predicated region
  $region2: #{vit_forward.3} parent=0 // pred_check
    _
  $region3: #{vit_forward.3} parent=0 // pred_check_branch
    %9 = sbr.rel (0) target = $region5
  $region4: #{vit_forward.3} parent=0 // pred_region
    _
  $region5: #{vit_forward.3} parent=0 // pred_fallthru
    _
  // Predicated region
  $region6: #{vit_forward.3} parent=0 // pred_check
    _
  $region7: #{vit_forward.3} parent=0 // pred_check_branch
    %11 = sbr.rel (0) target = $region9
  $region8: #{vit_forward.3} parent=0 // pred_region
    _
  $region9: #{vit_forward.3} parent=0 // pred_fallthru
    _
  // Predicated region
  $region10: #{vit_forward.3} parent=0 // pred_check
    _
  $region11: #{vit_forward.3} parent=0 // pred_check_branch
    %13 = sbr.rel (0) target = $region13
  $region12: #{vit_forward.3} parent=0 // pred_region
    _
  $region13: #{vit_forward.3} parent=0 // pred_fallthru
    _
  %v14 = vld [vmem:[%s0] sm:$0xff]
  %v15 = vld [vmem:[%s0 + $0x8] sm:$0xff]
  %v16 = vld [vmem:[%s0 + $0x10] sm:$0xff]
  %v17 = vld [vmem:[%s0 + $0x18] sm:$0xff]
  %v18 = vld [vmem:[%s0 + $0x20] sm:$0xff]
  %v19 = vld [vmem:[%s0 + $0x28] sm:$0xff]
  %v20 = vld [vmem:[%s0 + $0x30] sm:$0xff]
  %v21 = vld [vmem:[%s0 + $0x38] sm:$0xff]
  %v22 = vld [vmem:[%s0 + $0x40] sm:$0xff]
  %v23 = vld [vmem:[%s0 + $0x48] sm:$0xff]
  %v24 = vld [vmem:[%s0 + $0x50] sm:$0xff]
  %v25 = vld [vmem:[%s0 + $0x58] sm:$0xff]
  %v26 = vld [vmem:[%s1] sm:$0xff]
  %v27 = vld [vmem:[%s1 + $0x8] sm:$0xff]
  %v28 = vld [vmem:[%s1 + $0x10] sm:$0xff]
  %v29 = vld [vmem:[%s1 + $0x18] sm:$0xff]
  %v30 = vld [vmem:[%s1 + $0x20] sm:$0xff]
  %v31 = vld [vmem:[%s1 + $0x28] sm:$0xff]
  %v32 = vld [vmem:[%s1 + $0x30] sm:$0xff]
  %v33 = vld [vmem:[%s1 + $0x38] sm:$0xff]
  %v34 = vld [vmem:[%s1 + $0x40] sm:$0xff]
  %v35 = vld [vmem:[%s1 + $0x48] sm:$0xff]
  %v36 = vld [vmem:[%s1 + $0x50] sm:$0xff]
  %v37 = vld [vmem:[%s1 + $0x58] sm:$0xff]
  %v38 = vld [vmem:[%s1 + $0x60] sm:$0xff]
  %v39 = vld [vmem:[%s1 + $0x68] sm:$0xff]
  %v40 = vld [vmem:[%s1 + $0x70] sm:$0xff]
  %v41 = vld [vmem:[%s1 + $0x78] sm:$0xff]
  %v42 = vld [vmem:[%s1 + $0x80] sm:$0xff]
  %v43 = vld [vmem:[%s1 + $0x88] sm:$0xff]
  %v44 = vld [vmem:[%s1 + $0x90] sm:$0xff]
  %v45 = vld [vmem:[%s1 + $0x98] sm:$0xff]
  %v46 = vld [vmem:[%s1 + $0xa0] sm:$0xff]
  %v47 = vld [vmem:[%s1 + $0xa8] sm:$0xff]
  %v48 = vld [vmem:[%s1 + $0xb0] sm:$0xff]
  %v49 = vld [vmem:[%s1 + $0xb8] sm:$0xff]
  %v50 = vld [vmem:[%s1 + $0xc0] sm:$0xff]
  %v51 = vld [vmem:[%s1 + $0xc8] sm:$0xff]
  %v52 = vld [vmem:[%s1 + $0xd0] sm:$0xff]
  %v53 = vld [vmem:[%s1 + $0xd8] sm:$0xff]
  %v54 = vld [vmem:[%s1 + $0xe0] sm:$0xff]
  %v55 = vld [vmem:[%s1 + $0xe8] sm:$0xff]
  %v56 = vld [vmem:[%s1 + $0xf0] sm:$0xff]
  %v57 = vld [vmem:[%s1 + $0xf8] sm:$0xff]
  %v58 = vld [vmem:[%s1 + $0x100] sm:$0xff]
  %v59 = vld [vmem:[%s1 + $0x108] sm:$0xff]
  %v60 = vld [vmem:[%s1 + $0x110] sm:$0xff]
  %v61 = vld [vmem:[%s1 + $0x118] sm:$0xff]
  %v62 = vld [vmem:[%s1 + $0x120] sm:$0xff]
  %v63 = vld [vmem:[%s1 + $0x128] sm:$0xff]
  %v64 = vld [vmem:[%s1 + $0x130] sm:$0xff]
  %v65 = vld [vmem:[%s1 + $0x138] sm:$0xff]
  %v66 = vld [vmem:[%s1 + $0x140] sm:$0xff]
  %v67 = vld [vmem:[%s1 + $0x148] sm:$0xff]
  %v68 = vld [vmem:[%s1 + $0x150] sm:$0xff]
  %v69 = vld [vmem:[%s1 + $0x158] sm:$0xff]
  %v70 = vld [vmem:[%s1 + $0x160] sm:$0xff]
  %v71 = vld [vmem:[%s1 + $0x168] sm:$0xff]
  %v72 = vld [vmem:[%s1 + $0x170] sm:$0xff]
  %v73 = vld [vmem:[%s1 + $0x178] sm:$0xff]
  %v74 = vld [vmem:[%s1 + $0x180] sm:$0xff]
  %v75 = vld [vmem:[%s1 + $0x188] sm:$0xff]
  %v76 = vld [vmem:[%s1 + $0x190] sm:$0xff]
  %v77 = vld [vmem:[%s1 + $0x198] sm:$0xff]
  %v78 = vld [vmem:[%s1 + $0x1a0] sm:$0xff]
  %v79 = vld [vmem:[%s1 + $0x1a8] sm:$0xff]
  %v80 = vld [vmem:[%s1 + $0x1b0] sm:$0xff]
  %v81 = vld [vmem:[%s1 + $0x1b8] sm:$0xff]
  %v82 = vld [vmem:[%s1 + $0x1c0] sm:$0xff]
  %v83 = vld [vmem:[%s1 + $0x1c8] sm:$0xff]
  %v84 = vld [vmem:[%s1 + $0x1d0] sm:$0xff]
  %v85 = vld [vmem:[%s1 + $0x1d8] sm:$0xff]
  %v86 = vld [vmem:[%s1 + $0x1e0] sm:$0xff]
  %v87 = vld [vmem:[%s1 + $0x1e8] sm:$0xff]
  %v88 = vld [vmem:[%s1 + $0x1f0] sm:$0xff]
  %v89 = vld [vmem:[%s1 + $0x1f8] sm:$0xff]
  %v90 = vld [vmem:[%s1 + $0x200] sm:$0xff]
  %v91 = vld [vmem:[%s1 + $0x208] sm:$0xff]
  %v92 = vld [vmem:[%s1 + $0x210] sm:$0xff]
  %v93 = vld [vmem:[%s1 + $0x218] sm:$0xff]
  %v94 = vld [vmem:[%s1 + $0x220] sm:$0xff]
  %v95 = vld [vmem:[%s1 + $0x228] sm:$0xff]
  %v96 = vld [vmem:[%s1 + $0x230] sm:$0xff]
  %v97 = vld [vmem:[%s1 + $0x238] sm:$0xff]
  %v98 = vld [vmem:[%s1 + $0x240] sm:$0xff]
  %v99 = vld [vmem:[%s1 + $0x248] sm:$0xff]
  %v100 = vld [vmem:[%s1 + $0x250] sm:$0xff]
  %v101 = vld [vmem:[%s1 + $0x258] sm:$0xff]
  %v102 = vld [vmem:[%s1 + $0x260] sm:$0xff]
  %v103 = vld [vmem:[%s1 + $0x268] sm:$0xff]
  %v104 = vld [vmem:[%s1 + $0x270] sm:$0xff]
  %v105 = vld [vmem:[%s1 + $0x278] sm:$0xff]
  %v106 = vld [vmem:[%s1 + $0x280] sm:$0xff]
  %v107 = vld [vmem:[%s1 + $0x288] sm:$0xff]
  %v108 = vld [vmem:[%s1 + $0x290] sm:$0xff]
  %v109 = vld [vmem:[%s1 + $0x298] sm:$0xff]
  %v110 = vld [vmem:[%s1 + $0x2a0] sm:$0xff]
  %v111 = vld [vmem:[%s1 + $0x2a8] sm:$0xff]
  %v112 = vld [vmem:[%s1 + $0x2b0] sm:$0xff]
  %v113 = vld [vmem:[%s1 + $0x2b8] sm:$0xff]
  %v114 = vld [vmem:[%s1 + $0x2c0] sm:$0xff]
  %v115 = vld [vmem:[%s1 + $0x2c8] sm:$0xff]
  %v116 = vld [vmem:[%s1 + $0x2d0] sm:$0xff]
  %v117 = vld [vmem:[%s1 + $0x2d8] sm:$0xff]
  %v118 = vld [vmem:[%s1 + $0x2e0] sm:$0xff]
  %v119 = vld [vmem:[%s1 + $0x2e8] sm:$0xff]
  %v120 = vld [vmem:[%s1 + $0x2f0] sm:$0xff]
  %v121 = vld [vmem:[%s1 + $0x2f8] sm:$0xff]
  %v134 = vunpack.c.l.b16 %v14
  %v135 = vunpack.c.h.b16 %v14
  %v136 = vunpack.c.l.b16 %v15
  %v137 = vunpack.c.h.b16 %v15
  %v138 = vunpack.c.l.b16 %v16
  %v139 = vunpack.c.h.b16 %v16
  %v140 = vunpack.c.l.b16 %v17
  %v141 = vunpack.c.h.b16 %v17
  %v142 = vunpack.c.l.b16 %v18
  %v143 = vunpack.c.h.b16 %v18
  %v144 = vunpack.c.l.b16 %v19
  %v145 = vunpack.c.h.b16 %v19
  %v146 = vunpack.c.l.b16 %v20
  %v147 = vunpack.c.h.b16 %v20
  %v148 = vunpack.c.l.b16 %v21
  %v149 = vunpack.c.h.b16 %v21
  %v150 = vunpack.c.l.b16 %v22
  %v151 = vunpack.c.h.b16 %v22
  %v152 = vunpack.c.l.b16 %v23
  %v153 = vunpack.c.h.b16 %v23
  %v154 = vunpack.c.l.b16 %v24
  %v155 = vunpack.c.h.b16 %v24
  %v156 = vunpack.c.l.b16 %v25
  %v157 = vunpack.c.h.b16 %v25
  %v158 = vpack.c.b16 %v140, %v134
  %v159 = vpack.c.b16 %v141, %v135
  %v160 = vpack.c.b16 %v142, %v136
  %v161 = vpack.c.b16 %v143, %v137
  %v162 = vpack.c.b16 %v144, %v138
  %v163 = vpack.c.b16 %v145, %v139
  %v164 = vpack.c.b16 %v152, %v146
  %v165 = vpack.c.b16 %v153, %v147
  %v166 = vpack.c.b16 %v154, %v148
  %v167 = vpack.c.b16 %v155, %v149
  %v168 = vpack.c.b16 %v156, %v150
  %v169 = vpack.c.b16 %v157, %v151
  %v278 = vunpack.c.l.b16 %v26
  %v279 = vunpack.c.h.b16 %v26
  %v280 = vunpack.c.l.b16 %v27
  %v281 = vunpack.c.h.b16 %v27
  %v282 = vunpack.c.l.b16 %v28
  %v283 = vunpack.c.h.b16 %v28
  %v284 = vunpack.c.l.b16 %v29
  %v285 = vunpack.c.h.b16 %v29
  %v286 = vunpack.c.l.b16 %v30
  %v287 = vunpack.c.h.b16 %v30
  %v288 = vunpack.c.l.b16 %v31
  %v289 = vunpack.c.h.b16 %v31
  %v290 = vunpack.c.l.b16 %v32
  %v291 = vunpack.c.h.b16 %v32
  %v292 = vunpack.c.l.b16 %v33
  %v293 = vunpack.c.h.b16 %v33
  %v294 = vunpack.c.l.b16 %v34
  %v295 = vunpack.c.h.b16 %v34
  %v296 = vunpack.c.l.b16 %v35
  %v297 = vunpack.c.h.b16 %v35
  %v298 = vunpack.c.l.b16 %v36
  %v299 = vunpack.c.h.b16 %v36
  %v300 = vunpack.c.l.b16 %v37
  %v301 = vunpack.c.h.b16 %v37
  %v302 = vunpack.c.l.b16 %v38
  %v303 = vunpack.c.h.b16 %v38
  %v304 = vunpack.c.l.b16 %v39
  %v305 = vunpack.c.h.b16 %v39
  %v306 = vunpack.c.l.b16 %v40
  %v307 = vunpack.c.h.b16 %v40
  %v308 = vunpack.c.l.b16 %v41
  %v309 = vunpack.c.h.b16 %v41
  %v310 = vunpack.c.l.b16 %v42
  %v311 = vunpack.c.h.b16 %v42
  %v312 = vunpack.c.l.b16 %v43
  %v313 = vunpack.c.h.b16 %v43
  %v314 = vunpack.c.l.b16 %v44
  %v315 = vunpack.c.h.b16 %v44
  %v316 = vunpack.c.l.b16 %v45
  %v317 = vunpack.c.h.b16 %v45
  %v318 = vunpack.c.l.b16 %v46
  %v319 = vunpack.c.h.b16 %v46
  %v320 = vunpack.c.l.b16 %v47
  %v321 = vunpack.c.h.b16 %v47
  %v322 = vunpack.c.l.b16 %v48
  %v323 = vunpack.c.h.b16 %v48
  %v324 = vunpack.c.l.b16 %v49
  %v325 = vunpack.c.h.b16 %v49
  %v326 = vunpack.c.l.b16 %v50
  %v327 = vunpack.c.h.b16 %v50
  %v328 = vunpack.c.l.b16 %v51
  %v329 = vunpack.c.h.b16 %v51
  %v330 = vunpack.c.l.b16 %v52
  %v331 = vunpack.c.h.b16 %v52
  %v332 = vunpack.c.l.b16 %v53
  %v333 = vunpack.c.h.b16 %v53
  %v334 = vunpack.c.l.b16 %v54
  %v335 = vunpack.c.h.b16 %v54
  %v336 = vunpack.c.l.b16 %v55
  %v337 = vunpack.c.h.b16 %v55
  %v338 = vunpack.c.l.b16 %v56
  %v339 = vunpack.c.h.b16 %v56
  %v340 = vunpack.c.l.b16 %v57
  %v341 = vunpack.c.h.b16 %v57
  %v342 = vunpack.c.l.b16 %v58
  %v343 = vunpack.c.h.b16 %v58
  %v344 = vunpack.c.l.b16 %v59
  %v345 = vunpack.c.h.b16 %v59
  %v346 = vunpack.c.l.b16 %v60
  %v347 = vunpack.c.h.b16 %v60
  %v348 = vunpack.c.l.b16 %v61
  %v349 = vunpack.c.h.b16 %v61
  %v350 = vunpack.c.l.b16 %v62
  %v351 = vunpack.c.h.b16 %v62
  %v352 = vunpack.c.l.b16 %v63
  %v353 = vunpack.c.h.b16 %v63
  %v354 = vunpack.c.l.b16 %v64
  %v355 = vunpack.c.h.b16 %v64
  %v356 = vunpack.c.l.b16 %v65
  %v357 = vunpack.c.h.b16 %v65
  %v358 = vunpack.c.l.b16 %v66
  %v359 = vunpack.c.h.b16 %v66
  %v360 = vunpack.c.l.b16 %v67
  %v361 = vunpack.c.h.b16 %v67
  %v362 = vunpack.c.l.b16 %v68
  %v363 = vunpack.c.h.b16 %v68
  %v364 = vunpack.c.l.b16 %v69
  %v365 = vunpack.c.h.b16 %v69
  %v366 = vunpack.c.l.b16 %v70
  %v367 = vunpack.c.h.b16 %v70
  %v368 = vunpack.c.l.b16 %v71
  %v369 = vunpack.c.h.b16 %v71
  %v370 = vunpack.c.l.b16 %v72
  %v371 = vunpack.c.h.b16 %v72
  %v372 = vunpack.c.l.b16 %v73
  %v373 = vunpack.c.h.b16 %v73
  %v374 = vunpack.c.l.b16 %v74
  %v375 = vunpack.c.h.b16 %v74
  %v376 = vunpack.c.l.b16 %v75
  %v377 = vunpack.c.h.b16 %v75
  %v378 = vunpack.c.l.b16 %v76
  %v379 = vunpack.c.h.b16 %v76
  %v380 = vunpack.c.l.b16 %v77
  %v381 = vunpack.c.h.b16 %v77
  %v382 = vunpack.c.l.b16 %v78
  %v383 = vunpack.c.h.b16 %v78
  %v384 = vunpack.c.l.b16 %v79
  %v385 = vunpack.c.h.b16 %v79
  %v386 = vunpack.c.l.b16 %v80
  %v387 = vunpack.c.h.b16 %v80
  %v388 = vunpack.c.l.b16 %v81
  %v389 = vunpack.c.h.b16 %v81
  %v390 = vunpack.c.l.b16 %v82
  %v391 = vunpack.c.h.b16 %v82
  %v392 = vunpack.c.l.b16 %v83
  %v393 = vunpack.c.h.b16 %v83
  %v394 = vunpack.c.l.b16 %v84
  %v395 = vunpack.c.h.b16 %v84
  %v396 = vunpack.c.l.b16 %v85
  %v397 = vunpack.c.h.b16 %v85
  %v398 = vunpack.c.l.b16 %v86
  %v399 = vunpack.c.h.b16 %v86
  %v400 = vunpack.c.l.b16 %v87
  %v401 = vunpack.c.h.b16 %v87
  %v402 = vunpack.c.l.b16 %v88
  %v403 = vunpack.c.h.b16 %v88
  %v404 = vunpack.c.l.b16 %v89
  %v405 = vunpack.c.h.b16 %v89
  %v406 = vunpack.c.l.b16 %v90
  %v407 = vunpack.c.h.b16 %v90
  %v408 = vunpack.c.l.b16 %v91
  %v409 = vunpack.c.h.b16 %v91
  %v410 = vunpack.c.l.b16 %v92
  %v411 = vunpack.c.h.b16 %v92
  %v412 = vunpack.c.l.b16 %v93
  %v413 = vunpack.c.h.b16 %v93
  %v414 = vunpack.c.l.b16 %v94
  %v415 = vunpack.c.h.b16 %v94
  %v416 = vunpack.c.l.b16 %v95
  %v417 = vunpack.c.h.b16 %v95
  %v418 = vunpack.c.l.b16 %v96
  %v419 = vunpack.c.h.b16 %v96
  %v420 = vunpack.c.l.b16 %v97
  %v421 = vunpack.c.h.b16 %v97
  %v422 = vunpack.c.l.b16 %v98
  %v423 = vunpack.c.h.b16 %v98
  %v424 = vunpack.c.l.b16 %v99
  %v425 = vunpack.c.h.b16 %v99
  %v426 = vunpack.c.l.b16 %v100
  %v427 = vunpack.c.h.b16 %v100
  %v428 = vunpack.c.l.b16 %v101
  %v429 = vunpack.c.h.b16 %v101
  %v430 = vunpack.c.l.b16 %v102
  %v431 = vunpack.c.h.b16 %v102
  %v432 = vunpack.c.l.b16 %v103
  %v433 = vunpack.c.h.b16 %v103
  %v434 = vunpack.c.l.b16 %v104
  %v435 = vunpack.c.h.b16 %v104
  %v436 = vunpack.c.l.b16 %v105
  %v437 = vunpack.c.h.b16 %v105
  %v438 = vunpack.c.l.b16 %v106
  %v439 = vunpack.c.h.b16 %v106
  %v440 = vunpack.c.l.b16 %v107
  %v441 = vunpack.c.h.b16 %v107
  %v442 = vunpack.c.l.b16 %v108
  %v443 = vunpack.c.h.b16 %v108
  %v444 = vunpack.c.l.b16 %v109
  %v445 = vunpack.c.h.b16 %v109
  %v446 = vunpack.c.l.b16 %v110
  %v447 = vunpack.c.h.b16 %v110
  %v448 = vunpack.c.l.b16 %v111
  %v449 = vunpack.c.h.b16 %v111
  %v450 = vunpack.c.l.b16 %v112
  %v451 = vunpack.c.h.b16 %v112
  %v452 = vunpack.c.l.b16 %v113
  %v453 = vunpack.c.h.b16 %v113
  %v454 = vunpack.c.l.b16 %v114
  %v455 = vunpack.c.h.b16 %v114
  %v456 = vunpack.c.l.b16 %v115
  %v457 = vunpack.c.h.b16 %v115
  %v458 = vunpack.c.l.b16 %v116
  %v459 = vunpack.c.h.b16 %v116
  %v460 = vunpack.c.l.b16 %v117
  %v461 = vunpack.c.h.b16 %v117
  %v462 = vunpack.c.l.b16 %v118
  %v463 = vunpack.c.h.b16 %v118
  %v464 = vunpack.c.l.b16 %v119
  %v465 = vunpack.c.h.b16 %v119
  %v466 = vunpack.c.l.b16 %v120
  %v467 = vunpack.c.h.b16 %v120
  %v468 = vunpack.c.l.b16 %v121
  %v469 = vunpack.c.h.b16 %v121
  %v470 = vpack.c.b16 %v280, %v278
  %v471 = vpack.c.b16 %v281, %v279
  %v472 = vpack.c.b16 %v284, %v282
  %v473 = vpack.c.b16 %v285, %v283
  %v474 = vpack.c.b16 %v288, %v286
  %v475 = vpack.c.b16 %v289, %v287
  %v476 = vpack.c.b16 %v292, %v290
  %v477 = vpack.c.b16 %v293, %v291
  %v478 = vpack.c.b16 %v296, %v294
  %v479 = vpack.c.b16 %v297, %v295
  %v480 = vpack.c.b16 %v300, %v298
  %v481 = vpack.c.b16 %v301, %v299
  %v482 = vpack.c.b16 %v304, %v302
  %v483 = vpack.c.b16 %v305, %v303
  %v484 = vpack.c.b16 %v308, %v306
  %v485 = vpack.c.b16 %v309, %v307
  %v486 = vpack.c.b16 %v312, %v310
  %v487 = vpack.c.b16 %v313, %v311
  %v488 = vpack.c.b16 %v316, %v314
  %v489 = vpack.c.b16 %v317, %v315
  %v490 = vpack.c.b16 %v320, %v318
  %v491 = vpack.c.b16 %v321, %v319
  %v492 = vpack.c.b16 %v324, %v322
  %v493 = vpack.c.b16 %v325, %v323
  %v494 = vpack.c.b16 %v328, %v326
  %v495 = vpack.c.b16 %v329, %v327
  %v496 = vpack.c.b16 %v332, %v330
  %v497 = vpack.c.b16 %v333, %v331
  %v498 = vpack.c.b16 %v336, %v334
  %v499 = vpack.c.b16 %v337, %v335
  %v500 = vpack.c.b16 %v340, %v338
  %v501 = vpack.c.b16 %v341, %v339
  %v502 = vpack.c.b16 %v344, %v342
  %v503 = vpack.c.b16 %v345, %v343
  %v504 = vpack.c.b16 %v348, %v346
  %v505 = vpack.c.b16 %v349, %v347
  %v506 = vpack.c.b16 %v352, %v350
  %v507 = vpack.c.b16 %v353, %v351
  %v508 = vpack.c.b16 %v356, %v354
  %v509 = vpack.c.b16 %v357, %v355
  %v510 = vpack.c.b16 %v360, %v358
  %v511 = vpack.c.b16 %v361, %v359
  %v512 = vpack.c.b16 %v364, %v362
  %v513 = vpack.c.b16 %v365, %v363
  %v514 = vpack.c.b16 %v368, %v366
  %v515 = vpack.c.b16 %v369, %v367
  %v516 = vpack.c.b16 %v372, %v370
  %v517 = vpack.c.b16 %v373, %v371
  %v518 = vpack.c.b16 %v376, %v374
  %v519 = vpack.c.b16 %v377, %v375
  %v520 = vpack.c.b16 %v380, %v378
  %v521 = vpack.c.b16 %v381, %v379
  %v522 = vpack.c.b16 %v384, %v382
  %v523 = vpack.c.b16 %v385, %v383
  %v524 = vpack.c.b16 %v388, %v386
  %v525 = vpack.c.b16 %v389, %v387
  %v526 = vpack.c.b16 %v392, %v390
  %v527 = vpack.c.b16 %v393, %v391
  %v528 = vpack.c.b16 %v396, %v394
  %v529 = vpack.c.b16 %v397, %v395
  %v530 = vpack.c.b16 %v400, %v398
  %v531 = vpack.c.b16 %v401, %v399
  %v532 = vpack.c.b16 %v404, %v402
  %v533 = vpack.c.b16 %v405, %v403
  %v534 = vpack.c.b16 %v408, %v406
  %v535 = vpack.c.b16 %v409, %v407
  %v536 = vpack.c.b16 %v412, %v410
  %v537 = vpack.c.b16 %v413, %v411
  %v538 = vpack.c.b16 %v416, %v414
  %v539 = vpack.c.b16 %v417, %v415
  %v540 = vpack.c.b16 %v420, %v418
  %v541 = vpack.c.b16 %v421, %v419
  %v542 = vpack.c.b16 %v424, %v422
  %v543 = vpack.c.b16 %v425, %v423
  %v544 = vpack.c.b16 %v428, %v426
  %v545 = vpack.c.b16 %v429, %v427
  %v546 = vpack.c.b16 %v432, %v430
  %v547 = vpack.c.b16 %v433, %v431
  %v548 = vpack.c.b16 %v436, %v434
  %v549 = vpack.c.b16 %v437, %v435
  %v550 = vpack.c.b16 %v440, %v438
  %v551 = vpack.c.b16 %v441, %v439
  %v552 = vpack.c.b16 %v444, %v442
  %v553 = vpack.c.b16 %v445, %v443
  %v554 = vpack.c.b16 %v448, %v446
  %v555 = vpack.c.b16 %v449, %v447
  %v556 = vpack.c.b16 %v452, %v450
  %v557 = vpack.c.b16 %v453, %v451
  %v558 = vpack.c.b16 %v456, %v454
  %v559 = vpack.c.b16 %v457, %v455
  %v560 = vpack.c.b16 %v460, %v458
  %v561 = vpack.c.b16 %v461, %v459
  %v562 = vpack.c.b16 %v464, %v462
  %v563 = vpack.c.b16 %v465, %v463
  %v564 = vpack.c.b16 %v468, %v466
  %v565 = vpack.c.b16 %v469, %v467
  %662 = vmatprep.subr.bf16.mxu0 %v485
  %663 = vmatpush1.bf16.msra.mxu0 %v484
  %664 = vmatprep.subr.bf16.mxu0 %v483
  %665 = vmatpush1.bf16.msra.mxu0 %v482
  %666 = vmatprep.subr.bf16.mxu0 %v481
  %667 = vmatpush1.bf16.msra.mxu0 %v480
  %668 = vmatprep.subr.bf16.mxu0 %v479
  %669 = vmatpush1.bf16.msra.mxu0 %v478
  %670 = vmatprep.subr.bf16.mxu0 %v477
  %671 = vmatpush1.bf16.msra.mxu0 %v476
  %672 = vmatprep.subr.bf16.mxu0 %v475
  %673 = vmatpush1.bf16.msra.mxu0 %v474
  %674 = vmatprep.subr.bf16.mxu0 %v473
  %675 = vmatpush1.bf16.msra.mxu0 %v472
  %676 = vmatprep.subr.bf16.mxu0 %v471
  %677 = vmatpush1.bf16.msra.mxu0 %v470
  %678 = vmatprep.subr.bf16.mxu0 %v501
  %679 = vmatpush2.bf16.msra.mxu0 %v500
  %680 = vmatprep.subr.bf16.mxu0 %v499
  %681 = vmatpush2.bf16.msra.mxu0 %v498
  %682 = vmatprep.subr.bf16.mxu0 %v497
  %683 = vmatpush2.bf16.msra.mxu0 %v496
  %684 = vmatprep.subr.bf16.mxu0 %v495
  %685 = vmatpush2.bf16.msra.mxu0 %v494
  %686 = vmatprep.subr.bf16.mxu0 %v493
  %687 = vmatpush2.bf16.msra.mxu0 %v492
  %688 = vmatprep.subr.bf16.mxu0 %v491
  %689 = vmatpush2.bf16.msra.mxu0 %v490
  %690 = vmatprep.subr.bf16.mxu0 %v489
  %691 = vmatpush2.bf16.msra.mxu0 %v488
  %692 = vmatprep.subr.bf16.mxu0 %v487
  %693 = vmatpush2.bf16.msra.mxu0 %v486
  %694 = vmatprep.mubr.bf16.mxu0 %v159
  %695 = vmatmul.mubr.bf16.gmra.mxu0 %v158
  %v696 = vpop.f32.mrf.mxu0
  %v697 = vadd.f32 0.0, %v696
  %v698 = vpop.f32.mrf.mxu0
  %v699 = vadd.f32 0.0, %v698
  %v700 = vpop.f32.mrf.mxu0
  %v701 = vadd.f32 0.0, %v700
  %v702 = vpop.f32.mrf.mxu0
  %v703 = vadd.f32 0.0, %v702
  %704 = vmatprep.mubr.bf16.mxu0 %v165
  %705 = vmatmul.mubr.bf16.gmra.mxu0 %v164
  %v706 = vpop.f32.mrf.mxu0
  %v707 = vadd.f32 0.0, %v706
  %v708 = vpop.f32.mrf.mxu0
  %v709 = vadd.f32 0.0, %v708
  %v710 = vpop.f32.mrf.mxu0
  %v711 = vadd.f32 0.0, %v710
  %v712 = vpop.f32.mrf.mxu0
  %v713 = vadd.f32 0.0, %v712
  %714 = vdwg.mxu0
  %715 = vmatprep.subr.bf16.mxu0 %v517
  %716 = vmatpush1.bf16.msra.mxu0 %v516
  %717 = vmatprep.subr.bf16.mxu0 %v515
  %718 = vmatpush1.bf16.msra.mxu0 %v514
  %719 = vmatprep.subr.bf16.mxu0 %v513
  %720 = vmatpush1.bf16.msra.mxu0 %v512
  %721 = vmatprep.subr.bf16.mxu0 %v511
  %722 = vmatpush1.bf16.msra.mxu0 %v510
  %723 = vmatprep.subr.bf16.mxu0 %v509
  %724 = vmatpush1.bf16.msra.mxu0 %v508
  %725 = vmatprep.subr.bf16.mxu0 %v507
  %726 = vmatpush1.bf16.msra.mxu0 %v506
  %727 = vmatprep.subr.bf16.mxu0 %v505
  %728 = vmatpush1.bf16.msra.mxu0 %v504
  %729 = vmatprep.subr.bf16.mxu0 %v503
  %730 = vmatpush1.bf16.msra.mxu0 %v502
  %731 = vmatprep.subr.bf16.mxu0 %v533
  %732 = vmatpush2.bf16.msra.mxu0 %v532
  %733 = vmatprep.subr.bf16.mxu0 %v531
  %734 = vmatpush2.bf16.msra.mxu0 %v530
  %735 = vmatprep.subr.bf16.mxu0 %v529
  %736 = vmatpush2.bf16.msra.mxu0 %v528
  %737 = vmatprep.subr.bf16.mxu0 %v527
  %738 = vmatpush2.bf16.msra.mxu0 %v526
  %739 = vmatprep.subr.bf16.mxu0 %v525
  %740 = vmatpush2.bf16.msra.mxu0 %v524
  %741 = vmatprep.subr.bf16.mxu0 %v523
  %742 = vmatpush2.bf16.msra.mxu0 %v522
  %743 = vmatprep.subr.bf16.mxu0 %v521
  %744 = vmatpush2.bf16.msra.mxu0 %v520
  %745 = vmatprep.subr.bf16.mxu0 %v519
  %746 = vmatpush2.bf16.msra.mxu0 %v518
  %747 = vmatprep.mubr.bf16.mxu0 %v161
  %748 = vmatmul.mubr.bf16.gmra.mxu0 %v160
  %v749 = vpop.f32.mrf.mxu0
  %v750 = vadd.f32 %v697, %v749
  %v751 = vpop.f32.mrf.mxu0
  %v752 = vadd.f32 %v699, %v751
  %v753 = vpop.f32.mrf.mxu0
  %v754 = vadd.f32 %v701, %v753
  %v755 = vpop.f32.mrf.mxu0
  %v756 = vadd.f32 %v703, %v755
  %757 = vmatprep.mubr.bf16.mxu0 %v167
  %758 = vmatmul.mubr.bf16.gmra.mxu0 %v166
  %v759 = vpop.f32.mrf.mxu0
  %v760 = vadd.f32 %v707, %v759
  %v761 = vpop.f32.mrf.mxu0
  %v762 = vadd.f32 %v709, %v761
  %v763 = vpop.f32.mrf.mxu0
  %v764 = vadd.f32 %v711, %v763
  %v765 = vpop.f32.mrf.mxu0
  %v766 = vadd.f32 %v713, %v765
  %767 = vdwg.mxu0
  %768 = vmatprep.subr.bf16.mxu0 %v549
  %769 = vmatpush1.bf16.msra.mxu0 %v548
  %770 = vmatprep.subr.bf16.mxu0 %v547
  %771 = vmatpush1.bf16.msra.mxu0 %v546
  %772 = vmatprep.subr.bf16.mxu0 %v545
  %773 = vmatpush1.bf16.msra.mxu0 %v544
  %774 = vmatprep.subr.bf16.mxu0 %v543
  %775 = vmatpush1.bf16.msra.mxu0 %v542
  %776 = vmatprep.subr.bf16.mxu0 %v541
  %777 = vmatpush1.bf16.msra.mxu0 %v540
  %778 = vmatprep.subr.bf16.mxu0 %v539
  %779 = vmatpush1.bf16.msra.mxu0 %v538
  %780 = vmatprep.subr.bf16.mxu0 %v537
  %781 = vmatpush1.bf16.msra.mxu0 %v536
  %782 = vmatprep.subr.bf16.mxu0 %v535
  %783 = vmatpush1.bf16.msra.mxu0 %v534
  %784 = vmatprep.subr.bf16.mxu0 %v565
  %785 = vmatpush2.bf16.msra.mxu0 %v564
  %786 = vmatprep.subr.bf16.mxu0 %v563
  %787 = vmatpush2.bf16.msra.mxu0 %v562
  %788 = vmatprep.subr.bf16.mxu0 %v561
  %789 = vmatpush2.bf16.msra.mxu0 %v560
  %790 = vmatprep.subr.bf16.mxu0 %v559
  %791 = vmatpush2.bf16.msra.mxu0 %v558
  %792 = vmatprep.subr.bf16.mxu0 %v557
  %793 = vmatpush2.bf16.msra.mxu0 %v556
  %794 = vmatprep.subr.bf16.mxu0 %v555
  %795 = vmatpush2.bf16.msra.mxu0 %v554
  %796 = vmatprep.subr.bf16.mxu0 %v553
  %797 = vmatpush2.bf16.msra.mxu0 %v552
  %798 = vmatprep.subr.bf16.mxu0 %v551
  %799 = vmatpush2.bf16.msra.mxu0 %v550
  %800 = vmatprep.mubr.bf16.mxu0 %v163
  %801 = vmatmul.mubr.bf16.gmra.mxu0 %v162
  %v802 = vpop.f32.mrf.mxu0
  %v803 = vadd.f32 %v750, %v802
  %v804 = vpop.f32.mrf.mxu0
  %v805 = vadd.f32 %v752, %v804
  %v806 = vpop.f32.mrf.mxu0
  %v807 = vadd.f32 %v754, %v806
  %v808 = vpop.f32.mrf.mxu0
  %v809 = vadd.f32 %v756, %v808
  %810 = vmatprep.mubr.bf16.mxu0 %v169
  %811 = vmatmul.mubr.bf16.gmra.mxu0 %v168
  %v812 = vpop.f32.mrf.mxu0
  %v813 = vadd.f32 %v760, %v812
  %v814 = vpop.f32.mrf.mxu0
  %v815 = vadd.f32 %v762, %v814
  %v816 = vpop.f32.mrf.mxu0
  %v817 = vadd.f32 %v764, %v816
  %v818 = vpop.f32.mrf.mxu0
  %v819 = vadd.f32 %v766, %v818
  %820 = vdwg.mxu0
  %v821 = vld [vmem:[%s2] sm:$0xfe]
  %v822 = vld [vmem:[%s2 + $0x8] sm:$0xfe]
  %v823 = vld [vmem:[%s2 + $0x10] sm:$0xff]
  %v824 = vld [vmem:[%s2 + $0x18] sm:$0xff]
  %v825 = vld [vmem:[%s2 + $0x20] sm:$0x1]
  %v826 = vld [vmem:[%s2 + $0x28] sm:$0x1]
  %vm833 = vcmask 1046528
  %v834 = vrot.slane %v821, 1
  %v835 = vrot.slane %v823, 1
  %v836 = vsel %vm833, %v834, %v835
  %v837 = vrot.slane %v822, 1
  %v838 = vrot.slane %v824, 1
  %v839 = vsel %vm833, %v837, %v838
  %v840 = vrot.slane %v825, 1
  %v841 = vsel %vm833, %v835, %v840
  %v842 = vrot.slane %v826, 1
  %v843 = vsel %vm833, %v838, %v842
  %v848 = vadd.f32 %v803, %v836
  %v849 = vadd.f32 %v805, %v839
  %v850 = vadd.f32 %v807, %v841
  %v851 = vadd.f32 %v809, %v843
  %v852 = vadd.f32 %v813, %v836
  %v853 = vadd.f32 %v815, %v839
  %v854 = vadd.f32 %v817, %v841
  %v855 = vadd.f32 %v819, %v843
  %v856 = vld [vmem:[%s2] ss:$8 sm:$0x3]
  %v857 = vlaneseq
  %vm858 = vcmp.ge.s32.totalorder %v857, 0
  %vm859 = vcmp.lt.s32.totalorder %v857, 256
  %vm860 = vmand %vm858, %vm859
  %861 = vst.msk [vmem:[%s3] ss:$8 sm:$0x3] %vm860, %v856
  %862 = vst.msk [vmem:[%s3] ss:$8 sm:$0x0] %vm860, %v856
  %s863 = scalar_lea.vmem %s3, 48
  %864 = vst.msk [vmem:[%s863] ss:$8 sm:$0x3] %vm860, %v856
  %865 = vst.msk [vmem:[%s863] ss:$8 sm:$0x0] %vm860, %v856
  %vm874 = vcmask 1040384
  %v875 = vrot.slane %v848, 7
  %v876 = vrot.slane %v849, 7
  %v877 = vrot.slane %v850, 7
  %v878 = vsel %vm874, %v875, %v877
  %v879 = vrot.slane %v851, 7
  %v880 = vsel %vm874, %v876, %v879
  %v881 = vrot.slane %v852, 7
  %v882 = vrot.slane %v853, 7
  %v883 = vrot.slane %v854, 7
  %v884 = vsel %vm874, %v881, %v883
  %v885 = vrot.slane %v855, 7
  %v886 = vsel %vm874, %v882, %v885
  %899 = vst [vmem:[%s3] sm:$0xfe] %v875
  %900 = vst [vmem:[%s3 + $0x8] sm:$0xfe] %v876
  %901 = vst [vmem:[%s3 + $0x10] sm:$0xff] %v878
  %902 = vst [vmem:[%s3 + $0x18] sm:$0xff] %v880
  %903 = vst [vmem:[%s3 + $0x20] sm:$0x1] %v877
  %904 = vst [vmem:[%s3 + $0x28] sm:$0x1] %v879
  %905 = vst [vmem:[%s3 + $0x30] sm:$0xfe] %v881
  %906 = vst [vmem:[%s3 + $0x38] sm:$0xfe] %v882
  %907 = vst [vmem:[%s3 + $0x40] sm:$0xff] %v884
  %908 = vst [vmem:[%s3 + $0x48] sm:$0xff] %v886
  %909 = vst [vmem:[%s3 + $0x50] sm:$0x1] %v883
  %910 = vst [vmem:[%s3 + $0x58] sm:$0x1] %v885
  %911 = vst [vmem:[%s3 + $0x20] sm:$0xfe] 0.0
  %912 = vst [vmem:[%s3 + $0x28] sm:$0xfe] 0.0
  %913 = vst [vmem:[%s3 + $0x50] sm:$0xfe] 0.0
  %914 = vst [vmem:[%s3 + $0x58] sm:$0xfe] 0.0
  // Predicated region
  $region14: #{vit_forward.3} parent=0 // pred_check
    _
  $region15: #{vit_forward.3} parent=0 // pred_check_branch
    %916 = sbr.rel (0) target = $region17
  $region16: #{vit_forward.3} parent=0 // pred_region
    _
  $region17: #{vit_forward.3} parent=0 // pred_fallthru
    _
  // Predicated region
  $region18: #{vit_forward.3} parent=0 // pred_check
    _
  $region19: #{vit_forward.3} parent=0 // pred_check_branch
    %918 = sbr.rel (0) target = $region21
  $region20: #{vit_forward.3} parent=0 // pred_region
    _
  $region21: #{vit_forward.3} parent=0 // pred_fallthru
    _

// kernel: vit_forward.5
$region0: #{vit_forward.5}
  #allocation0 [shape = 'u32[]', space=smem, size = 0x4, offset = 0x4, fixed_abs, tag = 'smem constant byte address 0x4 - core index']
  #allocation1 [shape = 'u32[144,128]{1,0:T(1,128)}', space=vmem, size = 0x12000, scoped, tag = 'internal scratch']
  %s0 = inlined_call_operand.vmem [shape: f32[2,256], index: 0, kind: input, shape index: {}]
  %s1 = inlined_call_operand.vmem [shape: f32[1,256], index: 1, kind: input, shape index: {}]
  %s2 = inlined_call_operand.vmem [shape: f32[1,256], index: 2, kind: input, shape index: {}]
  %s3 = inlined_call_operand.vmem [shape: bf16[256,128], index: 3, kind: input, shape index: {}]
  %s4 = inlined_call_operand.vmem [shape: f32[1,128], index: 4, kind: input, shape index: {}]
  %s5 = inlined_call_operand.hbm [shape: f32[2,128], index: 5, kind: output, shape index: {}]
  %s6 = sld [smem:[#allocation0]]
  $region30: #{vit_forward.5} parent=0
    _
  %s8 = ssub.s32 1, %s6
  %s9 = scalar_select 0, %s8, %s6
  $region1: #{vit_forward.5} parent=0
    #allocation2 [shape = 'u8[1024]{0}', space=vmem, size = 0x400, scoped, tag = 'output window, operand 0, single buffered']
    #allocation3 [shape = 's32[1]{0}', space=sflag, size = 0x4, scoped, tag = 'scoped memory for vit_forward.5']
    %10 = vsyncpa [#allocation3], 0
    // Predicated region
    $region2: #{vit_forward.5} parent=1 // pred_check
      _
    $region3: #{vit_forward.5} parent=1 // pred_check_branch
      %12 = sbr.rel (0) target = $region5
    $region4: #{vit_forward.5} parent=1 // pred_region
      _
    $region5: #{vit_forward.5} parent=1 // pred_fallthru
      _
    // Predicated region
    $region6: #{vit_forward.5} parent=1 // pred_check
      _
    $region7: #{vit_forward.5} parent=1 // pred_check_branch
      %14 = sbr.rel (0) target = $region9
    $region8: #{vit_forward.5} parent=1 // pred_region
      _
    $region9: #{vit_forward.5} parent=1 // pred_fallthru
      _
    // Predicated region
    $region10: #{vit_forward.5} parent=1 // pred_check
      _
    $region11: #{vit_forward.5} parent=1 // pred_check_branch
      %16 = sbr.rel (0) target = $region13
    $region12: #{vit_forward.5} parent=1 // pred_region
      _
    $region13: #{vit_forward.5} parent=1 // pred_fallthru
      _
    // Predicated region
    $region14: #{vit_forward.5} parent=1 // pred_check
      _
    $region15: #{vit_forward.5} parent=1 // pred_check_branch
      %18 = sbr.rel (0) target = $region17
    $region16: #{vit_forward.5} parent=1 // pred_region
      _
    $region17: #{vit_forward.5} parent=1 // pred_fallthru
      _
    // Predicated region
    $region18: #{vit_forward.5} parent=1 // pred_check
      _
    $region19: #{vit_forward.5} parent=1 // pred_check_branch
      %20 = sbr.rel (0) target = $region21
    $region20: #{vit_forward.5} parent=1 // pred_region
      _
    $region21: #{vit_forward.5} parent=1 // pred_fallthru
      _
    %v22 = vld [vmem:[%s0] sm:$0xf]
    %v23 = vld [vmem:[%s1] sm:$0x3]
    %v24 = vld [vmem:[%s2] sm:$0x3]
    %v27 = vunpack.c.l.s4 1983009808
    %v28 = vunpack.c.0.s8 %v27
    %v29 = vlaneseq
    %v30 = vshrl.u32 %v29, 7
    %v31 = vsub.s32 %v28, %v30
    %v32 = vrot.slane %v22, %v31
    %v33 = vcombine.high %v32, %v32
    %vm36 = vcmask 1041408
    %v37 = vsel %vm36, %v32, 0.0
    %v38 = vsel %vm36, %v33, 0.0
    %v39 = vadd.f32 %v37, %v38
    %40 = vadd.xlane.f32.xlu0 %v39
    %v41 = vpop.xlane.xlu0 %40
    %v42 = vrcp.pop 256.0
    %v43 = vmul.f32 %v41, %v42
    %v46 = vunpack.c.l.s4 269488144
    %v47 = vunpack.c.0.s8 %v46
    %v48 = vlaneseq
    %v49 = vshrl.u32 %v48, 7
    %v50 = vsub.s32 %v47, %v49
    %v51 = vrot.slane %v43, %v50
    %v53 = vsub.f32 %v22, %v51
    %v54 = vmul.f32 %v53, %v53
    %v57 = vunpack.c.l.s4 1983009808
    %v58 = vunpack.c.0.s8 %v57
    %v59 = vlaneseq
    %v60 = vshrl.u32 %v59, 7
    %v61 = vsub.s32 %v58, %v60
    %v62 = vrot.slane %v54, %v61
    %v63 = vcombine.high %v62, %v62
    %v66 = vsel %vm36, %v62, 0.0
    %v67 = vsel %vm36, %v63, 0.0
    %v68 = vadd.f32 %v66, %v67
    %69 = vadd.xlane.f32.xlu0 %v68
    %v70 = vpop.xlane.xlu0 %69
    %v71 = vmul.f32 %v70, %v42
    %v72 = vadd.f32 %v71, 1e-06
    %v73 = vrsqrt.pop %v72
    %v76 = vunpack.c.l.s4 269488144
    %v77 = vunpack.c.0.s8 %v76
    %v78 = vlaneseq
    %v79 = vshrl.u32 %v78, 7
    %v80 = vsub.s32 %v77, %v79
    %v81 = vrot.slane %v73, %v80
    %v83 = vmul.f32 %v53, %v81
    %v85 = vlaneseq
    %v86 = vshrl.u32 %v85, 7
    %v87 = vsub.s32 0, %v86
    %v88 = vrot.slane %v23, %v87
    %v89 = vlaneseq
    %v90 = vshrl.u32 %v89, 7
    %v91 = vsub.s32 1, %v90
    %v92 = vrot.slane %v23, %v91
    %v93 = vcombine.low %v88, %v92
    %v95 = vunpack.c.l.s4 1983009808
    %v96 = vunpack.c.0.s8 %v95
    %v97 = vlaneseq
    %v98 = vshrl.u32 %v97, 7
    %v99 = vsub.s32 %v96, %v98
    %v100 = vrot.slane %v93, %v99
    %v102 = vmul.f32 %v83, %v100
    %v104 = vlaneseq
    %v105 = vshrl.u32 %v104, 7
    %v106 = vsub.s32 0, %v105
    %v107 = vrot.slane %v24, %v106
    %v108 = vlaneseq
    %v109 = vshrl.u32 %v108, 7
    %v110 = vsub.s32 1, %v109
    %v111 = vrot.slane %v24, %v110
    %v112 = vcombine.low %v107, %v111
    %v114 = vunpack.c.l.s4 1983009808
    %v115 = vunpack.c.0.s8 %v114
    %v116 = vlaneseq
    %v117 = vshrl.u32 %v116, 7
    %v118 = vsub.s32 %v115, %v117
    %v119 = vrot.slane %v112, %v118
    %v121 = vadd.f32 %v102, %v119
    %v124 = vunpack.c.l.s4 1983009808
    %v125 = vunpack.c.0.s8 %v124
    %v126 = vlaneseq
    %v127 = vshrl.u32 %v126, 7
    %v128 = vsub.s32 %v125, %v127
    %v129 = vrot.slane %v121, %v128
    %v130 = vcombine.high %v129, %v129
    %v133 = vpack.c.bf16 %v129, %v129
    %v134 = vpack.c.bf16 %v130, %v130
    %v135 = vld [vmem:[%s3] sm:$0xf]
    %v136 = vld [vmem:[%s3 + $0x4] sm:$0xf]
    %v137 = vld [vmem:[%s3 + $0x8] sm:$0xf]
    %v138 = vld [vmem:[%s3 + $0xc] sm:$0xf]
    %v139 = vld [vmem:[%s3 + $0x10] sm:$0xf]
    %v140 = vld [vmem:[%s3 + $0x14] sm:$0xf]
    %v141 = vld [vmem:[%s3 + $0x18] sm:$0xf]
    %v142 = vld [vmem:[%s3 + $0x1c] sm:$0xf]
    %v143 = vld [vmem:[%s3 + $0x20] sm:$0xf]
    %v144 = vld [vmem:[%s3 + $0x24] sm:$0xf]
    %v145 = vld [vmem:[%s3 + $0x28] sm:$0xf]
    %v146 = vld [vmem:[%s3 + $0x2c] sm:$0xf]
    %v147 = vld [vmem:[%s3 + $0x30] sm:$0xf]
    %v148 = vld [vmem:[%s3 + $0x34] sm:$0xf]
    %v149 = vld [vmem:[%s3 + $0x38] sm:$0xf]
    %v150 = vld [vmem:[%s3 + $0x3c] sm:$0xf]
    %v151 = vld [vmem:[%s3 + $0x40] sm:$0xf]
    %v152 = vld [vmem:[%s3 + $0x44] sm:$0xf]
    %v153 = vld [vmem:[%s3 + $0x48] sm:$0xf]
    %v154 = vld [vmem:[%s3 + $0x4c] sm:$0xf]
    %v155 = vld [vmem:[%s3 + $0x50] sm:$0xf]
    %v156 = vld [vmem:[%s3 + $0x54] sm:$0xf]
    %v157 = vld [vmem:[%s3 + $0x58] sm:$0xf]
    %v158 = vld [vmem:[%s3 + $0x5c] sm:$0xf]
    %v159 = vld [vmem:[%s3 + $0x60] sm:$0xf]
    %v160 = vld [vmem:[%s3 + $0x64] sm:$0xf]
    %v161 = vld [vmem:[%s3 + $0x68] sm:$0xf]
    %v162 = vld [vmem:[%s3 + $0x6c] sm:$0xf]
    %v163 = vld [vmem:[%s3 + $0x70] sm:$0xf]
    %v164 = vld [vmem:[%s3 + $0x74] sm:$0xf]
    %v165 = vld [vmem:[%s3 + $0x78] sm:$0xf]
    %v166 = vld [vmem:[%s3 + $0x7c] sm:$0xf]
    %v167 = vld [vmem:[%s4] sm:$0x1]
    %v169 = vlaneseq
    %v170 = vshrl.u32 %v169, 7
    %v171 = vsub.s32 0, %v170
    %v172 = vrot.slane %v167, %v171
    %v206 = vunpack.c.l.b16 %v135
    %v207 = vunpack.c.l.b16 %v136
    %v208 = vunpack.c.l.b16 %v137
    %v209 = vunpack.c.l.b16 %v138
    %v210 = vunpack.c.l.b16 %v139
    %v211 = vunpack.c.l.b16 %v140
    %v212 = vunpack.c.l.b16 %v141
    %v213 = vunpack.c.l.b16 %v142
    %v214 = vunpack.c.l.b16 %v143
    %v215 = vunpack.c.l.b16 %v144
    %v216 = vunpack.c.l.b16 %v145
    %v217 = vunpack.c.l.b16 %v146
    %v218 = vunpack.c.l.b16 %v147
    %v219 = vunpack.c.l.b16 %v148
    %v220 = vunpack.c.l.b16 %v149
    %v221 = vunpack.c.l.b16 %v150
    %v222 = vunpack.c.l.b16 %v151
    %v223 = vunpack.c.l.b16 %v152
    %v224 = vunpack.c.l.b16 %v153
    %v225 = vunpack.c.l.b16 %v154
    %v226 = vunpack.c.l.b16 %v155
    %v227 = vunpack.c.l.b16 %v156
    %v228 = vunpack.c.l.b16 %v157
    %v229 = vunpack.c.l.b16 %v158
    %v230 = vunpack.c.l.b16 %v159
    %v231 = vunpack.c.l.b16 %v160
    %v232 = vunpack.c.l.b16 %v161
    %v233 = vunpack.c.l.b16 %v162
    %v234 = vunpack.c.l.b16 %v163
    %v235 = vunpack.c.l.b16 %v164
    %v236 = vunpack.c.l.b16 %v165
    %v237 = vunpack.c.l.b16 %v166
    %v238 = vpack.c.b16 %v207, %v206
    %v239 = vpack.c.b16 %v209, %v208
    %v240 = vpack.c.b16 %v211, %v210
    %v241 = vpack.c.b16 %v213, %v212
    %v242 = vpack.c.b16 %v215, %v214
    %v243 = vpack.c.b16 %v217, %v216
    %v244 = vpack.c.b16 %v219, %v218
    %v245 = vpack.c.b16 %v221, %v220
    %v246 = vpack.c.b16 %v223, %v222
    %v247 = vpack.c.b16 %v225, %v224
    %v248 = vpack.c.b16 %v227, %v226
    %v249 = vpack.c.b16 %v229, %v228
    %v250 = vpack.c.b16 %v231, %v230
    %v251 = vpack.c.b16 %v233, %v232
    %v252 = vpack.c.b16 %v235, %v234
    %v253 = vpack.c.b16 %v237, %v236
    %270 = vmatprep.subr.bf16.mxu0 0
    %271 = vmatpush1.bf16.msra.mxu0 %v245
    %272 = vmatprep.subr.bf16.mxu0 0
    %273 = vmatpush1.bf16.msra.mxu0 %v244
    %274 = vmatprep.subr.bf16.mxu0 0
    %275 = vmatpush1.bf16.msra.mxu0 %v243
    %276 = vmatprep.subr.bf16.mxu0 0
    %277 = vmatpush1.bf16.msra.mxu0 %v242
    %278 = vmatprep.subr.bf16.mxu0 0
    %279 = vmatpush1.bf16.msra.mxu0 %v241
    %280 = vmatprep.subr.bf16.mxu0 0
    %281 = vmatpush1.bf16.msra.mxu0 %v240
    %282 = vmatprep.subr.bf16.mxu0 0
    %283 = vmatpush1.bf16.msra.mxu0 %v239
    %284 = vmatprep.subr.bf16.mxu0 0
    %285 = vmatpush1.bf16.msra.mxu0 %v238
    %286 = vmatprep.subr.bf16.mxu0 0
    %287 = vmatpush2.bf16.msra.mxu0 %v253
    %288 = vmatprep.subr.bf16.mxu0 0
    %289 = vmatpush2.bf16.msra.mxu0 %v252
    %290 = vmatprep.subr.bf16.mxu0 0
    %291 = vmatpush2.bf16.msra.mxu0 %v251
    %292 = vmatprep.subr.bf16.mxu0 0
    %293 = vmatpush2.bf16.msra.mxu0 %v250
    %294 = vmatprep.subr.bf16.mxu0 0
    %295 = vmatpush2.bf16.msra.mxu0 %v249
    %296 = vmatprep.subr.bf16.mxu0 0
    %297 = vmatpush2.bf16.msra.mxu0 %v248
    %298 = vmatprep.subr.bf16.mxu0 0
    %299 = vmatpush2.bf16.msra.mxu0 %v247
    %300 = vmatprep.subr.bf16.mxu0 0
    %301 = vmatpush2.bf16.msra.mxu0 %v246
    %302 = vmatprep.mubr.bf16.mxu0 %v134
    %303 = vmatmul.mubr.bf16.gmra.mxu0 %v133
    %v304 = vpop.f32.mrf.mxu0
    %v305 = vadd.f32 %v172, %v304
    %v306 = vpop.f32.mrf.mxu0
    %v307 = vpop.f32.mrf.mxu0
    %v308 = vpop.f32.mrf.mxu0
    %309 = vdwg.mxu0
    %310 = vst [vmem:[#allocation2] sm:$0x3] %v305
    // Predicated region
    $region22: #{vit_forward.5} parent=1 // pred_check
      _
    $region23: #{vit_forward.5} parent=1 // pred_check_branch
      %312 = sbr.rel (0) target = $region25
    $region24: #{vit_forward.5} parent=1 // pred_region
      %s314 = ssub.s32 32, 32
      %315 = vsyncadd [#allocation3], %s314
      %s317 = sshll.u32 [#allocation2], 4
      %s318 = int_to_ptr.vmem [resolvable:$true] %s317
      %320 = dma.vmem_to_hbm [thread:$0]  %s318, 32, %s5, [#allocation3]
    $region25: #{vit_forward.5} parent=1 // pred_fallthru
      _
    // Predicated region
    $region26: #{vit_forward.5} parent=1 // pred_check
      _
    $region27: #{vit_forward.5} parent=1 // pred_check_branch
      %322 = sbr.rel (0) target = $region29
    $region28: #{vit_forward.5} parent=1 // pred_region
      %323 = dma.done [#allocation3], 32
    $region29: #{vit_forward.5} parent=1 // pred_fallthru
      _
    %324 = vsyncpa [#allocation3], 1

// kernel: vit_forward.4
$region0: #{vit_forward.4}
  #allocation0 [shape = 'u32[]', space=smem, size = 0x4, offset = 0x4, fixed_abs, tag = 'smem constant byte address 0x4 - core index']
  #allocation1 [shape = 'u32[144,128]{1,0:T(1,128)}', space=vmem, size = 0x12000, scoped, tag = 'internal scratch']
  #allocation2 [shape = 'f32[48,256]{1,0:T(8,128)}', space=vmem, size = 0xc000, scoped, tag = 'scratch operand']
  #allocation3 [shape = 'f32[2,24,256]{2,1,0:T(8,128)}', space=vmem, size = 0xc000, scoped, tag = 'scratch operand']
  %s0 = inlined_call_operand.vmem [shape: f32[2,24,256], index: 0, kind: input, shape index: {}]
  %s1 = inlined_call_operand.vmem [shape: f32[2,1,256], index: 1, kind: input, shape index: {}]
  %s2 = inlined_call_operand.hbm [shape: f32[2,1,256], index: 2, kind: input, shape index: {}]
  %s3 = inlined_call_operand.hbm [shape: bf16[2,256,768], index: 3, kind: input, shape index: {}]
  %s4 = inlined_call_operand.vmem [shape: f32[2,1,768], index: 4, kind: input, shape index: {}]
  %s5 = inlined_call_operand.hbm [shape: bf16[2,256,256], index: 5, kind: input, shape index: {}]
  %s6 = inlined_call_operand.hbm [shape: f32[2,1,256], index: 6, kind: input, shape index: {}]
  %s7 = inlined_call_operand.hbm [shape: f32[2,1,256], index: 7, kind: input, shape index: {}]
  %s8 = inlined_call_operand.hbm [shape: f32[2,1,256], index: 8, kind: input, shape index: {}]
  %s9 = inlined_call_operand.vmem [shape: bf16[2,256,1024], index: 9, kind: input, shape index: {}]
  %s10 = inlined_call_operand.vmem [shape: f32[2,1,1024], index: 10, kind: input, shape index: {}]
  %s11 = inlined_call_operand.vmem [shape: bf16[2,1024,256], index: 11, kind: input, shape index: {}]
  %s12 = inlined_call_operand.hbm [shape: f32[2,1,256], index: 12, kind: input, shape index: {}]
  %s13 = inlined_call_operand.vmem [shape: f32[2,24,256], index: 13, kind: output, shape index: {}]
  %s14 = sld [smem:[#allocation0]]
  $region121: #{vit_forward.4} parent=0
    _
  %s16 = ssub.s32 1, %s14
  %s17 = scalar_select 0, %s16, %s14
  $region1: #{vit_forward.4} parent=0
    #allocation4 [shape = 'u8[2048]{0}', space=vmem, size = 0x800, scoped, tag = 'input window, operand 2']
    #allocation5 [shape = 's32[2]{0}', space=sflag, size = 0x8, scoped, tag = 'scoped memory for vit_forward.4']
    #allocation6 [shape = 'u8[786432]{0}', space=vmem, size = 0xc0000, scoped, tag = 'input window, operand 3']
    #allocation7 [shape = 's32[2]{0}', space=sflag, size = 0x8, scoped, tag = 'scoped memory for vit_forward.4']
    #allocation8 [shape = 'u8[262144]{0}', space=vmem, size = 0x40000, scoped, tag = 'input window, operand 5']
    #allocation9 [shape = 'u8[2048]{0}', space=vmem, size = 0x800, scoped, tag = 'input window, operand 6']
    #allocation10 [shape = 's32[2]{0}', space=sflag, size = 0x8, scoped, tag = 'scoped memory for vit_forward.4']
    #allocation11 [shape = 'u8[2048]{0}', space=vmem, size = 0x800, scoped, tag = 'input window, operand 7']
    #allocation12 [shape = 'u8[2048]{0}', space=vmem, size = 0x800, scoped, tag = 'input window, operand 8']
    #allocation13 [shape = 's32[2]{0}', space=sflag, size = 0x8, scoped, tag = 'scoped memory for vit_forward.4']
    #allocation14 [shape = 'u8[2048]{0}', space=vmem, size = 0x800, scoped, tag = 'input window, operand 12']
    %18 = vsyncpa [#allocation5], 0
    %s19 = scalar_lea.sflag [#allocation5], 1
    %20 = vsyncpa %s19, 0
    %21 = vsyncpa [#allocation7], 0
    %s22 = scalar_lea.sflag [#allocation7], 1
    %23 = vsyncpa %s22, 0
    %24 = vsyncpa [#allocation10], 0
    %s25 = scalar_lea.sflag [#allocation10], 1
    %26 = vsyncpa %s25, 0
    %27 = vsyncpa [#allocation13], 0
    %s28 = scalar_lea.sflag [#allocation13], 1
    %29 = vsyncpa %s28, 0
    loop: start=0, step=1, limit=4
    $region2: #{vit_forward.4} parent=1 // loop_pre_header
      _
    $region3: #{vit_forward.4} parent=1 // loop_header
      %s31 = sphi 0, %s35
      %p32 = scmp.ge.s32.totalorder %s31, 4
      %s38 = sphi 0, %s50
      %s39 = sphi 0, %s46
      %s40 = sphi 0, %s38
      %s41 = sphi 0, %s39
      %s42 = sphi 0, %s40
      %s43 = sphi 0, %s41
      %s53 = sphi 0, %s55
      %s56 = sphi 0, %s53
      %s57 = sphi 0, %s56
      %s73 = sphi 0, %s57
      %s79 = sphi 0, %s81
      %s82 = sphi 0, %s79
      %s83 = sphi 0, %s82
      %s99 = sphi 0, %s83
      %s105 = sphi 0, %s107
      %s108 = sphi 0, %s105
      %s109 = sphi 0, %s108
      %s125 = sphi 0, %s109
      %s131 = sphi 0, %s133
      %s134 = sphi 0, %s131
      %s135 = sphi 0, %s134
      %s151 = sphi 0, %s135
      %s157 = sphi 0, %s159
      %s160 = sphi 0, %s157
      %s161 = sphi 0, %s160
      %s177 = sphi 0, %s161
      %s183 = sphi 0, %s185
      %s186 = sphi 0, %s183
      %s187 = sphi 0, %s186
      %s203 = sphi 0, %s187
      %s209 = sphi 0, %s211
      %s212 = sphi 0, %s209
      %s213 = sphi 0, %s212
      %s229 = sphi 0, %s213
      %s235 = sphi 0, %s237
      %s238 = sphi 0, %s235
      %s239 = sphi 0, %s238
      %s255 = sphi 0, %s239
      %s261 = sphi 0, %s263
      %s264 = sphi 0, %s261
      %s265 = sphi 0, %s264
      %s281 = sphi 0, %s265
      %s287 = sphi 0, %s289
      %s290 = sphi 0, %s287
      %s291 = sphi 0, %s290
      %s307 = sphi 0, %s291
      %s313 = sphi 0, %s315
      %s316 = sphi 0, %s313
      %s317 = sphi 0, %s316
      %s333 = sphi 0, %s317
      %s339 = sphi 0, %s341
      %s342 = sphi 0, %s339
      %s343 = sphi 0, %s342
      %s359 = sphi 0, %s343
      %s365 = sphi 0, %s367
      %s368 = sphi 0, %s365
      %s369 = sphi 0, %s368
      %s385 = sphi 0, %s369
      %s391 = sphi 0, %s393
      %s394 = sphi 0, %s391
      %s395 = sphi 0, %s394
      %s411 = sphi 0, %s395
    $region4: #{vit_forward.4} parent=1 // loop_header_branch
      %34 = sbr.rel (%p32) target = $region8
    $region5: #{vit_forward.4} parent=1 // loop_body
      %s36 = ssub.s32 %s31, 1
      %s37 = ssub.s32 %s31, 2
      %s44 = sadd.s32 1, %s39
      %p45 = scmp.ge.s32.totalorder %s44, 2
      %s46 = scalar_select %p45, 0, %s44
      %s47 = sadd.s32 1, %s38
      %s48 = scalar_select %p45, %s47, %s38
      %p49 = scmp.ge.s32.totalorder %s48, 1
      %s50 = scalar_select %p49, 0, %s48
      %s51 = ssub.s32 %s38, %s50
      %p52 = scmp.eq.s32.totalorder %s51, 0
      %s54 = sadd.s32 %s53, 1
      %s55 = scalar_select %p52, %s53, %s54
      %p58 = pneg %p52
      %p59 = scmp.eq.s32.totalorder %s31, 1
      %p60 = por %p58, %p59
      %p61 = scmp.ne.s32.totalorder %s53, %s56
      %p62 = scmp.eq.s32.totalorder %s31, 0
      %p63 = por %p61, %p62
      %p64 = scmp.ne.s32.totalorder %s53, %s56
      %p65 = scmp.eq.s32.totalorder %s36, 1
      %p66 = por %p64, %p65
      %p67 = scmp.ne.s32.totalorder %s56, %s57
      %p68 = scmp.eq.s32.totalorder %s36, 0
      %p69 = por %p67, %p68
      %p70 = scmp.ne.s32.totalorder %s56, %s57
      %p71 = scmp.eq.s32.totalorder %s37, 1
      %p72 = por %p70, %p71
      %p74 = scmp.ne.s32.totalorder %s57, %s73
      %p75 = scmp.eq.s32.totalorder %s37, 0
      %p76 = por %p74, %p75
      %s77 = ssub.s32 %s39, %s46
      %p78 = scmp.eq.s32.totalorder %s77, 0
      %s80 = sadd.s32 %s79, 1
      %s81 = scalar_select %p78, %s79, %s80
      %p84 = pneg %p78
      %p85 = scmp.eq.s32.totalorder %s31, 1
      %p86 = por %p84, %p85
      %p87 = scmp.ne.s32.totalorder %s79, %s82
      %p88 = scmp.eq.s32.totalorder %s31, 0
      %p89 = por %p87, %p88
      %p90 = scmp.ne.s32.totalorder %s79, %s82
      %p91 = scmp.eq.s32.totalorder %s36, 1
      %p92 = por %p90, %p91
      %p93 = scmp.ne.s32.totalorder %s82, %s83
      %p94 = scmp.eq.s32.totalorder %s36, 0
      %p95 = por %p93, %p94
      %p96 = scmp.ne.s32.totalorder %s82, %s83
      %p97 = scmp.eq.s32.totalorder %s37, 1
      %p98 = por %p96, %p97
      %p100 = scmp.ne.s32.totalorder %s83, %s99
      %p101 = scmp.eq.s32.totalorder %s37, 0
      %p102 = por %p100, %p101
      %s103 = ssub.s32 %s39, %s46
      %p104 = scmp.eq.s32.totalorder %s103, 0
      %s106 = sadd.s32 %s105, 1
      %s107 = scalar_select %p104, %s105, %s106
      %p110 = pneg %p104
      %p111 = scmp.eq.s32.totalorder %s31, 1
      %p112 = por %p110, %p111
      %p113 = scmp.ne.s32.totalorder %s105, %s108
      %p114 = scmp.eq.s32.totalorder %s31, 0
      %p115 = por %p113, %p114
      %p116 = scmp.ne.s32.totalorder %s105, %s108
      %p117 = scmp.eq.s32.totalorder %s36, 1
      %p118 = por %p116, %p117
      %p119 = scmp.ne.s32.totalorder %s108, %s109
      %p120 = scmp.eq.s32.totalorder %s36, 0
      %p121 = por %p119, %p120
      %p122 = scmp.ne.s32.totalorder %s108, %s109
      %p123 = scmp.eq.s32.totalorder %s37, 1
      %p124 = por %p122, %p123
      %p126 = scmp.ne.s32.totalorder %s109, %s125
      %p127 = scmp.eq.s32.totalorder %s37, 0
      %p128 = por %p126, %p127
      %s129 = ssub.s32 %s39, %s46
      %p130 = scmp.eq.s32.totalorder %s129, 0
      %s132 = sadd.s32 %s131, 1
      %s133 = scalar_select %p130, %s131, %s132
      %p136 = pneg %p130
      %p137 = scmp.eq.s32.totalorder %s31, 1
      %p138 = por %p136, %p137
      %p139 = scmp.ne.s32.totalorder %s131, %s134
      %p140 = scmp.eq.s32.totalorder %s31, 0
      %p141 = por %p139, %p140
      %p142 = scmp.ne.s32.totalorder %s131, %s134
      %p143 = scmp.eq.s32.totalorder %s36, 1
      %p144 = por %p142, %p143
      %p145 = scmp.ne.s32.totalorder %s134, %s135
      %p146 = scmp.eq.s32.totalorder %s36, 0
      %p147 = por %p145, %p146
      %p148 = scmp.ne.s32.totalorder %s134, %s135
      %p149 = scmp.eq.s32.totalorder %s37, 1
      %p150 = por %p148, %p149
      %p152 = scmp.ne.s32.totalorder %s135, %s151
      %p153 = scmp.eq.s32.totalorder %s37, 0
      %p154 = por %p152, %p153
      %s155 = ssub.s32 %s39, %s46
      %p156 = scmp.eq.s32.totalorder %s155, 0
      %s158 = sadd.s32 %s157, 1
      %s159 = scalar_select %p156, %s157, %s158
      %p162 = pneg %p156
      %p163 = scmp.eq.s32.totalorder %s31, 1
      %p164 = por %p162, %p163
      %p165 = scmp.ne.s32.totalorder %s157, %s160
      %p166 = scmp.eq.s32.totalorder %s31, 0
      %p167 = por %p165, %p166
      %p168 = scmp.ne.s32.totalorder %s157, %s160
      %p169 = scmp.eq.s32.totalorder %s36, 1
      %p170 = por %p168, %p169
      %p171 = scmp.ne.s32.totalorder %s160, %s161
      %p172 = scmp.eq.s32.totalorder %s36, 0
      %p173 = por %p171, %p172
      %p174 = scmp.ne.s32.totalorder %s160, %s161
      %p175 = scmp.eq.s32.totalorder %s37, 1
      %p176 = por %p174, %p175
      %p178 = scmp.ne.s32.totalorder %s161, %s177
      %p179 = scmp.eq.s32.totalorder %s37, 0
      %p180 = por %p178, %p179
      %s181 = ssub.s32 %s39, %s46
      %p182 = scmp.eq.s32.totalorder %s181, 0
      %s184 = sadd.s32 %s183, 1
      %s185 = scalar_select %p182, %s183, %s184
      %p188 = pneg %p182
      %p189 = scmp.eq.s32.totalorder %s31, 1
      %p190 = por %p188, %p189
      %p191 = scmp.ne.s32.totalorder %s183, %s186
      %p192 = scmp.eq.s32.totalorder %s31, 0
      %p193 = por %p191, %p192
      %p194 = scmp.ne.s32.totalorder %s183, %s186
      %p195 = scmp.eq.s32.totalorder %s36, 1
      %p196 = por %p194, %p195
      %p197 = scmp.ne.s32.totalorder %s186, %s187
      %p198 = scmp.eq.s32.totalorder %s36, 0
      %p199 = por %p197, %p198
      %p200 = scmp.ne.s32.totalorder %s186, %s187
      %p201 = scmp.eq.s32.totalorder %s37, 1
      %p202 = por %p200, %p201
      %p204 = scmp.ne.s32.totalorder %s187, %s203
      %p205 = scmp.eq.s32.totalorder %s37, 0
      %p206 = por %p204, %p205
      %s207 = ssub.s32 %s39, %s46
      %p208 = scmp.eq.s32.totalorder %s207, 0
      %s210 = sadd.s32 %s209, 1
      %s211 = scalar_select %p208, %s209, %s210
      %p214 = pneg %p208
      %p215 = scmp.eq.s32.totalorder %s31, 1
      %p216 = por %p214, %p215
      %p217 = scmp.ne.s32.totalorder %s209, %s212
      %p218 = scmp.eq.s32.totalorder %s31, 0
      %p219 = por %p217, %p218
      %p220 = scmp.ne.s32.totalorder %s209, %s212
      %p221 = scmp.eq.s32.totalorder %s36, 1
      %p222 = por %p220, %p221
      %p223 = scmp.ne.s32.totalorder %s212, %s213
      %p224 = scmp.eq.s32.totalorder %s36, 0
      %p225 = por %p223, %p224
      %p226 = scmp.ne.s32.totalorder %s212, %s213
      %p227 = scmp.eq.s32.totalorder %s37, 1
      %p228 = por %p226, %p227
      %p230 = scmp.ne.s32.totalorder %s213, %s229
      %p231 = scmp.eq.s32.totalorder %s37, 0
      %p232 = por %p230, %p231
      %s233 = ssub.s32 %s39, %s46
      %p234 = scmp.eq.s32.totalorder %s233, 0
      %s236 = sadd.s32 %s235, 1
      %s237 = scalar_select %p234, %s235, %s236
      %p240 = pneg %p234
      %p241 = scmp.eq.s32.totalorder %s31, 1
      %p242 = por %p240, %p241
      %p243 = scmp.ne.s32.totalorder %s235, %s238
      %p244 = scmp.eq.s32.totalorder %s31, 0
      %p245 = por %p243, %p244
      %p246 = scmp.ne.s32.totalorder %s235, %s238
      %p247 = scmp.eq.s32.totalorder %s36, 1
      %p248 = por %p246, %p247
      %p249 = scmp.ne.s32.totalorder %s238, %s239
      %p250 = scmp.eq.s32.totalorder %s36, 0
      %p251 = por %p249, %p250
      %p252 = scmp.ne.s32.totalorder %s238, %s239
      %p253 = scmp.eq.s32.totalorder %s37, 1
      %p254 = por %p252, %p253
      %p256 = scmp.ne.s32.totalorder %s239, %s255
      %p257 = scmp.eq.s32.totalorder %s37, 0
      %p258 = por %p256, %p257
      %s259 = ssub.s32 %s39, %s46
      %p260 = scmp.eq.s32.totalorder %s259, 0
      %s262 = sadd.s32 %s261, 1
      %s263 = scalar_select %p260, %s261, %s262
      %p266 = pneg %p260
      %p267 = scmp.eq.s32.totalorder %s31, 1
      %p268 = por %p266, %p267
      %p269 = scmp.ne.s32.totalorder %s261, %s264
      %p270 = scmp.eq.s32.totalorder %s31, 0
      %p271 = por %p269, %p270
      %p272 = scmp.ne.s32.totalorder %s261, %s264
      %p273 = scmp.eq.s32.totalorder %s36, 1
      %p274 = por %p272, %p273
      %p275 = scmp.ne.s32.totalorder %s264, %s265
      %p276 = scmp.eq.s32.totalorder %s36, 0
      %p277 = por %p275, %p276
      %p278 = scmp.ne.s32.totalorder %s264, %s265
      %p279 = scmp.eq.s32.totalorder %s37, 1
      %p280 = por %p278, %p279
      %p282 = scmp.ne.s32.totalorder %s265, %s281
      %p283 = scmp.eq.s32.totalorder %s37, 0
      %p284 = por %p282, %p283
      %s285 = ssub.s32 %s39, %s46
      %p286 = scmp.eq.s32.totalorder %s285, 0
      %s288 = sadd.s32 %s287, 1
      %s289 = scalar_select %p286, %s287, %s288
      %p292 = pneg %p286
      %p293 = scmp.eq.s32.totalorder %s31, 1
      %p294 = por %p292, %p293
      %p295 = scmp.ne.s32.totalorder %s287, %s290
      %p296 = scmp.eq.s32.totalorder %s31, 0
      %p297 = por %p295, %p296
      %p298 = scmp.ne.s32.totalorder %s287, %s290
      %p299 = scmp.eq.s32.totalorder %s36, 1
      %p300 = por %p298, %p299
      %p301 = scmp.ne.s32.totalorder %s290, %s291
      %p302 = scmp.eq.s32.totalorder %s36, 0
      %p303 = por %p301, %p302
      %p304 = scmp.ne.s32.totalorder %s290, %s291
      %p305 = scmp.eq.s32.totalorder %s37, 1
      %p306 = por %p304, %p305
      %p308 = scmp.ne.s32.totalorder %s291, %s307
      %p309 = scmp.eq.s32.totalorder %s37, 0
      %p310 = por %p308, %p309
      %s311 = ssub.s32 %s39, %s46
      %p312 = scmp.eq.s32.totalorder %s311, 0
      %s314 = sadd.s32 %s313, 1
      %s315 = scalar_select %p312, %s313, %s314
      %p318 = pneg %p312
      %p319 = scmp.eq.s32.totalorder %s31, 1
      %p320 = por %p318, %p319
      %p321 = scmp.ne.s32.totalorder %s313, %s316
      %p322 = scmp.eq.s32.totalorder %s31, 0
      %p323 = por %p321, %p322
      %p324 = scmp.ne.s32.totalorder %s313, %s316
      %p325 = scmp.eq.s32.totalorder %s36, 1
      %p326 = por %p324, %p325
      %p327 = scmp.ne.s32.totalorder %s316, %s317
      %p328 = scmp.eq.s32.totalorder %s36, 0
      %p329 = por %p327, %p328
      %p330 = scmp.ne.s32.totalorder %s316, %s317
      %p331 = scmp.eq.s32.totalorder %s37, 1
      %p332 = por %p330, %p331
      %p334 = scmp.ne.s32.totalorder %s317, %s333
      %p335 = scmp.eq.s32.totalorder %s37, 0
      %p336 = por %p334, %p335
      %s337 = ssub.s32 %s39, %s46
      %p338 = scmp.eq.s32.totalorder %s337, 0
      %s340 = sadd.s32 %s339, 1
      %s341 = scalar_select %p338, %s339, %s340
      %p344 = pneg %p338
      %p345 = scmp.eq.s32.totalorder %s31, 1
      %p346 = por %p344, %p345
      %p347 = scmp.ne.s32.totalorder %s339, %s342
      %p348 = scmp.eq.s32.totalorder %s31, 0
      %p349 = por %p347, %p348
      %p350 = scmp.ne.s32.totalorder %s339, %s342
      %p351 = scmp.eq.s32.totalorder %s36, 1
      %p352 = por %p350, %p351
      %p353 = scmp.ne.s32.totalorder %s342, %s343
      %p354 = scmp.eq.s32.totalorder %s36, 0
      %p355 = por %p353, %p354
      %p356 = scmp.ne.s32.totalorder %s342, %s343
      %p357 = scmp.eq.s32.totalorder %s37, 1
      %p358 = por %p356, %p357
      %p360 = scmp.ne.s32.totalorder %s343, %s359
      %p361 = scmp.eq.s32.totalorder %s37, 0
      %p362 = por %p360, %p361
      %s363 = ssub.s32 %s39, %s46
      %p364 = scmp.eq.s32.totalorder %s363, 0
      %s366 = sadd.s32 %s365, 1
      %s367 = scalar_select %p364, %s365, %s366
      %p370 = pneg %p364
      %p371 = scmp.eq.s32.totalorder %s31, 1
      %p372 = por %p370, %p371
      %p373 = scmp.ne.s32.totalorder %s365, %s368
      %p374 = scmp.eq.s32.totalorder %s31, 0
      %p375 = por %p373, %p374
      %p376 = scmp.ne.s32.totalorder %s365, %s368
      %p377 = scmp.eq.s32.totalorder %s36, 1
      %p378 = por %p376, %p377
      %p379 = scmp.ne.s32.totalorder %s368, %s369
      %p380 = scmp.eq.s32.totalorder %s36, 0
      %p381 = por %p379, %p380
      %p382 = scmp.ne.s32.totalorder %s368, %s369
      %p383 = scmp.eq.s32.totalorder %s37, 1
      %p384 = por %p382, %p383
      %p386 = scmp.ne.s32.totalorder %s369, %s385
      %p387 = scmp.eq.s32.totalorder %s37, 0
      %p388 = por %p386, %p387
      %s389 = ssub.s32 %s38, %s50
      %p390 = scmp.eq.s32.totalorder %s389, 0
      %s392 = sadd.s32 %s391, 1
      %s393 = scalar_select %p390, %s391, %s392
      %p396 = pneg %p390
      %p397 = scmp.eq.s32.totalorder %s31, 1
      %p398 = por %p396, %p397
      %p399 = scmp.ne.s32.totalorder %s391, %s394
      %p400 = scmp.eq.s32.totalorder %s31, 0
      %p401 = por %p399, %p400
      %p402 = scmp.ne.s32.totalorder %s391, %s394
      %p403 = scmp.eq.s32.totalorder %s36, 1
      %p404 = por %p402, %p403
      %p405 = scmp.ne.s32.totalorder %s394, %s395
      %p406 = scmp.eq.s32.totalorder %s36, 0
      %p407 = por %p405, %p406
      %p408 = scmp.ne.s32.totalorder %s394, %s395
      %p409 = scmp.eq.s32.totalorder %s37, 1
      %p410 = por %p408, %p409
      %p412 = scmp.ne.s32.totalorder %s395, %s411
      %p413 = scmp.eq.s32.totalorder %s37, 0
      %p414 = por %p412, %p413
      %p415 = scmp.le.s32.totalorder 1, %s31
      %p416 = scmp.lt.s32.totalorder %s31, 3
      %p417 = pnand %p415, %p416
      %p418 = pneg %p417
      // Predicated region
      $region9: #{vit_forward.4} parent=5 // pred_check
        _
      $region10: #{vit_forward.4} parent=5 // pred_check_branch
        %420 = sbr.rel (%p417) target = $region12
      $region11: #{vit_forward.4} parent=5 // pred_region
        %s421 = ssub.s32 %s31, 1
        // Predicated region
        $region13: #{vit_forward.4} parent=11 // pred_check
          %p422 = pneg %p69
        $region14: #{vit_forward.4} parent=11 // pred_check_branch
          %424 = sbr.rel (%p422) target = $region16
        $region15: #{vit_forward.4} parent=11 // pred_region
          %s425 = smul.u32 2, %s40
          %p426 = scmp.lt.s32.totalorder %s425, 1
          %s427 = scalar_select %p426, %s425, 1
          %s428 = smul.addr %s427, 6
          %s429 = smul.addr %s428, 8
          %s430 = scalar_lea.vmem %s0, %s429
          %s431 = smul.u32 2, %s40
        $region16: #{vit_forward.4} parent=11 // pred_fallthru
          _
      $region12: #{vit_forward.4} parent=5 // pred_fallthru
        _
      %p432 = scmp.lt.s32.totalorder %s31, 2
      // Predicated region
      $region17: #{vit_forward.4} parent=5 // pred_check
        %p433 = pneg %p432
      $region18: #{vit_forward.4} parent=5 // pred_check_branch
        %435 = sbr.rel (%p433) target = $region20
      $region19: #{vit_forward.4} parent=5 // pred_region
        // Predicated region
        $region21: #{vit_forward.4} parent=19 // pred_check
          %p436 = pneg %p89
        $region22: #{vit_forward.4} parent=19 // pred_check_branch
          %438 = sbr.rel (%p436) target = $region24
        $region23: #{vit_forward.4} parent=19 // pred_region
          %p439 = scmp.lt.s32.totalorder %s39, 1
          %s440 = scalar_select %p439, %s39, 1
          %s441 = smul.addr %s440, 2
          %s442 = scalar_lea.vmem %s1, %s441
        $region24: #{vit_forward.4} parent=19 // pred_fallthru
          _
        // Predicated region
        $region25: #{vit_forward.4} parent=19 // pred_check
          %p443 = pneg %p115
        $region26: #{vit_forward.4} parent=19 // pred_check_branch
          %445 = sbr.rel (%p443) target = $region28
        $region27: #{vit_forward.4} parent=19 // pred_region
          %s446 = sand.u32 %s105, 1
          %s447 = scalar_lea.sflag [#allocation5], %s446
          %s448 = sand.u32 %s105, 1
          %s449 = smul.addr %s448, 2
          %s450 = scalar_lea.vmem [#allocation4], %s449
          %s452 = ssub.s32 32, 32
          %453 = vsyncadd %s447, %s452
          %s454 = smul.addr %s39, 2
          %s455 = smul.addr %s454, 16
          %s456 = scalar_lea.hbm %s2, %s455
          %s458 = sshll.u32 %s450, 4
          %s459 = int_to_ptr.vmem [resolvable:$true] %s458
          %461 = dma.hbm_to_vmem [thread:$0]  %s456, 32, %s459, %s447
        $region28: #{vit_forward.4} parent=19 // pred_fallthru
          _
        // Predicated region
        $region29: #{vit_forward.4} parent=19 // pred_check
          %p462 = pneg %p141
        $region30: #{vit_forward.4} parent=19 // pred_check_branch
          %464 = sbr.rel (%p462) target = $region32
        $region31: #{vit_forward.4} parent=19 // pred_region
          %s465 = sand.u32 %s31, 1
          %s466 = scalar_lea.sflag [#allocation7], %s465
          %s467 = sand.u32 %s131, 1
          %s468 = smul.addr %s467, 768
          %s469 = scalar_lea.vmem [#allocation6], %s468
          %s471 = ssub.s32 12288, 12288
          %472 = vsyncadd %s466, %s471
          %s473 = smul.addr %s39, 192
          %s474 = smul.addr %s473, 64
          %s475 = scalar_lea.hbm %s3, %s474
          %s476 = sshll.u32 %s469, 4
          %s477 = int_to_ptr.vmem [resolvable:$true] %s476
          %482 = dma.hbm_to_vmem [thread:$0]  %s475, 12288, %s477, %s466, 384, 384, 24
        $region32: #{vit_forward.4} parent=19 // pred_fallthru
          _
        // Predicated region
        $region33: #{vit_forward.4} parent=19 // pred_check
          %p483 = pneg %p167
        $region34: #{vit_forward.4} parent=19 // pred_check_branch
          %485 = sbr.rel (%p483) target = $region36
        $region35: #{vit_forward.4} parent=19 // pred_region
          %p486 = scmp.lt.s32.totalorder %s39, 1
          %s487 = scalar_select %p486, %s39, 1
          %s488 = smul.addr %s487, 6
          %s489 = scalar_lea.vmem %s4, %s488
        $region36: #{vit_forward.4} parent=19 // pred_fallthru
          _
        // Predicated region
        $region37: #{vit_forward.4} parent=19 // pred_check
          %p490 = pneg %p193
        $region38: #{vit_forward.4} parent=19 // pred_check_branch
          %492 = sbr.rel (%p490) target = $region40
        $region39: #{vit_forward.4} parent=19 // pred_region
          %s493 = sand.u32 %s31, 1
          %s494 = scalar_lea.sflag [#allocation7], %s493
          %s495 = sand.u32 %s183, 1
          %s496 = smul.addr %s495, 256
          %s497 = scalar_lea.vmem [#allocation8], %s496
          %s499 = ssub.s32 4096, 4096
          %500 = vsyncadd %s494, %s499
          %s501 = smul.addr %s39, 64
          %s502 = smul.addr %s501, 64
          %s503 = scalar_lea.hbm %s5, %s502
          %s504 = sshll.u32 %s497, 4
          %s505 = int_to_ptr.vmem [resolvable:$true] %s504
          %510 = dma.hbm_to_vmem [thread:$0]  %s503, 4096, %s505, %s494, 128, 128, 8
        $region40: #{vit_forward.4} parent=19 // pred_fallthru
          _
        // Predicated region
        $region41: #{vit_forward.4} parent=19 // pred_check
          %p511 = pneg %p219
        $region42: #{vit_forward.4} parent=19 // pred_check_branch
          %513 = sbr.rel (%p511) target = $region44
        $region43: #{vit_forward.4} parent=19 // pred_region
          %s514 = sand.u32 %s31, 1
          %s515 = scalar_lea.sflag [#allocation10], %s514
          %s516 = sand.u32 %s209, 1
          %s517 = smul.addr %s516, 2
          %s518 = scalar_lea.vmem [#allocation9], %s517
          %s520 = ssub.s32 32, 32
          %521 = vsyncadd %s515, %s520
          %s522 = smul.addr %s39, 2
          %s523 = smul.addr %s522, 16
          %s524 = scalar_lea.hbm %s6, %s523
          %s526 = sshll.u32 %s518, 4
          %s527 = int_to_ptr.vmem [resolvable:$true] %s526
          %529 = dma.hbm_to_vmem [thread:$0]  %s524, 32, %s527, %s515
        $region44: #{vit_forward.4} parent=19 // pred_fallthru
          _
        // Predicated region
        $region45: #{vit_forward.4} parent=19 // pred_check
          %p530 = pneg %p245
        $region46: #{vit_forward.4} parent=19 // pred_check_branch
          %532 = sbr.rel (%p530) target = $region48
        $region47: #{vit_forward.4} parent=19 // pred_region
          %s533 = sand.u32 %s31, 1
          %s534 = scalar_lea.sflag [#allocation10], %s533
          %s535 = sand.u32 %s235, 1
          %s536 = smul.addr %s535, 2
          %s537 = scalar_lea.vmem [#allocation11], %s536
          %s539 = ssub.s32 32, 32
          %540 = vsyncadd %s534, %s539
          %s541 = smul.addr %s39, 2
          %s542 = smul.addr %s541, 16
          %s543 = scalar_lea.hbm %s7, %s542
          %s545 = sshll.u32 %s537, 4
          %s546 = int_to_ptr.vmem [resolvable:$true] %s545
          %548 = dma.hbm_to_vmem [thread:$0]  %s543, 32, %s546, %s534
        $region48: #{vit_forward.4} parent=19 // pred_fallthru
          _
        // Predicated region
        $region49: #{vit_forward.4} parent=19 // pred_check
          %p549 = pneg %p271
        $region50: #{vit_forward.4} parent=19 // pred_check_branch
          %551 = sbr.rel (%p549) target = $region52
        $region51: #{vit_forward.4} parent=19 // pred_region
          %s552 = sand.u32 %s31, 1
          %s553 = scalar_lea.sflag [#allocation13], %s552
          %s554 = sand.u32 %s261, 1
          %s555 = smul.addr %s554, 2
          %s556 = scalar_lea.vmem [#allocation12], %s555
          %s558 = ssub.s32 32, 32
          %559 = vsyncadd %s553, %s558
          %s560 = smul.addr %s39, 2
          %s561 = smul.addr %s560, 16
          %s562 = scalar_lea.hbm %s8, %s561
          %s564 = sshll.u32 %s556, 4
          %s565 = int_to_ptr.vmem [resolvable:$true] %s564
          %567 = dma.hbm_to_vmem [thread:$0]  %s562, 32, %s565, %s553
        $region52: #{vit_forward.4} parent=19 // pred_fallthru
          _
        // Predicated region
        $region53: #{vit_forward.4} parent=19 // pred_check
          %p568 = pneg %p297
        $region54: #{vit_forward.4} parent=19 // pred_check_branch
          %570 = sbr.rel (%p568) target = $region56
        $region55: #{vit_forward.4} parent=19 // pred_region
          %p571 = scmp.lt.s32.totalorder %s39, 1
          %s572 = scalar_select %p571, %s39, 1
          %s573 = smul.addr %s572, 256
          %s574 = smul.addr %s573, 4
          %s575 = scalar_lea.vmem %s9, %s574
        $region56: #{vit_forward.4} parent=19 // pred_fallthru
          _
        // Predicated region
        $region57: #{vit_forward.4} parent=19 // pred_check
          %p576 = pneg %p323
        $region58: #{vit_forward.4} parent=19 // pred_check_branch
          %578 = sbr.rel (%p576) target = $region60
        $region59: #{vit_forward.4} parent=19 // pred_region
          %p579 = scmp.lt.s32.totalorder %s39, 1
          %s580 = scalar_select %p579, %s39, 1
          %s581 = smul.addr %s580, 8
          %s582 = scalar_lea.vmem %s10, %s581
        $region60: #{vit_forward.4} parent=19 // pred_fallthru
          _
        // Predicated region
        $region61: #{vit_forward.4} parent=19 // pred_check
          %p583 = pneg %p349
        $region62: #{vit_forward.4} parent=19 // pred_check_branch
          %585 = sbr.rel (%p583) target = $region64
        $region63: #{vit_forward.4} parent=19 // pred_region
          %p586 = scmp.lt.s32.totalorder %s39, 1
          %s587 = scalar_select %p586, %s39, 1
          %s588 = smul.addr %s587, 256
          %s589 = smul.addr %s588, 4
          %s590 = scalar_lea.vmem %s11, %s589
        $region64: #{vit_forward.4} parent=19 // pred_fallthru
          _
        // Predicated region
        $region65: #{vit_forward.4} parent=19 // pred_check
          %p591 = pneg %p375
        $region66: #{vit_forward.4} parent=19 // pred_check_branch
          %593 = sbr.rel (%p591) target = $region68
        $region67: #{vit_forward.4} parent=19 // pred_region
          %s594 = sand.u32 %s31, 1
          %s595 = scalar_lea.sflag [#allocation13], %s594
          %s596 = sand.u32 %s365, 1
          %s597 = smul.addr %s596, 2
          %s598 = scalar_lea.vmem [#allocation14], %s597
          %s600 = ssub.s32 32, 32
          %601 = vsyncadd %s595, %s600
          %s602 = smul.addr %s39, 2
          %s603 = smul.addr %s602, 16
          %s604 = scalar_lea.hbm %s12, %s603
          %s606 = sshll.u32 %s598, 4
          %s607 = int_to_ptr.vmem [resolvable:$true] %s606
          %609 = dma.hbm_to_vmem [thread:$0]  %s604, 32, %s607, %s595
        $region68: #{vit_forward.4} parent=19 // pred_fallthru
          _
      $region20: #{vit_forward.4} parent=5 // pred_fallthru
        _
      %p610 = scmp.le.s32.totalorder 1, %s31
      %p611 = scmp.lt.s32.totalorder %s31, 3
      %p612 = pnand %p610, %p611
      %p613 = pneg %p612
      // Predicated region
      $region69: #{vit_forward.4} parent=5 // pred_check
        _
      $region70: #{vit_forward.4} parent=5 // pred_check_branch
        %615 = sbr.rel (%p612) target = $region72
      $region71: #{vit_forward.4} parent=5 // pred_region
        %s616 = ssub.s32 %s31, 1
        %s617 = sand.u32 %s108, 1
        %s618 = scalar_lea.sflag [#allocation5], %s617
        %s619 = sand.u32 %s108, 1
        %s620 = smul.addr %s619, 2
        %s621 = scalar_lea.vmem [#allocation4], %s620
        // Predicated region
        $region73: #{vit_forward.4} parent=71 // pred_check
          %p622 = pneg %p121
        $region74: #{vit_forward.4} parent=71 // pred_check_branch
          %624 = sbr.rel (%p622) target = $region76
        $region75: #{vit_forward.4} parent=71 // pred_region
          %625 = dma.done %s618, 32
        $region76: #{vit_forward.4} parent=71 // pred_fallthru
          _
        %s626 = sand.u32 %s36, 1
        %s627 = scalar_lea.sflag [#allocation7], %s626
        %s628 = sand.u32 %s134, 1
        %s629 = smul.addr %s628, 768
        %s630 = scalar_lea.vmem [#allocation6], %s629
        // Predicated region
        $region77: #{vit_forward.4} parent=71 // pred_check
          %p631 = pneg %p147
        $region78: #{vit_forward.4} parent=71 // pred_check_branch
          %633 = sbr.rel (%p631) target = $region80
        $region79: #{vit_forward.4} parent=71 // pred_region
          %634 = dma.done %s627, 12288
        $region80: #{vit_forward.4} parent=71 // pred_fallthru
          _
        %s635 = sand.u32 %s36, 1
        %s636 = scalar_lea.sflag [#allocation7], %s635
        %s637 = sand.u32 %s186, 1
        %s638 = smul.addr %s637, 256
        %s639 = scalar_lea.vmem [#allocation8], %s638
        // Predicated region
        $region81: #{vit_forward.4} parent=71 // pred_check
          %p640 = pneg %p199
        $region82: #{vit_forward.4} parent=71 // pred_check_branch
          %642 = sbr.rel (%p640) target = $region84
        $region83: #{vit_forward.4} parent=71 // pred_region
          %643 = dma.done %s636, 4096
        $region84: #{vit_forward.4} parent=71 // pred_fallthru
          _
        %s644 = sand.u32 %s36, 1
        %s645 = scalar_lea.sflag [#allocation10], %s644
        %s646 = sand.u32 %s212, 1
        %s647 = smul.addr %s646, 2
        %s648 = scalar_lea.vmem [#allocation9], %s647
        // Predicated region
        $region85: #{vit_forward.4} parent=71 // pred_check
          %p649 = pneg %p225
        $region86: #{vit_forward.4} parent=71 // pred_check_branch
          %651 = sbr.rel (%p649) target = $region88
        $region87: #{vit_forward.4} parent=71 // pred_region
          %652 = dma.done %s645, 32
        $region88: #{vit_forward.4} parent=71 // pred_fallthru
          _
        %s653 = sand.u32 %s36, 1
        %s654 = scalar_lea.sflag [#allocation10], %s653
        %s655 = sand.u32 %s238, 1
        %s656 = smul.addr %s655, 2
        %s657 = scalar_lea.vmem [#allocation11], %s656
        // Predicated region
        $region89: #{vit_forward.4} parent=71 // pred_check
          %p658 = pneg %p251
        $region90: #{vit_forward.4} parent=71 // pred_check_branch
          %660 = sbr.rel (%p658) target = $region92
        $region91: #{vit_forward.4} parent=71 // pred_region
          %661 = dma.done %s654, 32
        $region92: #{vit_forward.4} parent=71 // pred_fallthru
          _
        %s662 = sand.u32 %s36, 1
        %s663 = scalar_lea.sflag [#allocation13], %s662
        %s664 = sand.u32 %s264, 1
        %s665 = smul.addr %s664, 2
        %s666 = scalar_lea.vmem [#allocation12], %s665
        // Predicated region
        $region93: #{vit_forward.4} parent=71 // pred_check
          %p667 = pneg %p277
        $region94: #{vit_forward.4} parent=71 // pred_check_branch
          %669 = sbr.rel (%p667) target = $region96
        $region95: #{vit_forward.4} parent=71 // pred_region
          %670 = dma.done %s663, 32
        $region96: #{vit_forward.4} parent=71 // pred_fallthru
          _
        %s671 = sand.u32 %s36, 1
        %s672 = scalar_lea.sflag [#allocation13], %s671
        %s673 = sand.u32 %s368, 1
        %s674 = smul.addr %s673, 2
        %s675 = scalar_lea.vmem [#allocation14], %s674
        // Predicated region
        $region97: #{vit_forward.4} parent=71 // pred_check
          %p676 = pneg %p381
        $region98: #{vit_forward.4} parent=71 // pred_check_branch
          %678 = sbr.rel (%p676) target = $region100
        $region99: #{vit_forward.4} parent=71 // pred_region
          %679 = dma.done %s672, 32
        $region100: #{vit_forward.4} parent=71 // pred_fallthru
          _
        %s680 = smul.u32 2, %s40
        %p681 = scmp.lt.s32.totalorder %s680, 1
        %s682 = scalar_select %p681, %s680, 1
        %s683 = smul.addr %s682, 6
        %s684 = smul.addr %s683, 8
        %s685 = scalar_lea.vmem %s0, %s684
        %p686 = pneg %p69
        %p687 = pneg %p66
        %p688 = scmp.lt.s32.totalorder %s41, 1
        %s689 = scalar_select %p688, %s41, 1
        %s690 = smul.addr %s689, 2
        %s691 = scalar_lea.vmem %s1, %s690
        %p692 = pneg %p95
        %p693 = pneg %p92
        %s694 = sand.u32 %s108, 1
        %s695 = scalar_lea.sflag [#allocation5], %s694
        %s696 = sand.u32 %s108, 1
        %s697 = smul.addr %s696, 2
        %s698 = scalar_lea.vmem [#allocation4], %s697
        %p699 = pneg %p121
        %p700 = pneg %p118
        %s701 = sand.u32 %s36, 1
        %s702 = scalar_lea.sflag [#allocation7], %s701
        %s703 = sand.u32 %s134, 1
        %s704 = smul.addr %s703, 768
        %s705 = scalar_lea.vmem [#allocation6], %s704
        %p706 = pneg %p147
        %p707 = pneg %p144
        %p708 = scmp.lt.s32.totalorder %s41, 1
        %s709 = scalar_select %p708, %s41, 1
        %s710 = smul.addr %s709, 6
        %s711 = scalar_lea.vmem %s4, %s710
        %p712 = pneg %p173
        %p713 = pneg %p170
        %s714 = sand.u32 %s36, 1
        %s715 = scalar_lea.sflag [#allocation7], %s714
        %s716 = sand.u32 %s186, 1
        %s717 = smul.addr %s716, 256
        %s718 = scalar_lea.vmem [#allocation8], %s717
        %p719 = pneg %p199
        %p720 = pneg %p196
        %s721 = sand.u32 %s36, 1
        %s722 = scalar_lea.sflag [#allocation10], %s721
        %s723 = sand.u32 %s212, 1
        %s724 = smul.addr %s723, 2
        %s725 = scalar_lea.vmem [#allocation9], %s724
        %p726 = pneg %p225
        %p727 = pneg %p222
        %s728 = sand.u32 %s36, 1
        %s729 = scalar_lea.sflag [#allocation10], %s728
        %s730 = sand.u32 %s238, 1
        %s731 = smul.addr %s730, 2
        %s732 = scalar_lea.vmem [#allocation11], %s731
        %p733 = pneg %p251
        %p734 = pneg %p248
        %s735 = sand.u32 %s36, 1
        %s736 = scalar_lea.sflag [#allocation13], %s735
        %s737 = sand.u32 %s264, 1
        %s738 = smul.addr %s737, 2
        %s739 = scalar_lea.vmem [#allocation12], %s738
        %p740 = pneg %p277
        %p741 = pneg %p274
        %p742 = scmp.lt.s32.totalorder %s41, 1
        %s743 = scalar_select %p742, %s41, 1
        %s744 = smul.addr %s743, 256
        %s745 = smul.addr %s744, 4
        %s746 = scalar_lea.vmem %s9, %s745
        %p747 = pneg %p303
        %p748 = pneg %p300
        %p749 = scmp.lt.s32.totalorder %s41, 1
        %s750 = scalar_select %p749, %s41, 1
        %s751 = smul.addr %s750, 8
        %s752 = scalar_lea.vmem %s10, %s751
        %p753 = pneg %p329
        %p754 = pneg %p326
        %p755 = scmp.lt.s32.totalorder %s41, 1
        %s756 = scalar_select %p755, %s41, 1
        %s757 = smul.addr %s756, 256
        %s758 = smul.addr %s757, 4
        %s759 = scalar_lea.vmem %s11, %s758
        %p760 = pneg %p355
        %p761 = pneg %p352
        %s762 = sand.u32 %s36, 1
        %s763 = scalar_lea.sflag [#allocation13], %s762
        %s764 = sand.u32 %s368, 1
        %s765 = smul.addr %s764, 2
        %s766 = scalar_lea.vmem [#allocation14], %s765
        %p767 = pneg %p381
        %p768 = pneg %p378
        %p769 = pneg %p407
        %p770 = pneg %p404
        %s771 = smul.u32 2, %s40
        %p772 = scmp.lt.s32.totalorder %s771, 1
        %s773 = scalar_select %p772, %s771, 1
        %s774 = smul.addr %s773, 6
        %s775 = smul.addr %s774, 8
        %s776 = scalar_lea.vmem %s13, %s775
        %s777 = smul.u32 2, %s40
        %p778 = scmp.lt.s32.totalorder %s777, 1
        %s779 = scalar_select %p778, %s777, 1
        %s780 = smul.addr %s779, 6
        %s781 = smul.addr %s780, 8
        %s782 = scalar_lea.vmem %s0, %s781
        %s783 = smul.u32 2, %s40
        %p784 = scmp.lt.s32.totalorder %s41, 1
        %s785 = scalar_select %p784, %s41, 1
        %s786 = smul.addr %s785, 2
        %s787 = scalar_lea.vmem %s1, %s786
        %p788 = scmp.lt.s32.totalorder %s41, 1
        %s789 = scalar_select %p788, %s41, 1
        %s790 = smul.addr %s789, 6
        %s791 = scalar_lea.vmem %s4, %s790
        %p792 = scmp.lt.s32.totalorder %s41, 1
        %s793 = scalar_select %p792, %s41, 1
        %s794 = smul.addr %s793, 256
        %s795 = smul.addr %s794, 4
        %s796 = scalar_lea.vmem %s9, %s795
        %p797 = scmp.lt.s32.totalorder %s41, 1
        %s798 = scalar_select %p797, %s41, 1
        %s799 = smul.addr %s798, 8
        %s800 = scalar_lea.vmem %s10, %s799
        %p801 = scmp.lt.s32.totalorder %s41, 1
        %s802 = scalar_select %p801, %s41, 1
        %s803 = smul.addr %s802, 256
        %s804 = smul.addr %s803, 4
        %s805 = scalar_lea.vmem %s11, %s804
        %s806 = smul.u32 2, %s40
        %p807 = scmp.lt.s32.totalorder %s806, 1
        %s808 = scalar_select %p807, %s806, 1
        %s809 = smul.addr %s808, 6
        %s810 = smul.addr %s809, 8
        %s811 = scalar_lea.vmem %s13, %s810
        %s812 = smul.u32 2, %s40
        %p814 = scmp.eq.s32.totalorder %s41, 0
        // Predicated region
        $region101: #{vit_forward.4} parent=71 // pred_check
          %p815 = pneg %p814
        $region102: #{vit_forward.4} parent=71 // pred_check_branch
          %817 = sbr.rel (%p815) target = $region104
        $region103: #{vit_forward.4} parent=71 // pred_region
          %v818 = vld [vmem:[%s782] sm:$0xff]
          %v819 = vld [vmem:[%s782 + $0x8] sm:$0xff]
          %v820 = vld [vmem:[%s782 + $0x10] sm:$0xff]
          %v821 = vld [vmem:[%s782 + $0x18] sm:$0xff]
          %v822 = vld [vmem:[%s782 + $0x20] sm:$0xff]
          %v823 = vld [vmem:[%s782 + $0x28] sm:$0xff]
          %v824 = vld [vmem:[%s782 + $0x30] sm:$0xff]
          %v825 = vld [vmem:[%s782 + $0x38] sm:$0xff]
          %v826 = vld [vmem:[%s782 + $0x40] sm:$0xff]
          %v827 = vld [vmem:[%s782 + $0x48] sm:$0xff]
          %v828 = vld [vmem:[%s782 + $0x50] sm:$0xff]
          %v829 = vld [vmem:[%s782 + $0x58] sm:$0xff]
          %830 = vst [vmem:[#allocation2] sm:$0xff] %v818
          %831 = vst [vmem:[#allocation2 + $0x8] sm:$0xff] %v819
          %832 = vst [vmem:[#allocation2 + $0x10] sm:$0xff] %v820
          %833 = vst [vmem:[#allocation2 + $0x18] sm:$0xff] %v821
          %834 = vst [vmem:[#allocation2 + $0x20] sm:$0xff] %v822
          %835 = vst [vmem:[#allocation2 + $0x28] sm:$0xff] %v823
          %836 = vst [vmem:[#allocation2 + $0x30] sm:$0xff] %v824
          %837 = vst [vmem:[#allocation2 + $0x38] sm:$0xff] %v825
          %838 = vst [vmem:[#allocation2 + $0x40] sm:$0xff] %v826
          %839 = vst [vmem:[#allocation2 + $0x48] sm:$0xff] %v827
          %840 = vst [vmem:[#allocation2 + $0x50] sm:$0xff] %v828
          %841 = vst [vmem:[#allocation2 + $0x58] sm:$0xff] %v829
        $region104: #{vit_forward.4} parent=71 // pred_fallthru
          _
        %v842 = vld [vmem:[#allocation2] sm:$0xff]
        %v843 = vld [vmem:[#allocation2 + $0x8] sm:$0xff]
        %v844 = vld [vmem:[#allocation2 + $0x10] sm:$0xff]
        %v845 = vld [vmem:[#allocation2 + $0x18] sm:$0xff]
        %v846 = vld [vmem:[#allocation2 + $0x20] sm:$0xff]
        %v847 = vld [vmem:[#allocation2 + $0x28] sm:$0xff]
        %v848 = vld [vmem:[#allocation2 + $0x30] sm:$0xff]
        %v849 = vld [vmem:[#allocation2 + $0x38] sm:$0xff]
        %v850 = vld [vmem:[#allocation2 + $0x40] sm:$0xff]
        %v851 = vld [vmem:[#allocation2 + $0x48] sm:$0xff]
        %v852 = vld [vmem:[#allocation2 + $0x50] sm:$0xff]
        %v853 = vld [vmem:[#allocation2 + $0x58] sm:$0xff]
        %v854 = vld [vmem:[%s787] sm:$0x3]
        %v855 = vld [vmem:[%s621] sm:$0x3]
        %v856 = vadd.f32 %v842, %v843
        %857 = vadd.xlane.f32.xlu0 %v856
        %v858 = vpop.xlane.xlu0 %857
        %v859 = vadd.f32 %v844, %v845
        %860 = vadd.xlane.f32.xlu0 %v859
        %v861 = vpop.xlane.xlu0 %860
        %v862 = vadd.f32 %v846, %v847
        %863 = vadd.xlane.f32.xlu0 %v862
        %v864 = vpop.xlane.xlu0 %863
        %v865 = vadd.f32 %v848, %v849
        %866 = vadd.xlane.f32.xlu0 %v865
        %v867 = vpop.xlane.xlu0 %866
        %v868 = vadd.f32 %v850, %v851
        %869 = vadd.xlane.f32.xlu0 %v868
        %v870 = vpop.xlane.xlu0 %869
        %v871 = vadd.f32 %v852, %v853
        %872 = vadd.xlane.f32.xlu0 %v871
        %v873 = vpop.xlane.xlu0 %872
        %v874 = vrcp.pop 256.0
        %v875 = vmul.f32 %v858, %v874
        %v876 = vmul.f32 %v861, %v874
        %v877 = vmul.f32 %v864, %v874
        %v878 = vmul.f32 %v867, %v874
        %v879 = vmul.f32 %v870, %v874
        %v880 = vmul.f32 %v873, %v874
        %v881 = vsub.f32 %v842, %v875
        %v882 = vsub.f32 %v843, %v875
        %v883 = vsub.f32 %v844, %v876
        %v884 = vsub.f32 %v845, %v876
        %v885 = vsub.f32 %v846, %v877
        %v886 = vsub.f32 %v847, %v877
        %v887 = vsub.f32 %v848, %v878
        %v888 = vsub.f32 %v849, %v878
        %v889 = vsub.f32 %v850, %v879
        %v890 = vsub.f32 %v851, %v879
        %v891 = vsub.f32 %v852, %v880
        %v892 = vsub.f32 %v853, %v880
        %v893 = vmul.f32 %v881, %v881
        %v894 = vmul.f32 %v882, %v882
        %v895 = vmul.f32 %v883, %v883
        %v896 = vmul.f32 %v884, %v884
        %v897 = vmul.f32 %v885, %v885
        %v898 = vmul.f32 %v886, %v886
        %v899 = vmul.f32 %v887, %v887
        %v900 = vmul.f32 %v888, %v888
        %v901 = vmul.f32 %v889, %v889
        %v902 = vmul.f32 %v890, %v890
        %v903 = vmul.f32 %v891, %v891
        %v904 = vmul.f32 %v892, %v892
        %v905 = vadd.f32 %v893, %v894
        %906 = vadd.xlane.f32.xlu0 %v905
        %v907 = vpop.xlane.xlu0 %906
        %v908 = vadd.f32 %v895, %v896
        %909 = vadd.xlane.f32.xlu0 %v908
        %v910 = vpop.xlane.xlu0 %909
        %v911 = vadd.f32 %v897, %v898
        %912 = vadd.xlane.f32.xlu0 %v911
        %v913 = vpop.xlane.xlu0 %912
        %v914 = vadd.f32 %v899, %v900
        %915 = vadd.xlane.f32.xlu0 %v914
        %v916 = vpop.xlane.xlu0 %915
        %v917 = vadd.f32 %v901, %v902
        %918 = vadd.xlane.f32.xlu0 %v917
        %v919 = vpop.xlane.xlu0 %918
        %v920 = vadd.f32 %v903, %v904
        %921 = vadd.xlane.f32.xlu0 %v920
        %v922 = vpop.xlane.xlu0 %921
        %v923 = vmul.f32 %v907, %v874
        %v924 = vmul.f32 %v910, %v874
        %v925 = vmul.f32 %v913, %v874
        %v926 = vmul.f32 %v916, %v874
        %v927 = vmul.f32 %v919, %v874
        %v928 = vmul.f32 %v922, %v874
        %v929 = vadd.f32 %v923, 1e-06
        %v930 = vadd.f32 %v924, 1e-06
        %v931 = vadd.f32 %v925, 1e-06
        %v932 = vadd.f32 %v926, 1e-06
        %v933 = vadd.f32 %v927, 1e-06
        %v934 = vadd.f32 %v928, 1e-06
        %v935 = vrsqrt.pop %v929
        %v936 = vrsqrt.pop %v930
        %v937 = vrsqrt.pop %v931
        %v938 = vrsqrt.pop %v932
        %v939 = vrsqrt.pop %v933
        %v940 = vrsqrt.pop %v934
        %v941 = vmul.f32 %v881, %v935
        %v942 = vmul.f32 %v882, %v935
        %v943 = vmul.f32 %v883, %v936
        %v944 = vmul.f32 %v884, %v936
        %v945 = vmul.f32 %v885, %v937
        %v946 = vmul.f32 %v886, %v937
        %v947 = vmul.f32 %v887, %v938
        %v948 = vmul.f32 %v888, %v938
        %v949 = vmul.f32 %v889, %v939
        %v950 = vmul.f32 %v890, %v939
        %v951 = vmul.f32 %v891, %v940
        %v952 = vmul.f32 %v892, %v940
        %v954 = vlaneseq
        %v955 = vshrl.u32 %v954, 7
        %v956 = vsub.s32 0, %v955
        %v957 = vrot.slane %v854, %v956
        %v958 = vlaneseq
        %v959 = vshrl.u32 %v958, 7
        %v960 = vsub.s32 1, %v959
        %v961 = vrot.slane %v854, %v960
        %v964 = vmul.f32 %v941, %v957
        %v965 = vmul.f32 %v942, %v961
        %v966 = vmul.f32 %v943, %v957
        %v967 = vmul.f32 %v944, %v961
        %v968 = vmul.f32 %v945, %v957
        %v969 = vmul.f32 %v946, %v961
        %v970 = vmul.f32 %v947, %v957
        %v971 = vmul.f32 %v948, %v961
        %v972 = vmul.f32 %v949, %v957
        %v973 = vmul.f32 %v950, %v961
        %v974 = vmul.f32 %v951, %v957
        %v975 = vmul.f32 %v952, %v961
        %v977 = vlaneseq
        %v978 = vshrl.u32 %v977, 7
        %v979 = vsub.s32 0, %v978
        %v980 = vrot.slane %v855, %v979
        %v981 = vlaneseq
        %v982 = vshrl.u32 %v981, 7
        %v983 = vsub.s32 1, %v982
        %v984 = vrot.slane %v855, %v983
        %v987 = vadd.f32 %v964, %v980
        %v988 = vadd.f32 %v965, %v984
        %v989 = vadd.f32 %v966, %v980
        %v990 = vadd.f32 %v967, %v984
        %v991 = vadd.f32 %v968, %v980
        %v992 = vadd.f32 %v969, %v984
        %v993 = vadd.f32 %v970, %v980
        %v994 = vadd.f32 %v971, %v984
        %v995 = vadd.f32 %v972, %v980
        %v996 = vadd.f32 %v973, %v984
        %v997 = vadd.f32 %v974, %v980
        %v998 = vadd.f32 %v975, %v984
        %v999 = vpack.c.bf16 %v989, %v987
        %v1000 = vpack.c.bf16 %v990, %v988
        %v1001 = vpack.c.bf16 %v993, %v991
        %v1002 = vpack.c.bf16 %v994, %v992
        %v1003 = vpack.c.bf16 %v997, %v995
        %v1004 = vpack.c.bf16 %v998, %v996
        %v1005 = vld [vmem:[%s630] sm:$0xff]
        %v1006 = vld [vmem:[%s630 + $0x8] sm:$0xff]
        %v1007 = vld [vmem:[%s630 + $0x10] sm:$0xff]
        %v1008 = vld [vmem:[%s630 + $0x18] sm:$0xff]
        %v1009 = vld [vmem:[%s630 + $0x20] sm:$0xff]
        %v1010 = vld [vmem:[%s630 + $0x28] sm:$0xff]
        %v1011 = vld [vmem:[%s630 + $0x30] sm:$0xff]
        %v1012 = vld [vmem:[%s630 + $0x38] sm:$0xff]
        %v1013 = vld [vmem:[%s630 + $0x40] sm:$0xff]
        %v1014 = vld [vmem:[%s630 + $0x48] sm:$0xff]
        %v1015 = vld [vmem:[%s630 + $0x50] sm:$0xff]
        %v1016 = vld [vmem:[%s630 + $0x58] sm:$0xff]
        %v1017 = vld [vmem:[%s630 + $0x60] sm:$0xff]
        %v1018 = vld [vmem:[%s630 + $0x68] sm:$0xff]
        %v1019 = vld [vmem:[%s630 + $0x70] sm:$0xff]
        %v1020 = vld [vmem:[%s630 + $0x78] sm:$0xff]
        %v1021 = vld [vmem:[%s630 + $0x80] sm:$0xff]
        %v1022 = vld [vmem:[%s630 + $0x88] sm:$0xff]
        %v1023 = vld [vmem:[%s630 + $0x90] sm:$0xff]
        %v1024 = vld [vmem:[%s630 + $0x98] sm:$0xff]
        %v1025 = vld [vmem:[%s630 + $0xa0] sm:$0xff]
        %v1026 = vld [vmem:[%s630 + $0xa8] sm:$0xff]
        %v1027 = vld [vmem:[%s630 + $0xb0] sm:$0xff]
        %v1028 = vld [vmem:[%s630 + $0xb8] sm:$0xff]
        %v1029 = vld [vmem:[%s630 + $0xc0] sm:$0xff]
        %v1030 = vld [vmem:[%s630 + $0xc8] sm:$0xff]
        %v1031 = vld [vmem:[%s630 + $0xd0] sm:$0xff]
        %v1032 = vld [vmem:[%s630 + $0xd8] sm:$0xff]
        %v1033 = vld [vmem:[%s630 + $0xe0] sm:$0xff]
        %v1034 = vld [vmem:[%s630 + $0xe8] sm:$0xff]
        %v1035 = vld [vmem:[%s630 + $0xf0] sm:$0xff]
        %v1036 = vld [vmem:[%s630 + $0xf8] sm:$0xff]
        %v1037 = vld [vmem:[%s630 + $0x100] sm:$0xff]
        %v1038 = vld [vmem:[%s630 + $0x108] sm:$0xff]
        %v1039 = vld [vmem:[%s630 + $0x110] sm:$0xff]
        %v1040 = vld [vmem:[%s630 + $0x118] sm:$0xff]
        %v1041 = vld [vmem:[%s630 + $0x120] sm:$0xff]
        %v1042 = vld [vmem:[%s630 + $0x128] sm:$0xff]
        %v1043 = vld [vmem:[%s630 + $0x130] sm:$0xff]
        %v1044 = vld [vmem:[%s630 + $0x138] sm:$0xff]
        %v1045 = vld [vmem:[%s630 + $0x140] sm:$0xff]
        %v1046 = vld [vmem:[%s630 + $0x148] sm:$0xff]
        %v1047 = vld [vmem:[%s630 + $0x150] sm:$0xff]
        %v1048 = vld [vmem:[%s630 + $0x158] sm:$0xff]
        %v1049 = vld [vmem:[%s630 + $0x160] sm:$0xff]
        %v1050 = vld [vmem:[%s630 + $0x168] sm:$0xff]
        %v1051 = vld [vmem:[%s630 + $0x170] sm:$0xff]
        %v1052 = vld [vmem:[%s630 + $0x178] sm:$0xff]
        %v1053 = vld [vmem:[%s630 + $0x180] sm:$0xff]
        %v1054 = vld [vmem:[%s630 + $0x188] sm:$0xff]
        %v1055 = vld [vmem:[%s630 + $0x190] sm:$0xff]
        %v1056 = vld [vmem:[%s630 + $0x198] sm:$0xff]
        %v1057 = vld [vmem:[%s630 + $0x1a0] sm:$0xff]
        %v1058 = vld [vmem:[%s630 + $0x1a8] sm:$0xff]
        %v1059 = vld [vmem:[%s630 + $0x1b0] sm:$0xff]
        %v1060 = vld [vmem:[%s630 + $0x1b8] sm:$0xff]
        %v1061 = vld [vmem:[%s630 + $0x1c0] sm:$0xff]
        %v1062 = vld [vmem:[%s630 + $0x1c8] sm:$0xff]
        %v1063 = vld [vmem:[%s630 + $0x1d0] sm:$0xff]
        %v1064 = vld [vmem:[%s630 + $0x1d8] sm:$0xff]
        %v1065 = vld [vmem:[%s630 + $0x1e0] sm:$0xff]
        %v1066 = vld [vmem:[%s630 + $0x1e8] sm:$0xff]
        %v1067 = vld [vmem:[%s630 + $0x1f0] sm:$0xff]
        %v1068 = vld [vmem:[%s630 + $0x1f8] sm:$0xff]
        %v1069 = vld [vmem:[%s630 + $0x200] sm:$0xff]
        %v1070 = vld [vmem:[%s630 + $0x208] sm:$0xff]
        %v1071 = vld [vmem:[%s630 + $0x210] sm:$0xff]
        %v1072 = vld [vmem:[%s630 + $0x218] sm:$0xff]
        %v1073 = vld [vmem:[%s630 + $0x220] sm:$0xff]
        %v1074 = vld [vmem:[%s630 + $0x228] sm:$0xff]
        %v1075 = vld [vmem:[%s630 + $0x230] sm:$0xff]
        %v1076 = vld [vmem:[%s630 + $0x238] sm:$0xff]
        %v1077 = vld [vmem:[%s630 + $0x240] sm:$0xff]
        %v1078 = vld [vmem:[%s630 + $0x248] sm:$0xff]
        %v1079 = vld [vmem:[%s630 + $0x250] sm:$0xff]
        %v1080 = vld [vmem:[%s630 + $0x258] sm:$0xff]
        %v1081 = vld [vmem:[%s630 + $0x260] sm:$0xff]
        %v1082 = vld [vmem:[%s630 + $0x268] sm:$0xff]
        %v1083 = vld [vmem:[%s630 + $0x270] sm:$0xff]
        %v1084 = vld [vmem:[%s630 + $0x278] sm:$0xff]
        %v1085 = vld [vmem:[%s630 + $0x280] sm:$0xff]
        %v1086 = vld [vmem:[%s630 + $0x288] sm:$0xff]
        %v1087 = vld [vmem:[%s630 + $0x290] sm:$0xff]
        %v1088 = vld [vmem:[%s630 + $0x298] sm:$0xff]
        %v1089 = vld [vmem:[%s630 + $0x2a0] sm:$0xff]
        %v1090 = vld [vmem:[%s630 + $0x2a8] sm:$0xff]
        %v1091 = vld [vmem:[%s630 + $0x2b0] sm:$0xff]
        %v1092 = vld [vmem:[%s630 + $0x2b8] sm:$0xff]
        %v1093 = vld [vmem:[%s630 + $0x2c0] sm:$0xff]
        %v1094 = vld [vmem:[%s630 + $0x2c8] sm:$0xff]
        %v1095 = vld [vmem:[%s630 + $0x2d0] sm:$0xff]
        %v1096 = vld [vmem:[%s630 + $0x2d8] sm:$0xff]
        %v1097 = vld [vmem:[%s630 + $0x2e0] sm:$0xff]
        %v1098 = vld [vmem:[%s630 + $0x2e8] sm:$0xff]
        %v1099 = vld [vmem:[%s630 + $0x2f0] sm:$0xff]
        %v1100 = vld [vmem:[%s630 + $0x2f8] sm:$0xff]
        %v1101 = vld [vmem:[%s791] sm:$0x3f]
        %v1103 = vlaneseq
        %v1104 = vshrl.u32 %v1103, 7
        %v1105 = vsub.s32 0, %v1104
        %v1106 = vrot.slane %v1101, %v1105
        %v1107 = vlaneseq
        %v1108 = vshrl.u32 %v1107, 7
        %v1109 = vsub.s32 1, %v1108
        %v1110 = vrot.slane %v1101, %v1109
        %v1111 = vlaneseq
        %v1112 = vshrl.u32 %v1111, 7
        %v1113 = vsub.s32 2, %v1112
        %v1114 = vrot.slane %v1101, %v1113
        %v1115 = vlaneseq
        %v1116 = vshrl.u32 %v1115, 7
        %v1117 = vsub.s32 3, %v1116
        %v1118 = vrot.slane %v1101, %v1117
        %v1119 = vlaneseq
        %v1120 = vshrl.u32 %v1119, 7
        %v1121 = vsub.s32 4, %v1120
        %v1122 = vrot.slane %v1101, %v1121
        %v1123 = vlaneseq
        %v1124 = vshrl.u32 %v1123, 7
        %v1125 = vsub.s32 5, %v1124
        %v1126 = vrot.slane %v1101, %v1125
        %v1229 = vunpack.c.l.b16 %v1005
        %v1230 = vunpack.c.h.b16 %v1005
        %v1231 = vunpack.c.l.b16 %v1006
        %v1232 = vunpack.c.h.b16 %v1006
        %v1233 = vunpack.c.l.b16 %v1007
        %v1234 = vunpack.c.h.b16 %v1007
        %v1235 = vunpack.c.l.b16 %v1008
        %v1236 = vunpack.c.h.b16 %v1008
        %v1237 = vunpack.c.l.b16 %v1009
        %v1238 = vunpack.c.h.b16 %v1009
        %v1239 = vunpack.c.l.b16 %v1010
        %v1240 = vunpack.c.h.b16 %v1010
        %v1241 = vunpack.c.l.b16 %v1011
        %v1242 = vunpack.c.h.b16 %v1011
        %v1243 = vunpack.c.l.b16 %v1012
        %v1244 = vunpack.c.h.b16 %v1012
        %v1245 = vunpack.c.l.b16 %v1013
        %v1246 = vunpack.c.h.b16 %v1013
        %v1247 = vunpack.c.l.b16 %v1014
        %v1248 = vunpack.c.h.b16 %v1014
        %v1249 = vunpack.c.l.b16 %v1015
        %v1250 = vunpack.c.h.b16 %v1015
        %v1251 = vunpack.c.l.b16 %v1016
        %v1252 = vunpack.c.h.b16 %v1016
        %v1253 = vunpack.c.l.b16 %v1017
        %v1254 = vunpack.c.h.b16 %v1017
        %v1255 = vunpack.c.l.b16 %v1018
        %v1256 = vunpack.c.h.b16 %v1018
        %v1257 = vunpack.c.l.b16 %v1019
        %v1258 = vunpack.c.h.b16 %v1019
        %v1259 = vunpack.c.l.b16 %v1020
        %v1260 = vunpack.c.h.b16 %v1020
        %v1261 = vunpack.c.l.b16 %v1021
        %v1262 = vunpack.c.h.b16 %v1021
        %v1263 = vunpack.c.l.b16 %v1022
        %v1264 = vunpack.c.h.b16 %v1022
        %v1265 = vunpack.c.l.b16 %v1023
        %v1266 = vunpack.c.h.b16 %v1023
        %v1267 = vunpack.c.l.b16 %v1024
        %v1268 = vunpack.c.h.b16 %v1024
        %v1269 = vunpack.c.l.b16 %v1025
        %v1270 = vunpack.c.h.b16 %v1025
        %v1271 = vunpack.c.l.b16 %v1026
        %v1272 = vunpack.c.h.b16 %v1026
        %v1273 = vunpack.c.l.b16 %v1027
        %v1274 = vunpack.c.h.b16 %v1027
        %v1275 = vunpack.c.l.b16 %v1028
        %v1276 = vunpack.c.h.b16 %v1028
        %v1277 = vunpack.c.l.b16 %v1029
        %v1278 = vunpack.c.h.b16 %v1029
        %v1279 = vunpack.c.l.b16 %v1030
        %v1280 = vunpack.c.h.b16 %v1030
        %v1281 = vunpack.c.l.b16 %v1031
        %v1282 = vunpack.c.h.b16 %v1031
        %v1283 = vunpack.c.l.b16 %v1032
        %v1284 = vunpack.c.h.b16 %v1032
        %v1285 = vunpack.c.l.b16 %v1033
        %v1286 = vunpack.c.h.b16 %v1033
        %v1287 = vunpack.c.l.b16 %v1034
        %v1288 = vunpack.c.h.b16 %v1034
        %v1289 = vunpack.c.l.b16 %v1035
        %v1290 = vunpack.c.h.b16 %v1035
        %v1291 = vunpack.c.l.b16 %v1036
        %v1292 = vunpack.c.h.b16 %v1036
        %v1293 = vunpack.c.l.b16 %v1037
        %v1294 = vunpack.c.h.b16 %v1037
        %v1295 = vunpack.c.l.b16 %v1038
        %v1296 = vunpack.c.h.b16 %v1038
        %v1297 = vunpack.c.l.b16 %v1039
        %v1298 = vunpack.c.h.b16 %v1039
        %v1299 = vunpack.c.l.b16 %v1040
        %v1300 = vunpack.c.h.b16 %v1040
        %v1301 = vunpack.c.l.b16 %v1041
        %v1302 = vunpack.c.h.b16 %v1041
        %v1303 = vunpack.c.l.b16 %v1042
        %v1304 = vunpack.c.h.b16 %v1042
        %v1305 = vunpack.c.l.b16 %v1043
        %v1306 = vunpack.c.h.b16 %v1043
        %v1307 = vunpack.c.l.b16 %v1044
        %v1308 = vunpack.c.h.b16 %v1044
        %v1309 = vunpack.c.l.b16 %v1045
        %v1310 = vunpack.c.h.b16 %v1045
        %v1311 = vunpack.c.l.b16 %v1046
        %v1312 = vunpack.c.h.b16 %v1046
        %v1313 = vunpack.c.l.b16 %v1047
        %v1314 = vunpack.c.h.b16 %v1047
        %v1315 = vunpack.c.l.b16 %v1048
        %v1316 = vunpack.c.h.b16 %v1048
        %v1317 = vunpack.c.l.b16 %v1049
        %v1318 = vunpack.c.h.b16 %v1049
        %v1319 = vunpack.c.l.b16 %v1050
        %v1320 = vunpack.c.h.b16 %v1050
        %v1321 = vunpack.c.l.b16 %v1051
        %v1322 = vunpack.c.h.b16 %v1051
        %v1323 = vunpack.c.l.b16 %v1052
        %v1324 = vunpack.c.h.b16 %v1052
        %v1325 = vunpack.c.l.b16 %v1053
        %v1326 = vunpack.c.h.b16 %v1053
        %v1327 = vunpack.c.l.b16 %v1054
        %v1328 = vunpack.c.h.b16 %v1054
        %v1329 = vunpack.c.l.b16 %v1055
        %v1330 = vunpack.c.h.b16 %v1055
        %v1331 = vunpack.c.l.b16 %v1056
        %v1332 = vunpack.c.h.b16 %v1056
        %v1333 = vunpack.c.l.b16 %v1057
        %v1334 = vunpack.c.h.b16 %v1057
        %v1335 = vunpack.c.l.b16 %v1058
        %v1336 = vunpack.c.h.b16 %v1058
        %v1337 = vunpack.c.l.b16 %v1059
        %v1338 = vunpack.c.h.b16 %v1059
        %v1339 = vunpack.c.l.b16 %v1060
        %v1340 = vunpack.c.h.b16 %v1060
        %v1341 = vunpack.c.l.b16 %v1061
        %v1342 = vunpack.c.h.b16 %v1061
        %v1343 = vunpack.c.l.b16 %v1062
        %v1344 = vunpack.c.h.b16 %v1062
        %v1345 = vunpack.c.l.b16 %v1063
        %v1346 = vunpack.c.h.b16 %v1063
        %v1347 = vunpack.c.l.b16 %v1064
        %v1348 = vunpack.c.h.b16 %v1064
        %v1349 = vunpack.c.l.b16 %v1065
        %v1350 = vunpack.c.h.b16 %v1065
        %v1351 = vunpack.c.l.b16 %v1066
        %v1352 = vunpack.c.h.b16 %v1066
        %v1353 = vunpack.c.l.b16 %v1067
        %v1354 = vunpack.c.h.b16 %v1067
        %v1355 = vunpack.c.l.b16 %v1068
        %v1356 = vunpack.c.h.b16 %v1068
        %v1357 = vunpack.c.l.b16 %v1069
        %v1358 = vunpack.c.h.b16 %v1069
        %v1359 = vunpack.c.l.b16 %v1070
        %v1360 = vunpack.c.h.b16 %v1070
        %v1361 = vunpack.c.l.b16 %v1071
        %v1362 = vunpack.c.h.b16 %v1071
        %v1363 = vunpack.c.l.b16 %v1072
        %v1364 = vunpack.c.h.b16 %v1072
        %v1365 = vunpack.c.l.b16 %v1073
        %v1366 = vunpack.c.h.b16 %v1073
        %v1367 = vunpack.c.l.b16 %v1074
        %v1368 = vunpack.c.h.b16 %v1074
        %v1369 = vunpack.c.l.b16 %v1075
        %v1370 = vunpack.c.h.b16 %v1075
        %v1371 = vunpack.c.l.b16 %v1076
        %v1372 = vunpack.c.h.b16 %v1076
        %v1373 = vunpack.c.l.b16 %v1077
        %v1374 = vunpack.c.h.b16 %v1077
        %v1375 = vunpack.c.l.b16 %v1078
        %v1376 = vunpack.c.h.b16 %v1078
        %v1377 = vunpack.c.l.b16 %v1079
        %v1378 = vunpack.c.h.b16 %v1079
        %v1379 = vunpack.c.l.b16 %v1080
        %v1380 = vunpack.c.h.b16 %v1080
        %v1381 = vunpack.c.l.b16 %v1081
        %v1382 = vunpack.c.h.b16 %v1081
        %v1383 = vunpack.c.l.b16 %v1082
        %v1384 = vunpack.c.h.b16 %v1082
        %v1385 = vunpack.c.l.b16 %v1083
        %v1386 = vunpack.c.h.b16 %v1083
        %v1387 = vunpack.c.l.b16 %v1084
        %v1388 = vunpack.c.h.b16 %v1084
        %v1389 = vunpack.c.l.b16 %v1085
        %v1390 = vunpack.c.h.b16 %v1085
        %v1391 = vunpack.c.l.b16 %v1086
        %v1392 = vunpack.c.h.b16 %v1086
        %v1393 = vunpack.c.l.b16 %v1087
        %v1394 = vunpack.c.h.b16 %v1087
        %v1395 = vunpack.c.l.b16 %v1088
        %v1396 = vunpack.c.h.b16 %v1088
        %v1397 = vunpack.c.l.b16 %v1089
        %v1398 = vunpack.c.h.b16 %v1089
        %v1399 = vunpack.c.l.b16 %v1090
        %v1400 = vunpack.c.h.b16 %v1090
        %v1401 = vunpack.c.l.b16 %v1091
        %v1402 = vunpack.c.h.b16 %v1091
        %v1403 = vunpack.c.l.b16 %v1092
        %v1404 = vunpack.c.h.b16 %v1092
        %v1405 = vunpack.c.l.b16 %v1093
        %v1406 = vunpack.c.h.b16 %v1093
        %v1407 = vunpack.c.l.b16 %v1094
        %v1408 = vunpack.c.h.b16 %v1094
        %v1409 = vunpack.c.l.b16 %v1095
        %v1410 = vunpack.c.h.b16 %v1095
        %v1411 = vunpack.c.l.b16 %v1096
        %v1412 = vunpack.c.h.b16 %v1096
        %v1413 = vunpack.c.l.b16 %v1097
        %v1414 = vunpack.c.h.b16 %v1097
        %v1415 = vunpack.c.l.b16 %v1098
        %v1416 = vunpack.c.h.b16 %v1098
        %v1417 = vunpack.c.l.b16 %v1099
        %v1418 = vunpack.c.h.b16 %v1099
        %v1419 = vunpack.c.l.b16 %v1100
        %v1420 = vunpack.c.h.b16 %v1100
        %v1421 = vpack.c.b16 %v1235, %v1229
        %v1422 = vpack.c.b16 %v1236, %v1230
        %v1423 = vpack.c.b16 %v1237, %v1231
        %v1424 = vpack.c.b16 %v1238, %v1232
        %v1425 = vpack.c.b16 %v1239, %v1233
        %v1426 = vpack.c.b16 %v1240, %v1234
        %v1427 = vpack.c.b16 %v1247, %v1241
        %v1428 = vpack.c.b16 %v1248, %v1242
        %v1429 = vpack.c.b16 %v1249, %v1243
        %v1430 = vpack.c.b16 %v1250, %v1244
        %v1431 = vpack.c.b16 %v1251, %v1245
        %v1432 = vpack.c.b16 %v1252, %v1246
        %v1433 = vpack.c.b16 %v1259, %v1253
        %v1434 = vpack.c.b16 %v1260, %v1254
        %v1435 = vpack.c.b16 %v1261, %v1255
        %v1436 = vpack.c.b16 %v1262, %v1256
        %v1437 = vpack.c.b16 %v1263, %v1257
        %v1438 = vpack.c.b16 %v1264, %v1258
        %v1439 = vpack.c.b16 %v1271, %v1265
        %v1440 = vpack.c.b16 %v1272, %v1266
        %v1441 = vpack.c.b16 %v1273, %v1267
        %v1442 = vpack.c.b16 %v1274, %v1268
        %v1443 = vpack.c.b16 %v1275, %v1269
        %v1444 = vpack.c.b16 %v1276, %v1270
        %v1445 = vpack.c.b16 %v1283, %v1277
        %v1446 = vpack.c.b16 %v1284, %v1278
        %v1447 = vpack.c.b16 %v1285, %v1279
        %v1448 = vpack.c.b16 %v1286, %v1280
        %v1449 = vpack.c.b16 %v1287, %v1281
        %v1450 = vpack.c.b16 %v1288, %v1282
        %v1451 = vpack.c.b16 %v1295, %v1289
        %v1452 = vpack.c.b16 %v1296, %v1290
        %v1453 = vpack.c.b16 %v1297, %v1291
        %v1454 = vpack.c.b16 %v1298, %v1292
        %v1455 = vpack.c.b16 %v1299, %v1293
        %v1456 = vpack.c.b16 %v1300, %v1294
        %v1457 = vpack.c.b16 %v1307, %v1301
        %v1458 = vpack.c.b16 %v1308, %v1302
        %v1459 = vpack.c.b16 %v1309, %v1303
        %v1460 = vpack.c.b16 %v1310, %v1304
        %v1461 = vpack.c.b16 %v1311, %v1305
        %v1462 = vpack.c.b16 %v1312, %v1306
        %v1463 = vpack.c.b16 %v1319, %v1313
        %v1464 = vpack.c.b16 %v1320, %v1314
        %v1465 = vpack.c.b16 %v1321, %v1315
        %v1466 = vpack.c.b16 %v1322, %v1316
        %v1467 = vpack.c.b16 %v1323, %v1317
        %v1468 = vpack.c.b16 %v1324, %v1318
        %v1469 = vpack.c.b16 %v1331, %v1325
        %v1470 = vpack.c.b16 %v1332, %v1326
        %v1471 = vpack.c.b16 %v1333, %v1327
        %v1472 = vpack.c.b16 %v1334, %v1328
        %v1473 = vpack.c.b16 %v1335, %v1329
        %v1474 = vpack.c.b16 %v1336, %v1330
        %v1475 = vpack.c.b16 %v1343, %v1337
        %v1476 = vpack.c.b16 %v1344, %v1338
        %v1477 = vpack.c.b16 %v1345, %v1339
        %v1478 = vpack.c.b16 %v1346, %v1340
        %v1479 = vpack.c.b16 %v1347, %v1341
        %v1480 = vpack.c.b16 %v1348, %v1342
        %v1481 = vpack.c.b16 %v1355, %v1349
        %v1482 = vpack.c.b16 %v1356, %v1350
        %v1483 = vpack.c.b16 %v1357, %v1351
        %v1484 = vpack.c.b16 %v1358, %v1352
        %v1485 = vpack.c.b16 %v1359, %v1353
        %v1486 = vpack.c.b16 %v1360, %v1354
        %v1487 = vpack.c.b16 %v1367, %v1361
        %v1488 = vpack.c.b16 %v1368, %v1362
        %v1489 = vpack.c.b16 %v1369, %v1363
        %v1490 = vpack.c.b16 %v1370, %v1364
        %v1491 = vpack.c.b16 %v1371, %v1365
        %v1492 = vpack.c.b16 %v1372, %v1366
        %v1493 = vpack.c.b16 %v1379, %v1373
        %v1494 = vpack.c.b16 %v1380, %v1374
        %v1495 = vpack.c.b16 %v1381, %v1375
        %v1496 = vpack.c.b16 %v1382, %v1376
        %v1497 = vpack.c.b16 %v1383, %v1377
        %v1498 = vpack.c.b16 %v1384, %v1378
        %v1499 = vpack.c.b16 %v1391, %v1385
        %v1500 = vpack.c.b16 %v1392, %v1386
        %v1501 = vpack.c.b16 %v1393, %v1387
        %v1502 = vpack.c.b16 %v1394, %v1388
        %v1503 = vpack.c.b16 %v1395, %v1389
        %v1504 = vpack.c.b16 %v1396, %v1390
        %v1505 = vpack.c.b16 %v1403, %v1397
        %v1506 = vpack.c.b16 %v1404, %v1398
        %v1507 = vpack.c.b16 %v1405, %v1399
        %v1508 = vpack.c.b16 %v1406, %v1400
        %v1509 = vpack.c.b16 %v1407, %v1401
        %v1510 = vpack.c.b16 %v1408, %v1402
        %v1511 = vpack.c.b16 %v1415, %v1409
        %v1512 = vpack.c.b16 %v1416, %v1410
        %v1513 = vpack.c.b16 %v1417, %v1411
        %v1514 = vpack.c.b16 %v1418, %v1412
        %v1515 = vpack.c.b16 %v1419, %v1413
        %v1516 = vpack.c.b16 %v1420, %v1414
        %1613 = vmatprep.subr.bf16.mxu0 %v1464
        %1614 = vmatpush1.bf16.msra.mxu0 %v1463
        %1615 = vmatprep.subr.bf16.mxu0 %v1458
        %1616 = vmatpush1.bf16.msra.mxu0 %v1457
        %1617 = vmatprep.subr.bf16.mxu0 %v1452
        %1618 = vmatpush1.bf16.msra.mxu0 %v1451
        %1619 = vmatprep.subr.bf16.mxu0 %v1446
        %1620 = vmatpush1.bf16.msra.mxu0 %v1445
        %1621 = vmatprep.subr.bf16.mxu0 %v1440
        %1622 = vmatpush1.bf16.msra.mxu0 %v1439
        %1623 = vmatprep.subr.bf16.mxu0 %v1434
        %1624 = vmatpush1.bf16.msra.mxu0 %v1433
        %1625 = vmatprep.subr.bf16.mxu0 %v1428
        %1626 = vmatpush1.bf16.msra.mxu0 %v1427
        %1627 = vmatprep.subr.bf16.mxu0 %v1422
        %1628 = vmatpush1.bf16.msra.mxu0 %v1421
        %1629 = vmatprep.subr.bf16.mxu0 %v1512
        %1630 = vmatpush2.bf16.msra.mxu0 %v1511
        %1631 = vmatprep.subr.bf16.mxu0 %v1506
        %1632 = vmatpush2.bf16.msra.mxu0 %v1505
        %1633 = vmatprep.subr.bf16.mxu0 %v1500
        %1634 = vmatpush2.bf16.msra.mxu0 %v1499
        %1635 = vmatprep.subr.bf16.mxu0 %v1494
        %1636 = vmatpush2.bf16.msra.mxu0 %v1493
        %1637 = vmatprep.subr.bf16.mxu0 %v1488
        %1638 = vmatpush2.bf16.msra.mxu0 %v1487
        %1639 = vmatprep.subr.bf16.mxu0 %v1482
        %1640 = vmatpush2.bf16.msra.mxu0 %v1481
        %1641 = vmatprep.subr.bf16.mxu0 %v1476
        %1642 = vmatpush2.bf16.msra.mxu0 %v1475
        %1643 = vmatprep.subr.bf16.mxu0 %v1470
        %1644 = vmatpush2.bf16.msra.mxu0 %v1469
        %1645 = vmatprep.mubr.bf16.mxu0 %v1000
        %1646 = vmatmul.mubr.bf16.gmra.mxu0 %v999
        %v1647 = vpop.f32.mrf.mxu0
        %v1648 = vadd.f32 %v1106, %v1647
        %v1649 = vpop.f32.mrf.mxu0
        %v1650 = vadd.f32 %v1110, %v1649
        %v1651 = vpop.f32.mrf.mxu0
        %v1652 = vadd.f32 %v1106, %v1651
        %v1653 = vpop.f32.mrf.mxu0
        %v1654 = vadd.f32 %v1110, %v1653
        %1655 = vmatprep.mubr.bf16.mxu0 %v1002
        %1656 = vmatmul.mubr.bf16.gmra.mxu0 %v1001
        %v1657 = vpop.f32.mrf.mxu0
        %v1658 = vadd.f32 %v1106, %v1657
        %v1659 = vpop.f32.mrf.mxu0
        %v1660 = vadd.f32 %v1110, %v1659
        %v1661 = vpop.f32.mrf.mxu0
        %v1662 = vadd.f32 %v1106, %v1661
        %v1663 = vpop.f32.mrf.mxu0
        %v1664 = vadd.f32 %v1110, %v1663
        %1665 = vmatprep.mubr.bf16.mxu0 %v1004
        %1666 = vmatmul.mubr.bf16.gmra.mxu0 %v1003
        %v1667 = vpop.f32.mrf.mxu0
        %v1668 = vadd.f32 %v1106, %v1667
        %v1669 = vpop.f32.mrf.mxu0
        %v1670 = vadd.f32 %v1110, %v1669
        %v1671 = vpop.f32.mrf.mxu0
        %v1672 = vadd.f32 %v1106, %v1671
        %v1673 = vpop.f32.mrf.mxu0
        %v1674 = vadd.f32 %v1110, %v1673
        %1675 = vdwg.mxu0
        %1676 = vmatprep.subr.bf16.mxu0 %v1466
        %1677 = vmatpush1.bf16.msra.mxu0 %v1465
        %1678 = vmatprep.subr.bf16.mxu0 %v1460
        %1679 = vmatpush1.bf16.msra.mxu0 %v1459
        %1680 = vmatprep.subr.bf16.mxu0 %v1454
        %1681 = vmatpush1.bf16.msra.mxu0 %v1453
        %1682 = vmatprep.subr.bf16.mxu0 %v1448
        %1683 = vmatpush1.bf16.msra.mxu0 %v1447
        %1684 = vmatprep.subr.bf16.mxu0 %v1442
        %1685 = vmatpush1.bf16.msra.mxu0 %v1441
        %1686 = vmatprep.subr.bf16.mxu0 %v1436
        %1687 = vmatpush1.bf16.msra.mxu0 %v1435
        %1688 = vmatprep.subr.bf16.mxu0 %v1430
        %1689 = vmatpush1.bf16.msra.mxu0 %v1429
        %1690 = vmatprep.subr.bf16.mxu0 %v1424
        %1691 = vmatpush1.bf16.msra.mxu0 %v1423
        %1692 = vmatprep.subr.bf16.mxu0 %v1514
        %1693 = vmatpush2.bf16.msra.mxu0 %v1513
        %1694 = vmatprep.subr.bf16.mxu0 %v1508
        %1695 = vmatpush2.bf16.msra.mxu0 %v1507
        %1696 = vmatprep.subr.bf16.mxu0 %v1502
        %1697 = vmatpush2.bf16.msra.mxu0 %v1501
        %1698 = vmatprep.subr.bf16.mxu0 %v1496
        %1699 = vmatpush2.bf16.msra.mxu0 %v1495
        %1700 = vmatprep.subr.bf16.mxu0 %v1490
        %1701 = vmatpush2.bf16.msra.mxu0 %v1489
        %1702 = vmatprep.subr.bf16.mxu0 %v1484
        %1703 = vmatpush2.bf16.msra.mxu0 %v1483
        %1704 = vmatprep.subr.bf16.mxu0 %v1478
        %1705 = vmatpush2.bf16.msra.mxu0 %v1477
        %1706 = vmatprep.subr.bf16.mxu0 %v1472
        %1707 = vmatpush2.bf16.msra.mxu0 %v1471
        %1708 = vmatprep.mubr.bf16.mxu0 %v1000
        %1709 = vmatmul.mubr.bf16.gmra.mxu0 %v999
        %v1710 = vpop.f32.mrf.mxu0
        %v1711 = vadd.f32 %v1114, %v1710
        %v1712 = vpop.f32.mrf.mxu0
        %v1713 = vadd.f32 %v1118, %v1712
        %v1714 = vpop.f32.mrf.mxu0
        %v1715 = vadd.f32 %v1114, %v1714
        %v1716 = vpop.f32.mrf.mxu0
        %v1717 = vadd.f32 %v1118, %v1716
        %1718 = vmatprep.mubr.bf16.mxu0 %v1002
        %1719 = vmatmul.mubr.bf16.gmra.mxu0 %v1001
        %v1720 = vpop.f32.mrf.mxu0
        %v1721 = vadd.f32 %v1114, %v1720
        %v1722 = vpop.f32.mrf.mxu0
        %v1723 = vadd.f32 %v1118, %v1722
        %v1724 = vpop.f32.mrf.mxu0
        %v1725 = vadd.f32 %v1114, %v1724
        %v1726 = vpop.f32.mrf.mxu0
        %v1727 = vadd.f32 %v1118, %v1726
        %1728 = vmatprep.mubr.bf16.mxu0 %v1004
        %1729 = vmatmul.mubr.bf16.gmra.mxu0 %v1003
        %v1730 = vpop.f32.mrf.mxu0
        %v1731 = vadd.f32 %v1114, %v1730
        %v1732 = vpop.f32.mrf.mxu0
        %v1733 = vadd.f32 %v1118, %v1732
        %v1734 = vpop.f32.mrf.mxu0
        %v1735 = vadd.f32 %v1114, %v1734
        %v1736 = vpop.f32.mrf.mxu0
        %v1737 = vadd.f32 %v1118, %v1736
        %1738 = vdwg.mxu0
        %1739 = vmatprep.subr.bf16.mxu0 %v1468
        %1740 = vmatpush1.bf16.msra.mxu0 %v1467
        %1741 = vmatprep.subr.bf16.mxu0 %v1462
        %1742 = vmatpush1.bf16.msra.mxu0 %v1461
        %1743 = vmatprep.subr.bf16.mxu0 %v1456
        %1744 = vmatpush1.bf16.msra.mxu0 %v1455
        %1745 = vmatprep.subr.bf16.mxu0 %v1450
        %1746 = vmatpush1.bf16.msra.mxu0 %v1449
        %1747 = vmatprep.subr.bf16.mxu0 %v1444
        %1748 = vmatpush1.bf16.msra.mxu0 %v1443
        %1749 = vmatprep.subr.bf16.mxu0 %v1438
        %1750 = vmatpush1.bf16.msra.mxu0 %v1437
        %1751 = vmatprep.subr.bf16.mxu0 %v1432
        %1752 = vmatpush1.bf16.msra.mxu0 %v1431
        %1753 = vmatprep.subr.bf16.mxu0 %v1426
        %1754 = vmatpush1.bf16.msra.mxu0 %v1425
        %1755 = vmatprep.subr.bf16.mxu0 %v1516
        %1756 = vmatpush2.bf16.msra.mxu0 %v1515
        %1757 = vmatprep.subr.bf16.mxu0 %v1510
        %1758 = vmatpush2.bf16.msra.mxu0 %v1509
        %1759 = vmatprep.subr.bf16.mxu0 %v1504
        %1760 = vmatpush2.bf16.msra.mxu0 %v1503
        %1761 = vmatprep.subr.bf16.mxu0 %v1498
        %1762 = vmatpush2.bf16.msra.mxu0 %v1497
        %1763 = vmatprep.subr.bf16.mxu0 %v1492
        %1764 = vmatpush2.bf16.msra.mxu0 %v1491
        %1765 = vmatprep.subr.bf16.mxu0 %v1486
        %1766 = vmatpush2.bf16.msra.mxu0 %v1485
        %1767 = vmatprep.subr.bf16.mxu0 %v1480
        %1768 = vmatpush2.bf16.msra.mxu0 %v1479
        %1769 = vmatprep.subr.bf16.mxu0 %v1474
        %1770 = vmatpush2.bf16.msra.mxu0 %v1473
        %1771 = vmatprep.mubr.bf16.mxu0 %v1000
        %1772 = vmatmul.mubr.bf16.gmra.mxu0 %v999
        %v1773 = vpop.f32.mrf.mxu0
        %v1774 = vadd.f32 %v1122, %v1773
        %v1775 = vpop.f32.mrf.mxu0
        %v1776 = vadd.f32 %v1126, %v1775
        %v1777 = vpop.f32.mrf.mxu0
        %v1778 = vadd.f32 %v1122, %v1777
        %v1779 = vpop.f32.mrf.mxu0
        %v1780 = vadd.f32 %v1126, %v1779
        %1781 = vmatprep.mubr.bf16.mxu0 %v1002
        %1782 = vmatmul.mubr.bf16.gmra.mxu0 %v1001
        %v1783 = vpop.f32.mrf.mxu0
        %v1784 = vadd.f32 %v1122, %v1783
        %v1785 = vpop.f32.mrf.mxu0
        %v1786 = vadd.f32 %v1126, %v1785
        %v1787 = vpop.f32.mrf.mxu0
        %v1788 = vadd.f32 %v1122, %v1787
        %v1789 = vpop.f32.mrf.mxu0
        %v1790 = vadd.f32 %v1126, %v1789
        %1791 = vmatprep.mubr.bf16.mxu0 %v1004
        %1792 = vmatmul.mubr.bf16.gmra.mxu0 %v1003
        %v1793 = vpop.f32.mrf.mxu0
        %v1794 = vadd.f32 %v1122, %v1793
        %v1795 = vpop.f32.mrf.mxu0
        %v1796 = vadd.f32 %v1126, %v1795
        %v1797 = vpop.f32.mrf.mxu0
        %v1798 = vadd.f32 %v1122, %v1797
        %v1799 = vpop.f32.mrf.mxu0
        %v1800 = vadd.f32 %v1126, %v1799
        %1801 = vdwg.mxu0
        %v1802 = vpack.c.bf16 %v1652, %v1648
        %v1803 = vpack.c.bf16 %v1654, %v1650
        %v1804 = vpack.c.bf16 %v1658, %v1658
        %v1805 = vpack.c.bf16 %v1660, %v1660
        %v1806 = vpack.c.bf16 %v1668, %v1662
        %v1807 = vpack.c.bf16 %v1670, %v1664
        %v1808 = vpack.c.bf16 %v1672, %v1672
        %v1809 = vpack.c.bf16 %v1674, %v1674
        %v1810 = vpack.c.bf16 %v1715, %v1711
        %v1811 = vpack.c.bf16 %v1717, %v1713
        %v1812 = vpack.c.bf16 %v1721, %v1721
        %v1813 = vpack.c.bf16 %v1723, %v1723
        %v1814 = vpack.c.bf16 %v1731, %v1725
        %v1815 = vpack.c.bf16 %v1733, %v1727
        %v1816 = vpack.c.bf16 %v1735, %v1735
        %v1817 = vpack.c.bf16 %v1737, %v1737
        %v1818 = vpack.c.bf16 %v1778, %v1774
        %v1819 = vpack.c.bf16 %v1780, %v1776
        %v1820 = vpack.c.bf16 %v1784, %v1784
        %v1821 = vpack.c.bf16 %v1786, %v1786
        %v1822 = vpack.c.bf16 %v1794, %v1788
        %v1823 = vpack.c.bf16 %v1796, %v1790
        %v1824 = vpack.c.bf16 %v1798, %v1798
        %v1825 = vpack.c.bf16 %v1800, %v1800
        %v1826 = vlaneseq
        %v1827 = vand.u32 %v1826, 127
        %vm1828 = vcmp.lt.s32.totalorder %v1827, 17
        %v1829 = vsel %vm1828, 0.0, -1e+30
        %vm1830 = vcmask 523264
        %v1832 = vsel %vm1830, %v1802, 0
        %v1835 = vsel %vm1830, %v1804, 0
        %v1838 = vsel %vm1830, %v1810, 0
        %v1841 = vsel %vm1830, %v1812, 0
        %1843 = vmatprep.subr.bf16.mxu0 0
        %1844 = vmatpush1.bf16.xpose.msra.mxu0 0
        %1845 = vmatprep.subr.bf16.mxu0 0
        %1846 = vmatpush1.bf16.xpose.msra.mxu0 0
        %1847 = vmatprep.subr.bf16.mxu0 0
        %1848 = vmatpush1.bf16.xpose.msra.mxu0 0
        %1849 = vmatprep.subr.bf16.mxu0 0
        %1850 = vmatpush1.bf16.xpose.msra.mxu0 0
        %1851 = vmatprep.subr.bf16.mxu0 0
        %1852 = vmatpush1.bf16.xpose.msra.mxu0 0
        %1853 = vmatprep.subr.bf16.mxu0 0
        %1854 = vmatpush1.bf16.xpose.msra.mxu0 0
        %1855 = vmatprep.subr.bf16.mxu0 0
        %1856 = vmatpush1.bf16.xpose.msra.mxu0 %v1841
        %1857 = vmatprep.subr.bf16.mxu0 0
        %1858 = vmatpush1.bf16.xpose.msra.mxu0 %v1838
        %1859 = vmatprep.subr.bf16.mxu0 0
        %1860 = vmatpush2.bf16.xpose.msra.mxu0 0
        %1861 = vmatprep.subr.bf16.mxu0 0
        %1862 = vmatpush2.bf16.xpose.msra.mxu0 0
        %1863 = vmatprep.subr.bf16.mxu0 0
        %1864 = vmatpush2.bf16.xpose.msra.mxu0 0
        %1865 = vmatprep.subr.bf16.mxu0 0
        %1866 = vmatpush2.bf16.xpose.msra.mxu0 0
        %1867 = vmatprep.subr.bf16.mxu0 0
        %1868 = vmatpush2.bf16.xpose.msra.mxu0 0
        %1869 = vmatprep.subr.bf16.mxu0 0
        %1870 = vmatpush2.bf16.xpose.msra.mxu0 0
        %1871 = vmatprep.subr.bf16.mxu0 0
        %1872 = vmatpush2.bf16.xpose.msra.mxu0 0
        %1873 = vmatprep.subr.bf16.mxu0 0
        %1874 = vmatpush2.bf16.xpose.msra.mxu0 0
        %1875 = vmatprep.mubr.bf16.mxu0 0
        %1876 = vmatmul.mubr.bf16.gmra.mxu0 %v1832
        %v1877 = vpop.f32.mrf.mxu0
        %v1878 = vadd.f32 %v1829, %v1877
        %v1879 = vpop.f32.mrf.mxu0
        %v1880 = vpop.f32.mrf.mxu0
        %v1881 = vadd.f32 %v1829, %v1880
        %v1882 = vpop.f32.mrf.mxu0
        %1883 = vmatprep.mubr.bf16.mxu0 0
        %1884 = vmatmul.mubr.bf16.gmra.mxu0 %v1835
        %v1885 = vpop.f32.mrf.mxu0
        %v1886 = vadd.f32 %v1829, %v1885
        %v1887 = vpop.f32.mrf.mxu0
        %v1888 = vpop.f32.mrf.mxu0
        %v1889 = vpop.f32.mrf.mxu0
        %1890 = vdwg.mxu0
        %v1892 = vsel %vm1830, %v1806, 0
        %v1895 = vsel %vm1830, %v1808, 0
        %v1898 = vsel %vm1830, %v1814, 0
        %v1901 = vsel %vm1830, %v1816, 0
        %1903 = vmatprep.subr.bf16.mxu0 0
        %1904 = vmatpush1.bf16.xpose.msra.mxu0 0
        %1905 = vmatprep.subr.bf16.mxu0 0
        %1906 = vmatpush1.bf16.xpose.msra.mxu0 0
        %1907 = vmatprep.subr.bf16.mxu0 0
        %1908 = vmatpush1.bf16.xpose.msra.mxu0 0
        %1909 = vmatprep.subr.bf16.mxu0 0
        %1910 = vmatpush1.bf16.xpose.msra.mxu0 0
        %1911 = vmatprep.subr.bf16.mxu0 0
        %1912 = vmatpush1.bf16.xpose.msra.mxu0 0
        %1913 = vmatprep.subr.bf16.mxu0 0
        %1914 = vmatpush1.bf16.xpose.msra.mxu0 0
        %1915 = vmatprep.subr.bf16.mxu0 0
        %1916 = vmatpush1.bf16.xpose.msra.mxu0 %v1901
        %1917 = vmatprep.subr.bf16.mxu0 0
        %1918 = vmatpush1.bf16.xpose.msra.mxu0 %v1898
        %1919 = vmatprep.subr.bf16.mxu0 0
        %1920 = vmatpush2.bf16.xpose.msra.mxu0 0
        %1921 = vmatprep.subr.bf16.mxu0 0
        %1922 = vmatpush2.bf16.xpose.msra.mxu0 0
        %1923 = vmatprep.subr.bf16.mxu0 0
        %1924 = vmatpush2.bf16.xpose.msra.mxu0 0
        %1925 = vmatprep.subr.bf16.mxu0 0
        %1926 = vmatpush2.bf16.xpose.msra.mxu0 0
        %1927 = vmatprep.subr.bf16.mxu0 0
        %1928 = vmatpush2.bf16.xpose.msra.mxu0 0
        %1929 = vmatprep.subr.bf16.mxu0 0
        %1930 = vmatpush2.bf16.xpose.msra.mxu0 0
        %1931 = vmatprep.subr.bf16.mxu0 0
        %1932 = vmatpush2.bf16.xpose.msra.mxu0 0
        %1933 = vmatprep.subr.bf16.mxu0 0
        %1934 = vmatpush2.bf16.xpose.msra.mxu0 0
        %1935 = vmatprep.mubr.bf16.mxu0 0
        %1936 = vmatmul.mubr.bf16.gmra.mxu0 %v1892
        %v1937 = vpop.f32.mrf.mxu0
        %v1938 = vadd.f32 %v1829, %v1937
        %v1939 = vpop.f32.mrf.mxu0
        %v1940 = vpop.f32.mrf.mxu0
        %v1941 = vadd.f32 %v1829, %v1940
        %v1942 = vpop.f32.mrf.mxu0
        %1943 = vmatprep.mubr.bf16.mxu0 0
        %1944 = vmatmul.mubr.bf16.gmra.mxu0 %v1895
        %v1945 = vpop.f32.mrf.mxu0
        %v1946 = vadd.f32 %v1829, %v1945
        %v1947 = vpop.f32.mrf.mxu0
        %v1948 = vpop.f32.mrf.mxu0
        %v1949 = vpop.f32.mrf.mxu0
        %1950 = vdwg.mxu0
        %vm1951 = vcmask 195584
        %v1952 = vsel %vm1951, %v1878, -inf
        %1953 = vmax.xlane.f32.xlu0 %v1952
        %v1954 = vpop.xlane.xlu0 %1953
        %v1955 = vsel %vm1951, %v1881, -inf
        %1956 = vmax.xlane.f32.xlu0 %v1955
        %v1957 = vpop.xlane.xlu0 %1956
        %v1958 = vsel %vm1951, %v1886, -inf
        %1959 = vmax.xlane.f32.xlu0 %v1958
        %v1960 = vpop.xlane.xlu0 %1959
        %v1961 = vsel %vm1951, %v1938, -inf
        %1962 = vmax.xlane.f32.xlu0 %v1961
        %v1963 = vpop.xlane.xlu0 %1962
        %v1964 = vsel %vm1951, %v1941, -inf
        %1965 = vmax.xlane.f32.xlu0 %v1964
        %v1966 = vpop.xlane.xlu0 %1965
        %v1967 = vsel %vm1951, %v1946, -inf
        %1968 = vmax.xlane.f32.xlu0 %v1967
        %v1969 = vpop.xlane.xlu0 %1968
        %v1970 = vsub.f32 %v1878, %v1954
        %v1971 = vsub.f32 %v1881, %v1957
        %v1972 = vsub.f32 %v1886, %v1960
        %v1973 = vsub.f32 %v1938, %v1963
        %v1974 = vsub.f32 %v1941, %v1966
        %v1975 = vsub.f32 %v1946, %v1969
        %v1976 = vmul.f32 %v1970, 1.442695
        %v1977 = vpow.pop %v1976
        %v1978 = vmul.f32 %v1971, 1.442695
        %v1979 = vpow.pop %v1978
        %v1980 = vmul.f32 %v1972, 1.442695
        %v1981 = vpow.pop %v1980
        %v1982 = vmul.f32 %v1973, 1.442695
        %v1983 = vpow.pop %v1982
        %v1984 = vmul.f32 %v1974, 1.442695
        %v1985 = vpow.pop %v1984
        %v1986 = vmul.f32 %v1975, 1.442695
        %v1987 = vpow.pop %v1986
        %v1988 = vsel %vm1951, %v1977, 0.0
        %1989 = vadd.xlane.f32.xlu0 %v1988
        %v1990 = vpop.xlane.xlu0 %1989
        %v1991 = vsel %vm1951, %v1979, 0.0
        %1992 = vadd.xlane.f32.xlu0 %v1991
        %v1993 = vpop.xlane.xlu0 %1992
        %v1994 = vsel %vm1951, %v1981, 0.0
        %1995 = vadd.xlane.f32.xlu0 %v1994
        %v1996 = vpop.xlane.xlu0 %1995
        %v1997 = vsel %vm1951, %v1983, 0.0
        %1998 = vadd.xlane.f32.xlu0 %v1997
        %v1999 = vpop.xlane.xlu0 %1998
        %v2000 = vsel %vm1951, %v1985, 0.0
        %2001 = vadd.xlane.f32.xlu0 %v2000
        %v2002 = vpop.xlane.xlu0 %2001
        %v2003 = vsel %vm1951, %v1987, 0.0
        %2004 = vadd.xlane.f32.xlu0 %v2003
        %v2005 = vpop.xlane.xlu0 %2004
        %v2006 = vrcp.pop %v1990
        %v2007 = vmul.f32 %v1977, %v2006
        %v2008 = vrcp.pop %v1993
        %v2009 = vmul.f32 %v1979, %v2008
        %v2010 = vrcp.pop %v1996
        %v2011 = vmul.f32 %v1981, %v2010
        %v2012 = vrcp.pop %v1999
        %v2013 = vmul.f32 %v1983, %v2012
        %v2014 = vrcp.pop %v2002
        %v2015 = vmul.f32 %v1985, %v2014
        %v2016 = vrcp.pop %v2005
        %v2017 = vmul.f32 %v1987, %v2016
        %v2018 = vpack.c.bf16 %v2009, %v2007
        %v2019 = vpack.c.bf16 %v2011, %v2011
        %v2020 = vpack.c.bf16 %v2015, %v2013
        %v2021 = vpack.c.bf16 %v2017, %v2017
        %v2023 = vsel %vm1951, %v2018, 0
        %v2026 = vsel %vm1951, %v2019, 0
        %vm2028 = vcmask 1043456
        %v2030 = vsel %vm2028, %v1820, 0
        %2032 = vmatprep.subr.bf16.mxu0 0
        %2033 = vmatpush1.bf16.msra.mxu0 0
        %2034 = vmatprep.subr.bf16.mxu0 0
        %2035 = vmatpush1.bf16.msra.mxu0 0
        %2036 = vmatprep.subr.bf16.mxu0 0
        %2037 = vmatpush1.bf16.msra.mxu0 0
        %2038 = vmatprep.subr.bf16.mxu0 0
        %2039 = vmatpush1.bf16.msra.mxu0 0
        %2040 = vmatprep.subr.bf16.mxu0 0
        %2041 = vmatpush1.bf16.msra.mxu0 0
        %2042 = vmatprep.subr.bf16.mxu0 0
        %2043 = vmatpush1.bf16.msra.mxu0 0
        %2044 = vmatprep.subr.bf16.mxu0 0
        %2045 = vmatpush1.bf16.msra.mxu0 %v2030
        %2046 = vmatprep.subr.bf16.mxu0 0
        %2047 = vmatpush1.bf16.msra.mxu0 %v1818
        %2048 = vmatprep.subr.bf16.mxu0 0
        %2049 = vmatpush2.bf16.msra.mxu0 0
        %2050 = vmatprep.subr.bf16.mxu0 0
        %2051 = vmatpush2.bf16.msra.mxu0 0
        %2052 = vmatprep.subr.bf16.mxu0 0
        %2053 = vmatpush2.bf16.msra.mxu0 0
        %2054 = vmatprep.subr.bf16.mxu0 0
        %2055 = vmatpush2.bf16.msra.mxu0 0
        %2056 = vmatprep.subr.bf16.mxu0 0
        %2057 = vmatpush2.bf16.msra.mxu0 0
        %2058 = vmatprep.subr.bf16.mxu0 0
        %2059 = vmatpush2.bf16.msra.mxu0 0
        %2060 = vmatprep.subr.bf16.mxu0 0
        %2061 = vmatpush2.bf16.msra.mxu0 0
        %2062 = vmatprep.subr.bf16.mxu0 0
        %2063 = vmatpush2.bf16.msra.mxu0 0
        %2064 = vmatprep.mubr.bf16.mxu0 0
        %2065 = vmatmul.mubr.bf16.gmra.mxu0 %v2023
        %v2066 = vpop.f32.mrf.mxu0
        %v2067 = vadd.f32 0.0, %v2066
        %v2068 = vpop.f32.mrf.mxu0
        %v2069 = vpop.f32.mrf.mxu0
        %v2070 = vadd.f32 0.0, %v2069
        %v2071 = vpop.f32.mrf.mxu0
        %2072 = vmatprep.mubr.bf16.mxu0 0
        %2073 = vmatmul.mubr.bf16.gmra.mxu0 %v2026
        %v2074 = vpop.f32.mrf.mxu0
        %v2075 = vadd.f32 0.0, %v2074
        %v2076 = vpop.f32.mrf.mxu0
        %v2077 = vpop.f32.mrf.mxu0
        %v2078 = vpop.f32.mrf.mxu0
        %2079 = vdwg.mxu0
        %v2081 = vsel %vm1951, %v2020, 0
        %v2084 = vsel %vm1951, %v2021, 0
        %v2087 = vsel %vm2028, %v1824, 0
        %2089 = vmatprep.subr.bf16.mxu0 0
        %2090 = vmatpush1.bf16.msra.mxu0 0
        %2091 = vmatprep.subr.bf16.mxu0 0
        %2092 = vmatpush1.bf16.msra.mxu0 0
        %2093 = vmatprep.subr.bf16.mxu0 0
        %2094 = vmatpush1.bf16.msra.mxu0 0
        %2095 = vmatprep.subr.bf16.mxu0 0
        %2096 = vmatpush1.bf16.msra.mxu0 0
        %2097 = vmatprep.subr.bf16.mxu0 0
        %2098 = vmatpush1.bf16.msra.mxu0 0
        %2099 = vmatprep.subr.bf16.mxu0 0
        %2100 = vmatpush1.bf16.msra.mxu0 0
        %2101 = vmatprep.subr.bf16.mxu0 0
        %2102 = vmatpush1.bf16.msra.mxu0 %v2087
        %2103 = vmatprep.subr.bf16.mxu0 0
        %2104 = vmatpush1.bf16.msra.mxu0 %v1822
        %2105 = vmatprep.subr.bf16.mxu0 0
        %2106 = vmatpush2.bf16.msra.mxu0 0
        %2107 = vmatprep.subr.bf16.mxu0 0
        %2108 = vmatpush2.bf16.msra.mxu0 0
        %2109 = vmatprep.subr.bf16.mxu0 0
        %2110 = vmatpush2.bf16.msra.mxu0 0
        %2111 = vmatprep.subr.bf16.mxu0 0
        %2112 = vmatpush2.bf16.msra.mxu0 0
        %2113 = vmatprep.subr.bf16.mxu0 0
        %2114 = vmatpush2.bf16.msra.mxu0 0
        %2115 = vmatprep.subr.bf16.mxu0 0
        %2116 = vmatpush2.bf16.msra.mxu0 0
        %2117 = vmatprep.subr.bf16.mxu0 0
        %2118 = vmatpush2.bf16.msra.mxu0 0
        %2119 = vmatprep.subr.bf16.mxu0 0
        %2120 = vmatpush2.bf16.msra.mxu0 0
        %2121 = vmatprep.mubr.bf16.mxu0 0
        %2122 = vmatmul.mubr.bf16.gmra.mxu0 %v2081
        %v2123 = vpop.f32.mrf.mxu0
        %v2124 = vadd.f32 0.0, %v2123
        %v2125 = vpop.f32.mrf.mxu0
        %v2126 = vpop.f32.mrf.mxu0
        %v2127 = vadd.f32 0.0, %v2126
        %v2128 = vpop.f32.mrf.mxu0
        %2129 = vmatprep.mubr.bf16.mxu0 0
        %2130 = vmatmul.mubr.bf16.gmra.mxu0 %v2084
        %v2131 = vpop.f32.mrf.mxu0
        %v2132 = vadd.f32 0.0, %v2131
        %v2133 = vpop.f32.mrf.mxu0
        %v2134 = vpop.f32.mrf.mxu0
        %v2135 = vpop.f32.mrf.mxu0
        %2136 = vdwg.mxu0
        %2137 = vst.msk [vmem:[#allocation3] sm:$0xff] %vm1830, %v2067
        %2138 = vst.msk [vmem:[#allocation3 + $0x10] sm:$0xff] %vm1830, %v2070
        %2139 = vst.msk [vmem:[#allocation3 + $0x20] sm:$0xff] %vm1830, %v2075
        %2140 = vst.msk [vmem:[#allocation3 + $0x30] sm:$0xff] %vm1830, %v2124
        %2141 = vst.msk [vmem:[#allocation3 + $0x40] sm:$0xff] %vm1830, %v2127
        %2142 = vst.msk [vmem:[#allocation3 + $0x50] sm:$0xff] %vm1830, %v2132
        %2145 = vrot.lane.b32.xlu0 %v1802, 64
        %v2146 = vpop.permute.xlu0 %2145
        %2147 = vrot.lane.b32.xlu0 %v1804, 64
        %v2148 = vpop.permute.xlu0 %2147
        %2151 = vrot.lane.b32.xlu0 %v1810, 64
        %v2152 = vpop.permute.xlu0 %2151
        %2153 = vrot.lane.b32.xlu0 %v1812, 64
        %v2154 = vpop.permute.xlu0 %2153
        %v2156 = vsel %vm1830, %v2146, 0
        %v2159 = vsel %vm1830, %v2148, 0
        %v2162 = vsel %vm1830, %v2152, 0
        %v2165 = vsel %vm1830, %v2154, 0
        %2167 = vmatprep.subr.bf16.mxu0 0
        %2168 = vmatpush1.bf16.xpose.msra.mxu0 0
        %2169 = vmatprep.subr.bf16.mxu0 0
        %2170 = vmatpush1.bf16.xpose.msra.mxu0 0
        %2171 = vmatprep.subr.bf16.mxu0 0
        %2172 = vmatpush1.bf16.xpose.msra.mxu0 0
        %2173 = vmatprep.subr.bf16.mxu0 0
        %2174 = vmatpush1.bf16.xpose.msra.mxu0 0
        %2175 = vmatprep.subr.bf16.mxu0 0
        %2176 = vmatpush1.bf16.xpose.msra.mxu0 0
        %2177 = vmatprep.subr.bf16.mxu0 0
        %2178 = vmatpush1.bf16.xpose.msra.mxu0 0
        %2179 = vmatprep.subr.bf16.mxu0 0
        %2180 = vmatpush1.bf16.xpose.msra.mxu0 %v2165
        %2181 = vmatprep.subr.bf16.mxu0 0
        %2182 = vmatpush1.bf16.xpose.msra.mxu0 %v2162
        %2183 = vmatprep.subr.bf16.mxu0 0
        %2184 = vmatpush2.bf16.xpose.msra.mxu0 0
        %2185 = vmatprep.subr.bf16.mxu0 0
        %2186 = vmatpush2.bf16.xpose.msra.mxu0 0
        %2187 = vmatprep.subr.bf16.mxu0 0
        %2188 = vmatpush2.bf16.xpose.msra.mxu0 0
        %2189 = vmatprep.subr.bf16.mxu0 0
        %2190 = vmatpush2.bf16.xpose.msra.mxu0 0
        %2191 = vmatprep.subr.bf16.mxu0 0
        %2192 = vmatpush2.bf16.xpose.msra.mxu0 0
        %2193 = vmatprep.subr.bf16.mxu0 0
        %2194 = vmatpush2.bf16.xpose.msra.mxu0 0
        %2195 = vmatprep.subr.bf16.mxu0 0
        %2196 = vmatpush2.bf16.xpose.msra.mxu0 0
        %2197 = vmatprep.subr.bf16.mxu0 0
        %2198 = vmatpush2.bf16.xpose.msra.mxu0 0
        %2199 = vmatprep.mubr.bf16.mxu0 0
        %2200 = vmatmul.mubr.bf16.gmra.mxu0 %v2156
        %v2201 = vpop.f32.mrf.mxu0
        %v2202 = vadd.f32 %v1829, %v2201
        %v2203 = vpop.f32.mrf.mxu0
        %v2204 = vpop.f32.mrf.mxu0
        %v2205 = vadd.f32 %v1829, %v2204
        %v2206 = vpop.f32.mrf.mxu0
        %2207 = vmatprep.mubr.bf16.mxu0 0
        %2208 = vmatmul.mubr.bf16.gmra.mxu0 %v2159
        %v2209 = vpop.f32.mrf.mxu0
        %v2210 = vadd.f32 %v1829, %v2209
        %v2211 = vpop.f32.mrf.mxu0
        %v2212 = vpop.f32.mrf.mxu0
        %v2213 = vpop.f32.mrf.mxu0
        %2214 = vdwg.mxu0
        %2217 = vrot.lane.b32.xlu0 %v1806, 64
        %v2218 = vpop.permute.xlu0 %2217
        %2219 = vrot.lane.b32.xlu0 %v1808, 64
        %v2220 = vpop.permute.xlu0 %2219
        %2223 = vrot.lane.b32.xlu0 %v1814, 64
        %v2224 = vpop.permute.xlu0 %2223
        %2225 = vrot.lane.b32.xlu0 %v1816, 64
        %v2226 = vpop.permute.xlu0 %2225
        %v2228 = vsel %vm1830, %v2218, 0
        %v2231 = vsel %vm1830, %v2220, 0
        %v2234 = vsel %vm1830, %v2224, 0
        %v2237 = vsel %vm1830, %v2226, 0
        %2239 = vmatprep.subr.bf16.mxu0 0
        %2240 = vmatpush1.bf16.xpose.msra.mxu0 0
        %2241 = vmatprep.subr.bf16.mxu0 0
        %2242 = vmatpush1.bf16.xpose.msra.mxu0 0
        %2243 = vmatprep.subr.bf16.mxu0 0
        %2244 = vmatpush1.bf16.xpose.msra.mxu0 0
        %2245 = vmatprep.subr.bf16.mxu0 0
        %2246 = vmatpush1.bf16.xpose.msra.mxu0 0
        %2247 = vmatprep.subr.bf16.mxu0 0
        %2248 = vmatpush1.bf16.xpose.msra.mxu0 0
        %2249 = vmatprep.subr.bf16.mxu0 0
        %2250 = vmatpush1.bf16.xpose.msra.mxu0 0
        %2251 = vmatprep.subr.bf16.mxu0 0
        %2252 = vmatpush1.bf16.xpose.msra.mxu0 %v2237
        %2253 = vmatprep.subr.bf16.mxu0 0
        %2254 = vmatpush1.bf16.xpose.msra.mxu0 %v2234
        %2255 = vmatprep.subr.bf16.mxu0 0
        %2256 = vmatpush2.bf16.xpose.msra.mxu0 0
        %2257 = vmatprep.subr.bf16.mxu0 0
        %2258 = vmatpush2.bf16.xpose.msra.mxu0 0
        %2259 = vmatprep.subr.bf16.mxu0 0
        %2260 = vmatpush2.bf16.xpose.msra.mxu0 0
        %2261 = vmatprep.subr.bf16.mxu0 0
        %2262 = vmatpush2.bf16.xpose.msra.mxu0 0
        %2263 = vmatprep.subr.bf16.mxu0 0
        %2264 = vmatpush2.bf16.xpose.msra.mxu0 0
        %2265 = vmatprep.subr.bf16.mxu0 0
        %2266 = vmatpush2.bf16.xpose.msra.mxu0 0
        %2267 = vmatprep.subr.bf16.mxu0 0
        %2268 = vmatpush2.bf16.xpose.msra.mxu0 0
        %2269 = vmatprep.subr.bf16.mxu0 0
        %2270 = vmatpush2.bf16.xpose.msra.mxu0 0
        %2271 = vmatprep.mubr.bf16.mxu0 0
        %2272 = vmatmul.mubr.bf16.gmra.mxu0 %v2228
        %v2273 = vpop.f32.mrf.mxu0
        %v2274 = vadd.f32 %v1829, %v2273
        %v2275 = vpop.f32.mrf.mxu0
        %v2276 = vpop.f32.mrf.mxu0
        %v2277 = vadd.f32 %v1829, %v2276
        %v2278 = vpop.f32.mrf.mxu0
        %2279 = vmatprep.mubr.bf16.mxu0 0
        %2280 = vmatmul.mubr.bf16.gmra.mxu0 %v2231
        %v2281 = vpop.f32.mrf.mxu0
        %v2282 = vadd.f32 %v1829, %v2281
        %v2283 = vpop.f32.mrf.mxu0
        %v2284 = vpop.f32.mrf.mxu0
        %v2285 = vpop.f32.mrf.mxu0
        %2286 = vdwg.mxu0
        %v2287 = vsel %vm1951, %v2202, -inf
        %2288 = vmax.xlane.f32.xlu0 %v2287
        %v2289 = vpop.xlane.xlu0 %2288
        %v2290 = vsel %vm1951, %v2205, -inf
        %2291 = vmax.xlane.f32.xlu0 %v2290
        %v2292 = vpop.xlane.xlu0 %2291
        %v2293 = vsel %vm1951, %v2210, -inf
        %2294 = vmax.xlane.f32.xlu0 %v2293
        %v2295 = vpop.xlane.xlu0 %2294
        %v2296 = vsel %vm1951, %v2274, -inf
        %2297 = vmax.xlane.f32.xlu0 %v2296
        %v2298 = vpop.xlane.xlu0 %2297
        %v2299 = vsel %vm1951, %v2277, -inf
        %2300 = vmax.xlane.f32.xlu0 %v2299
        %v2301 = vpop.xlane.xlu0 %2300
        %v2302 = vsel %vm1951, %v2282, -inf
        %2303 = vmax.xlane.f32.xlu0 %v2302
        %v2304 = vpop.xlane.xlu0 %2303
        %v2305 = vsub.f32 %v2202, %v2289
        %v2306 = vsub.f32 %v2205, %v2292
        %v2307 = vsub.f32 %v2210, %v2295
        %v2308 = vsub.f32 %v2274, %v2298
        %v2309 = vsub.f32 %v2277, %v2301
        %v2310 = vsub.f32 %v2282, %v2304
        %v2311 = vmul.f32 %v2305, 1.442695
        %v2312 = vpow.pop %v2311
        %v2313 = vmul.f32 %v2306, 1.442695
        %v2314 = vpow.pop %v2313
        %v2315 = vmul.f32 %v2307, 1.442695
        %v2316 = vpow.pop %v2315
        %v2317 = vmul.f32 %v2308, 1.442695
        %v2318 = vpow.pop %v2317
        %v2319 = vmul.f32 %v2309, 1.442695
        %v2320 = vpow.pop %v2319
        %v2321 = vmul.f32 %v2310, 1.442695
        %v2322 = vpow.pop %v2321
        %v2323 = vsel %vm1951, %v2312, 0.0
        %2324 = vadd.xlane.f32.xlu0 %v2323
        %v2325 = vpop.xlane.xlu0 %2324
        %v2326 = vsel %vm1951, %v2314, 0.0
        %2327 = vadd.xlane.f32.xlu0 %v2326
        %v2328 = vpop.xlane.xlu0 %2327
        %v2329 = vsel %vm1951, %v2316, 0.0
        %2330 = vadd.xlane.f32.xlu0 %v2329
        %v2331 = vpop.xlane.xlu0 %2330
        %v2332 = vsel %vm1951, %v2318, 0.0
        %2333 = vadd.xlane.f32.xlu0 %v2332
        %v2334 = vpop.xlane.xlu0 %2333
        %v2335 = vsel %vm1951, %v2320, 0.0
        %2336 = vadd.xlane.f32.xlu0 %v2335
        %v2337 = vpop.xlane.xlu0 %2336
        %v2338 = vsel %vm1951, %v2322, 0.0
        %2339 = vadd.xlane.f32.xlu0 %v2338
        %v2340 = vpop.xlane.xlu0 %2339
        %v2341 = vrcp.pop %v2325
        %v2342 = vmul.f32 %v2312, %v2341
        %v2343 = vrcp.pop %v2328
        %v2344 = vmul.f32 %v2314, %v2343
        %v2345 = vrcp.pop %v2331
        %v2346 = vmul.f32 %v2316, %v2345
        %v2347 = vrcp.pop %v2334
        %v2348 = vmul.f32 %v2318, %v2347
        %v2349 = vrcp.pop %v2337
        %v2350 = vmul.f32 %v2320, %v2349
        %v2351 = vrcp.pop %v2340
        %v2352 = vmul.f32 %v2322, %v2351
        %v2353 = vpack.c.bf16 %v2344, %v2342
        %v2354 = vpack.c.bf16 %v2346, %v2346
        %v2355 = vpack.c.bf16 %v2350, %v2348
        %v2356 = vpack.c.bf16 %v2352, %v2352
        %2359 = vrot.lane.b32.xlu0 %v1818, 64
        %v2360 = vpop.permute.xlu0 %2359
        %2361 = vrot.lane.b32.xlu0 %v1820, 64
        %v2362 = vpop.permute.xlu0 %2361
        %v2365 = vsel %vm1951, %v2353, 0
        %v2368 = vsel %vm1951, %v2354, 0
        %v2371 = vsel %vm2028, %v2362, 0
        %2373 = vmatprep.subr.bf16.mxu0 0
        %2374 = vmatpush1.bf16.msra.mxu0 0
        %2375 = vmatprep.subr.bf16.mxu0 0
        %2376 = vmatpush1.bf16.msra.mxu0 0
        %2377 = vmatprep.subr.bf16.mxu0 0
        %2378 = vmatpush1.bf16.msra.mxu0 0
        %2379 = vmatprep.subr.bf16.mxu0 0
        %2380 = vmatpush1.bf16.msra.mxu0 0
        %2381 = vmatprep.subr.bf16.mxu0 0
        %2382 = vmatpush1.bf16.msra.mxu0 0
        %2383 = vmatprep.subr.bf16.mxu0 0
        %2384 = vmatpush1.bf16.msra.mxu0 0
        %2385 = vmatprep.subr.bf16.mxu0 0
        %2386 = vmatpush1.bf16.msra.mxu0 %v2371
        %2387 = vmatprep.subr.bf16.mxu0 0
        %2388 = vmatpush1.bf16.msra.mxu0 %v2360
        %2389 = vmatprep.subr.bf16.mxu0 0
        %2390 = vmatpush2.bf16.msra.mxu0 0
        %2391 = vmatprep.subr.bf16.mxu0 0
        %2392 = vmatpush2.bf16.msra.mxu0 0
        %2393 = vmatprep.subr.bf16.mxu0 0
        %2394 = vmatpush2.bf16.msra.mxu0 0
        %2395 = vmatprep.subr.bf16.mxu0 0
        %2396 = vmatpush2.bf16.msra.mxu0 0
        %2397 = vmatprep.subr.bf16.mxu0 0
        %2398 = vmatpush2.bf16.msra.mxu0 0
        %2399 = vmatprep.subr.bf16.mxu0 0
        %2400 = vmatpush2.bf16.msra.mxu0 0
        %2401 = vmatprep.subr.bf16.mxu0 0
        %2402 = vmatpush2.bf16.msra.mxu0 0
        %2403 = vmatprep.subr.bf16.mxu0 0
        %2404 = vmatpush2.bf16.msra.mxu0 0
        %2405 = vmatprep.mubr.bf16.mxu0 0
        %2406 = vmatmul.mubr.bf16.gmra.mxu0 %v2365
        %v2407 = vpop.f32.mrf.mxu0
        %v2408 = vadd.f32 0.0, %v2407
        %v2409 = vpop.f32.mrf.mxu0
        %v2410 = vpop.f32.mrf.mxu0
        %v2411 = vadd.f32 0.0, %v2410
        %v2412 = vpop.f32.mrf.mxu0
        %2413 = vmatprep.mubr.bf16.mxu0 0
        %2414 = vmatmul.mubr.bf16.gmra.mxu0 %v2368
        %v2415 = vpop.f32.mrf.mxu0
        %v2416 = vadd.f32 0.0, %v2415
        %v2417 = vpop.f32.mrf.mxu0
        %v2418 = vpop.f32.mrf.mxu0
        %v2419 = vpop.f32.mrf.mxu0
        %2420 = vdwg.mxu0
        %2423 = vrot.lane.b32.xlu0 %v1822, 64
        %v2424 = vpop.permute.xlu0 %2423
        %2425 = vrot.lane.b32.xlu0 %v1824, 64
        %v2426 = vpop.permute.xlu0 %2425
        %v2429 = vsel %vm1951, %v2355, 0
        %v2432 = vsel %vm1951, %v2356, 0
        %v2435 = vsel %vm2028, %v2426, 0
        %2437 = vmatprep.subr.bf16.mxu0 0
        %2438 = vmatpush1.bf16.msra.mxu0 0
        %2439 = vmatprep.subr.bf16.mxu0 0
        %2440 = vmatpush1.bf16.msra.mxu0 0
        %2441 = vmatprep.subr.bf16.mxu0 0
        %2442 = vmatpush1.bf16.msra.mxu0 0
        %2443 = vmatprep.subr.bf16.mxu0 0
        %2444 = vmatpush1.bf16.msra.mxu0 0
        %2445 = vmatprep.subr.bf16.mxu0 0
        %2446 = vmatpush1.bf16.msra.mxu0 0
        %2447 = vmatprep.subr.bf16.mxu0 0
        %2448 = vmatpush1.bf16.msra.mxu0 0
        %2449 = vmatprep.subr.bf16.mxu0 0
        %2450 = vmatpush1.bf16.msra.mxu0 %v2435
        %2451 = vmatprep.subr.bf16.mxu0 0
        %2452 = vmatpush1.bf16.msra.mxu0 %v2424
        %2453 = vmatprep.subr.bf16.mxu0 0
        %2454 = vmatpush2.bf16.msra.mxu0 0
        %2455 = vmatprep.subr.bf16.mxu0 0
        %2456 = vmatpush2.bf16.msra.mxu0 0
        %2457 = vmatprep.subr.bf16.mxu0 0
        %2458 = vmatpush2.bf16.msra.mxu0 0
        %2459 = vmatprep.subr.bf16.mxu0 0
        %2460 = vmatpush2.bf16.msra.mxu0 0
        %2461 = vmatprep.subr.bf16.mxu0 0
        %2462 = vmatpush2.bf16.msra.mxu0 0
        %2463 = vmatprep.subr.bf16.mxu0 0
        %2464 = vmatpush2.bf16.msra.mxu0 0
        %2465 = vmatprep.subr.bf16.mxu0 0
        %2466 = vmatpush2.bf16.msra.mxu0 0
        %2467 = vmatprep.subr.bf16.mxu0 0
        %2468 = vmatpush2.bf16.msra.mxu0 0
        %2469 = vmatprep.mubr.bf16.mxu0 0
        %2470 = vmatmul.mubr.bf16.gmra.mxu0 %v2429
        %v2471 = vpop.f32.mrf.mxu0
        %v2472 = vadd.f32 0.0, %v2471
        %v2473 = vpop.f32.mrf.mxu0
        %v2474 = vpop.f32.mrf.mxu0
        %v2475 = vadd.f32 0.0, %v2474
        %v2476 = vpop.f32.mrf.mxu0
        %2477 = vmatprep.mubr.bf16.mxu0 0
        %2478 = vmatmul.mubr.bf16.gmra.mxu0 %v2432
        %v2479 = vpop.f32.mrf.mxu0
        %v2480 = vadd.f32 0.0, %v2479
        %v2481 = vpop.f32.mrf.mxu0
        %v2482 = vpop.f32.mrf.mxu0
        %v2483 = vpop.f32.mrf.mxu0
        %2484 = vdwg.mxu0
        %2491 = vrot.lane.b32.xlu0 %v2408, 64
        %v2492 = vpop.permute.xlu0 %2491
        %2493 = vrot.lane.b32.xlu0 %v2411, 64
        %v2494 = vpop.permute.xlu0 %2493
        %2495 = vrot.lane.b32.xlu0 %v2416, 64
        %v2496 = vpop.permute.xlu0 %2495
        %2497 = vrot.lane.b32.xlu0 %v2472, 64
        %v2498 = vpop.permute.xlu0 %2497
        %2499 = vrot.lane.b32.xlu0 %v2475, 64
        %v2500 = vpop.permute.xlu0 %2499
        %2501 = vrot.lane.b32.xlu0 %v2480, 64
        %v2502 = vpop.permute.xlu0 %2501
        %vm2509 = vcmask 1048064
        %2510 = vst.msk [vmem:[#allocation3] sm:$0xff] %vm2509, %v2492
        %2511 = vst.msk [vmem:[#allocation3 + $0x10] sm:$0xff] %vm2509, %v2494
        %2512 = vst.msk [vmem:[#allocation3 + $0x20] sm:$0xff] %vm2509, %v2496
        %2513 = vst.msk [vmem:[#allocation3 + $0x30] sm:$0xff] %vm2509, %v2498
        %2514 = vst.msk [vmem:[#allocation3 + $0x40] sm:$0xff] %vm2509, %v2500
        %2515 = vst.msk [vmem:[#allocation3 + $0x50] sm:$0xff] %vm2509, %v2502
        %v2517 = vsel %vm1830, %v1803, 0
        %v2520 = vsel %vm1830, %v1805, 0
        %v2523 = vsel %vm1830, %v1811, 0
        %v2526 = vsel %vm1830, %v1813, 0
        %2528 = vmatprep.subr.bf16.mxu0 0
        %2529 = vmatpush1.bf16.xpose.msra.mxu0 0
        %2530 = vmatprep.subr.bf16.mxu0 0
        %2531 = vmatpush1.bf16.xpose.msra.mxu0 0
        %2532 = vmatprep.subr.bf16.mxu0 0
        %2533 = vmatpush1.bf16.xpose.msra.mxu0 0
        %2534 = vmatprep.subr.bf16.mxu0 0
        %2535 = vmatpush1.bf16.xpose.msra.mxu0 0
        %2536 = vmatprep.subr.bf16.mxu0 0
        %2537 = vmatpush1.bf16.xpose.msra.mxu0 0
        %2538 = vmatprep.subr.bf16.mxu0 0
        %2539 = vmatpush1.bf16.xpose.msra.mxu0 0
        %2540 = vmatprep.subr.bf16.mxu0 0
        %2541 = vmatpush1.bf16.xpose.msra.mxu0 %v2526
        %2542 = vmatprep.subr.bf16.mxu0 0
        %2543 = vmatpush1.bf16.xpose.msra.mxu0 %v2523
        %2544 = vmatprep.subr.bf16.mxu0 0
        %2545 = vmatpush2.bf16.xpose.msra.mxu0 0
        %2546 = vmatprep.subr.bf16.mxu0 0
        %2547 = vmatpush2.bf16.xpose.msra.mxu0 0
        %2548 = vmatprep.subr.bf16.mxu0 0
        %2549 = vmatpush2.bf16.xpose.msra.mxu0 0
        %2550 = vmatprep.subr.bf16.mxu0 0
        %2551 = vmatpush2.bf16.xpose.msra.mxu0 0
        %2552 = vmatprep.subr.bf16.mxu0 0
        %2553 = vmatpush2.bf16.xpose.msra.mxu0 0
        %2554 = vmatprep.subr.bf16.mxu0 0
        %2555 = vmatpush2.bf16.xpose.msra.mxu0 0
        %2556 = vmatprep.subr.bf16.mxu0 0
        %2557 = vmatpush2.bf16.xpose.msra.mxu0 0
        %2558 = vmatprep.subr.bf16.mxu0 0
        %2559 = vmatpush2.bf16.xpose.msra.mxu0 0
        %2560 = vmatprep.mubr.bf16.mxu0 0
        %2561 = vmatmul.mubr.bf16.gmra.mxu0 %v2517
        %v2562 = vpop.f32.mrf.mxu0
        %v2563 = vadd.f32 %v1829, %v2562
        %v2564 = vpop.f32.mrf.mxu0
        %v2565 = vpop.f32.mrf.mxu0
        %v2566 = vadd.f32 %v1829, %v2565
        %v2567 = vpop.f32.mrf.mxu0
        %2568 = vmatprep.mubr.bf16.mxu0 0
        %2569 = vmatmul.mubr.bf16.gmra.mxu0 %v2520
        %v2570 = vpop.f32.mrf.mxu0
        %v2571 = vadd.f32 %v1829, %v2570
        %v2572 = vpop.f32.mrf.mxu0
        %v2573 = vpop.f32.mrf.mxu0
        %v2574 = vpop.f32.mrf.mxu0
        %2575 = vdwg.mxu0
        %v2577 = vsel %vm1830, %v1807, 0
        %v2580 = vsel %vm1830, %v1809, 0
        %v2583 = vsel %vm1830, %v1815, 0
        %v2586 = vsel %vm1830, %v1817, 0
        %2588 = vmatprep.subr.bf16.mxu0 0
        %2589 = vmatpush1.bf16.xpose.msra.mxu0 0
        %2590 = vmatprep.subr.bf16.mxu0 0
        %2591 = vmatpush1.bf16.xpose.msra.mxu0 0
        %2592 = vmatprep.subr.bf16.mxu0 0
        %2593 = vmatpush1.bf16.xpose.msra.mxu0 0
        %2594 = vmatprep.subr.bf16.mxu0 0
        %2595 = vmatpush1.bf16.xpose.msra.mxu0 0
        %2596 = vmatprep.subr.bf16.mxu0 0
        %2597 = vmatpush1.bf16.xpose.msra.mxu0 0
        %2598 = vmatprep.subr.bf16.mxu0 0
        %2599 = vmatpush1.bf16.xpose.msra.mxu0 0
        %2600 = vmatprep.subr.bf16.mxu0 0
        %2601 = vmatpush1.bf16.xpose.msra.mxu0 %v2586
        %2602 = vmatprep.subr.bf16.mxu0 0
        %2603 = vmatpush1.bf16.xpose.msra.mxu0 %v2583
        %2604 = vmatprep.subr.bf16.mxu0 0
        %2605 = vmatpush2.bf16.xpose.msra.mxu0 0
        %2606 = vmatprep.subr.bf16.mxu0 0
        %2607 = vmatpush2.bf16.xpose.msra.mxu0 0
        %2608 = vmatprep.subr.bf16.mxu0 0
        %2609 = vmatpush2.bf16.xpose.msra.mxu0 0
        %2610 = vmatprep.subr.bf16.mxu0 0
        %2611 = vmatpush2.bf16.xpose.msra.mxu0 0
        %2612 = vmatprep.subr.bf16.mxu0 0
        %2613 = vmatpush2.bf16.xpose.msra.mxu0 0
        %2614 = vmatprep.subr.bf16.mxu0 0
        %2615 = vmatpush2.bf16.xpose.msra.mxu0 0
        %2616 = vmatprep.subr.bf16.mxu0 0
        %2617 = vmatpush2.bf16.xpose.msra.mxu0 0
        %2618 = vmatprep.subr.bf16.mxu0 0
        %2619 = vmatpush2.bf16.xpose.msra.mxu0 0
        %2620 = vmatprep.mubr.bf16.mxu0 0
        %2621 = vmatmul.mubr.bf16.gmra.mxu0 %v2577
        %v2622 = vpop.f32.mrf.mxu0
        %v2623 = vadd.f32 %v1829, %v2622
        %v2624 = vpop.f32.mrf.mxu0
        %v2625 = vpop.f32.mrf.mxu0
        %v2626 = vadd.f32 %v1829, %v2625
        %v2627 = vpop.f32.mrf.mxu0
        %2628 = vmatprep.mubr.bf16.mxu0 0
        %2629 = vmatmul.mubr.bf16.gmra.mxu0 %v2580
        %v2630 = vpop.f32.mrf.mxu0
        %v2631 = vadd.f32 %v1829, %v2630
        %v2632 = vpop.f32.mrf.mxu0
        %v2633 = vpop.f32.mrf.mxu0
        %v2634 = vpop.f32.mrf.mxu0
        %2635 = vdwg.mxu0
        %v2636 = vsel %vm1951, %v2563, -inf
        %2637 = vmax.xlane.f32.xlu0 %v2636
        %v2638 = vpop.xlane.xlu0 %2637
        %v2639 = vsel %vm1951, %v2566, -inf
        %2640 = vmax.xlane.f32.xlu0 %v2639
        %v2641 = vpop.xlane.xlu0 %2640
        %v2642 = vsel %vm1951, %v2571, -inf
        %2643 = vmax.xlane.f32.xlu0 %v2642
        %v2644 = vpop.xlane.xlu0 %2643
        %v2645 = vsel %vm1951, %v2623, -inf
        %2646 = vmax.xlane.f32.xlu0 %v2645
        %v2647 = vpop.xlane.xlu0 %2646
        %v2648 = vsel %vm1951, %v2626, -inf
        %2649 = vmax.xlane.f32.xlu0 %v2648
        %v2650 = vpop.xlane.xlu0 %2649
        %v2651 = vsel %vm1951, %v2631, -inf
        %2652 = vmax.xlane.f32.xlu0 %v2651
        %v2653 = vpop.xlane.xlu0 %2652
        %v2654 = vsub.f32 %v2563, %v2638
        %v2655 = vsub.f32 %v2566, %v2641
        %v2656 = vsub.f32 %v2571, %v2644
        %v2657 = vsub.f32 %v2623, %v2647
        %v2658 = vsub.f32 %v2626, %v2650
        %v2659 = vsub.f32 %v2631, %v2653
        %v2660 = vmul.f32 %v2654, 1.442695
        %v2661 = vpow.pop %v2660
        %v2662 = vmul.f32 %v2655, 1.442695
        %v2663 = vpow.pop %v2662
        %v2664 = vmul.f32 %v2656, 1.442695
        %v2665 = vpow.pop %v2664
        %v2666 = vmul.f32 %v2657, 1.442695
        %v2667 = vpow.pop %v2666
        %v2668 = vmul.f32 %v2658, 1.442695
        %v2669 = vpow.pop %v2668
        %v2670 = vmul.f32 %v2659, 1.442695
        %v2671 = vpow.pop %v2670
        %v2672 = vsel %vm1951, %v2661, 0.0
        %2673 = vadd.xlane.f32.xlu0 %v2672
        %v2674 = vpop.xlane.xlu0 %2673
        %v2675 = vsel %vm1951, %v2663, 0.0
        %2676 = vadd.xlane.f32.xlu0 %v2675
        %v2677 = vpop.xlane.xlu0 %2676
        %v2678 = vsel %vm1951, %v2665, 0.0
        %2679 = vadd.xlane.f32.xlu0 %v2678
        %v2680 = vpop.xlane.xlu0 %2679
        %v2681 = vsel %vm1951, %v2667, 0.0
        %2682 = vadd.xlane.f32.xlu0 %v2681
        %v2683 = vpop.xlane.xlu0 %2682
        %v2684 = vsel %vm1951, %v2669, 0.0
        %2685 = vadd.xlane.f32.xlu0 %v2684
        %v2686 = vpop.xlane.xlu0 %2685
        %v2687 = vsel %vm1951, %v2671, 0.0
        %2688 = vadd.xlane.f32.xlu0 %v2687
        %v2689 = vpop.xlane.xlu0 %2688
        %v2690 = vrcp.pop %v2674
        %v2691 = vmul.f32 %v2661, %v2690
        %v2692 = vrcp.pop %v2677
        %v2693 = vmul.f32 %v2663, %v2692
        %v2694 = vrcp.pop %v2680
        %v2695 = vmul.f32 %v2665, %v2694
        %v2696 = vrcp.pop %v2683
        %v2697 = vmul.f32 %v2667, %v2696
        %v2698 = vrcp.pop %v2686
        %v2699 = vmul.f32 %v2669, %v2698
        %v2700 = vrcp.pop %v2689
        %v2701 = vmul.f32 %v2671, %v2700
        %v2702 = vpack.c.bf16 %v2693, %v2691
        %v2703 = vpack.c.bf16 %v2695, %v2695
        %v2704 = vpack.c.bf16 %v2699, %v2697
        %v2705 = vpack.c.bf16 %v2701, %v2701
        %v2707 = vsel %vm1951, %v2702, 0
        %v2710 = vsel %vm1951, %v2703, 0
        %v2713 = vsel %vm2028, %v1821, 0
        %2715 = vmatprep.subr.bf16.mxu0 0
        %2716 = vmatpush1.bf16.msra.mxu0 0
        %2717 = vmatprep.subr.bf16.mxu0 0
        %2718 = vmatpush1.bf16.msra.mxu0 0
        %2719 = vmatprep.subr.bf16.mxu0 0
        %2720 = vmatpush1.bf16.msra.mxu0 0
        %2721 = vmatprep.subr.bf16.mxu0 0
        %2722 = vmatpush1.bf16.msra.mxu0 0
        %2723 = vmatprep.subr.bf16.mxu0 0
        %2724 = vmatpush1.bf16.msra.mxu0 0
        %2725 = vmatprep.subr.bf16.mxu0 0
        %2726 = vmatpush1.bf16.msra.mxu0 0
        %2727 = vmatprep.subr.bf16.mxu0 0
        %2728 = vmatpush1.bf16.msra.mxu0 %v2713
        %2729 = vmatprep.subr.bf16.mxu0 0
        %2730 = vmatpush1.bf16.msra.mxu0 %v1819
        %2731 = vmatprep.subr.bf16.mxu0 0
        %2732 = vmatpush2.bf16.msra.mxu0 0
        %2733 = vmatprep.subr.bf16.mxu0 0
        %2734 = vmatpush2.bf16.msra.mxu0 0
        %2735 = vmatprep.subr.bf16.mxu0 0
        %2736 = vmatpush2.bf16.msra.mxu0 0
        %2737 = vmatprep.subr.bf16.mxu0 0
        %2738 = vmatpush2.bf16.msra.mxu0 0
        %2739 = vmatprep.subr.bf16.mxu0 0
        %2740 = vmatpush2.bf16.msra.mxu0 0
        %2741 = vmatprep.subr.bf16.mxu0 0
        %2742 = vmatpush2.bf16.msra.mxu0 0
        %2743 = vmatprep.subr.bf16.mxu0 0
        %2744 = vmatpush2.bf16.msra.mxu0 0
        %2745 = vmatprep.subr.bf16.mxu0 0
        %2746 = vmatpush2.bf16.msra.mxu0 0
        %2747 = vmatprep.mubr.bf16.mxu0 0
        %2748 = vmatmul.mubr.bf16.gmra.mxu0 %v2707
        %v2749 = vpop.f32.mrf.mxu0
        %v2750 = vadd.f32 0.0, %v2749
        %v2751 = vpop.f32.mrf.mxu0
        %v2752 = vpop.f32.mrf.mxu0
        %v2753 = vadd.f32 0.0, %v2752
        %v2754 = vpop.f32.mrf.mxu0
        %2755 = vmatprep.mubr.bf16.mxu0 0
        %2756 = vmatmul.mubr.bf16.gmra.mxu0 %v2710
        %v2757 = vpop.f32.mrf.mxu0
        %v2758 = vadd.f32 0.0, %v2757
        %v2759 = vpop.f32.mrf.mxu0
        %v2760 = vpop.f32.mrf.mxu0
        %v2761 = vpop.f32.mrf.mxu0
        %2762 = vdwg.mxu0
        %v2764 = vsel %vm1951, %v2704, 0
        %v2767 = vsel %vm1951, %v2705, 0
        %v2770 = vsel %vm2028, %v1825, 0
        %2772 = vmatprep.subr.bf16.mxu0 0
        %2773 = vmatpush1.bf16.msra.mxu0 0
        %2774 = vmatprep.subr.bf16.mxu0 0
        %2775 = vmatpush1.bf16.msra.mxu0 0
        %2776 = vmatprep.subr.bf16.mxu0 0
        %2777 = vmatpush1.bf16.msra.mxu0 0
        %2778 = vmatprep.subr.bf16.mxu0 0
        %2779 = vmatpush1.bf16.msra.mxu0 0
        %2780 = vmatprep.subr.bf16.mxu0 0
        %2781 = vmatpush1.bf16.msra.mxu0 0
        %2782 = vmatprep.subr.bf16.mxu0 0
        %2783 = vmatpush1.bf16.msra.mxu0 0
        %2784 = vmatprep.subr.bf16.mxu0 0
        %2785 = vmatpush1.bf16.msra.mxu0 %v2770
        %2786 = vmatprep.subr.bf16.mxu0 0
        %2787 = vmatpush1.bf16.msra.mxu0 %v1823
        %2788 = vmatprep.subr.bf16.mxu0 0
        %2789 = vmatpush2.bf16.msra.mxu0 0
        %2790 = vmatprep.subr.bf16.mxu0 0
        %2791 = vmatpush2.bf16.msra.mxu0 0
        %2792 = vmatprep.subr.bf16.mxu0 0
        %2793 = vmatpush2.bf16.msra.mxu0 0
        %2794 = vmatprep.subr.bf16.mxu0 0
        %2795 = vmatpush2.bf16.msra.mxu0 0
        %2796 = vmatprep.subr.bf16.mxu0 0
        %2797 = vmatpush2.bf16.msra.mxu0 0
        %2798 = vmatprep.subr.bf16.mxu0 0
        %2799 = vmatpush2.bf16.msra.mxu0 0
        %2800 = vmatprep.subr.bf16.mxu0 0
        %2801 = vmatpush2.bf16.msra.mxu0 0
        %2802 = vmatprep.subr.bf16.mxu0 0
        %2803 = vmatpush2.bf16.msra.mxu0 0
        %2804 = vmatprep.mubr.bf16.mxu0 0
        %2805 = vmatmul.mubr.bf16.gmra.mxu0 %v2764
        %v2806 = vpop.f32.mrf.mxu0
        %v2807 = vadd.f32 0.0, %v2806
        %v2808 = vpop.f32.mrf.mxu0
        %v2809 = vpop.f32.mrf.mxu0
        %v2810 = vadd.f32 0.0, %v2809
        %v2811 = vpop.f32.mrf.mxu0
        %2812 = vmatprep.mubr.bf16.mxu0 0
        %2813 = vmatmul.mubr.bf16.gmra.mxu0 %v2767
        %v2814 = vpop.f32.mrf.mxu0
        %v2815 = vadd.f32 0.0, %v2814
        %v2816 = vpop.f32.mrf.mxu0
        %v2817 = vpop.f32.mrf.mxu0
        %v2818 = vpop.f32.mrf.mxu0
        %2819 = vdwg.mxu0
        %2820 = vst.msk [vmem:[#allocation3 + $0x8] sm:$0xff] %vm1830, %v2750
        %2821 = vst.msk [vmem:[#allocation3 + $0x18] sm:$0xff] %vm1830, %v2753
        %2822 = vst.msk [vmem:[#allocation3 + $0x28] sm:$0xff] %vm1830, %v2758
        %2823 = vst.msk [vmem:[#allocation3 + $0x38] sm:$0xff] %vm1830, %v2807
        %2824 = vst.msk [vmem:[#allocation3 + $0x48] sm:$0xff] %vm1830, %v2810
        %2825 = vst.msk [vmem:[#allocation3 + $0x58] sm:$0xff] %vm1830, %v2815
        %2828 = vrot.lane.b32.xlu0 %v1803, 64
        %v2829 = vpop.permute.xlu0 %2828
        %2830 = vrot.lane.b32.xlu0 %v1805, 64
        %v2831 = vpop.permute.xlu0 %2830
        %2834 = vrot.lane.b32.xlu0 %v1811, 64
        %v2835 = vpop.permute.xlu0 %2834
        %2836 = vrot.lane.b32.xlu0 %v1813, 64
        %v2837 = vpop.permute.xlu0 %2836
        %v2839 = vsel %vm1830, %v2829, 0
        %v2842 = vsel %vm1830, %v2831, 0
        %v2845 = vsel %vm1830, %v2835, 0
        %v2848 = vsel %vm1830, %v2837, 0
        %2850 = vmatprep.subr.bf16.mxu0 0
        %2851 = vmatpush1.bf16.xpose.msra.mxu0 0
        %2852 = vmatprep.subr.bf16.mxu0 0
        %2853 = vmatpush1.bf16.xpose.msra.mxu0 0
        %2854 = vmatprep.subr.bf16.mxu0 0
        %2855 = vmatpush1.bf16.xpose.msra.mxu0 0
        %2856 = vmatprep.subr.bf16.mxu0 0
        %2857 = vmatpush1.bf16.xpose.msra.mxu0 0
        %2858 = vmatprep.subr.bf16.mxu0 0
        %2859 = vmatpush1.bf16.xpose.msra.mxu0 0
        %2860 = vmatprep.subr.bf16.mxu0 0
        %2861 = vmatpush1.bf16.xpose.msra.mxu0 0
        %2862 = vmatprep.subr.bf16.mxu0 0
        %2863 = vmatpush1.bf16.xpose.msra.mxu0 %v2848
        %2864 = vmatprep.subr.bf16.mxu0 0
        %2865 = vmatpush1.bf16.xpose.msra.mxu0 %v2845
        %2866 = vmatprep.subr.bf16.mxu0 0
        %2867 = vmatpush2.bf16.xpose.msra.mxu0 0
        %2868 = vmatprep.subr.bf16.mxu0 0
        %2869 = vmatpush2.bf16.xpose.msra.mxu0 0
        %2870 = vmatprep.subr.bf16.mxu0 0
        %2871 = vmatpush2.bf16.xpose.msra.mxu0 0
        %2872 = vmatprep.subr.bf16.mxu0 0
        %2873 = vmatpush2.bf16.xpose.msra.mxu0 0
        %2874 = vmatprep.subr.bf16.mxu0 0
        %2875 = vmatpush2.bf16.xpose.msra.mxu0 0
        %2876 = vmatprep.subr.bf16.mxu0 0
        %2877 = vmatpush2.bf16.xpose.msra.mxu0 0
        %2878 = vmatprep.subr.bf16.mxu0 0
        %2879 = vmatpush2.bf16.xpose.msra.mxu0 0
        %2880 = vmatprep.subr.bf16.mxu0 0
        %2881 = vmatpush2.bf16.xpose.msra.mxu0 0
        %2882 = vmatprep.mubr.bf16.mxu0 0
        %2883 = vmatmul.mubr.bf16.gmra.mxu0 %v2839
        %v2884 = vpop.f32.mrf.mxu0
        %v2885 = vadd.f32 %v1829, %v2884
        %v2886 = vpop.f32.mrf.mxu0
        %v2887 = vpop.f32.mrf.mxu0
        %v2888 = vadd.f32 %v1829, %v2887
        %v2889 = vpop.f32.mrf.mxu0
        %2890 = vmatprep.mubr.bf16.mxu0 0
        %2891 = vmatmul.mubr.bf16.gmra.mxu0 %v2842
        %v2892 = vpop.f32.mrf.mxu0
        %v2893 = vadd.f32 %v1829, %v2892
        %v2894 = vpop.f32.mrf.mxu0
        %v2895 = vpop.f32.mrf.mxu0
        %v2896 = vpop.f32.mrf.mxu0
        %2897 = vdwg.mxu0
        %2900 = vrot.lane.b32.xlu0 %v1807, 64
        %v2901 = vpop.permute.xlu0 %2900
        %2902 = vrot.lane.b32.xlu0 %v1809, 64
        %v2903 = vpop.permute.xlu0 %2902
        %2906 = vrot.lane.b32.xlu0 %v1815, 64
        %v2907 = vpop.permute.xlu0 %2906
        %2908 = vrot.lane.b32.xlu0 %v1817, 64
        %v2909 = vpop.permute.xlu0 %2908
        %v2911 = vsel %vm1830, %v2901, 0
        %v2914 = vsel %vm1830, %v2903, 0
        %v2917 = vsel %vm1830, %v2907, 0
        %v2920 = vsel %vm1830, %v2909, 0
        %2922 = vmatprep.subr.bf16.mxu0 0
        %2923 = vmatpush1.bf16.xpose.msra.mxu0 0
        %2924 = vmatprep.subr.bf16.mxu0 0
        %2925 = vmatpush1.bf16.xpose.msra.mxu0 0
        %2926 = vmatprep.subr.bf16.mxu0 0
        %2927 = vmatpush1.bf16.xpose.msra.mxu0 0
        %2928 = vmatprep.subr.bf16.mxu0 0
        %2929 = vmatpush1.bf16.xpose.msra.mxu0 0
        %2930 = vmatprep.subr.bf16.mxu0 0
        %2931 = vmatpush1.bf16.xpose.msra.mxu0 0
        %2932 = vmatprep.subr.bf16.mxu0 0
        %2933 = vmatpush1.bf16.xpose.msra.mxu0 0
        %2934 = vmatprep.subr.bf16.mxu0 0
        %2935 = vmatpush1.bf16.xpose.msra.mxu0 %v2920
        %2936 = vmatprep.subr.bf16.mxu0 0
        %2937 = vmatpush1.bf16.xpose.msra.mxu0 %v2917
        %2938 = vmatprep.subr.bf16.mxu0 0
        %2939 = vmatpush2.bf16.xpose.msra.mxu0 0
        %2940 = vmatprep.subr.bf16.mxu0 0
        %2941 = vmatpush2.bf16.xpose.msra.mxu0 0
        %2942 = vmatprep.subr.bf16.mxu0 0
        %2943 = vmatpush2.bf16.xpose.msra.mxu0 0
        %2944 = vmatprep.subr.bf16.mxu0 0
        %2945 = vmatpush2.bf16.xpose.msra.mxu0 0
        %2946 = vmatprep.subr.bf16.mxu0 0
        %2947 = vmatpush2.bf16.xpose.msra.mxu0 0
        %2948 = vmatprep.subr.bf16.mxu0 0
        %2949 = vmatpush2.bf16.xpose.msra.mxu0 0
        %2950 = vmatprep.subr.bf16.mxu0 0
        %2951 = vmatpush2.bf16.xpose.msra.mxu0 0
        %2952 = vmatprep.subr.bf16.mxu0 0
        %2953 = vmatpush2.bf16.xpose.msra.mxu0 0
        %2954 = vmatprep.mubr.bf16.mxu0 0
        %2955 = vmatmul.mubr.bf16.gmra.mxu0 %v2911
        %v2956 = vpop.f32.mrf.mxu0
        %v2957 = vadd.f32 %v1829, %v2956
        %v2958 = vpop.f32.mrf.mxu0
        %v2959 = vpop.f32.mrf.mxu0
        %v2960 = vadd.f32 %v1829, %v2959
        %v2961 = vpop.f32.mrf.mxu0
        %2962 = vmatprep.mubr.bf16.mxu0 0
        %2963 = vmatmul.mubr.bf16.gmra.mxu0 %v2914
        %v2964 = vpop.f32.mrf.mxu0
        %v2965 = vadd.f32 %v1829, %v2964
        %v2966 = vpop.f32.mrf.mxu0
        %v2967 = vpop.f32.mrf.mxu0
        %v2968 = vpop.f32.mrf.mxu0
        %2969 = vdwg.mxu0
        %v2970 = vsel %vm1951, %v2885, -inf
        %2971 = vmax.xlane.f32.xlu0 %v2970
        %v2972 = vpop.xlane.xlu0 %2971
        %v2973 = vsel %vm1951, %v2888, -inf
        %2974 = vmax.xlane.f32.xlu0 %v2973
        %v2975 = vpop.xlane.xlu0 %2974
        %v2976 = vsel %vm1951, %v2893, -inf
        %2977 = vmax.xlane.f32.xlu0 %v2976
        %v2978 = vpop.xlane.xlu0 %2977
        %v2979 = vsel %vm1951, %v2957, -inf
        %2980 = vmax.xlane.f32.xlu0 %v2979
        %v2981 = vpop.xlane.xlu0 %2980
        %v2982 = vsel %vm1951, %v2960, -inf
        %2983 = vmax.xlane.f32.xlu0 %v2982
        %v2984 = vpop.xlane.xlu0 %2983
        %v2985 = vsel %vm1951, %v2965, -inf
        %2986 = vmax.xlane.f32.xlu0 %v2985
        %v2987 = vpop.xlane.xlu0 %2986
        %v2988 = vsub.f32 %v2885, %v2972
        %v2989 = vsub.f32 %v2888, %v2975
        %v2990 = vsub.f32 %v2893, %v2978
        %v2991 = vsub.f32 %v2957, %v2981
        %v2992 = vsub.f32 %v2960, %v2984
        %v2993 = vsub.f32 %v2965, %v2987
        %v2994 = vmul.f32 %v2988, 1.442695
        %v2995 = vpow.pop %v2994
        %v2996 = vmul.f32 %v2989, 1.442695
        %v2997 = vpow.pop %v2996
        %v2998 = vmul.f32 %v2990, 1.442695
        %v2999 = vpow.pop %v2998
        %v3000 = vmul.f32 %v2991, 1.442695
        %v3001 = vpow.pop %v3000
        %v3002 = vmul.f32 %v2992, 1.442695
        %v3003 = vpow.pop %v3002
        %v3004 = vmul.f32 %v2993, 1.442695
        %v3005 = vpow.pop %v3004
        %v3006 = vsel %vm1951, %v2995, 0.0
        %3007 = vadd.xlane.f32.xlu0 %v3006
        %v3008 = vpop.xlane.xlu0 %3007
        %v3009 = vsel %vm1951, %v2997, 0.0
        %3010 = vadd.xlane.f32.xlu0 %v3009
        %v3011 = vpop.xlane.xlu0 %3010
        %v3012 = vsel %vm1951, %v2999, 0.0
        %3013 = vadd.xlane.f32.xlu0 %v3012
        %v3014 = vpop.xlane.xlu0 %3013
        %v3015 = vsel %vm1951, %v3001, 0.0
        %3016 = vadd.xlane.f32.xlu0 %v3015
        %v3017 = vpop.xlane.xlu0 %3016
        %v3018 = vsel %vm1951, %v3003, 0.0
        %3019 = vadd.xlane.f32.xlu0 %v3018
        %v3020 = vpop.xlane.xlu0 %3019
        %v3021 = vsel %vm1951, %v3005, 0.0
        %3022 = vadd.xlane.f32.xlu0 %v3021
        %v3023 = vpop.xlane.xlu0 %3022
        %v3024 = vrcp.pop %v3008
        %v3025 = vmul.f32 %v2995, %v3024
        %v3026 = vrcp.pop %v3011
        %v3027 = vmul.f32 %v2997, %v3026
        %v3028 = vrcp.pop %v3014
        %v3029 = vmul.f32 %v2999, %v3028
        %v3030 = vrcp.pop %v3017
        %v3031 = vmul.f32 %v3001, %v3030
        %v3032 = vrcp.pop %v3020
        %v3033 = vmul.f32 %v3003, %v3032
        %v3034 = vrcp.pop %v3023
        %v3035 = vmul.f32 %v3005, %v3034
        %v3036 = vpack.c.bf16 %v3027, %v3025
        %v3037 = vpack.c.bf16 %v3029, %v3029
        %v3038 = vpack.c.bf16 %v3033, %v3031
        %v3039 = vpack.c.bf16 %v3035, %v3035
        %3042 = vrot.lane.b32.xlu0 %v1819, 64
        %v3043 = vpop.permute.xlu0 %3042
        %3044 = vrot.lane.b32.xlu0 %v1821, 64
        %v3045 = vpop.permute.xlu0 %3044
        %v3048 = vsel %vm1951, %v3036, 0
        %v3051 = vsel %vm1951, %v3037, 0
        %v3054 = vsel %vm2028, %v3045, 0
        %3056 = vmatprep.subr.bf16.mxu0 0
        %3057 = vmatpush1.bf16.msra.mxu0 0
        %3058 = vmatprep.subr.bf16.mxu0 0
        %3059 = vmatpush1.bf16.msra.mxu0 0
        %3060 = vmatprep.subr.bf16.mxu0 0
        %3061 = vmatpush1.bf16.msra.mxu0 0
        %3062 = vmatprep.subr.bf16.mxu0 0
        %3063 = vmatpush1.bf16.msra.mxu0 0
        %3064 = vmatprep.subr.bf16.mxu0 0
        %3065 = vmatpush1.bf16.msra.mxu0 0
        %3066 = vmatprep.subr.bf16.mxu0 0
        %3067 = vmatpush1.bf16.msra.mxu0 0
        %3068 = vmatprep.subr.bf16.mxu0 0
        %3069 = vmatpush1.bf16.msra.mxu0 %v3054
        %3070 = vmatprep.subr.bf16.mxu0 0
        %3071 = vmatpush1.bf16.msra.mxu0 %v3043
        %3072 = vmatprep.subr.bf16.mxu0 0
        %3073 = vmatpush2.bf16.msra.mxu0 0
        %3074 = vmatprep.subr.bf16.mxu0 0
        %3075 = vmatpush2.bf16.msra.mxu0 0
        %3076 = vmatprep.subr.bf16.mxu0 0
        %3077 = vmatpush2.bf16.msra.mxu0 0
        %3078 = vmatprep.subr.bf16.mxu0 0
        %3079 = vmatpush2.bf16.msra.mxu0 0
        %3080 = vmatprep.subr.bf16.mxu0 0
        %3081 = vmatpush2.bf16.msra.mxu0 0
        %3082 = vmatprep.subr.bf16.mxu0 0
        %3083 = vmatpush2.bf16.msra.mxu0 0
        %3084 = vmatprep.subr.bf16.mxu0 0
        %3085 = vmatpush2.bf16.msra.mxu0 0
        %3086 = vmatprep.subr.bf16.mxu0 0
        %3087 = vmatpush2.bf16.msra.mxu0 0
        %3088 = vmatprep.mubr.bf16.mxu0 0
        %3089 = vmatmul.mubr.bf16.gmra.mxu0 %v3048
        %v3090 = vpop.f32.mrf.mxu0
        %v3091 = vadd.f32 0.0, %v3090
        %v3092 = vpop.f32.mrf.mxu0
        %v3093 = vpop.f32.mrf.mxu0
        %v3094 = vadd.f32 0.0, %v3093
        %v3095 = vpop.f32.mrf.mxu0
        %3096 = vmatprep.mubr.bf16.mxu0 0
        %3097 = vmatmul.mubr.bf16.gmra.mxu0 %v3051
        %v3098 = vpop.f32.mrf.mxu0
        %v3099 = vadd.f32 0.0, %v3098
        %v3100 = vpop.f32.mrf.mxu0
        %v3101 = vpop.f32.mrf.mxu0
        %v3102 = vpop.f32.mrf.mxu0
        %3103 = vdwg.mxu0
        %3106 = vrot.lane.b32.xlu0 %v1823, 64
        %v3107 = vpop.permute.xlu0 %3106
        %3108 = vrot.lane.b32.xlu0 %v1825, 64
        %v3109 = vpop.permute.xlu0 %3108
        %v3112 = vsel %vm1951, %v3038, 0
        %v3115 = vsel %vm1951, %v3039, 0
        %v3118 = vsel %vm2028, %v3109, 0
        %3120 = vmatprep.subr.bf16.mxu0 0
        %3121 = vmatpush1.bf16.msra.mxu0 0
        %3122 = vmatprep.subr.bf16.mxu0 0
        %3123 = vmatpush1.bf16.msra.mxu0 0
        %3124 = vmatprep.subr.bf16.mxu0 0
        %3125 = vmatpush1.bf16.msra.mxu0 0
        %3126 = vmatprep.subr.bf16.mxu0 0
        %3127 = vmatpush1.bf16.msra.mxu0 0
        %3128 = vmatprep.subr.bf16.mxu0 0
        %3129 = vmatpush1.bf16.msra.mxu0 0
        %3130 = vmatprep.subr.bf16.mxu0 0
        %3131 = vmatpush1.bf16.msra.mxu0 0
        %3132 = vmatprep.subr.bf16.mxu0 0
        %3133 = vmatpush1.bf16.msra.mxu0 %v3118
        %3134 = vmatprep.subr.bf16.mxu0 0
        %3135 = vmatpush1.bf16.msra.mxu0 %v3107
        %3136 = vmatprep.subr.bf16.mxu0 0
        %3137 = vmatpush2.bf16.msra.mxu0 0
        %3138 = vmatprep.subr.bf16.mxu0 0
        %3139 = vmatpush2.bf16.msra.mxu0 0
        %3140 = vmatprep.subr.bf16.mxu0 0
        %3141 = vmatpush2.bf16.msra.mxu0 0
        %3142 = vmatprep.subr.bf16.mxu0 0
        %3143 = vmatpush2.bf16.msra.mxu0 0
        %3144 = vmatprep.subr.bf16.mxu0 0
        %3145 = vmatpush2.bf16.msra.mxu0 0
        %3146 = vmatprep.subr.bf16.mxu0 0
        %3147 = vmatpush2.bf16.msra.mxu0 0
        %3148 = vmatprep.subr.bf16.mxu0 0
        %3149 = vmatpush2.bf16.msra.mxu0 0
        %3150 = vmatprep.subr.bf16.mxu0 0
        %3151 = vmatpush2.bf16.msra.mxu0 0
        %3152 = vmatprep.mubr.bf16.mxu0 0
        %3153 = vmatmul.mubr.bf16.gmra.mxu0 %v3112
        %v3154 = vpop.f32.mrf.mxu0
        %v3155 = vadd.f32 0.0, %v3154
        %v3156 = vpop.f32.mrf.mxu0
        %v3157 = vpop.f32.mrf.mxu0
        %v3158 = vadd.f32 0.0, %v3157
        %v3159 = vpop.f32.mrf.mxu0
        %3160 = vmatprep.mubr.bf16.mxu0 0
        %3161 = vmatmul.mubr.bf16.gmra.mxu0 %v3115
        %v3162 = vpop.f32.mrf.mxu0
        %v3163 = vadd.f32 0.0, %v3162
        %v3164 = vpop.f32.mrf.mxu0
        %v3165 = vpop.f32.mrf.mxu0
        %v3166 = vpop.f32.mrf.mxu0
        %3167 = vdwg.mxu0
        %3174 = vrot.lane.b32.xlu0 %v3091, 64
        %v3175 = vpop.permute.xlu0 %3174
        %3176 = vrot.lane.b32.xlu0 %v3094, 64
        %v3177 = vpop.permute.xlu0 %3176
        %3178 = vrot.lane.b32.xlu0 %v3099, 64
        %v3179 = vpop.permute.xlu0 %3178
        %3180 = vrot.lane.b32.xlu0 %v3155, 64
        %v3181 = vpop.permute.xlu0 %3180
        %3182 = vrot.lane.b32.xlu0 %v3158, 64
        %v3183 = vpop.permute.xlu0 %3182
        %3184 = vrot.lane.b32.xlu0 %v3163, 64
        %v3185 = vpop.permute.xlu0 %3184
        %3192 = vst.msk [vmem:[#allocation3 + $0x8] sm:$0xff] %vm2509, %v3175
        %3193 = vst.msk [vmem:[#allocation3 + $0x18] sm:$0xff] %vm2509, %v3177
        %3194 = vst.msk [vmem:[#allocation3 + $0x28] sm:$0xff] %vm2509, %v3179
        %3195 = vst.msk [vmem:[#allocation3 + $0x38] sm:$0xff] %vm2509, %v3181
        %3196 = vst.msk [vmem:[#allocation3 + $0x48] sm:$0xff] %vm2509, %v3183
        %3197 = vst.msk [vmem:[#allocation3 + $0x58] sm:$0xff] %vm2509, %v3185
        %v3198 = vld [vmem:[#allocation3] sm:$0xff]
        %v3199 = vld [vmem:[#allocation3 + $0x8] sm:$0xff]
        %v3200 = vld [vmem:[#allocation3 + $0x10] sm:$0xff]
        %v3201 = vld [vmem:[#allocation3 + $0x18] sm:$0xff]
        %v3202 = vld [vmem:[#allocation3 + $0x20] sm:$0xff]
        %v3203 = vld [vmem:[#allocation3 + $0x28] sm:$0xff]
        %v3204 = vld [vmem:[#allocation3 + $0x30] sm:$0xff]
        %v3205 = vld [vmem:[#allocation3 + $0x38] sm:$0xff]
        %v3206 = vld [vmem:[#allocation3 + $0x40] sm:$0xff]
        %v3207 = vld [vmem:[#allocation3 + $0x48] sm:$0xff]
        %v3208 = vld [vmem:[#allocation3 + $0x50] sm:$0xff]
        %v3209 = vld [vmem:[#allocation3 + $0x58] sm:$0xff]
        %v3210 = vpack.c.bf16 %v3200, %v3198
        %v3211 = vpack.c.bf16 %v3201, %v3199
        %v3212 = vpack.c.bf16 %v3204, %v3202
        %v3213 = vpack.c.bf16 %v3205, %v3203
        %v3214 = vpack.c.bf16 %v3208, %v3206
        %v3215 = vpack.c.bf16 %v3209, %v3207
        %v3216 = vld [vmem:[%s639] sm:$0xff]
        %v3217 = vld [vmem:[%s639 + $0x8] sm:$0xff]
        %v3218 = vld [vmem:[%s639 + $0x10] sm:$0xff]
        %v3219 = vld [vmem:[%s639 + $0x18] sm:$0xff]
        %v3220 = vld [vmem:[%s639 + $0x20] sm:$0xff]
        %v3221 = vld [vmem:[%s639 + $0x28] sm:$0xff]
        %v3222 = vld [vmem:[%s639 + $0x30] sm:$0xff]
        %v3223 = vld [vmem:[%s639 + $0x38] sm:$0xff]
        %v3224 = vld [vmem:[%s639 + $0x40] sm:$0xff]
        %v3225 = vld [vmem:[%s639 + $0x48] sm:$0xff]
        %v3226 = vld [vmem:[%s639 + $0x50] sm:$0xff]
        %v3227 = vld [vmem:[%s639 + $0x58] sm:$0xff]
        %v3228 = vld [vmem:[%s639 + $0x60] sm:$0xff]
        %v3229 = vld [vmem:[%s639 + $0x68] sm:$0xff]
        %v3230 = vld [vmem:[%s639 + $0x70] sm:$0xff]
        %v3231 = vld [vmem:[%s639 + $0x78] sm:$0xff]
        %v3232 = vld [vmem:[%s639 + $0x80] sm:$0xff]
        %v3233 = vld [vmem:[%s639 + $0x88] sm:$0xff]
        %v3234 = vld [vmem:[%s639 + $0x90] sm:$0xff]
        %v3235 = vld [vmem:[%s639 + $0x98] sm:$0xff]
        %v3236 = vld [vmem:[%s639 + $0xa0] sm:$0xff]
        %v3237 = vld [vmem:[%s639 + $0xa8] sm:$0xff]
        %v3238 = vld [vmem:[%s639 + $0xb0] sm:$0xff]
        %v3239 = vld [vmem:[%s639 + $0xb8] sm:$0xff]
        %v3240 = vld [vmem:[%s639 + $0xc0] sm:$0xff]
        %v3241 = vld [vmem:[%s639 + $0xc8] sm:$0xff]
        %v3242 = vld [vmem:[%s639 + $0xd0] sm:$0xff]
        %v3243 = vld [vmem:[%s639 + $0xd8] sm:$0xff]
        %v3244 = vld [vmem:[%s639 + $0xe0] sm:$0xff]
        %v3245 = vld [vmem:[%s639 + $0xe8] sm:$0xff]
        %v3246 = vld [vmem:[%s639 + $0xf0] sm:$0xff]
        %v3247 = vld [vmem:[%s639 + $0xf8] sm:$0xff]
        %v3248 = vld [vmem:[%s648] sm:$0x3]
        %v3250 = vlaneseq
        %v3251 = vshrl.u32 %v3250, 7
        %v3252 = vsub.s32 0, %v3251
        %v3253 = vrot.slane %v3248, %v3252
        %v3254 = vlaneseq
        %v3255 = vshrl.u32 %v3254, 7
        %v3256 = vsub.s32 1, %v3255
        %v3257 = vrot.slane %v3248, %v3256
        %v3292 = vunpack.c.l.b16 %v3216
        %v3293 = vunpack.c.h.b16 %v3216
        %v3294 = vunpack.c.l.b16 %v3217
        %v3295 = vunpack.c.h.b16 %v3217
        %v3296 = vunpack.c.l.b16 %v3218
        %v3297 = vunpack.c.h.b16 %v3218
        %v3298 = vunpack.c.l.b16 %v3219
        %v3299 = vunpack.c.h.b16 %v3219
        %v3300 = vunpack.c.l.b16 %v3220
        %v3301 = vunpack.c.h.b16 %v3220
        %v3302 = vunpack.c.l.b16 %v3221
        %v3303 = vunpack.c.h.b16 %v3221
        %v3304 = vunpack.c.l.b16 %v3222
        %v3305 = vunpack.c.h.b16 %v3222
        %v3306 = vunpack.c.l.b16 %v3223
        %v3307 = vunpack.c.h.b16 %v3223
        %v3308 = vunpack.c.l.b16 %v3224
        %v3309 = vunpack.c.h.b16 %v3224
        %v3310 = vunpack.c.l.b16 %v3225
        %v3311 = vunpack.c.h.b16 %v3225
        %v3312 = vunpack.c.l.b16 %v3226
        %v3313 = vunpack.c.h.b16 %v3226
        %v3314 = vunpack.c.l.b16 %v3227
        %v3315 = vunpack.c.h.b16 %v3227
        %v3316 = vunpack.c.l.b16 %v3228
        %v3317 = vunpack.c.h.b16 %v3228
        %v3318 = vunpack.c.l.b16 %v3229
        %v3319 = vunpack.c.h.b16 %v3229
        %v3320 = vunpack.c.l.b16 %v3230
        %v3321 = vunpack.c.h.b16 %v3230
        %v3322 = vunpack.c.l.b16 %v3231
        %v3323 = vunpack.c.h.b16 %v3231
        %v3324 = vunpack.c.l.b16 %v3232
        %v3325 = vunpack.c.h.b16 %v3232
        %v3326 = vunpack.c.l.b16 %v3233
        %v3327 = vunpack.c.h.b16 %v3233
        %v3328 = vunpack.c.l.b16 %v3234
        %v3329 = vunpack.c.h.b16 %v3234
        %v3330 = vunpack.c.l.b16 %v3235
        %v3331 = vunpack.c.h.b16 %v3235
        %v3332 = vunpack.c.l.b16 %v3236
        %v3333 = vunpack.c.h.b16 %v3236
        %v3334 = vunpack.c.l.b16 %v3237
        %v3335 = vunpack.c.h.b16 %v3237
        %v3336 = vunpack.c.l.b16 %v3238
        %v3337 = vunpack.c.h.b16 %v3238
        %v3338 = vunpack.c.l.b16 %v3239
        %v3339 = vunpack.c.h.b16 %v3239
        %v3340 = vunpack.c.l.b16 %v3240
        %v3341 = vunpack.c.h.b16 %v3240
        %v3342 = vunpack.c.l.b16 %v3241
        %v3343 = vunpack.c.h.b16 %v3241
        %v3344 = vunpack.c.l.b16 %v3242
        %v3345 = vunpack.c.h.b16 %v3242
        %v3346 = vunpack.c.l.b16 %v3243
        %v3347 = vunpack.c.h.b16 %v3243
        %v3348 = vunpack.c.l.b16 %v3244
        %v3349 = vunpack.c.h.b16 %v3244
        %v3350 = vunpack.c.l.b16 %v3245
        %v3351 = vunpack.c.h.b16 %v3245
        %v3352 = vunpack.c.l.b16 %v3246
        %v3353 = vunpack.c.h.b16 %v3246
        %v3354 = vunpack.c.l.b16 %v3247
        %v3355 = vunpack.c.h.b16 %v3247
        %v3356 = vpack.c.b16 %v3294, %v3292
        %v3357 = vpack.c.b16 %v3295, %v3293
        %v3358 = vpack.c.b16 %v3298, %v3296
        %v3359 = vpack.c.b16 %v3299, %v3297
        %v3360 = vpack.c.b16 %v3302, %v3300
        %v3361 = vpack.c.b16 %v3303, %v3301
        %v3362 = vpack.c.b16 %v3306, %v3304
        %v3363 = vpack.c.b16 %v3307, %v3305
        %v3364 = vpack.c.b16 %v3310, %v3308
        %v3365 = vpack.c.b16 %v3311, %v3309
        %v3366 = vpack.c.b16 %v3314, %v3312
        %v3367 = vpack.c.b16 %v3315, %v3313
        %v3368 = vpack.c.b16 %v3318, %v3316
        %v3369 = vpack.c.b16 %v3319, %v3317
        %v3370 = vpack.c.b16 %v3322, %v3320
        %v3371 = vpack.c.b16 %v3323, %v3321
        %v3372 = vpack.c.b16 %v3326, %v3324
        %v3373 = vpack.c.b16 %v3327, %v3325
        %v3374 = vpack.c.b16 %v3330, %v3328
        %v3375 = vpack.c.b16 %v3331, %v3329
        %v3376 = vpack.c.b16 %v3334, %v3332
        %v3377 = vpack.c.b16 %v3335, %v3333
        %v3378 = vpack.c.b16 %v3338, %v3336
        %v3379 = vpack.c.b16 %v3339, %v3337
        %v3380 = vpack.c.b16 %v3342, %v3340
        %v3381 = vpack.c.b16 %v3343, %v3341
        %v3382 = vpack.c.b16 %v3346, %v3344
        %v3383 = vpack.c.b16 %v3347, %v3345
        %v3384 = vpack.c.b16 %v3350, %v3348
        %v3385 = vpack.c.b16 %v3351, %v3349
        %v3386 = vpack.c.b16 %v3354, %v3352
        %v3387 = vpack.c.b16 %v3355, %v3353
        %3420 = vmatprep.subr.bf16.mxu0 %v3371
        %3421 = vmatpush1.bf16.msra.mxu0 %v3370
        %3422 = vmatprep.subr.bf16.mxu0 %v3369
        %3423 = vmatpush1.bf16.msra.mxu0 %v3368
        %3424 = vmatprep.subr.bf16.mxu0 %v3367
        %3425 = vmatpush1.bf16.msra.mxu0 %v3366
        %3426 = vmatprep.subr.bf16.mxu0 %v3365
        %3427 = vmatpush1.bf16.msra.mxu0 %v3364
        %3428 = vmatprep.subr.bf16.mxu0 %v3363
        %3429 = vmatpush1.bf16.msra.mxu0 %v3362
        %3430 = vmatprep.subr.bf16.mxu0 %v3361
        %3431 = vmatpush1.bf16.msra.mxu0 %v3360
        %3432 = vmatprep.subr.bf16.mxu0 %v3359
        %3433 = vmatpush1.bf16.msra.mxu0 %v3358
        %3434 = vmatprep.subr.bf16.mxu0 %v3357
        %3435 = vmatpush1.bf16.msra.mxu0 %v3356
        %3436 = vmatprep.subr.bf16.mxu0 %v3387
        %3437 = vmatpush2.bf16.msra.mxu0 %v3386
        %3438 = vmatprep.subr.bf16.mxu0 %v3385
        %3439 = vmatpush2.bf16.msra.mxu0 %v3384
        %3440 = vmatprep.subr.bf16.mxu0 %v3383
        %3441 = vmatpush2.bf16.msra.mxu0 %v3382
        %3442 = vmatprep.subr.bf16.mxu0 %v3381
        %3443 = vmatpush2.bf16.msra.mxu0 %v3380
        %3444 = vmatprep.subr.bf16.mxu0 %v3379
        %3445 = vmatpush2.bf16.msra.mxu0 %v3378
        %3446 = vmatprep.subr.bf16.mxu0 %v3377
        %3447 = vmatpush2.bf16.msra.mxu0 %v3376
        %3448 = vmatprep.subr.bf16.mxu0 %v3375
        %3449 = vmatpush2.bf16.msra.mxu0 %v3374
        %3450 = vmatprep.subr.bf16.mxu0 %v3373
        %3451 = vmatpush2.bf16.msra.mxu0 %v3372
        %3452 = vmatprep.mubr.bf16.mxu0 %v3211
        %3453 = vmatmul.mubr.bf16.gmra.mxu0 %v3210
        %v3454 = vpop.f32.mrf.mxu0
        %v3455 = vadd.f32 %v3253, %v3454
        %v3456 = vpop.f32.mrf.mxu0
        %v3457 = vadd.f32 %v3257, %v3456
        %v3458 = vpop.f32.mrf.mxu0
        %v3459 = vadd.f32 %v3253, %v3458
        %v3460 = vpop.f32.mrf.mxu0
        %v3461 = vadd.f32 %v3257, %v3460
        %3462 = vmatprep.mubr.bf16.mxu0 %v3213
        %3463 = vmatmul.mubr.bf16.gmra.mxu0 %v3212
        %v3464 = vpop.f32.mrf.mxu0
        %v3465 = vadd.f32 %v3253, %v3464
        %v3466 = vpop.f32.mrf.mxu0
        %v3467 = vadd.f32 %v3257, %v3466
        %v3468 = vpop.f32.mrf.mxu0
        %v3469 = vadd.f32 %v3253, %v3468
        %v3470 = vpop.f32.mrf.mxu0
        %v3471 = vadd.f32 %v3257, %v3470
        %3472 = vmatprep.mubr.bf16.mxu0 %v3215
        %3473 = vmatmul.mubr.bf16.gmra.mxu0 %v3214
        %v3474 = vpop.f32.mrf.mxu0
        %v3475 = vadd.f32 %v3253, %v3474
        %v3476 = vpop.f32.mrf.mxu0
        %v3477 = vadd.f32 %v3257, %v3476
        %v3478 = vpop.f32.mrf.mxu0
        %v3479 = vadd.f32 %v3253, %v3478
        %v3480 = vpop.f32.mrf.mxu0
        %v3481 = vadd.f32 %v3257, %v3480
        %3482 = vdwg.mxu0
        %v3483 = vadd.f32 %v842, %v3455
        %v3484 = vadd.f32 %v843, %v3457
        %v3485 = vadd.f32 %v844, %v3459
        %v3486 = vadd.f32 %v845, %v3461
        %v3487 = vadd.f32 %v846, %v3465
        %v3488 = vadd.f32 %v847, %v3467
        %v3489 = vadd.f32 %v848, %v3469
        %v3490 = vadd.f32 %v849, %v3471
        %v3491 = vadd.f32 %v850, %v3475
        %v3492 = vadd.f32 %v851, %v3477
        %v3493 = vadd.f32 %v852, %v3479
        %v3494 = vadd.f32 %v853, %v3481
        %v3495 = vld [vmem:[%s657] sm:$0x3]
        %v3496 = vld [vmem:[%s666] sm:$0x3]
        %v3497 = vadd.f32 %v3483, %v3484
        %3498 = vadd.xlane.f32.xlu0 %v3497
        %v3499 = vpop.xlane.xlu0 %3498
        %v3500 = vadd.f32 %v3485, %v3486
        %3501 = vadd.xlane.f32.xlu0 %v3500
        %v3502 = vpop.xlane.xlu0 %3501
        %v3503 = vadd.f32 %v3487, %v3488
        %3504 = vadd.xlane.f32.xlu0 %v3503
        %v3505 = vpop.xlane.xlu0 %3504
        %v3506 = vadd.f32 %v3489, %v3490
        %3507 = vadd.xlane.f32.xlu0 %v3506
        %v3508 = vpop.xlane.xlu0 %3507
        %v3509 = vadd.f32 %v3491, %v3492
        %3510 = vadd.xlane.f32.xlu0 %v3509
        %v3511 = vpop.xlane.xlu0 %3510
        %v3512 = vadd.f32 %v3493, %v3494
        %3513 = vadd.xlane.f32.xlu0 %v3512
        %v3514 = vpop.xlane.xlu0 %3513
        %v3515 = vmul.f32 %v3499, %v874
        %v3516 = vmul.f32 %v3502, %v874
        %v3517 = vmul.f32 %v3505, %v874
        %v3518 = vmul.f32 %v3508, %v874
        %v3519 = vmul.f32 %v3511, %v874
        %v3520 = vmul.f32 %v3514, %v874
        %v3521 = vsub.f32 %v3483, %v3515
        %v3522 = vsub.f32 %v3484, %v3515
        %v3523 = vsub.f32 %v3485, %v3516
        %v3524 = vsub.f32 %v3486, %v3516
        %v3525 = vsub.f32 %v3487, %v3517
        %v3526 = vsub.f32 %v3488, %v3517
        %v3527 = vsub.f32 %v3489, %v3518
        %v3528 = vsub.f32 %v3490, %v3518
        %v3529 = vsub.f32 %v3491, %v3519
        %v3530 = vsub.f32 %v3492, %v3519
        %v3531 = vsub.f32 %v3493, %v3520
        %v3532 = vsub.f32 %v3494, %v3520
        %v3533 = vmul.f32 %v3521, %v3521
        %v3534 = vmul.f32 %v3522, %v3522
        %v3535 = vmul.f32 %v3523, %v3523
        %v3536 = vmul.f32 %v3524, %v3524
        %v3537 = vmul.f32 %v3525, %v3525
        %v3538 = vmul.f32 %v3526, %v3526
        %v3539 = vmul.f32 %v3527, %v3527
        %v3540 = vmul.f32 %v3528, %v3528
        %v3541 = vmul.f32 %v3529, %v3529
        %v3542 = vmul.f32 %v3530, %v3530
        %v3543 = vmul.f32 %v3531, %v3531
        %v3544 = vmul.f32 %v3532, %v3532
        %v3545 = vadd.f32 %v3533, %v3534
        %3546 = vadd.xlane.f32.xlu0 %v3545
        %v3547 = vpop.xlane.xlu0 %3546
        %v3548 = vadd.f32 %v3535, %v3536
        %3549 = vadd.xlane.f32.xlu0 %v3548
        %v3550 = vpop.xlane.xlu0 %3549
        %v3551 = vadd.f32 %v3537, %v3538
        %3552 = vadd.xlane.f32.xlu0 %v3551
        %v3553 = vpop.xlane.xlu0 %3552
        %v3554 = vadd.f32 %v3539, %v3540
        %3555 = vadd.xlane.f32.xlu0 %v3554
        %v3556 = vpop.xlane.xlu0 %3555
        %v3557 = vadd.f32 %v3541, %v3542
        %3558 = vadd.xlane.f32.xlu0 %v3557
        %v3559 = vpop.xlane.xlu0 %3558
        %v3560 = vadd.f32 %v3543, %v3544
        %3561 = vadd.xlane.f32.xlu0 %v3560
        %v3562 = vpop.xlane.xlu0 %3561
        %v3563 = vmul.f32 %v3547, %v874
        %v3564 = vmul.f32 %v3550, %v874
        %v3565 = vmul.f32 %v3553, %v874
        %v3566 = vmul.f32 %v3556, %v874
        %v3567 = vmul.f32 %v3559, %v874
        %v3568 = vmul.f32 %v3562, %v874
        %v3569 = vadd.f32 %v3563, 1e-06
        %v3570 = vadd.f32 %v3564, 1e-06
        %v3571 = vadd.f32 %v3565, 1e-06
        %v3572 = vadd.f32 %v3566, 1e-06
        %v3573 = vadd.f32 %v3567, 1e-06
        %v3574 = vadd.f32 %v3568, 1e-06
        %v3575 = vrsqrt.pop %v3569
        %v3576 = vrsqrt.pop %v3570
        %v3577 = vrsqrt.pop %v3571
        %v3578 = vrsqrt.pop %v3572
        %v3579 = vrsqrt.pop %v3573
        %v3580 = vrsqrt.pop %v3574
        %v3581 = vmul.f32 %v3521, %v3575
        %v3582 = vmul.f32 %v3522, %v3575
        %v3583 = vmul.f32 %v3523, %v3576
        %v3584 = vmul.f32 %v3524, %v3576
        %v3585 = vmul.f32 %v3525, %v3577
        %v3586 = vmul.f32 %v3526, %v3577
        %v3587 = vmul.f32 %v3527, %v3578
        %v3588 = vmul.f32 %v3528, %v3578
        %v3589 = vmul.f32 %v3529, %v3579
        %v3590 = vmul.f32 %v3530, %v3579
        %v3591 = vmul.f32 %v3531, %v3580
        %v3592 = vmul.f32 %v3532, %v3580
        %v3594 = vlaneseq
        %v3595 = vshrl.u32 %v3594, 7
        %v3596 = vsub.s32 0, %v3595
        %v3597 = vrot.slane %v3495, %v3596
        %v3598 = vlaneseq
        %v3599 = vshrl.u32 %v3598, 7
        %v3600 = vsub.s32 1, %v3599
        %v3601 = vrot.slane %v3495, %v3600
        %v3604 = vmul.f32 %v3581, %v3597
        %v3605 = vmul.f32 %v3582, %v3601
        %v3606 = vmul.f32 %v3583, %v3597
        %v3607 = vmul.f32 %v3584, %v3601
        %v3608 = vmul.f32 %v3585, %v3597
        %v3609 = vmul.f32 %v3586, %v3601
        %v3610 = vmul.f32 %v3587, %v3597
        %v3611 = vmul.f32 %v3588, %v3601
        %v3612 = vmul.f32 %v3589, %v3597
        %v3613 = vmul.f32 %v3590, %v3601
        %v3614 = vmul.f32 %v3591, %v3597
        %v3615 = vmul.f32 %v3592, %v3601
        %v3617 = vlaneseq
        %v3618 = vshrl.u32 %v3617, 7
        %v3619 = vsub.s32 0, %v3618
        %v3620 = vrot.slane %v3496, %v3619
        %v3621 = vlaneseq
        %v3622 = vshrl.u32 %v3621, 7
        %v3623 = vsub.s32 1, %v3622
        %v3624 = vrot.slane %v3496, %v3623
        %v3627 = vadd.f32 %v3604, %v3620
        %v3628 = vadd.f32 %v3605, %v3624
        %v3629 = vadd.f32 %v3606, %v3620
        %v3630 = vadd.f32 %v3607, %v3624
        %v3631 = vadd.f32 %v3608, %v3620
        %v3632 = vadd.f32 %v3609, %v3624
        %v3633 = vadd.f32 %v3610, %v3620
        %v3634 = vadd.f32 %v3611, %v3624
        %v3635 = vadd.f32 %v3612, %v3620
        %v3636 = vadd.f32 %v3613, %v3624
        %v3637 = vadd.f32 %v3614, %v3620
        %v3638 = vadd.f32 %v3615, %v3624
        %v3639 = vpack.c.bf16 %v3629, %v3627
        %v3640 = vpack.c.bf16 %v3630, %v3628
        %v3641 = vpack.c.bf16 %v3633, %v3631
        %v3642 = vpack.c.bf16 %v3634, %v3632
        %v3643 = vpack.c.bf16 %v3637, %v3635
        %v3644 = vpack.c.bf16 %v3638, %v3636
        %v3645 = vld [vmem:[%s796] sm:$0xff]
        %v3646 = vld [vmem:[%s796 + $0x8] sm:$0xff]
        %v3647 = vld [vmem:[%s796 + $0x10] sm:$0xff]
        %v3648 = vld [vmem:[%s796 + $0x18] sm:$0xff]
        %v3649 = vld [vmem:[%s796 + $0x20] sm:$0xff]
        %v3650 = vld [vmem:[%s796 + $0x28] sm:$0xff]
        %v3651 = vld [vmem:[%s796 + $0x30] sm:$0xff]
        %v3652 = vld [vmem:[%s796 + $0x38] sm:$0xff]
        %v3653 = vld [vmem:[%s796 + $0x40] sm:$0xff]
        %v3654 = vld [vmem:[%s796 + $0x48] sm:$0xff]
        %v3655 = vld [vmem:[%s796 + $0x50] sm:$0xff]
        %v3656 = vld [vmem:[%s796 + $0x58] sm:$0xff]
        %v3657 = vld [vmem:[%s796 + $0x60] sm:$0xff]
        %v3658 = vld [vmem:[%s796 + $0x68] sm:$0xff]
        %v3659 = vld [vmem:[%s796 + $0x70] sm:$0xff]
        %v3660 = vld [vmem:[%s796 + $0x78] sm:$0xff]
        %v3661 = vld [vmem:[%s796 + $0x80] sm:$0xff]
        %v3662 = vld [vmem:[%s796 + $0x88] sm:$0xff]
        %v3663 = vld [vmem:[%s796 + $0x90] sm:$0xff]
        %v3664 = vld [vmem:[%s796 + $0x98] sm:$0xff]
        %v3665 = vld [vmem:[%s796 + $0xa0] sm:$0xff]
        %v3666 = vld [vmem:[%s796 + $0xa8] sm:$0xff]
        %v3667 = vld [vmem:[%s796 + $0xb0] sm:$0xff]
        %v3668 = vld [vmem:[%s796 + $0xb8] sm:$0xff]
        %v3669 = vld [vmem:[%s796 + $0xc0] sm:$0xff]
        %v3670 = vld [vmem:[%s796 + $0xc8] sm:$0xff]
        %v3671 = vld [vmem:[%s796 + $0xd0] sm:$0xff]
        %v3672 = vld [vmem:[%s796 + $0xd8] sm:$0xff]
        %v3673 = vld [vmem:[%s796 + $0xe0] sm:$0xff]
        %v3674 = vld [vmem:[%s796 + $0xe8] sm:$0xff]
        %v3675 = vld [vmem:[%s796 + $0xf0] sm:$0xff]
        %v3676 = vld [vmem:[%s796 + $0xf8] sm:$0xff]
        %v3677 = vld [vmem:[%s796 + $0x100] sm:$0xff]
        %v3678 = vld [vmem:[%s796 + $0x108] sm:$0xff]
        %v3679 = vld [vmem:[%s796 + $0x110] sm:$0xff]
        %v3680 = vld [vmem:[%s796 + $0x118] sm:$0xff]
        %v3681 = vld [vmem:[%s796 + $0x120] sm:$0xff]
        %v3682 = vld [vmem:[%s796 + $0x128] sm:$0xff]
        %v3683 = vld [vmem:[%s796 + $0x130] sm:$0xff]
        %v3684 = vld [vmem:[%s796 + $0x138] sm:$0xff]
        %v3685 = vld [vmem:[%s796 + $0x140] sm:$0xff]
        %v3686 = vld [vmem:[%s796 + $0x148] sm:$0xff]
        %v3687 = vld [vmem:[%s796 + $0x150] sm:$0xff]
        %v3688 = vld [vmem:[%s796 + $0x158] sm:$0xff]
        %v3689 = vld [vmem:[%s796 + $0x160] sm:$0xff]
        %v3690 = vld [vmem:[%s796 + $0x168] sm:$0xff]
        %v3691 = vld [vmem:[%s796 + $0x170] sm:$0xff]
        %v3692 = vld [vmem:[%s796 + $0x178] sm:$0xff]
        %v3693 = vld [vmem:[%s796 + $0x180] sm:$0xff]
        %v3694 = vld [vmem:[%s796 + $0x188] sm:$0xff]
        %v3695 = vld [vmem:[%s796 + $0x190] sm:$0xff]
        %v3696 = vld [vmem:[%s796 + $0x198] sm:$0xff]
        %v3697 = vld [vmem:[%s796 + $0x1a0] sm:$0xff]
        %v3698 = vld [vmem:[%s796 + $0x1a8] sm:$0xff]
        %v3699 = vld [vmem:[%s796 + $0x1b0] sm:$0xff]
        %v3700 = vld [vmem:[%s796 + $0x1b8] sm:$0xff]
        %v3701 = vld [vmem:[%s796 + $0x1c0] sm:$0xff]
        %v3702 = vld [vmem:[%s796 + $0x1c8] sm:$0xff]
        %v3703 = vld [vmem:[%s796 + $0x1d0] sm:$0xff]
        %v3704 = vld [vmem:[%s796 + $0x1d8] sm:$0xff]
        %v3705 = vld [vmem:[%s796 + $0x1e0] sm:$0xff]
        %v3706 = vld [vmem:[%s796 + $0x1e8] sm:$0xff]
        %v3707 = vld [vmem:[%s796 + $0x1f0] sm:$0xff]
        %v3708 = vld [vmem:[%s796 + $0x1f8] sm:$0xff]
        %v3709 = vld [vmem:[%s796 + $0x200] sm:$0xff]
        %v3710 = vld [vmem:[%s796 + $0x208] sm:$0xff]
        %v3711 = vld [vmem:[%s796 + $0x210] sm:$0xff]
        %v3712 = vld [vmem:[%s796 + $0x218] sm:$0xff]
        %v3713 = vld [vmem:[%s796 + $0x220] sm:$0xff]
        %v3714 = vld [vmem:[%s796 + $0x228] sm:$0xff]
        %v3715 = vld [vmem:[%s796 + $0x230] sm:$0xff]
        %v3716 = vld [vmem:[%s796 + $0x238] sm:$0xff]
        %v3717 = vld [vmem:[%s796 + $0x240] sm:$0xff]
        %v3718 = vld [vmem:[%s796 + $0x248] sm:$0xff]
        %v3719 = vld [vmem:[%s796 + $0x250] sm:$0xff]
        %v3720 = vld [vmem:[%s796 + $0x258] sm:$0xff]
        %v3721 = vld [vmem:[%s796 + $0x260] sm:$0xff]
        %v3722 = vld [vmem:[%s796 + $0x268] sm:$0xff]
        %v3723 = vld [vmem:[%s796 + $0x270] sm:$0xff]
        %v3724 = vld [vmem:[%s796 + $0x278] sm:$0xff]
        %v3725 = vld [vmem:[%s796 + $0x280] sm:$0xff]
        %v3726 = vld [vmem:[%s796 + $0x288] sm:$0xff]
        %v3727 = vld [vmem:[%s796 + $0x290] sm:$0xff]
        %v3728 = vld [vmem:[%s796 + $0x298] sm:$0xff]
        %v3729 = vld [vmem:[%s796 + $0x2a0] sm:$0xff]
        %v3730 = vld [vmem:[%s796 + $0x2a8] sm:$0xff]
        %v3731 = vld [vmem:[%s796 + $0x2b0] sm:$0xff]
        %v3732 = vld [vmem:[%s796 + $0x2b8] sm:$0xff]
        %v3733 = vld [vmem:[%s796 + $0x2c0] sm:$0xff]
        %v3734 = vld [vmem:[%s796 + $0x2c8] sm:$0xff]
        %v3735 = vld [vmem:[%s796 + $0x2d0] sm:$0xff]
        %v3736 = vld [vmem:[%s796 + $0x2d8] sm:$0xff]
        %v3737 = vld [vmem:[%s796 + $0x2e0] sm:$0xff]
        %v3738 = vld [vmem:[%s796 + $0x2e8] sm:$0xff]
        %v3739 = vld [vmem:[%s796 + $0x2f0] sm:$0xff]
        %v3740 = vld [vmem:[%s796 + $0x2f8] sm:$0xff]
        %v3741 = vld [vmem:[%s796 + $0x300] sm:$0xff]
        %v3742 = vld [vmem:[%s796 + $0x308] sm:$0xff]
        %v3743 = vld [vmem:[%s796 + $0x310] sm:$0xff]
        %v3744 = vld [vmem:[%s796 + $0x318] sm:$0xff]
        %v3745 = vld [vmem:[%s796 + $0x320] sm:$0xff]
        %v3746 = vld [vmem:[%s796 + $0x328] sm:$0xff]
        %v3747 = vld [vmem:[%s796 + $0x330] sm:$0xff]
        %v3748 = vld [vmem:[%s796 + $0x338] sm:$0xff]
        %v3749 = vld [vmem:[%s796 + $0x340] sm:$0xff]
        %v3750 = vld [vmem:[%s796 + $0x348] sm:$0xff]
        %v3751 = vld [vmem:[%s796 + $0x350] sm:$0xff]
        %v3752 = vld [vmem:[%s796 + $0x358] sm:$0xff]
        %v3753 = vld [vmem:[%s796 + $0x360] sm:$0xff]
        %v3754 = vld [vmem:[%s796 + $0x368] sm:$0xff]
        %v3755 = vld [vmem:[%s796 + $0x370] sm:$0xff]
        %v3756 = vld [vmem:[%s796 + $0x378] sm:$0xff]
        %v3757 = vld [vmem:[%s796 + $0x380] sm:$0xff]
        %v3758 = vld [vmem:[%s796 + $0x388] sm:$0xff]
        %v3759 = vld [vmem:[%s796 + $0x390] sm:$0xff]
        %v3760 = vld [vmem:[%s796 + $0x398] sm:$0xff]
        %v3761 = vld [vmem:[%s796 + $0x3a0] sm:$0xff]
        %v3762 = vld [vmem:[%s796 + $0x3a8] sm:$0xff]
        %v3763 = vld [vmem:[%s796 + $0x3b0] sm:$0xff]
        %v3764 = vld [vmem:[%s796 + $0x3b8] sm:$0xff]
        %v3765 = vld [vmem:[%s796 + $0x3c0] sm:$0xff]
        %v3766 = vld [vmem:[%s796 + $0x3c8] sm:$0xff]
        %v3767 = vld [vmem:[%s796 + $0x3d0] sm:$0xff]
        %v3768 = vld [vmem:[%s796 + $0x3d8] sm:$0xff]
        %v3769 = vld [vmem:[%s796 + $0x3e0] sm:$0xff]
        %v3770 = vld [vmem:[%s796 + $0x3e8] sm:$0xff]
        %v3771 = vld [vmem:[%s796 + $0x3f0] sm:$0xff]
        %v3772 = vld [vmem:[%s796 + $0x3f8] sm:$0xff]
        %v3773 = vld [vmem:[%s800] sm:$0xff]
        %v3775 = vlaneseq
        %v3776 = vshrl.u32 %v3775, 7
        %v3777 = vsub.s32 0, %v3776
        %v3778 = vrot.slane %v3773, %v3777
        %v3779 = vlaneseq
        %v3780 = vshrl.u32 %v3779, 7
        %v3781 = vsub.s32 1, %v3780
        %v3782 = vrot.slane %v3773, %v3781
        %v3783 = vlaneseq
        %v3784 = vshrl.u32 %v3783, 7
        %v3785 = vsub.s32 2, %v3784
        %v3786 = vrot.slane %v3773, %v3785
        %v3787 = vlaneseq
        %v3788 = vshrl.u32 %v3787, 7
        %v3789 = vsub.s32 3, %v3788
        %v3790 = vrot.slane %v3773, %v3789
        %v3791 = vlaneseq
        %v3792 = vshrl.u32 %v3791, 7
        %v3793 = vsub.s32 4, %v3792
        %v3794 = vrot.slane %v3773, %v3793
        %v3795 = vlaneseq
        %v3796 = vshrl.u32 %v3795, 7
        %v3797 = vsub.s32 5, %v3796
        %v3798 = vrot.slane %v3773, %v3797
        %v3799 = vlaneseq
        %v3800 = vshrl.u32 %v3799, 7
        %v3801 = vsub.s32 6, %v3800
        %v3802 = vrot.slane %v3773, %v3801
        %v3803 = vlaneseq
        %v3804 = vshrl.u32 %v3803, 7
        %v3805 = vsub.s32 7, %v3804
        %v3806 = vrot.slane %v3773, %v3805
        %v3943 = vunpack.c.l.b16 %v3645
        %v3944 = vunpack.c.h.b16 %v3645
        %v3945 = vunpack.c.l.b16 %v3646
        %v3946 = vunpack.c.h.b16 %v3646
        %v3947 = vunpack.c.l.b16 %v3647
        %v3948 = vunpack.c.h.b16 %v3647
        %v3949 = vunpack.c.l.b16 %v3648
        %v3950 = vunpack.c.h.b16 %v3648
        %v3951 = vunpack.c.l.b16 %v3649
        %v3952 = vunpack.c.h.b16 %v3649
        %v3953 = vunpack.c.l.b16 %v3650
        %v3954 = vunpack.c.h.b16 %v3650
        %v3955 = vunpack.c.l.b16 %v3651
        %v3956 = vunpack.c.h.b16 %v3651
        %v3957 = vunpack.c.l.b16 %v3652
        %v3958 = vunpack.c.h.b16 %v3652
        %v3959 = vunpack.c.l.b16 %v3653
        %v3960 = vunpack.c.h.b16 %v3653
        %v3961 = vunpack.c.l.b16 %v3654
        %v3962 = vunpack.c.h.b16 %v3654
        %v3963 = vunpack.c.l.b16 %v3655
        %v3964 = vunpack.c.h.b16 %v3655
        %v3965 = vunpack.c.l.b16 %v3656
        %v3966 = vunpack.c.h.b16 %v3656
        %v3967 = vunpack.c.l.b16 %v3657
        %v3968 = vunpack.c.h.b16 %v3657
        %v3969 = vunpack.c.l.b16 %v3658
        %v3970 = vunpack.c.h.b16 %v3658
        %v3971 = vunpack.c.l.b16 %v3659
        %v3972 = vunpack.c.h.b16 %v3659
        %v3973 = vunpack.c.l.b16 %v3660
        %v3974 = vunpack.c.h.b16 %v3660
        %v3975 = vunpack.c.l.b16 %v3661
        %v3976 = vunpack.c.h.b16 %v3661
        %v3977 = vunpack.c.l.b16 %v3662
        %v3978 = vunpack.c.h.b16 %v3662
        %v3979 = vunpack.c.l.b16 %v3663
        %v3980 = vunpack.c.h.b16 %v3663
        %v3981 = vunpack.c.l.b16 %v3664
        %v3982 = vunpack.c.h.b16 %v3664
        %v3983 = vunpack.c.l.b16 %v3665
        %v3984 = vunpack.c.h.b16 %v3665
        %v3985 = vunpack.c.l.b16 %v3666
        %v3986 = vunpack.c.h.b16 %v3666
        %v3987 = vunpack.c.l.b16 %v3667
        %v3988 = vunpack.c.h.b16 %v3667
        %v3989 = vunpack.c.l.b16 %v3668
        %v3990 = vunpack.c.h.b16 %v3668
        %v3991 = vunpack.c.l.b16 %v3669
        %v3992 = vunpack.c.h.b16 %v3669
        %v3993 = vunpack.c.l.b16 %v3670
        %v3994 = vunpack.c.h.b16 %v3670
        %v3995 = vunpack.c.l.b16 %v3671
        %v3996 = vunpack.c.h.b16 %v3671
        %v3997 = vunpack.c.l.b16 %v3672
        %v3998 = vunpack.c.h.b16 %v3672
        %v3999 = vunpack.c.l.b16 %v3673
        %v4000 = vunpack.c.h.b16 %v3673
        %v4001 = vunpack.c.l.b16 %v3674
        %v4002 = vunpack.c.h.b16 %v3674
        %v4003 = vunpack.c.l.b16 %v3675
        %v4004 = vunpack.c.h.b16 %v3675
        %v4005 = vunpack.c.l.b16 %v3676
        %v4006 = vunpack.c.h.b16 %v3676
        %v4007 = vunpack.c.l.b16 %v3677
        %v4008 = vunpack.c.h.b16 %v3677
        %v4009 = vunpack.c.l.b16 %v3678
        %v4010 = vunpack.c.h.b16 %v3678
        %v4011 = vunpack.c.l.b16 %v3679
        %v4012 = vunpack.c.h.b16 %v3679
        %v4013 = vunpack.c.l.b16 %v3680
        %v4014 = vunpack.c.h.b16 %v3680
        %v4015 = vunpack.c.l.b16 %v3681
        %v4016 = vunpack.c.h.b16 %v3681
        %v4017 = vunpack.c.l.b16 %v3682
        %v4018 = vunpack.c.h.b16 %v3682
        %v4019 = vunpack.c.l.b16 %v3683
        %v4020 = vunpack.c.h.b16 %v3683
        %v4021 = vunpack.c.l.b16 %v3684
        %v4022 = vunpack.c.h.b16 %v3684
        %v4023 = vunpack.c.l.b16 %v3685
        %v4024 = vunpack.c.h.b16 %v3685
        %v4025 = vunpack.c.l.b16 %v3686
        %v4026 = vunpack.c.h.b16 %v3686
        %v4027 = vunpack.c.l.b16 %v3687
        %v4028 = vunpack.c.h.b16 %v3687
        %v4029 = vunpack.c.l.b16 %v3688
        %v4030 = vunpack.c.h.b16 %v3688
        %v4031 = vunpack.c.l.b16 %v3689
        %v4032 = vunpack.c.h.b16 %v3689
        %v4033 = vunpack.c.l.b16 %v3690
        %v4034 = vunpack.c.h.b16 %v3690
        %v4035 = vunpack.c.l.b16 %v3691
        %v4036 = vunpack.c.h.b16 %v3691
        %v4037 = vunpack.c.l.b16 %v3692
        %v4038 = vunpack.c.h.b16 %v3692
        %v4039 = vunpack.c.l.b16 %v3693
        %v4040 = vunpack.c.h.b16 %v3693
        %v4041 = vunpack.c.l.b16 %v3694
        %v4042 = vunpack.c.h.b16 %v3694
        %v4043 = vunpack.c.l.b16 %v3695
        %v4044 = vunpack.c.h.b16 %v3695
        %v4045 = vunpack.c.l.b16 %v3696
        %v4046 = vunpack.c.h.b16 %v3696
        %v4047 = vunpack.c.l.b16 %v3697
        %v4048 = vunpack.c.h.b16 %v3697
        %v4049 = vunpack.c.l.b16 %v3698
        %v4050 = vunpack.c.h.b16 %v3698
        %v4051 = vunpack.c.l.b16 %v3699
        %v4052 = vunpack.c.h.b16 %v3699
        %v4053 = vunpack.c.l.b16 %v3700
        %v4054 = vunpack.c.h.b16 %v3700
        %v4055 = vunpack.c.l.b16 %v3701
        %v4056 = vunpack.c.h.b16 %v3701
        %v4057 = vunpack.c.l.b16 %v3702
        %v4058 = vunpack.c.h.b16 %v3702
        %v4059 = vunpack.c.l.b16 %v3703
        %v4060 = vunpack.c.h.b16 %v3703
        %v4061 = vunpack.c.l.b16 %v3704
        %v4062 = vunpack.c.h.b16 %v3704
        %v4063 = vunpack.c.l.b16 %v3705
        %v4064 = vunpack.c.h.b16 %v3705
        %v4065 = vunpack.c.l.b16 %v3706
        %v4066 = vunpack.c.h.b16 %v3706
        %v4067 = vunpack.c.l.b16 %v3707
        %v4068 = vunpack.c.h.b16 %v3707
        %v4069 = vunpack.c.l.b16 %v3708
        %v4070 = vunpack.c.h.b16 %v3708
        %v4071 = vunpack.c.l.b16 %v3709
        %v4072 = vunpack.c.h.b16 %v3709
        %v4073 = vunpack.c.l.b16 %v3710
        %v4074 = vunpack.c.h.b16 %v3710
        %v4075 = vunpack.c.l.b16 %v3711
        %v4076 = vunpack.c.h.b16 %v3711
        %v4077 = vunpack.c.l.b16 %v3712
        %v4078 = vunpack.c.h.b16 %v3712
        %v4079 = vunpack.c.l.b16 %v3713
        %v4080 = vunpack.c.h.b16 %v3713
        %v4081 = vunpack.c.l.b16 %v3714
        %v4082 = vunpack.c.h.b16 %v3714
        %v4083 = vunpack.c.l.b16 %v3715
        %v4084 = vunpack.c.h.b16 %v3715
        %v4085 = vunpack.c.l.b16 %v3716
        %v4086 = vunpack.c.h.b16 %v3716
        %v4087 = vunpack.c.l.b16 %v3717
        %v4088 = vunpack.c.h.b16 %v3717
        %v4089 = vunpack.c.l.b16 %v3718
        %v4090 = vunpack.c.h.b16 %v3718
        %v4091 = vunpack.c.l.b16 %v3719
        %v4092 = vunpack.c.h.b16 %v3719
        %v4093 = vunpack.c.l.b16 %v3720
        %v4094 = vunpack.c.h.b16 %v3720
        %v4095 = vunpack.c.l.b16 %v3721
        %v4096 = vunpack.c.h.b16 %v3721
        %v4097 = vunpack.c.l.b16 %v3722
        %v4098 = vunpack.c.h.b16 %v3722
        %v4099 = vunpack.c.l.b16 %v3723
        %v4100 = vunpack.c.h.b16 %v3723
        %v4101 = vunpack.c.l.b16 %v3724
        %v4102 = vunpack.c.h.b16 %v3724
        %v4103 = vunpack.c.l.b16 %v3725
        %v4104 = vunpack.c.h.b16 %v3725
        %v4105 = vunpack.c.l.b16 %v3726
        %v4106 = vunpack.c.h.b16 %v3726
        %v4107 = vunpack.c.l.b16 %v3727
        %v4108 = vunpack.c.h.b16 %v3727
        %v4109 = vunpack.c.l.b16 %v3728
        %v4110 = vunpack.c.h.b16 %v3728
        %v4111 = vunpack.c.l.b16 %v3729
        %v4112 = vunpack.c.h.b16 %v3729
        %v4113 = vunpack.c.l.b16 %v3730
        %v4114 = vunpack.c.h.b16 %v3730
        %v4115 = vunpack.c.l.b16 %v3731
        %v4116 = vunpack.c.h.b16 %v3731
        %v4117 = vunpack.c.l.b16 %v3732
        %v4118 = vunpack.c.h.b16 %v3732
        %v4119 = vunpack.c.l.b16 %v3733
        %v4120 = vunpack.c.h.b16 %v3733
        %v4121 = vunpack.c.l.b16 %v3734
        %v4122 = vunpack.c.h.b16 %v3734
        %v4123 = vunpack.c.l.b16 %v3735
        %v4124 = vunpack.c.h.b16 %v3735
        %v4125 = vunpack.c.l.b16 %v3736
        %v4126 = vunpack.c.h.b16 %v3736
        %v4127 = vunpack.c.l.b16 %v3737
        %v4128 = vunpack.c.h.b16 %v3737
        %v4129 = vunpack.c.l.b16 %v3738
        %v4130 = vunpack.c.h.b16 %v3738
        %v4131 = vunpack.c.l.b16 %v3739
        %v4132 = vunpack.c.h.b16 %v3739
        %v4133 = vunpack.c.l.b16 %v3740
        %v4134 = vunpack.c.h.b16 %v3740
        %v4135 = vunpack.c.l.b16 %v3741
        %v4136 = vunpack.c.h.b16 %v3741
        %v4137 = vunpack.c.l.b16 %v3742
        %v4138 = vunpack.c.h.b16 %v3742
        %v4139 = vunpack.c.l.b16 %v3743
        %v4140 = vunpack.c.h.b16 %v3743
        %v4141 = vunpack.c.l.b16 %v3744
        %v4142 = vunpack.c.h.b16 %v3744
        %v4143 = vunpack.c.l.b16 %v3745
        %v4144 = vunpack.c.h.b16 %v3745
        %v4145 = vunpack.c.l.b16 %v3746
        %v4146 = vunpack.c.h.b16 %v3746
        %v4147 = vunpack.c.l.b16 %v3747
        %v4148 = vunpack.c.h.b16 %v3747
        %v4149 = vunpack.c.l.b16 %v3748
        %v4150 = vunpack.c.h.b16 %v3748
        %v4151 = vunpack.c.l.b16 %v3749
        %v4152 = vunpack.c.h.b16 %v3749
        %v4153 = vunpack.c.l.b16 %v3750
        %v4154 = vunpack.c.h.b16 %v3750
        %v4155 = vunpack.c.l.b16 %v3751
        %v4156 = vunpack.c.h.b16 %v3751
        %v4157 = vunpack.c.l.b16 %v3752
        %v4158 = vunpack.c.h.b16 %v3752
        %v4159 = vunpack.c.l.b16 %v3753
        %v4160 = vunpack.c.h.b16 %v3753
        %v4161 = vunpack.c.l.b16 %v3754
        %v4162 = vunpack.c.h.b16 %v3754
        %v4163 = vunpack.c.l.b16 %v3755
        %v4164 = vunpack.c.h.b16 %v3755
        %v4165 = vunpack.c.l.b16 %v3756
        %v4166 = vunpack.c.h.b16 %v3756
        %v4167 = vunpack.c.l.b16 %v3757
        %v4168 = vunpack.c.h.b16 %v3757
        %v4169 = vunpack.c.l.b16 %v3758
        %v4170 = vunpack.c.h.b16 %v3758
        %v4171 = vunpack.c.l.b16 %v3759
        %v4172 = vunpack.c.h.b16 %v3759
        %v4173 = vunpack.c.l.b16 %v3760
        %v4174 = vunpack.c.h.b16 %v3760
        %v4175 = vunpack.c.l.b16 %v3761
        %v4176 = vunpack.c.h.b16 %v3761
        %v4177 = vunpack.c.l.b16 %v3762
        %v4178 = vunpack.c.h.b16 %v3762
        %v4179 = vunpack.c.l.b16 %v3763
        %v4180 = vunpack.c.h.b16 %v3763
        %v4181 = vunpack.c.l.b16 %v3764
        %v4182 = vunpack.c.h.b16 %v3764
        %v4183 = vunpack.c.l.b16 %v3765
        %v4184 = vunpack.c.h.b16 %v3765
        %v4185 = vunpack.c.l.b16 %v3766
        %v4186 = vunpack.c.h.b16 %v3766
        %v4187 = vunpack.c.l.b16 %v3767
        %v4188 = vunpack.c.h.b16 %v3767
        %v4189 = vunpack.c.l.b16 %v3768
        %v4190 = vunpack.c.h.b16 %v3768
        %v4191 = vunpack.c.l.b16 %v3769
        %v4192 = vunpack.c.h.b16 %v3769
        %v4193 = vunpack.c.l.b16 %v3770
        %v4194 = vunpack.c.h.b16 %v3770
        %v4195 = vunpack.c.l.b16 %v3771
        %v4196 = vunpack.c.h.b16 %v3771
        %v4197 = vunpack.c.l.b16 %v3772
        %v4198 = vunpack.c.h.b16 %v3772
        %v4199 = vpack.c.b16 %v3951, %v3943
        %v4200 = vpack.c.b16 %v3952, %v3944
        %v4201 = vpack.c.b16 %v3953, %v3945
        %v4202 = vpack.c.b16 %v3954, %v3946
        %v4203 = vpack.c.b16 %v3955, %v3947
        %v4204 = vpack.c.b16 %v3956, %v3948
        %v4205 = vpack.c.b16 %v3957, %v3949
        %v4206 = vpack.c.b16 %v3958, %v3950
        %v4207 = vpack.c.b16 %v3967, %v3959
        %v4208 = vpack.c.b16 %v3968, %v3960
        %v4209 = vpack.c.b16 %v3969, %v3961
        %v4210 = vpack.c.b16 %v3970, %v3962
        %v4211 = vpack.c.b16 %v3971, %v3963
        %v4212 = vpack.c.b16 %v3972, %v3964
        %v4213 = vpack.c.b16 %v3973, %v3965
        %v4214 = vpack.c.b16 %v3974, %v3966
        %v4215 = vpack.c.b16 %v3983, %v3975
        %v4216 = vpack.c.b16 %v3984, %v3976
        %v4217 = vpack.c.b16 %v3985, %v3977
        %v4218 = vpack.c.b16 %v3986, %v3978
        %v4219 = vpack.c.b16 %v3987, %v3979
        %v4220 = vpack.c.b16 %v3988, %v3980
        %v4221 = vpack.c.b16 %v3989, %v3981
        %v4222 = vpack.c.b16 %v3990, %v3982
        %v4223 = vpack.c.b16 %v3999, %v3991
        %v4224 = vpack.c.b16 %v4000, %v3992
        %v4225 = vpack.c.b16 %v4001, %v3993
        %v4226 = vpack.c.b16 %v4002, %v3994
        %v4227 = vpack.c.b16 %v4003, %v3995
        %v4228 = vpack.c.b16 %v4004, %v3996
        %v4229 = vpack.c.b16 %v4005, %v3997
        %v4230 = vpack.c.b16 %v4006, %v3998
        %v4231 = vpack.c.b16 %v4015, %v4007
        %v4232 = vpack.c.b16 %v4016, %v4008
        %v4233 = vpack.c.b16 %v4017, %v4009
        %v4234 = vpack.c.b16 %v4018, %v4010
        %v4235 = vpack.c.b16 %v4019, %v4011
        %v4236 = vpack.c.b16 %v4020, %v4012
        %v4237 = vpack.c.b16 %v4021, %v4013
        %v4238 = vpack.c.b16 %v4022, %v4014
        %v4239 = vpack.c.b16 %v4031, %v4023
        %v4240 = vpack.c.b16 %v4032, %v4024
        %v4241 = vpack.c.b16 %v4033, %v4025
        %v4242 = vpack.c.b16 %v4034, %v4026
        %v4243 = vpack.c.b16 %v4035, %v4027
        %v4244 = vpack.c.b16 %v4036, %v4028
        %v4245 = vpack.c.b16 %v4037, %v4029
        %v4246 = vpack.c.b16 %v4038, %v4030
        %v4247 = vpack.c.b16 %v4047, %v4039
        %v4248 = vpack.c.b16 %v4048, %v4040
        %v4249 = vpack.c.b16 %v4049, %v4041
        %v4250 = vpack.c.b16 %v4050, %v4042
        %v4251 = vpack.c.b16 %v4051, %v4043
        %v4252 = vpack.c.b16 %v4052, %v4044
        %v4253 = vpack.c.b16 %v4053, %v4045
        %v4254 = vpack.c.b16 %v4054, %v4046
        %v4255 = vpack.c.b16 %v4063, %v4055
        %v4256 = vpack.c.b16 %v4064, %v4056
        %v4257 = vpack.c.b16 %v4065, %v4057
        %v4258 = vpack.c.b16 %v4066, %v4058
        %v4259 = vpack.c.b16 %v4067, %v4059
        %v4260 = vpack.c.b16 %v4068, %v4060
        %v4261 = vpack.c.b16 %v4069, %v4061
        %v4262 = vpack.c.b16 %v4070, %v4062
        %v4263 = vpack.c.b16 %v4079, %v4071
        %v4264 = vpack.c.b16 %v4080, %v4072
        %v4265 = vpack.c.b16 %v4081, %v4073
        %v4266 = vpack.c.b16 %v4082, %v4074
        %v4267 = vpack.c.b16 %v4083, %v4075
        %v4268 = vpack.c.b16 %v4084, %v4076
        %v4269 = vpack.c.b16 %v4085, %v4077
        %v4270 = vpack.c.b16 %v4086, %v4078
        %v4271 = vpack.c.b16 %v4095, %v4087
        %v4272 = vpack.c.b16 %v4096, %v4088
        %v4273 = vpack.c.b16 %v4097, %v4089
        %v4274 = vpack.c.b16 %v4098, %v4090
        %v4275 = vpack.c.b16 %v4099, %v4091
        %v4276 = vpack.c.b16 %v4100, %v4092
        %v4277 = vpack.c.b16 %v4101, %v4093
        %v4278 = vpack.c.b16 %v4102, %v4094
        %v4279 = vpack.c.b16 %v4111, %v4103
        %v4280 = vpack.c.b16 %v4112, %v4104
        %v4281 = vpack.c.b16 %v4113, %v4105
        %v4282 = vpack.c.b16 %v4114, %v4106
        %v4283 = vpack.c.b16 %v4115, %v4107
        %v4284 = vpack.c.b16 %v4116, %v4108
        %v4285 = vpack.c.b16 %v4117, %v4109
        %v4286 = vpack.c.b16 %v4118, %v4110
        %v4287 = vpack.c.b16 %v4127, %v4119
        %v4288 = vpack.c.b16 %v4128, %v4120
        %v4289 = vpack.c.b16 %v4129, %v4121
        %v4290 = vpack.c.b16 %v4130, %v4122
        %v4291 = vpack.c.b16 %v4131, %v4123
        %v4292 = vpack.c.b16 %v4132, %v4124
        %v4293 = vpack.c.b16 %v4133, %v4125
        %v4294 = vpack.c.b16 %v4134, %v4126
        %v4295 = vpack.c.b16 %v4143, %v4135
        %v4296 = vpack.c.b16 %v4144, %v4136
        %v4297 = vpack.c.b16 %v4145, %v4137
        %v4298 = vpack.c.b16 %v4146, %v4138
        %v4299 = vpack.c.b16 %v4147, %v4139
        %v4300 = vpack.c.b16 %v4148, %v4140
        %v4301 = vpack.c.b16 %v4149, %v4141
        %v4302 = vpack.c.b16 %v4150, %v4142
        %v4303 = vpack.c.b16 %v4159, %v4151
        %v4304 = vpack.c.b16 %v4160, %v4152
        %v4305 = vpack.c.b16 %v4161, %v4153
        %v4306 = vpack.c.b16 %v4162, %v4154
        %v4307 = vpack.c.b16 %v4163, %v4155
        %v4308 = vpack.c.b16 %v4164, %v4156
        %v4309 = vpack.c.b16 %v4165, %v4157
        %v4310 = vpack.c.b16 %v4166, %v4158
        %v4311 = vpack.c.b16 %v4175, %v4167
        %v4312 = vpack.c.b16 %v4176, %v4168
        %v4313 = vpack.c.b16 %v4177, %v4169
        %v4314 = vpack.c.b16 %v4178, %v4170
        %v4315 = vpack.c.b16 %v4179, %v4171
        %v4316 = vpack.c.b16 %v4180, %v4172
        %v4317 = vpack.c.b16 %v4181, %v4173
        %v4318 = vpack.c.b16 %v4182, %v4174
        %v4319 = vpack.c.b16 %v4191, %v4183
        %v4320 = vpack.c.b16 %v4192, %v4184
        %v4321 = vpack.c.b16 %v4193, %v4185
        %v4322 = vpack.c.b16 %v4194, %v4186
        %v4323 = vpack.c.b16 %v4195, %v4187
        %v4324 = vpack.c.b16 %v4196, %v4188
        %v4325 = vpack.c.b16 %v4197, %v4189
        %v4326 = vpack.c.b16 %v4198, %v4190
        %4455 = vmatprep.subr.bf16.mxu0 %v4256
        %4456 = vmatpush1.bf16.msra.mxu0 %v4255
        %4457 = vmatprep.subr.bf16.mxu0 %v4248
        %4458 = vmatpush1.bf16.msra.mxu0 %v4247
        %4459 = vmatprep.subr.bf16.mxu0 %v4240
        %4460 = vmatpush1.bf16.msra.mxu0 %v4239
        %4461 = vmatprep.subr.bf16.mxu0 %v4232
        %4462 = vmatpush1.bf16.msra.mxu0 %v4231
        %4463 = vmatprep.subr.bf16.mxu0 %v4224
        %4464 = vmatpush1.bf16.msra.mxu0 %v4223
        %4465 = vmatprep.subr.bf16.mxu0 %v4216
        %4466 = vmatpush1.bf16.msra.mxu0 %v4215
        %4467 = vmatprep.subr.bf16.mxu0 %v4208
        %4468 = vmatpush1.bf16.msra.mxu0 %v4207
        %4469 = vmatprep.subr.bf16.mxu0 %v4200
        %4470 = vmatpush1.bf16.msra.mxu0 %v4199
        %4471 = vmatprep.subr.bf16.mxu0 %v4320
        %4472 = vmatpush2.bf16.msra.mxu0 %v4319
        %4473 = vmatprep.subr.bf16.mxu0 %v4312
        %4474 = vmatpush2.bf16.msra.mxu0 %v4311
        %4475 = vmatprep.subr.bf16.mxu0 %v4304
        %4476 = vmatpush2.bf16.msra.mxu0 %v4303
        %4477 = vmatprep.subr.bf16.mxu0 %v4296
        %4478 = vmatpush2.bf16.msra.mxu0 %v4295
        %4479 = vmatprep.subr.bf16.mxu0 %v4288
        %4480 = vmatpush2.bf16.msra.mxu0 %v4287
        %4481 = vmatprep.subr.bf16.mxu0 %v4280
        %4482 = vmatpush2.bf16.msra.mxu0 %v4279
        %4483 = vmatprep.subr.bf16.mxu0 %v4272
        %4484 = vmatpush2.bf16.msra.mxu0 %v4271
        %4485 = vmatprep.subr.bf16.mxu0 %v4264
        %4486 = vmatpush2.bf16.msra.mxu0 %v4263
        %4487 = vmatprep.mubr.bf16.mxu0 %v3640
        %4488 = vmatmul.mubr.bf16.gmra.mxu0 %v3639
        %v4489 = vpop.f32.mrf.mxu0
        %v4490 = vadd.f32 %v3778, %v4489
        %v4491 = vpop.f32.mrf.mxu0
        %v4492 = vadd.f32 %v3782, %v4491
        %v4493 = vpop.f32.mrf.mxu0
        %v4494 = vadd.f32 %v3778, %v4493
        %v4495 = vpop.f32.mrf.mxu0
        %v4496 = vadd.f32 %v3782, %v4495
        %4497 = vmatprep.mubr.bf16.mxu0 %v3642
        %4498 = vmatmul.mubr.bf16.gmra.mxu0 %v3641
        %v4499 = vpop.f32.mrf.mxu0
        %v4500 = vadd.f32 %v3778, %v4499
        %v4501 = vpop.f32.mrf.mxu0
        %v4502 = vadd.f32 %v3782, %v4501
        %v4503 = vpop.f32.mrf.mxu0
        %v4504 = vadd.f32 %v3778, %v4503
        %v4505 = vpop.f32.mrf.mxu0
        %v4506 = vadd.f32 %v3782, %v4505
        %4507 = vmatprep.mubr.bf16.mxu0 %v3644
        %4508 = vmatmul.mubr.bf16.gmra.mxu0 %v3643
        %v4509 = vpop.f32.mrf.mxu0
        %v4510 = vadd.f32 %v3778, %v4509
        %v4511 = vpop.f32.mrf.mxu0
        %v4512 = vadd.f32 %v3782, %v4511
        %v4513 = vpop.f32.mrf.mxu0
        %v4514 = vadd.f32 %v3778, %v4513
        %v4515 = vpop.f32.mrf.mxu0
        %v4516 = vadd.f32 %v3782, %v4515
        %4517 = vdwg.mxu0
        %4518 = vmatprep.subr.bf16.mxu0 %v4258
        %4519 = vmatpush1.bf16.msra.mxu0 %v4257
        %4520 = vmatprep.subr.bf16.mxu0 %v4250
        %4521 = vmatpush1.bf16.msra.mxu0 %v4249
        %4522 = vmatprep.subr.bf16.mxu0 %v4242
        %4523 = vmatpush1.bf16.msra.mxu0 %v4241
        %4524 = vmatprep.subr.bf16.mxu0 %v4234
        %4525 = vmatpush1.bf16.msra.mxu0 %v4233
        %4526 = vmatprep.subr.bf16.mxu0 %v4226
        %4527 = vmatpush1.bf16.msra.mxu0 %v4225
        %4528 = vmatprep.subr.bf16.mxu0 %v4218
        %4529 = vmatpush1.bf16.msra.mxu0 %v4217
        %4530 = vmatprep.subr.bf16.mxu0 %v4210
        %4531 = vmatpush1.bf16.msra.mxu0 %v4209
        %4532 = vmatprep.subr.bf16.mxu0 %v4202
        %4533 = vmatpush1.bf16.msra.mxu0 %v4201
        %4534 = vmatprep.subr.bf16.mxu0 %v4322
        %4535 = vmatpush2.bf16.msra.mxu0 %v4321
        %4536 = vmatprep.subr.bf16.mxu0 %v4314
        %4537 = vmatpush2.bf16.msra.mxu0 %v4313
        %4538 = vmatprep.subr.bf16.mxu0 %v4306
        %4539 = vmatpush2.bf16.msra.mxu0 %v4305
        %4540 = vmatprep.subr.bf16.mxu0 %v4298
        %4541 = vmatpush2.bf16.msra.mxu0 %v4297
        %4542 = vmatprep.subr.bf16.mxu0 %v4290
        %4543 = vmatpush2.bf16.msra.mxu0 %v4289
        %4544 = vmatprep.subr.bf16.mxu0 %v4282
        %4545 = vmatpush2.bf16.msra.mxu0 %v4281
        %4546 = vmatprep.subr.bf16.mxu0 %v4274
        %4547 = vmatpush2.bf16.msra.mxu0 %v4273
        %4548 = vmatprep.subr.bf16.mxu0 %v4266
        %4549 = vmatpush2.bf16.msra.mxu0 %v4265
        %4550 = vmatprep.mubr.bf16.mxu0 %v3640
        %4551 = vmatmul.mubr.bf16.gmra.mxu0 %v3639
        %v4552 = vpop.f32.mrf.mxu0
        %v4553 = vadd.f32 %v3786, %v4552
        %v4554 = vpop.f32.mrf.mxu0
        %v4555 = vadd.f32 %v3790, %v4554
        %v4556 = vpop.f32.mrf.mxu0
        %v4557 = vadd.f32 %v3786, %v4556
        %v4558 = vpop.f32.mrf.mxu0
        %v4559 = vadd.f32 %v3790, %v4558
        %4560 = vmatprep.mubr.bf16.mxu0 %v3642
        %4561 = vmatmul.mubr.bf16.gmra.mxu0 %v3641
        %v4562 = vpop.f32.mrf.mxu0
        %v4563 = vadd.f32 %v3786, %v4562
        %v4564 = vpop.f32.mrf.mxu0
        %v4565 = vadd.f32 %v3790, %v4564
        %v4566 = vpop.f32.mrf.mxu0
        %v4567 = vadd.f32 %v3786, %v4566
        %v4568 = vpop.f32.mrf.mxu0
        %v4569 = vadd.f32 %v3790, %v4568
        %4570 = vmatprep.mubr.bf16.mxu0 %v3644
        %4571 = vmatmul.mubr.bf16.gmra.mxu0 %v3643
        %v4572 = vpop.f32.mrf.mxu0
        %v4573 = vadd.f32 %v3786, %v4572
        %v4574 = vpop.f32.mrf.mxu0
        %v4575 = vadd.f32 %v3790, %v4574
        %v4576 = vpop.f32.mrf.mxu0
        %v4577 = vadd.f32 %v3786, %v4576
        %v4578 = vpop.f32.mrf.mxu0
        %v4579 = vadd.f32 %v3790, %v4578
        %4580 = vdwg.mxu0
        %4581 = vmatprep.subr.bf16.mxu0 %v4260
        %4582 = vmatpush1.bf16.msra.mxu0 %v4259
        %4583 = vmatprep.subr.bf16.mxu0 %v4252
        %4584 = vmatpush1.bf16.msra.mxu0 %v4251
        %4585 = vmatprep.subr.bf16.mxu0 %v4244
        %4586 = vmatpush1.bf16.msra.mxu0 %v4243
        %4587 = vmatprep.subr.bf16.mxu0 %v4236
        %4588 = vmatpush1.bf16.msra.mxu0 %v4235
        %4589 = vmatprep.subr.bf16.mxu0 %v4228
        %4590 = vmatpush1.bf16.msra.mxu0 %v4227
        %4591 = vmatprep.subr.bf16.mxu0 %v4220
        %4592 = vmatpush1.bf16.msra.mxu0 %v4219
        %4593 = vmatprep.subr.bf16.mxu0 %v4212
        %4594 = vmatpush1.bf16.msra.mxu0 %v4211
        %4595 = vmatprep.subr.bf16.mxu0 %v4204
        %4596 = vmatpush1.bf16.msra.mxu0 %v4203
        %4597 = vmatprep.subr.bf16.mxu0 %v4324
        %4598 = vmatpush2.bf16.msra.mxu0 %v4323
        %4599 = vmatprep.subr.bf16.mxu0 %v4316
        %4600 = vmatpush2.bf16.msra.mxu0 %v4315
        %4601 = vmatprep.subr.bf16.mxu0 %v4308
        %4602 = vmatpush2.bf16.msra.mxu0 %v4307
        %4603 = vmatprep.subr.bf16.mxu0 %v4300
        %4604 = vmatpush2.bf16.msra.mxu0 %v4299
        %4605 = vmatprep.subr.bf16.mxu0 %v4292
        %4606 = vmatpush2.bf16.msra.mxu0 %v4291
        %4607 = vmatprep.subr.bf16.mxu0 %v4284
        %4608 = vmatpush2.bf16.msra.mxu0 %v4283
        %4609 = vmatprep.subr.bf16.mxu0 %v4276
        %4610 = vmatpush2.bf16.msra.mxu0 %v4275
        %4611 = vmatprep.subr.bf16.mxu0 %v4268
        %4612 = vmatpush2.bf16.msra.mxu0 %v4267
        %4613 = vmatprep.mubr.bf16.mxu0 %v3640
        %4614 = vmatmul.mubr.bf16.gmra.mxu0 %v3639
        %v4615 = vpop.f32.mrf.mxu0
        %v4616 = vadd.f32 %v3794, %v4615
        %v4617 = vpop.f32.mrf.mxu0
        %v4618 = vadd.f32 %v3798, %v4617
        %v4619 = vpop.f32.mrf.mxu0
        %v4620 = vadd.f32 %v3794, %v4619
        %v4621 = vpop.f32.mrf.mxu0
        %v4622 = vadd.f32 %v3798, %v4621
        %4623 = vmatprep.mubr.bf16.mxu0 %v3642
        %4624 = vmatmul.mubr.bf16.gmra.mxu0 %v3641
        %v4625 = vpop.f32.mrf.mxu0
        %v4626 = vadd.f32 %v3794, %v4625
        %v4627 = vpop.f32.mrf.mxu0
        %v4628 = vadd.f32 %v3798, %v4627
        %v4629 = vpop.f32.mrf.mxu0
        %v4630 = vadd.f32 %v3794, %v4629
        %v4631 = vpop.f32.mrf.mxu0
        %v4632 = vadd.f32 %v3798, %v4631
        %4633 = vmatprep.mubr.bf16.mxu0 %v3644
        %4634 = vmatmul.mubr.bf16.gmra.mxu0 %v3643
        %v4635 = vpop.f32.mrf.mxu0
        %v4636 = vadd.f32 %v3794, %v4635
        %v4637 = vpop.f32.mrf.mxu0
        %v4638 = vadd.f32 %v3798, %v4637
        %v4639 = vpop.f32.mrf.mxu0
        %v4640 = vadd.f32 %v3794, %v4639
        %v4641 = vpop.f32.mrf.mxu0
        %v4642 = vadd.f32 %v3798, %v4641
        %4643 = vdwg.mxu0
        %4644 = vmatprep.subr.bf16.mxu0 %v4262
        %4645 = vmatpush1.bf16.msra.mxu0 %v4261
        %4646 = vmatprep.subr.bf16.mxu0 %v4254
        %4647 = vmatpush1.bf16.msra.mxu0 %v4253
        %4648 = vmatprep.subr.bf16.mxu0 %v4246
        %4649 = vmatpush1.bf16.msra.mxu0 %v4245
        %4650 = vmatprep.subr.bf16.mxu0 %v4238
        %4651 = vmatpush1.bf16.msra.mxu0 %v4237
        %4652 = vmatprep.subr.bf16.mxu0 %v4230
        %4653 = vmatpush1.bf16.msra.mxu0 %v4229
        %4654 = vmatprep.subr.bf16.mxu0 %v4222
        %4655 = vmatpush1.bf16.msra.mxu0 %v4221
        %4656 = vmatprep.subr.bf16.mxu0 %v4214
        %4657 = vmatpush1.bf16.msra.mxu0 %v4213
        %4658 = vmatprep.subr.bf16.mxu0 %v4206
        %4659 = vmatpush1.bf16.msra.mxu0 %v4205
        %4660 = vmatprep.subr.bf16.mxu0 %v4326
        %4661 = vmatpush2.bf16.msra.mxu0 %v4325
        %4662 = vmatprep.subr.bf16.mxu0 %v4318
        %4663 = vmatpush2.bf16.msra.mxu0 %v4317
        %4664 = vmatprep.subr.bf16.mxu0 %v4310
        %4665 = vmatpush2.bf16.msra.mxu0 %v4309
        %4666 = vmatprep.subr.bf16.mxu0 %v4302
        %4667 = vmatpush2.bf16.msra.mxu0 %v4301
        %4668 = vmatprep.subr.bf16.mxu0 %v4294
        %4669 = vmatpush2.bf16.msra.mxu0 %v4293
        %4670 = vmatprep.subr.bf16.mxu0 %v4286
        %4671 = vmatpush2.bf16.msra.mxu0 %v4285
        %4672 = vmatprep.subr.bf16.mxu0 %v4278
        %4673 = vmatpush2.bf16.msra.mxu0 %v4277
        %4674 = vmatprep.subr.bf16.mxu0 %v4270
        %4675 = vmatpush2.bf16.msra.mxu0 %v4269
        %4676 = vmatprep.mubr.bf16.mxu0 %v3640
        %4677 = vmatmul.mubr.bf16.gmra.mxu0 %v3639
        %v4678 = vpop.f32.mrf.mxu0
        %v4679 = vadd.f32 %v3802, %v4678
        %v4680 = vpop.f32.mrf.mxu0
        %v4681 = vadd.f32 %v3806, %v4680
        %v4682 = vpop.f32.mrf.mxu0
        %v4683 = vadd.f32 %v3802, %v4682
        %v4684 = vpop.f32.mrf.mxu0
        %v4685 = vadd.f32 %v3806, %v4684
        %4686 = vmatprep.mubr.bf16.mxu0 %v3642
        %4687 = vmatmul.mubr.bf16.gmra.mxu0 %v3641
        %v4688 = vpop.f32.mrf.mxu0
        %v4689 = vadd.f32 %v3802, %v4688
        %v4690 = vpop.f32.mrf.mxu0
        %v4691 = vadd.f32 %v3806, %v4690
        %v4692 = vpop.f32.mrf.mxu0
        %v4693 = vadd.f32 %v3802, %v4692
        %v4694 = vpop.f32.mrf.mxu0
        %v4695 = vadd.f32 %v3806, %v4694
        %4696 = vmatprep.mubr.bf16.mxu0 %v3644
        %4697 = vmatmul.mubr.bf16.gmra.mxu0 %v3643
        %v4698 = vpop.f32.mrf.mxu0
        %v4699 = vadd.f32 %v3802, %v4698
        %v4700 = vpop.f32.mrf.mxu0
        %v4701 = vadd.f32 %v3806, %v4700
        %v4702 = vpop.f32.mrf.mxu0
        %v4703 = vadd.f32 %v3802, %v4702
        %v4704 = vpop.f32.mrf.mxu0
        %v4705 = vadd.f32 %v3806, %v4704
        %4706 = vdwg.mxu0
        %v4707 = vmul.f32 %v4490, 0.5
        %v4708 = vmul.f32 %v4492, 0.5
        %v4709 = vmul.f32 %v4553, 0.5
        %v4710 = vmul.f32 %v4555, 0.5
        %v4711 = vmul.f32 %v4616, 0.5
        %v4712 = vmul.f32 %v4618, 0.5
        %v4713 = vmul.f32 %v4679, 0.5
        %v4714 = vmul.f32 %v4681, 0.5
        %v4715 = vmul.f32 %v4494, 0.5
        %v4716 = vmul.f32 %v4496, 0.5
        %v4717 = vmul.f32 %v4557, 0.5
        %v4718 = vmul.f32 %v4559, 0.5
        %v4719 = vmul.f32 %v4620, 0.5
        %v4720 = vmul.f32 %v4622, 0.5
        %v4721 = vmul.f32 %v4683, 0.5
        %v4722 = vmul.f32 %v4685, 0.5
        %v4723 = vmul.f32 %v4500, 0.5
        %v4724 = vmul.f32 %v4502, 0.5
        %v4725 = vmul.f32 %v4563, 0.5
        %v4726 = vmul.f32 %v4565, 0.5
        %v4727 = vmul.f32 %v4626, 0.5
        %v4728 = vmul.f32 %v4628, 0.5
        %v4729 = vmul.f32 %v4689, 0.5
        %v4730 = vmul.f32 %v4691, 0.5
        %v4731 = vmul.f32 %v4504, 0.5
        %v4732 = vmul.f32 %v4506, 0.5
        %v4733 = vmul.f32 %v4567, 0.5
        %v4734 = vmul.f32 %v4569, 0.5
        %v4735 = vmul.f32 %v4630, 0.5
        %v4736 = vmul.f32 %v4632, 0.5
        %v4737 = vmul.f32 %v4693, 0.5
        %v4738 = vmul.f32 %v4695, 0.5
        %v4739 = vmul.f32 %v4510, 0.5
        %v4740 = vmul.f32 %v4512, 0.5
        %v4741 = vmul.f32 %v4573, 0.5
        %v4742 = vmul.f32 %v4575, 0.5
        %v4743 = vmul.f32 %v4636, 0.5
        %v4744 = vmul.f32 %v4638, 0.5
        %v4745 = vmul.f32 %v4699, 0.5
        %v4746 = vmul.f32 %v4701, 0.5
        %v4747 = vmul.f32 %v4514, 0.5
        %v4748 = vmul.f32 %v4516, 0.5
        %v4749 = vmul.f32 %v4577, 0.5
        %v4750 = vmul.f32 %v4579, 0.5
        %v4751 = vmul.f32 %v4640, 0.5
        %v4752 = vmul.f32 %v4642, 0.5
        %v4753 = vmul.f32 %v4703, 0.5
        %v4754 = vmul.f32 %v4705, 0.5
        %v4755 = vmul.f32 %v4490, 0.70710677
        %v4756 = vmul.f32 %v4492, 0.70710677
        %v4757 = vmul.f32 %v4553, 0.70710677
        %v4758 = vmul.f32 %v4555, 0.70710677
        %v4759 = vmul.f32 %v4616, 0.70710677
        %v4760 = vmul.f32 %v4618, 0.70710677
        %v4761 = vmul.f32 %v4679, 0.70710677
        %v4762 = vmul.f32 %v4681, 0.70710677
        %v4763 = vmul.f32 %v4494, 0.70710677
        %v4764 = vmul.f32 %v4496, 0.70710677
        %v4765 = vmul.f32 %v4557, 0.70710677
        %v4766 = vmul.f32 %v4559, 0.70710677
        %v4767 = vmul.f32 %v4620, 0.70710677
        %v4768 = vmul.f32 %v4622, 0.70710677
        %v4769 = vmul.f32 %v4683, 0.70710677
        %v4770 = vmul.f32 %v4685, 0.70710677
        %v4771 = vmul.f32 %v4500, 0.70710677
        %v4772 = vmul.f32 %v4502, 0.70710677
        %v4773 = vmul.f32 %v4563, 0.70710677
        %v4774 = vmul.f32 %v4565, 0.70710677
        %v4775 = vmul.f32 %v4626, 0.70710677
        %v4776 = vmul.f32 %v4628, 0.70710677
        %v4777 = vmul.f32 %v4689, 0.70710677
        %v4778 = vmul.f32 %v4691, 0.70710677
        %v4779 = vmul.f32 %v4504, 0.70710677
        %v4780 = vmul.f32 %v4506, 0.70710677
        %v4781 = vmul.f32 %v4567, 0.70710677
        %v4782 = vmul.f32 %v4569, 0.70710677
        %v4783 = vmul.f32 %v4630, 0.70710677
        %v4784 = vmul.f32 %v4632, 0.70710677
        %v4785 = vmul.f32 %v4693, 0.70710677
        %v4786 = vmul.f32 %v4695, 0.70710677
        %v4787 = vmul.f32 %v4510, 0.70710677
        %v4788 = vmul.f32 %v4512, 0.70710677
        %v4789 = vmul.f32 %v4573, 0.70710677
        %v4790 = vmul.f32 %v4575, 0.70710677
        %v4791 = vmul.f32 %v4636, 0.70710677
        %v4792 = vmul.f32 %v4638, 0.70710677
        %v4793 = vmul.f32 %v4699, 0.70710677
        %v4794 = vmul.f32 %v4701, 0.70710677
        %v4795 = vmul.f32 %v4514, 0.70710677
        %v4796 = vmul.f32 %v4516, 0.70710677
        %v4797 = vmul.f32 %v4577, 0.70710677
        %v4798 = vmul.f32 %v4579, 0.70710677
        %v4799 = vmul.f32 %v4640, 0.70710677
        %v4800 = vmul.f32 %v4642, 0.70710677
        %v4801 = vmul.f32 %v4703, 0.70710677
        %v4802 = vmul.f32 %v4705, 0.70710677
        %vm4803 = vcmp.ge.f32.partialorder %v4755, 0.0
        %vm4804 = vcmp.ge.f32.partialorder %v4756, 0.0
        %vm4805 = vcmp.ge.f32.partialorder %v4757, 0.0
        %vm4806 = vcmp.ge.f32.partialorder %v4758, 0.0
        %vm4807 = vcmp.ge.f32.partialorder %v4759, 0.0
        %vm4808 = vcmp.ge.f32.partialorder %v4760, 0.0
        %vm4809 = vcmp.ge.f32.partialorder %v4761, 0.0
        %vm4810 = vcmp.ge.f32.partialorder %v4762, 0.0
        %vm4811 = vcmp.ge.f32.partialorder %v4763, 0.0
        %vm4812 = vcmp.ge.f32.partialorder %v4764, 0.0
        %vm4813 = vcmp.ge.f32.partialorder %v4765, 0.0
        %vm4814 = vcmp.ge.f32.partialorder %v4766, 0.0
        %vm4815 = vcmp.ge.f32.partialorder %v4767, 0.0
        %vm4816 = vcmp.ge.f32.partialorder %v4768, 0.0
        %vm4817 = vcmp.ge.f32.partialorder %v4769, 0.0
        %vm4818 = vcmp.ge.f32.partialorder %v4770, 0.0
        %vm4819 = vcmp.ge.f32.partialorder %v4771, 0.0
        %vm4820 = vcmp.ge.f32.partialorder %v4772, 0.0
        %vm4821 = vcmp.ge.f32.partialorder %v4773, 0.0
        %vm4822 = vcmp.ge.f32.partialorder %v4774, 0.0
        %vm4823 = vcmp.ge.f32.partialorder %v4775, 0.0
        %vm4824 = vcmp.ge.f32.partialorder %v4776, 0.0
        %vm4825 = vcmp.ge.f32.partialorder %v4777, 0.0
        %vm4826 = vcmp.ge.f32.partialorder %v4778, 0.0
        %vm4827 = vcmp.ge.f32.partialorder %v4779, 0.0
        %vm4828 = vcmp.ge.f32.partialorder %v4780, 0.0
        %vm4829 = vcmp.ge.f32.partialorder %v4781, 0.0
        %vm4830 = vcmp.ge.f32.partialorder %v4782, 0.0
        %vm4831 = vcmp.ge.f32.partialorder %v4783, 0.0
        %vm4832 = vcmp.ge.f32.partialorder %v4784, 0.0
        %vm4833 = vcmp.ge.f32.partialorder %v4785, 0.0
        %vm4834 = vcmp.ge.f32.partialorder %v4786, 0.0
        %vm4835 = vcmp.ge.f32.partialorder %v4787, 0.0
        %vm4836 = vcmp.ge.f32.partialorder %v4788, 0.0
        %vm4837 = vcmp.ge.f32.partialorder %v4789, 0.0
        %vm4838 = vcmp.ge.f32.partialorder %v4790, 0.0
        %vm4839 = vcmp.ge.f32.partialorder %v4791, 0.0
        %vm4840 = vcmp.ge.f32.partialorder %v4792, 0.0
        %vm4841 = vcmp.ge.f32.partialorder %v4793, 0.0
        %vm4842 = vcmp.ge.f32.partialorder %v4794, 0.0
        %vm4843 = vcmp.ge.f32.partialorder %v4795, 0.0
        %vm4844 = vcmp.ge.f32.partialorder %v4796, 0.0
        %vm4845 = vcmp.ge.f32.partialorder %v4797, 0.0
        %vm4846 = vcmp.ge.f32.partialorder %v4798, 0.0
        %vm4847 = vcmp.ge.f32.partialorder %v4799, 0.0
        %vm4848 = vcmp.ge.f32.partialorder %v4800, 0.0
        %vm4849 = vcmp.ge.f32.partialorder %v4801, 0.0
        %vm4850 = vcmp.ge.f32.partialorder %v4802, 0.0
        %v4851 = vsel %vm4803, 1.0, -1.0
        %v4852 = vsel %vm4804, 1.0, -1.0
        %v4853 = vsel %vm4805, 1.0, -1.0
        %v4854 = vsel %vm4806, 1.0, -1.0
        %v4855 = vsel %vm4807, 1.0, -1.0
        %v4856 = vsel %vm4808, 1.0, -1.0
        %v4857 = vsel %vm4809, 1.0, -1.0
        %v4858 = vsel %vm4810, 1.0, -1.0
        %v4859 = vsel %vm4811, 1.0, -1.0
        %v4860 = vsel %vm4812, 1.0, -1.0
        %v4861 = vsel %vm4813, 1.0, -1.0
        %v4862 = vsel %vm4814, 1.0, -1.0
        %v4863 = vsel %vm4815, 1.0, -1.0
        %v4864 = vsel %vm4816, 1.0, -1.0
        %v4865 = vsel %vm4817, 1.0, -1.0
        %v4866 = vsel %vm4818, 1.0, -1.0
        %v4867 = vsel %vm4819, 1.0, -1.0
        %v4868 = vsel %vm4820, 1.0, -1.0
        %v4869 = vsel %vm4821, 1.0, -1.0
        %v4870 = vsel %vm4822, 1.0, -1.0
        %v4871 = vsel %vm4823, 1.0, -1.0
        %v4872 = vsel %vm4824, 1.0, -1.0
        %v4873 = vsel %vm4825, 1.0, -1.0
        %v4874 = vsel %vm4826, 1.0, -1.0
        %v4875 = vsel %vm4827, 1.0, -1.0
        %v4876 = vsel %vm4828, 1.0, -1.0
        %v4877 = vsel %vm4829, 1.0, -1.0
        %v4878 = vsel %vm4830, 1.0, -1.0
        %v4879 = vsel %vm4831, 1.0, -1.0
        %v4880 = vsel %vm4832, 1.0, -1.0
        %v4881 = vsel %vm4833, 1.0, -1.0
        %v4882 = vsel %vm4834, 1.0, -1.0
        %v4883 = vsel %vm4835, 1.0, -1.0
        %v4884 = vsel %vm4836, 1.0, -1.0
        %v4885 = vsel %vm4837, 1.0, -1.0
        %v4886 = vsel %vm4838, 1.0, -1.0
        %v4887 = vsel %vm4839, 1.0, -1.0
        %v4888 = vsel %vm4840, 1.0, -1.0
        %v4889 = vsel %vm4841, 1.0, -1.0
        %v4890 = vsel %vm4842, 1.0, -1.0
        %v4891 = vsel %vm4843, 1.0, -1.0
        %v4892 = vsel %vm4844, 1.0, -1.0
        %v4893 = vsel %vm4845, 1.0, -1.0
        %v4894 = vsel %vm4846, 1.0, -1.0
        %v4895 = vsel %vm4847, 1.0, -1.0
        %v4896 = vsel %vm4848, 1.0, -1.0
        %v4897 = vsel %vm4849, 1.0, -1.0
        %v4898 = vsel %vm4850, 1.0, -1.0
        %v4899 = vmul.f32 %v4755, %v4851
        %v4900 = vmul.f32 %v4756, %v4852
        %v4901 = vmul.f32 %v4757, %v4853
        %v4902 = vmul.f32 %v4758, %v4854
        %v4903 = vmul.f32 %v4759, %v4855
        %v4904 = vmul.f32 %v4760, %v4856
        %v4905 = vmul.f32 %v4761, %v4857
        %v4906 = vmul.f32 %v4762, %v4858
        %v4907 = vmul.f32 %v4763, %v4859
        %v4908 = vmul.f32 %v4764, %v4860
        %v4909 = vmul.f32 %v4765, %v4861
        %v4910 = vmul.f32 %v4766, %v4862
        %v4911 = vmul.f32 %v4767, %v4863
        %v4912 = vmul.f32 %v4768, %v4864
        %v4913 = vmul.f32 %v4769, %v4865
        %v4914 = vmul.f32 %v4770, %v4866
        %v4915 = vmul.f32 %v4771, %v4867
        %v4916 = vmul.f32 %v4772, %v4868
        %v4917 = vmul.f32 %v4773, %v4869
        %v4918 = vmul.f32 %v4774, %v4870
        %v4919 = vmul.f32 %v4775, %v4871
        %v4920 = vmul.f32 %v4776, %v4872
        %v4921 = vmul.f32 %v4777, %v4873
        %v4922 = vmul.f32 %v4778, %v4874
        %v4923 = vmul.f32 %v4779, %v4875
        %v4924 = vmul.f32 %v4780, %v4876
        %v4925 = vmul.f32 %v4781, %v4877
        %v4926 = vmul.f32 %v4782, %v4878
        %v4927 = vmul.f32 %v4783, %v4879
        %v4928 = vmul.f32 %v4784, %v4880
        %v4929 = vmul.f32 %v4785, %v4881
        %v4930 = vmul.f32 %v4786, %v4882
        %v4931 = vmul.f32 %v4787, %v4883
        %v4932 = vmul.f32 %v4788, %v4884
        %v4933 = vmul.f32 %v4789, %v4885
        %v4934 = vmul.f32 %v4790, %v4886
        %v4935 = vmul.f32 %v4791, %v4887
        %v4936 = vmul.f32 %v4792, %v4888
        %v4937 = vmul.f32 %v4793, %v4889
        %v4938 = vmul.f32 %v4794, %v4890
        %v4939 = vmul.f32 %v4795, %v4891
        %v4940 = vmul.f32 %v4796, %v4892
        %v4941 = vmul.f32 %v4797, %v4893
        %v4942 = vmul.f32 %v4798, %v4894
        %v4943 = vmul.f32 %v4799, %v4895
        %v4944 = vmul.f32 %v4800, %v4896
        %v4945 = vmul.f32 %v4801, %v4897
        %v4946 = vmul.f32 %v4802, %v4898
        %v4947 = vmul.f32 %v4899, 0.3275911
        %v4948 = vmul.f32 %v4900, 0.3275911
        %v4949 = vmul.f32 %v4901, 0.3275911
        %v4950 = vmul.f32 %v4902, 0.3275911
        %v4951 = vmul.f32 %v4903, 0.3275911
        %v4952 = vmul.f32 %v4904, 0.3275911
        %v4953 = vmul.f32 %v4905, 0.3275911
        %v4954 = vmul.f32 %v4906, 0.3275911
        %v4955 = vmul.f32 %v4907, 0.3275911
        %v4956 = vmul.f32 %v4908, 0.3275911
        %v4957 = vmul.f32 %v4909, 0.3275911
        %v4958 = vmul.f32 %v4910, 0.3275911
        %v4959 = vmul.f32 %v4911, 0.3275911
        %v4960 = vmul.f32 %v4912, 0.3275911
        %v4961 = vmul.f32 %v4913, 0.3275911
        %v4962 = vmul.f32 %v4914, 0.3275911
        %v4963 = vmul.f32 %v4915, 0.3275911
        %v4964 = vmul.f32 %v4916, 0.3275911
        %v4965 = vmul.f32 %v4917, 0.3275911
        %v4966 = vmul.f32 %v4918, 0.3275911
        %v4967 = vmul.f32 %v4919, 0.3275911
        %v4968 = vmul.f32 %v4920, 0.3275911
        %v4969 = vmul.f32 %v4921, 0.3275911
        %v4970 = vmul.f32 %v4922, 0.3275911
        %v4971 = vmul.f32 %v4923, 0.3275911
        %v4972 = vmul.f32 %v4924, 0.3275911
        %v4973 = vmul.f32 %v4925, 0.3275911
        %v4974 = vmul.f32 %v4926, 0.3275911
        %v4975 = vmul.f32 %v4927, 0.3275911
        %v4976 = vmul.f32 %v4928, 0.3275911
        %v4977 = vmul.f32 %v4929, 0.3275911
        %v4978 = vmul.f32 %v4930, 0.3275911
        %v4979 = vmul.f32 %v4931, 0.3275911
        %v4980 = vmul.f32 %v4932, 0.3275911
        %v4981 = vmul.f32 %v4933, 0.3275911
        %v4982 = vmul.f32 %v4934, 0.3275911
        %v4983 = vmul.f32 %v4935, 0.3275911
        %v4984 = vmul.f32 %v4936, 0.3275911
        %v4985 = vmul.f32 %v4937, 0.3275911
        %v4986 = vmul.f32 %v4938, 0.3275911
        %v4987 = vmul.f32 %v4939, 0.3275911
        %v4988 = vmul.f32 %v4940, 0.3275911
        %v4989 = vmul.f32 %v4941, 0.3275911
        %v4990 = vmul.f32 %v4942, 0.3275911
        %v4991 = vmul.f32 %v4943, 0.3275911
        %v4992 = vmul.f32 %v4944, 0.3275911
        %v4993 = vmul.f32 %v4945, 0.3275911
        %v4994 = vmul.f32 %v4946, 0.3275911
        %v4995 = vadd.f32 %v4947, 1.0
        %v4996 = vadd.f32 %v4948, 1.0
        %v4997 = vadd.f32 %v4949, 1.0
        %v4998 = vadd.f32 %v4950, 1.0
        %v4999 = vadd.f32 %v4951, 1.0
        %v5000 = vadd.f32 %v4952, 1.0
        %v5001 = vadd.f32 %v4953, 1.0
        %v5002 = vadd.f32 %v4954, 1.0
        %v5003 = vadd.f32 %v4955, 1.0
        %v5004 = vadd.f32 %v4956, 1.0
        %v5005 = vadd.f32 %v4957, 1.0
        %v5006 = vadd.f32 %v4958, 1.0
        %v5007 = vadd.f32 %v4959, 1.0
        %v5008 = vadd.f32 %v4960, 1.0
        %v5009 = vadd.f32 %v4961, 1.0
        %v5010 = vadd.f32 %v4962, 1.0
        %v5011 = vadd.f32 %v4963, 1.0
        %v5012 = vadd.f32 %v4964, 1.0
        %v5013 = vadd.f32 %v4965, 1.0
        %v5014 = vadd.f32 %v4966, 1.0
        %v5015 = vadd.f32 %v4967, 1.0
        %v5016 = vadd.f32 %v4968, 1.0
        %v5017 = vadd.f32 %v4969, 1.0
        %v5018 = vadd.f32 %v4970, 1.0
        %v5019 = vadd.f32 %v4971, 1.0
        %v5020 = vadd.f32 %v4972, 1.0
        %v5021 = vadd.f32 %v4973, 1.0
        %v5022 = vadd.f32 %v4974, 1.0
        %v5023 = vadd.f32 %v4975, 1.0
        %v5024 = vadd.f32 %v4976, 1.0
        %v5025 = vadd.f32 %v4977, 1.0
        %v5026 = vadd.f32 %v4978, 1.0
        %v5027 = vadd.f32 %v4979, 1.0
        %v5028 = vadd.f32 %v4980, 1.0
        %v5029 = vadd.f32 %v4981, 1.0
        %v5030 = vadd.f32 %v4982, 1.0
        %v5031 = vadd.f32 %v4983, 1.0
        %v5032 = vadd.f32 %v4984, 1.0
        %v5033 = vadd.f32 %v4985, 1.0
        %v5034 = vadd.f32 %v4986, 1.0
        %v5035 = vadd.f32 %v4987, 1.0
        %v5036 = vadd.f32 %v4988, 1.0
        %v5037 = vadd.f32 %v4989, 1.0
        %v5038 = vadd.f32 %v4990, 1.0
        %v5039 = vadd.f32 %v4991, 1.0
        %v5040 = vadd.f32 %v4992, 1.0
        %v5041 = vadd.f32 %v4993, 1.0
        %v5042 = vadd.f32 %v4994, 1.0
        %v5043 = vrcp.pop %v4995
        %v5044 = vmul.f32 1.0, %v5043
        %v5045 = vrcp.pop %v4996
        %v5046 = vmul.f32 1.0, %v5045
        %v5047 = vrcp.pop %v4997
        %v5048 = vmul.f32 1.0, %v5047
        %v5049 = vrcp.pop %v4998
        %v5050 = vmul.f32 1.0, %v5049
        %v5051 = vrcp.pop %v4999
        %v5052 = vmul.f32 1.0, %v5051
        %v5053 = vrcp.pop %v5000
        %v5054 = vmul.f32 1.0, %v5053
        %v5055 = vrcp.pop %v5001
        %v5056 = vmul.f32 1.0, %v5055
        %v5057 = vrcp.pop %v5002
        %v5058 = vmul.f32 1.0, %v5057
        %v5059 = vrcp.pop %v5003
        %v5060 = vmul.f32 1.0, %v5059
        %v5061 = vrcp.pop %v5004
        %v5062 = vmul.f32 1.0, %v5061
        %v5063 = vrcp.pop %v5005
        %v5064 = vmul.f32 1.0, %v5063
        %v5065 = vrcp.pop %v5006
        %v5066 = vmul.f32 1.0, %v5065
        %v5067 = vrcp.pop %v5007
        %v5068 = vmul.f32 1.0, %v5067
        %v5069 = vrcp.pop %v5008
        %v5070 = vmul.f32 1.0, %v5069
        %v5071 = vrcp.pop %v5009
        %v5072 = vmul.f32 1.0, %v5071
        %v5073 = vrcp.pop %v5010
        %v5074 = vmul.f32 1.0, %v5073
        %v5075 = vrcp.pop %v5011
        %v5076 = vmul.f32 1.0, %v5075
        %v5077 = vrcp.pop %v5012
        %v5078 = vmul.f32 1.0, %v5077
        %v5079 = vrcp.pop %v5013
        %v5080 = vmul.f32 1.0, %v5079
        %v5081 = vrcp.pop %v5014
        %v5082 = vmul.f32 1.0, %v5081
        %v5083 = vrcp.pop %v5015
        %v5084 = vmul.f32 1.0, %v5083
        %v5085 = vrcp.pop %v5016
        %v5086 = vmul.f32 1.0, %v5085
        %v5087 = vrcp.pop %v5017
        %v5088 = vmul.f32 1.0, %v5087
        %v5089 = vrcp.pop %v5018
        %v5090 = vmul.f32 1.0, %v5089
        %v5091 = vrcp.pop %v5019
        %v5092 = vmul.f32 1.0, %v5091
        %v5093 = vrcp.pop %v5020
        %v5094 = vmul.f32 1.0, %v5093
        %v5095 = vrcp.pop %v5021
        %v5096 = vmul.f32 1.0, %v5095
        %v5097 = vrcp.pop %v5022
        %v5098 = vmul.f32 1.0, %v5097
        %v5099 = vrcp.pop %v5023
        %v5100 = vmul.f32 1.0, %v5099
        %v5101 = vrcp.pop %v5024
        %v5102 = vmul.f32 1.0, %v5101
        %v5103 = vrcp.pop %v5025
        %v5104 = vmul.f32 1.0, %v5103
        %v5105 = vrcp.pop %v5026
        %v5106 = vmul.f32 1.0, %v5105
        %v5107 = vrcp.pop %v5027
        %v5108 = vmul.f32 1.0, %v5107
        %v5109 = vrcp.pop %v5028
        %v5110 = vmul.f32 1.0, %v5109
        %v5111 = vrcp.pop %v5029
        %v5112 = vmul.f32 1.0, %v5111
        %v5113 = vrcp.pop %v5030
        %v5114 = vmul.f32 1.0, %v5113
        %v5115 = vrcp.pop %v5031
        %v5116 = vmul.f32 1.0, %v5115
        %v5117 = vrcp.pop %v5032
        %v5118 = vmul.f32 1.0, %v5117
        %v5119 = vrcp.pop %v5033
        %v5120 = vmul.f32 1.0, %v5119
        %v5121 = vrcp.pop %v5034
        %v5122 = vmul.f32 1.0, %v5121
        %v5123 = vrcp.pop %v5035
        %v5124 = vmul.f32 1.0, %v5123
        %v5125 = vrcp.pop %v5036
        %v5126 = vmul.f32 1.0, %v5125
        %v5127 = vrcp.pop %v5037
        %v5128 = vmul.f32 1.0, %v5127
        %v5129 = vrcp.pop %v5038
        %v5130 = vmul.f32 1.0, %v5129
        %v5131 = vrcp.pop %v5039
        %v5132 = vmul.f32 1.0, %v5131
        %v5133 = vrcp.pop %v5040
        %v5134 = vmul.f32 1.0, %v5133
        %v5135 = vrcp.pop %v5041
        %v5136 = vmul.f32 1.0, %v5135
        %v5137 = vrcp.pop %v5042
        %v5138 = vmul.f32 1.0, %v5137
        %v5139 = vmul.f32 %v5044, 1.0614054
        %v5140 = vmul.f32 %v5046, 1.0614054
        %v5141 = vmul.f32 %v5048, 1.0614054
        %v5142 = vmul.f32 %v5050, 1.0614054
        %v5143 = vmul.f32 %v5052, 1.0614054
        %v5144 = vmul.f32 %v5054, 1.0614054
        %v5145 = vmul.f32 %v5056, 1.0614054
        %v5146 = vmul.f32 %v5058, 1.0614054
        %v5147 = vmul.f32 %v5060, 1.0614054
        %v5148 = vmul.f32 %v5062, 1.0614054
        %v5149 = vmul.f32 %v5064, 1.0614054
        %v5150 = vmul.f32 %v5066, 1.0614054
        %v5151 = vmul.f32 %v5068, 1.0614054
        %v5152 = vmul.f32 %v5070, 1.0614054
        %v5153 = vmul.f32 %v5072, 1.0614054
        %v5154 = vmul.f32 %v5074, 1.0614054
        %v5155 = vmul.f32 %v5076, 1.0614054
        %v5156 = vmul.f32 %v5078, 1.0614054
        %v5157 = vmul.f32 %v5080, 1.0614054
        %v5158 = vmul.f32 %v5082, 1.0614054
        %v5159 = vmul.f32 %v5084, 1.0614054
        %v5160 = vmul.f32 %v5086, 1.0614054
        %v5161 = vmul.f32 %v5088, 1.0614054
        %v5162 = vmul.f32 %v5090, 1.0614054
        %v5163 = vmul.f32 %v5092, 1.0614054
        %v5164 = vmul.f32 %v5094, 1.0614054
        %v5165 = vmul.f32 %v5096, 1.0614054
        %v5166 = vmul.f32 %v5098, 1.0614054
        %v5167 = vmul.f32 %v5100, 1.0614054
        %v5168 = vmul.f32 %v5102, 1.0614054
        %v5169 = vmul.f32 %v5104, 1.0614054
        %v5170 = vmul.f32 %v5106, 1.0614054
        %v5171 = vmul.f32 %v5108, 1.0614054
        %v5172 = vmul.f32 %v5110, 1.0614054
        %v5173 = vmul.f32 %v5112, 1.0614054
        %v5174 = vmul.f32 %v5114, 1.0614054
        %v5175 = vmul.f32 %v5116, 1.0614054
        %v5176 = vmul.f32 %v5118, 1.0614054
        %v5177 = vmul.f32 %v5120, 1.0614054
        %v5178 = vmul.f32 %v5122, 1.0614054
        %v5179 = vmul.f32 %v5124, 1.0614054
        %v5180 = vmul.f32 %v5126, 1.0614054
        %v5181 = vmul.f32 %v5128, 1.0614054
        %v5182 = vmul.f32 %v5130, 1.0614054
        %v5183 = vmul.f32 %v5132, 1.0614054
        %v5184 = vmul.f32 %v5134, 1.0614054
        %v5185 = vmul.f32 %v5136, 1.0614054
        %v5186 = vmul.f32 %v5138, 1.0614054
        %v5187 = vadd.f32 %v5139, -1.4531521
        %v5188 = vadd.f32 %v5140, -1.4531521
        %v5189 = vadd.f32 %v5141, -1.4531521
        %v5190 = vadd.f32 %v5142, -1.4531521
        %v5191 = vadd.f32 %v5143, -1.4531521
        %v5192 = vadd.f32 %v5144, -1.4531521
        %v5193 = vadd.f32 %v5145, -1.4531521
        %v5194 = vadd.f32 %v5146, -1.4531521
        %v5195 = vadd.f32 %v5147, -1.4531521
        %v5196 = vadd.f32 %v5148, -1.4531521
        %v5197 = vadd.f32 %v5149, -1.4531521
        %v5198 = vadd.f32 %v5150, -1.4531521
        %v5199 = vadd.f32 %v5151, -1.4531521
        %v5200 = vadd.f32 %v5152, -1.4531521
        %v5201 = vadd.f32 %v5153, -1.4531521
        %v5202 = vadd.f32 %v5154, -1.4531521
        %v5203 = vadd.f32 %v5155, -1.4531521
        %v5204 = vadd.f32 %v5156, -1.4531521
        %v5205 = vadd.f32 %v5157, -1.4531521
        %v5206 = vadd.f32 %v5158, -1.4531521
        %v5207 = vadd.f32 %v5159, -1.4531521
        %v5208 = vadd.f32 %v5160, -1.4531521
        %v5209 = vadd.f32 %v5161, -1.4531521
        %v5210 = vadd.f32 %v5162, -1.4531521
        %v5211 = vadd.f32 %v5163, -1.4531521
        %v5212 = vadd.f32 %v5164, -1.4531521
        %v5213 = vadd.f32 %v5165, -1.4531521
        %v5214 = vadd.f32 %v5166, -1.4531521
        %v5215 = vadd.f32 %v5167, -1.4531521
        %v5216 = vadd.f32 %v5168, -1.4531521
        %v5217 = vadd.f32 %v5169, -1.4531521
        %v5218 = vadd.f32 %v5170, -1.4531521
        %v5219 = vadd.f32 %v5171, -1.4531521
        %v5220 = vadd.f32 %v5172, -1.4531521
        %v5221 = vadd.f32 %v5173, -1.4531521
        %v5222 = vadd.f32 %v5174, -1.4531521
        %v5223 = vadd.f32 %v5175, -1.4531521
        %v5224 = vadd.f32 %v5176, -1.4531521
        %v5225 = vadd.f32 %v5177, -1.4531521
        %v5226 = vadd.f32 %v5178, -1.4531521
        %v5227 = vadd.f32 %v5179, -1.4531521
        %v5228 = vadd.f32 %v5180, -1.4531521
        %v5229 = vadd.f32 %v5181, -1.4531521
        %v5230 = vadd.f32 %v5182, -1.4531521
        %v5231 = vadd.f32 %v5183, -1.4531521
        %v5232 = vadd.f32 %v5184, -1.4531521
        %v5233 = vadd.f32 %v5185, -1.4531521
        %v5234 = vadd.f32 %v5186, -1.4531521
        %v5235 = vmul.f32 %v5187, %v5044
        %v5236 = vmul.f32 %v5188, %v5046
        %v5237 = vmul.f32 %v5189, %v5048
        %v5238 = vmul.f32 %v5190, %v5050
        %v5239 = vmul.f32 %v5191, %v5052
        %v5240 = vmul.f32 %v5192, %v5054
        %v5241 = vmul.f32 %v5193, %v5056
        %v5242 = vmul.f32 %v5194, %v5058
        %v5243 = vmul.f32 %v5195, %v5060
        %v5244 = vmul.f32 %v5196, %v5062
        %v5245 = vmul.f32 %v5197, %v5064
        %v5246 = vmul.f32 %v5198, %v5066
        %v5247 = vmul.f32 %v5199, %v5068
        %v5248 = vmul.f32 %v5200, %v5070
        %v5249 = vmul.f32 %v5201, %v5072
        %v5250 = vmul.f32 %v5202, %v5074
        %v5251 = vmul.f32 %v5203, %v5076
        %v5252 = vmul.f32 %v5204, %v5078
        %v5253 = vmul.f32 %v5205, %v5080
        %v5254 = vmul.f32 %v5206, %v5082
        %v5255 = vmul.f32 %v5207, %v5084
        %v5256 = vmul.f32 %v5208, %v5086
        %v5257 = vmul.f32 %v5209, %v5088
        %v5258 = vmul.f32 %v5210, %v5090
        %v5259 = vmul.f32 %v5211, %v5092
        %v5260 = vmul.f32 %v5212, %v5094
        %v5261 = vmul.f32 %v5213, %v5096
        %v5262 = vmul.f32 %v5214, %v5098
        %v5263 = vmul.f32 %v5215, %v5100
        %v5264 = vmul.f32 %v5216, %v5102
        %v5265 = vmul.f32 %v5217, %v5104
        %v5266 = vmul.f32 %v5218, %v5106
        %v5267 = vmul.f32 %v5219, %v5108
        %v5268 = vmul.f32 %v5220, %v5110
        %v5269 = vmul.f32 %v5221, %v5112
        %v5270 = vmul.f32 %v5222, %v5114
        %v5271 = vmul.f32 %v5223, %v5116
        %v5272 = vmul.f32 %v5224, %v5118
        %v5273 = vmul.f32 %v5225, %v5120
        %v5274 = vmul.f32 %v5226, %v5122
        %v5275 = vmul.f32 %v5227, %v5124
        %v5276 = vmul.f32 %v5228, %v5126
        %v5277 = vmul.f32 %v5229, %v5128
        %v5278 = vmul.f32 %v5230, %v5130
        %v5279 = vmul.f32 %v5231, %v5132
        %v5280 = vmul.f32 %v5232, %v5134
        %v5281 = vmul.f32 %v5233, %v5136
        %v5282 = vmul.f32 %v5234, %v5138
        %v5283 = vadd.f32 %v5235, 1.4214138
        %v5284 = vadd.f32 %v5236, 1.4214138
        %v5285 = vadd.f32 %v5237, 1.4214138
        %v5286 = vadd.f32 %v5238, 1.4214138
        %v5287 = vadd.f32 %v5239, 1.4214138
        %v5288 = vadd.f32 %v5240, 1.4214138
        %v5289 = vadd.f32 %v5241, 1.4214138
        %v5290 = vadd.f32 %v5242, 1.4214138
        %v5291 = vadd.f32 %v5243, 1.4214138
        %v5292 = vadd.f32 %v5244, 1.4214138
        %v5293 = vadd.f32 %v5245, 1.4214138
        %v5294 = vadd.f32 %v5246, 1.4214138
        %v5295 = vadd.f32 %v5247, 1.4214138
        %v5296 = vadd.f32 %v5248, 1.4214138
        %v5297 = vadd.f32 %v5249, 1.4214138
        %v5298 = vadd.f32 %v5250, 1.4214138
        %v5299 = vadd.f32 %v5251, 1.4214138
        %v5300 = vadd.f32 %v5252, 1.4214138
        %v5301 = vadd.f32 %v5253, 1.4214138
        %v5302 = vadd.f32 %v5254, 1.4214138
        %v5303 = vadd.f32 %v5255, 1.4214138
        %v5304 = vadd.f32 %v5256, 1.4214138
        %v5305 = vadd.f32 %v5257, 1.4214138
        %v5306 = vadd.f32 %v5258, 1.4214138
        %v5307 = vadd.f32 %v5259, 1.4214138
        %v5308 = vadd.f32 %v5260, 1.4214138
        %v5309 = vadd.f32 %v5261, 1.4214138
        %v5310 = vadd.f32 %v5262, 1.4214138
        %v5311 = vadd.f32 %v5263, 1.4214138
        %v5312 = vadd.f32 %v5264, 1.4214138
        %v5313 = vadd.f32 %v5265, 1.4214138
        %v5314 = vadd.f32 %v5266, 1.4214138
        %v5315 = vadd.f32 %v5267, 1.4214138
        %v5316 = vadd.f32 %v5268, 1.4214138
        %v5317 = vadd.f32 %v5269, 1.4214138
        %v5318 = vadd.f32 %v5270, 1.4214138
        %v5319 = vadd.f32 %v5271, 1.4214138
        %v5320 = vadd.f32 %v5272, 1.4214138
        %v5321 = vadd.f32 %v5273, 1.4214138
        %v5322 = vadd.f32 %v5274, 1.4214138
        %v5323 = vadd.f32 %v5275, 1.4214138
        %v5324 = vadd.f32 %v5276, 1.4214138
        %v5325 = vadd.f32 %v5277, 1.4214138
        %v5326 = vadd.f32 %v5278, 1.4214138
        %v5327 = vadd.f32 %v5279, 1.4214138
        %v5328 = vadd.f32 %v5280, 1.4214138
        %v5329 = vadd.f32 %v5281, 1.4214138
        %v5330 = vadd.f32 %v5282, 1.4214138
        %v5331 = vmul.f32 %v5283, %v5044
        %v5332 = vmul.f32 %v5284, %v5046
        %v5333 = vmul.f32 %v5285, %v5048
        %v5334 = vmul.f32 %v5286, %v5050
        %v5335 = vmul.f32 %v5287, %v5052
        %v5336 = vmul.f32 %v5288, %v5054
        %v5337 = vmul.f32 %v5289, %v5056
        %v5338 = vmul.f32 %v5290, %v5058
        %v5339 = vmul.f32 %v5291, %v5060
        %v5340 = vmul.f32 %v5292, %v5062
        %v5341 = vmul.f32 %v5293, %v5064
        %v5342 = vmul.f32 %v5294, %v5066
        %v5343 = vmul.f32 %v5295, %v5068
        %v5344 = vmul.f32 %v5296, %v5070
        %v5345 = vmul.f32 %v5297, %v5072
        %v5346 = vmul.f32 %v5298, %v5074
        %v5347 = vmul.f32 %v5299, %v5076
        %v5348 = vmul.f32 %v5300, %v5078
        %v5349 = vmul.f32 %v5301, %v5080
        %v5350 = vmul.f32 %v5302, %v5082
        %v5351 = vmul.f32 %v5303, %v5084
        %v5352 = vmul.f32 %v5304, %v5086
        %v5353 = vmul.f32 %v5305, %v5088
        %v5354 = vmul.f32 %v5306, %v5090
        %v5355 = vmul.f32 %v5307, %v5092
        %v5356 = vmul.f32 %v5308, %v5094
        %v5357 = vmul.f32 %v5309, %v5096
        %v5358 = vmul.f32 %v5310, %v5098
        %v5359 = vmul.f32 %v5311, %v5100
        %v5360 = vmul.f32 %v5312, %v5102
        %v5361 = vmul.f32 %v5313, %v5104
        %v5362 = vmul.f32 %v5314, %v5106
        %v5363 = vmul.f32 %v5315, %v5108
        %v5364 = vmul.f32 %v5316, %v5110
        %v5365 = vmul.f32 %v5317, %v5112
        %v5366 = vmul.f32 %v5318, %v5114
        %v5367 = vmul.f32 %v5319, %v5116
        %v5368 = vmul.f32 %v5320, %v5118
        %v5369 = vmul.f32 %v5321, %v5120
        %v5370 = vmul.f32 %v5322, %v5122
        %v5371 = vmul.f32 %v5323, %v5124
        %v5372 = vmul.f32 %v5324, %v5126
        %v5373 = vmul.f32 %v5325, %v5128
        %v5374 = vmul.f32 %v5326, %v5130
        %v5375 = vmul.f32 %v5327, %v5132
        %v5376 = vmul.f32 %v5328, %v5134
        %v5377 = vmul.f32 %v5329, %v5136
        %v5378 = vmul.f32 %v5330, %v5138
        %v5379 = vadd.f32 %v5331, -0.28449672
        %v5380 = vadd.f32 %v5332, -0.28449672
        %v5381 = vadd.f32 %v5333, -0.28449672
        %v5382 = vadd.f32 %v5334, -0.28449672
        %v5383 = vadd.f32 %v5335, -0.28449672
        %v5384 = vadd.f32 %v5336, -0.28449672
        %v5385 = vadd.f32 %v5337, -0.28449672
        %v5386 = vadd.f32 %v5338, -0.28449672
        %v5387 = vadd.f32 %v5339, -0.28449672
        %v5388 = vadd.f32 %v5340, -0.28449672
        %v5389 = vadd.f32 %v5341, -0.28449672
        %v5390 = vadd.f32 %v5342, -0.28449672
        %v5391 = vadd.f32 %v5343, -0.28449672
        %v5392 = vadd.f32 %v5344, -0.28449672
        %v5393 = vadd.f32 %v5345, -0.28449672
        %v5394 = vadd.f32 %v5346, -0.28449672
        %v5395 = vadd.f32 %v5347, -0.28449672
        %v5396 = vadd.f32 %v5348, -0.28449672
        %v5397 = vadd.f32 %v5349, -0.28449672
        %v5398 = vadd.f32 %v5350, -0.28449672
        %v5399 = vadd.f32 %v5351, -0.28449672
        %v5400 = vadd.f32 %v5352, -0.28449672
        %v5401 = vadd.f32 %v5353, -0.28449672
        %v5402 = vadd.f32 %v5354, -0.28449672
        %v5403 = vadd.f32 %v5355, -0.28449672
        %v5404 = vadd.f32 %v5356, -0.28449672
        %v5405 = vadd.f32 %v5357, -0.28449672
        %v5406 = vadd.f32 %v5358, -0.28449672
        %v5407 = vadd.f32 %v5359, -0.28449672
        %v5408 = vadd.f32 %v5360, -0.28449672
        %v5409 = vadd.f32 %v5361, -0.28449672
        %v5410 = vadd.f32 %v5362, -0.28449672
        %v5411 = vadd.f32 %v5363, -0.28449672
        %v5412 = vadd.f32 %v5364, -0.28449672
        %v5413 = vadd.f32 %v5365, -0.28449672
        %v5414 = vadd.f32 %v5366, -0.28449672
        %v5415 = vadd.f32 %v5367, -0.28449672
        %v5416 = vadd.f32 %v5368, -0.28449672
        %v5417 = vadd.f32 %v5369, -0.28449672
        %v5418 = vadd.f32 %v5370, -0.28449672
        %v5419 = vadd.f32 %v5371, -0.28449672
        %v5420 = vadd.f32 %v5372, -0.28449672
        %v5421 = vadd.f32 %v5373, -0.28449672
        %v5422 = vadd.f32 %v5374, -0.28449672
        %v5423 = vadd.f32 %v5375, -0.28449672
        %v5424 = vadd.f32 %v5376, -0.28449672
        %v5425 = vadd.f32 %v5377, -0.28449672
        %v5426 = vadd.f32 %v5378, -0.28449672
        %v5427 = vmul.f32 %v5379, %v5044
        %v5428 = vmul.f32 %v5380, %v5046
        %v5429 = vmul.f32 %v5381, %v5048
        %v5430 = vmul.f32 %v5382, %v5050
        %v5431 = vmul.f32 %v5383, %v5052
        %v5432 = vmul.f32 %v5384, %v5054
        %v5433 = vmul.f32 %v5385, %v5056
        %v5434 = vmul.f32 %v5386, %v5058
        %v5435 = vmul.f32 %v5387, %v5060
        %v5436 = vmul.f32 %v5388, %v5062
        %v5437 = vmul.f32 %v5389, %v5064
        %v5438 = vmul.f32 %v5390, %v5066
        %v5439 = vmul.f32 %v5391, %v5068
        %v5440 = vmul.f32 %v5392, %v5070
        %v5441 = vmul.f32 %v5393, %v5072
        %v5442 = vmul.f32 %v5394, %v5074
        %v5443 = vmul.f32 %v5395, %v5076
        %v5444 = vmul.f32 %v5396, %v5078
        %v5445 = vmul.f32 %v5397, %v5080
        %v5446 = vmul.f32 %v5398, %v5082
        %v5447 = vmul.f32 %v5399, %v5084
        %v5448 = vmul.f32 %v5400, %v5086
        %v5449 = vmul.f32 %v5401, %v5088
        %v5450 = vmul.f32 %v5402, %v5090
        %v5451 = vmul.f32 %v5403, %v5092
        %v5452 = vmul.f32 %v5404, %v5094
        %v5453 = vmul.f32 %v5405, %v5096
        %v5454 = vmul.f32 %v5406, %v5098
        %v5455 = vmul.f32 %v5407, %v5100
        %v5456 = vmul.f32 %v5408, %v5102
        %v5457 = vmul.f32 %v5409, %v5104
        %v5458 = vmul.f32 %v5410, %v5106
        %v5459 = vmul.f32 %v5411, %v5108
        %v5460 = vmul.f32 %v5412, %v5110
        %v5461 = vmul.f32 %v5413, %v5112
        %v5462 = vmul.f32 %v5414, %v5114
        %v5463 = vmul.f32 %v5415, %v5116
        %v5464 = vmul.f32 %v5416, %v5118
        %v5465 = vmul.f32 %v5417, %v5120
        %v5466 = vmul.f32 %v5418, %v5122
        %v5467 = vmul.f32 %v5419, %v5124
        %v5468 = vmul.f32 %v5420, %v5126
        %v5469 = vmul.f32 %v5421, %v5128
        %v5470 = vmul.f32 %v5422, %v5130
        %v5471 = vmul.f32 %v5423, %v5132
        %v5472 = vmul.f32 %v5424, %v5134
        %v5473 = vmul.f32 %v5425, %v5136
        %v5474 = vmul.f32 %v5426, %v5138
        %v5475 = vadd.f32 %v5427, 0.2548296
        %v5476 = vadd.f32 %v5428, 0.2548296
        %v5477 = vadd.f32 %v5429, 0.2548296
        %v5478 = vadd.f32 %v5430, 0.2548296
        %v5479 = vadd.f32 %v5431, 0.2548296
        %v5480 = vadd.f32 %v5432, 0.2548296
        %v5481 = vadd.f32 %v5433, 0.2548296
        %v5482 = vadd.f32 %v5434, 0.2548296
        %v5483 = vadd.f32 %v5435, 0.2548296
        %v5484 = vadd.f32 %v5436, 0.2548296
        %v5485 = vadd.f32 %v5437, 0.2548296
        %v5486 = vadd.f32 %v5438, 0.2548296
        %v5487 = vadd.f32 %v5439, 0.2548296
        %v5488 = vadd.f32 %v5440, 0.2548296
        %v5489 = vadd.f32 %v5441, 0.2548296
        %v5490 = vadd.f32 %v5442, 0.2548296
        %v5491 = vadd.f32 %v5443, 0.2548296
        %v5492 = vadd.f32 %v5444, 0.2548296
        %v5493 = vadd.f32 %v5445, 0.2548296
        %v5494 = vadd.f32 %v5446, 0.2548296
        %v5495 = vadd.f32 %v5447, 0.2548296
        %v5496 = vadd.f32 %v5448, 0.2548296
        %v5497 = vadd.f32 %v5449, 0.2548296
        %v5498 = vadd.f32 %v5450, 0.2548296
        %v5499 = vadd.f32 %v5451, 0.2548296
        %v5500 = vadd.f32 %v5452, 0.2548296
        %v5501 = vadd.f32 %v5453, 0.2548296
        %v5502 = vadd.f32 %v5454, 0.2548296
        %v5503 = vadd.f32 %v5455, 0.2548296
        %v5504 = vadd.f32 %v5456, 0.2548296
        %v5505 = vadd.f32 %v5457, 0.2548296
        %v5506 = vadd.f32 %v5458, 0.2548296
        %v5507 = vadd.f32 %v5459, 0.2548296
        %v5508 = vadd.f32 %v5460, 0.2548296
        %v5509 = vadd.f32 %v5461, 0.2548296
        %v5510 = vadd.f32 %v5462, 0.2548296
        %v5511 = vadd.f32 %v5463, 0.2548296
        %v5512 = vadd.f32 %v5464, 0.2548296
        %v5513 = vadd.f32 %v5465, 0.2548296
        %v5514 = vadd.f32 %v5466, 0.2548296
        %v5515 = vadd.f32 %v5467, 0.2548296
        %v5516 = vadd.f32 %v5468, 0.2548296
        %v5517 = vadd.f32 %v5469, 0.2548296
        %v5518 = vadd.f32 %v5470, 0.2548296
        %v5519 = vadd.f32 %v5471, 0.2548296
        %v5520 = vadd.f32 %v5472, 0.2548296
        %v5521 = vadd.f32 %v5473, 0.2548296
        %v5522 = vadd.f32 %v5474, 0.2548296
        %v5523 = vmul.f32 %v5475, %v5044
        %v5524 = vmul.f32 %v5476, %v5046
        %v5525 = vmul.f32 %v5477, %v5048
        %v5526 = vmul.f32 %v5478, %v5050
        %v5527 = vmul.f32 %v5479, %v5052
        %v5528 = vmul.f32 %v5480, %v5054
        %v5529 = vmul.f32 %v5481, %v5056
        %v5530 = vmul.f32 %v5482, %v5058
        %v5531 = vmul.f32 %v5483, %v5060
        %v5532 = vmul.f32 %v5484, %v5062
        %v5533 = vmul.f32 %v5485, %v5064
        %v5534 = vmul.f32 %v5486, %v5066
        %v5535 = vmul.f32 %v5487, %v5068
        %v5536 = vmul.f32 %v5488, %v5070
        %v5537 = vmul.f32 %v5489, %v5072
        %v5538 = vmul.f32 %v5490, %v5074
        %v5539 = vmul.f32 %v5491, %v5076
        %v5540 = vmul.f32 %v5492, %v5078
        %v5541 = vmul.f32 %v5493, %v5080
        %v5542 = vmul.f32 %v5494, %v5082
        %v5543 = vmul.f32 %v5495, %v5084
        %v5544 = vmul.f32 %v5496, %v5086
        %v5545 = vmul.f32 %v5497, %v5088
        %v5546 = vmul.f32 %v5498, %v5090
        %v5547 = vmul.f32 %v5499, %v5092
        %v5548 = vmul.f32 %v5500, %v5094
        %v5549 = vmul.f32 %v5501, %v5096
        %v5550 = vmul.f32 %v5502, %v5098
        %v5551 = vmul.f32 %v5503, %v5100
        %v5552 = vmul.f32 %v5504, %v5102
        %v5553 = vmul.f32 %v5505, %v5104
        %v5554 = vmul.f32 %v5506, %v5106
        %v5555 = vmul.f32 %v5507, %v5108
        %v5556 = vmul.f32 %v5508, %v5110
        %v5557 = vmul.f32 %v5509, %v5112
        %v5558 = vmul.f32 %v5510, %v5114
        %v5559 = vmul.f32 %v5511, %v5116
        %v5560 = vmul.f32 %v5512, %v5118
        %v5561 = vmul.f32 %v5513, %v5120
        %v5562 = vmul.f32 %v5514, %v5122
        %v5563 = vmul.f32 %v5515, %v5124
        %v5564 = vmul.f32 %v5516, %v5126
        %v5565 = vmul.f32 %v5517, %v5128
        %v5566 = vmul.f32 %v5518, %v5130
        %v5567 = vmul.f32 %v5519, %v5132
        %v5568 = vmul.f32 %v5520, %v5134
        %v5569 = vmul.f32 %v5521, %v5136
        %v5570 = vmul.f32 %v5522, %v5138
        %v5571 = vsub.f32 0.0, %v4899
        %v5572 = vsub.f32 0.0, %v4900
        %v5573 = vsub.f32 0.0, %v4901
        %v5574 = vsub.f32 0.0, %v4902
        %v5575 = vsub.f32 0.0, %v4903
        %v5576 = vsub.f32 0.0, %v4904
        %v5577 = vsub.f32 0.0, %v4905
        %v5578 = vsub.f32 0.0, %v4906
        %v5579 = vsub.f32 0.0, %v4907
        %v5580 = vsub.f32 0.0, %v4908
        %v5581 = vsub.f32 0.0, %v4909
        %v5582 = vsub.f32 0.0, %v4910
        %v5583 = vsub.f32 0.0, %v4911
        %v5584 = vsub.f32 0.0, %v4912
        %v5585 = vsub.f32 0.0, %v4913
        %v5586 = vsub.f32 0.0, %v4914
        %v5587 = vsub.f32 0.0, %v4915
        %v5588 = vsub.f32 0.0, %v4916
        %v5589 = vsub.f32 0.0, %v4917
        %v5590 = vsub.f32 0.0, %v4918
        %v5591 = vsub.f32 0.0, %v4919
        %v5592 = vsub.f32 0.0, %v4920
        %v5593 = vsub.f32 0.0, %v4921
        %v5594 = vsub.f32 0.0, %v4922
        %v5595 = vsub.f32 0.0, %v4923
        %v5596 = vsub.f32 0.0, %v4924
        %v5597 = vsub.f32 0.0, %v4925
        %v5598 = vsub.f32 0.0, %v4926
        %v5599 = vsub.f32 0.0, %v4927
        %v5600 = vsub.f32 0.0, %v4928
        %v5601 = vsub.f32 0.0, %v4929
        %v5602 = vsub.f32 0.0, %v4930
        %v5603 = vsub.f32 0.0, %v4931
        %v5604 = vsub.f32 0.0, %v4932
        %v5605 = vsub.f32 0.0, %v4933
        %v5606 = vsub.f32 0.0, %v4934
        %v5607 = vsub.f32 0.0, %v4935
        %v5608 = vsub.f32 0.0, %v4936
        %v5609 = vsub.f32 0.0, %v4937
        %v5610 = vsub.f32 0.0, %v4938
        %v5611 = vsub.f32 0.0, %v4939
        %v5612 = vsub.f32 0.0, %v4940
        %v5613 = vsub.f32 0.0, %v4941
        %v5614 = vsub.f32 0.0, %v4942
        %v5615 = vsub.f32 0.0, %v4943
        %v5616 = vsub.f32 0.0, %v4944
        %v5617 = vsub.f32 0.0, %v4945
        %v5618 = vsub.f32 0.0, %v4946
        %v5619 = vmul.f32 %v5571, %v4899
        %v5620 = vmul.f32 %v5572, %v4900
        %v5621 = vmul.f32 %v5573, %v4901
        %v5622 = vmul.f32 %v5574, %v4902
        %v5623 = vmul.f32 %v5575, %v4903
        %v5624 = vmul.f32 %v5576, %v4904
        %v5625 = vmul.f32 %v5577, %v4905
        %v5626 = vmul.f32 %v5578, %v4906
        %v5627 = vmul.f32 %v5579, %v4907
        %v5628 = vmul.f32 %v5580, %v4908
        %v5629 = vmul.f32 %v5581, %v4909
        %v5630 = vmul.f32 %v5582, %v4910
        %v5631 = vmul.f32 %v5583, %v4911
        %v5632 = vmul.f32 %v5584, %v4912
        %v5633 = vmul.f32 %v5585, %v4913
        %v5634 = vmul.f32 %v5586, %v4914
        %v5635 = vmul.f32 %v5587, %v4915
        %v5636 = vmul.f32 %v5588, %v4916
        %v5637 = vmul.f32 %v5589, %v4917
        %v5638 = vmul.f32 %v5590, %v4918
        %v5639 = vmul.f32 %v5591, %v4919
        %v5640 = vmul.f32 %v5592, %v4920
        %v5641 = vmul.f32 %v5593, %v4921
        %v5642 = vmul.f32 %v5594, %v4922
        %v5643 = vmul.f32 %v5595, %v4923
        %v5644 = vmul.f32 %v5596, %v4924
        %v5645 = vmul.f32 %v5597, %v4925
        %v5646 = vmul.f32 %v5598, %v4926
        %v5647 = vmul.f32 %v5599, %v4927
        %v5648 = vmul.f32 %v5600, %v4928
        %v5649 = vmul.f32 %v5601, %v4929
        %v5650 = vmul.f32 %v5602, %v4930
        %v5651 = vmul.f32 %v5603, %v4931
        %v5652 = vmul.f32 %v5604, %v4932
        %v5653 = vmul.f32 %v5605, %v4933
        %v5654 = vmul.f32 %v5606, %v4934
        %v5655 = vmul.f32 %v5607, %v4935
        %v5656 = vmul.f32 %v5608, %v4936
        %v5657 = vmul.f32 %v5609, %v4937
        %v5658 = vmul.f32 %v5610, %v4938
        %v5659 = vmul.f32 %v5611, %v4939
        %v5660 = vmul.f32 %v5612, %v4940
        %v5661 = vmul.f32 %v5613, %v4941
        %v5662 = vmul.f32 %v5614, %v4942
        %v5663 = vmul.f32 %v5615, %v4943
        %v5664 = vmul.f32 %v5616, %v4944
        %v5665 = vmul.f32 %v5617, %v4945
        %v5666 = vmul.f32 %v5618, %v4946
        %v5667 = vmul.f32 %v5619, 1.442695
        %v5668 = vpow.pop %v5667
        %v5669 = vmul.f32 %v5620, 1.442695
        %v5670 = vpow.pop %v5669
        %v5671 = vmul.f32 %v5621, 1.442695
        %v5672 = vpow.pop %v5671
        %v5673 = vmul.f32 %v5622, 1.442695
        %v5674 = vpow.pop %v5673
        %v5675 = vmul.f32 %v5623, 1.442695
        %v5676 = vpow.pop %v5675
        %v5677 = vmul.f32 %v5624, 1.442695
        %v5678 = vpow.pop %v5677
        %v5679 = vmul.f32 %v5625, 1.442695
        %v5680 = vpow.pop %v5679
        %v5681 = vmul.f32 %v5626, 1.442695
        %v5682 = vpow.pop %v5681
        %v5683 = vmul.f32 %v5627, 1.442695
        %v5684 = vpow.pop %v5683
        %v5685 = vmul.f32 %v5628, 1.442695
        %v5686 = vpow.pop %v5685
        %v5687 = vmul.f32 %v5629, 1.442695
        %v5688 = vpow.pop %v5687
        %v5689 = vmul.f32 %v5630, 1.442695
        %v5690 = vpow.pop %v5689
        %v5691 = vmul.f32 %v5631, 1.442695
        %v5692 = vpow.pop %v5691
        %v5693 = vmul.f32 %v5632, 1.442695
        %v5694 = vpow.pop %v5693
        %v5695 = vmul.f32 %v5633, 1.442695
        %v5696 = vpow.pop %v5695
        %v5697 = vmul.f32 %v5634, 1.442695
        %v5698 = vpow.pop %v5697
        %v5699 = vmul.f32 %v5635, 1.442695
        %v5700 = vpow.pop %v5699
        %v5701 = vmul.f32 %v5636, 1.442695
        %v5702 = vpow.pop %v5701
        %v5703 = vmul.f32 %v5637, 1.442695
        %v5704 = vpow.pop %v5703
        %v5705 = vmul.f32 %v5638, 1.442695
        %v5706 = vpow.pop %v5705
        %v5707 = vmul.f32 %v5639, 1.442695
        %v5708 = vpow.pop %v5707
        %v5709 = vmul.f32 %v5640, 1.442695
        %v5710 = vpow.pop %v5709
        %v5711 = vmul.f32 %v5641, 1.442695
        %v5712 = vpow.pop %v5711
        %v5713 = vmul.f32 %v5642, 1.442695
        %v5714 = vpow.pop %v5713
        %v5715 = vmul.f32 %v5643, 1.442695
        %v5716 = vpow.pop %v5715
        %v5717 = vmul.f32 %v5644, 1.442695
        %v5718 = vpow.pop %v5717
        %v5719 = vmul.f32 %v5645, 1.442695
        %v5720 = vpow.pop %v5719
        %v5721 = vmul.f32 %v5646, 1.442695
        %v5722 = vpow.pop %v5721
        %v5723 = vmul.f32 %v5647, 1.442695
        %v5724 = vpow.pop %v5723
        %v5725 = vmul.f32 %v5648, 1.442695
        %v5726 = vpow.pop %v5725
        %v5727 = vmul.f32 %v5649, 1.442695
        %v5728 = vpow.pop %v5727
        %v5729 = vmul.f32 %v5650, 1.442695
        %v5730 = vpow.pop %v5729
        %v5731 = vmul.f32 %v5651, 1.442695
        %v5732 = vpow.pop %v5731
        %v5733 = vmul.f32 %v5652, 1.442695
        %v5734 = vpow.pop %v5733
        %v5735 = vmul.f32 %v5653, 1.442695
        %v5736 = vpow.pop %v5735
        %v5737 = vmul.f32 %v5654, 1.442695
        %v5738 = vpow.pop %v5737
        %v5739 = vmul.f32 %v5655, 1.442695
        %v5740 = vpow.pop %v5739
        %v5741 = vmul.f32 %v5656, 1.442695
        %v5742 = vpow.pop %v5741
        %v5743 = vmul.f32 %v5657, 1.442695
        %v5744 = vpow.pop %v5743
        %v5745 = vmul.f32 %v5658, 1.442695
        %v5746 = vpow.pop %v5745
        %v5747 = vmul.f32 %v5659, 1.442695
        %v5748 = vpow.pop %v5747
        %v5749 = vmul.f32 %v5660, 1.442695
        %v5750 = vpow.pop %v5749
        %v5751 = vmul.f32 %v5661, 1.442695
        %v5752 = vpow.pop %v5751
        %v5753 = vmul.f32 %v5662, 1.442695
        %v5754 = vpow.pop %v5753
        %v5755 = vmul.f32 %v5663, 1.442695
        %v5756 = vpow.pop %v5755
        %v5757 = vmul.f32 %v5664, 1.442695
        %v5758 = vpow.pop %v5757
        %v5759 = vmul.f32 %v5665, 1.442695
        %v5760 = vpow.pop %v5759
        %v5761 = vmul.f32 %v5666, 1.442695
        %v5762 = vpow.pop %v5761
        %v5763 = vmul.f32 %v5523, %v5668
        %v5764 = vmul.f32 %v5524, %v5670
        %v5765 = vmul.f32 %v5525, %v5672
        %v5766 = vmul.f32 %v5526, %v5674
        %v5767 = vmul.f32 %v5527, %v5676
        %v5768 = vmul.f32 %v5528, %v5678
        %v5769 = vmul.f32 %v5529, %v5680
        %v5770 = vmul.f32 %v5530, %v5682
        %v5771 = vmul.f32 %v5531, %v5684
        %v5772 = vmul.f32 %v5532, %v5686
        %v5773 = vmul.f32 %v5533, %v5688
        %v5774 = vmul.f32 %v5534, %v5690
        %v5775 = vmul.f32 %v5535, %v5692
        %v5776 = vmul.f32 %v5536, %v5694
        %v5777 = vmul.f32 %v5537, %v5696
        %v5778 = vmul.f32 %v5538, %v5698
        %v5779 = vmul.f32 %v5539, %v5700
        %v5780 = vmul.f32 %v5540, %v5702
        %v5781 = vmul.f32 %v5541, %v5704
        %v5782 = vmul.f32 %v5542, %v5706
        %v5783 = vmul.f32 %v5543, %v5708
        %v5784 = vmul.f32 %v5544, %v5710
        %v5785 = vmul.f32 %v5545, %v5712
        %v5786 = vmul.f32 %v5546, %v5714
        %v5787 = vmul.f32 %v5547, %v5716
        %v5788 = vmul.f32 %v5548, %v5718
        %v5789 = vmul.f32 %v5549, %v5720
        %v5790 = vmul.f32 %v5550, %v5722
        %v5791 = vmul.f32 %v5551, %v5724
        %v5792 = vmul.f32 %v5552, %v5726
        %v5793 = vmul.f32 %v5553, %v5728
        %v5794 = vmul.f32 %v5554, %v5730
        %v5795 = vmul.f32 %v5555, %v5732
        %v5796 = vmul.f32 %v5556, %v5734
        %v5797 = vmul.f32 %v5557, %v5736
        %v5798 = vmul.f32 %v5558, %v5738
        %v5799 = vmul.f32 %v5559, %v5740
        %v5800 = vmul.f32 %v5560, %v5742
        %v5801 = vmul.f32 %v5561, %v5744
        %v5802 = vmul.f32 %v5562, %v5746
        %v5803 = vmul.f32 %v5563, %v5748
        %v5804 = vmul.f32 %v5564, %v5750
        %v5805 = vmul.f32 %v5565, %v5752
        %v5806 = vmul.f32 %v5566, %v5754
        %v5807 = vmul.f32 %v5567, %v5756
        %v5808 = vmul.f32 %v5568, %v5758
        %v5809 = vmul.f32 %v5569, %v5760
        %v5810 = vmul.f32 %v5570, %v5762
        %v5811 = vsub.f32 1.0, %v5763
        %v5812 = vsub.f32 1.0, %v5764
        %v5813 = vsub.f32 1.0, %v5765
        %v5814 = vsub.f32 1.0, %v5766
        %v5815 = vsub.f32 1.0, %v5767
        %v5816 = vsub.f32 1.0, %v5768
        %v5817 = vsub.f32 1.0, %v5769
        %v5818 = vsub.f32 1.0, %v5770
        %v5819 = vsub.f32 1.0, %v5771
        %v5820 = vsub.f32 1.0, %v5772
        %v5821 = vsub.f32 1.0, %v5773
        %v5822 = vsub.f32 1.0, %v5774
        %v5823 = vsub.f32 1.0, %v5775
        %v5824 = vsub.f32 1.0, %v5776
        %v5825 = vsub.f32 1.0, %v5777
        %v5826 = vsub.f32 1.0, %v5778
        %v5827 = vsub.f32 1.0, %v5779
        %v5828 = vsub.f32 1.0, %v5780
        %v5829 = vsub.f32 1.0, %v5781
        %v5830 = vsub.f32 1.0, %v5782
        %v5831 = vsub.f32 1.0, %v5783
        %v5832 = vsub.f32 1.0, %v5784
        %v5833 = vsub.f32 1.0, %v5785
        %v5834 = vsub.f32 1.0, %v5786
        %v5835 = vsub.f32 1.0, %v5787
        %v5836 = vsub.f32 1.0, %v5788
        %v5837 = vsub.f32 1.0, %v5789
        %v5838 = vsub.f32 1.0, %v5790
        %v5839 = vsub.f32 1.0, %v5791
        %v5840 = vsub.f32 1.0, %v5792
        %v5841 = vsub.f32 1.0, %v5793
        %v5842 = vsub.f32 1.0, %v5794
        %v5843 = vsub.f32 1.0, %v5795
        %v5844 = vsub.f32 1.0, %v5796
        %v5845 = vsub.f32 1.0, %v5797
        %v5846 = vsub.f32 1.0, %v5798
        %v5847 = vsub.f32 1.0, %v5799
        %v5848 = vsub.f32 1.0, %v5800
        %v5849 = vsub.f32 1.0, %v5801
        %v5850 = vsub.f32 1.0, %v5802
        %v5851 = vsub.f32 1.0, %v5803
        %v5852 = vsub.f32 1.0, %v5804
        %v5853 = vsub.f32 1.0, %v5805
        %v5854 = vsub.f32 1.0, %v5806
        %v5855 = vsub.f32 1.0, %v5807
        %v5856 = vsub.f32 1.0, %v5808
        %v5857 = vsub.f32 1.0, %v5809
        %v5858 = vsub.f32 1.0, %v5810
        %v5859 = vmul.f32 %v4851, %v5811
        %v5860 = vmul.f32 %v4852, %v5812
        %v5861 = vmul.f32 %v4853, %v5813
        %v5862 = vmul.f32 %v4854, %v5814
        %v5863 = vmul.f32 %v4855, %v5815
        %v5864 = vmul.f32 %v4856, %v5816
        %v5865 = vmul.f32 %v4857, %v5817
        %v5866 = vmul.f32 %v4858, %v5818
        %v5867 = vmul.f32 %v4859, %v5819
        %v5868 = vmul.f32 %v4860, %v5820
        %v5869 = vmul.f32 %v4861, %v5821
        %v5870 = vmul.f32 %v4862, %v5822
        %v5871 = vmul.f32 %v4863, %v5823
        %v5872 = vmul.f32 %v4864, %v5824
        %v5873 = vmul.f32 %v4865, %v5825
        %v5874 = vmul.f32 %v4866, %v5826
        %v5875 = vmul.f32 %v4867, %v5827
        %v5876 = vmul.f32 %v4868, %v5828
        %v5877 = vmul.f32 %v4869, %v5829
        %v5878 = vmul.f32 %v4870, %v5830
        %v5879 = vmul.f32 %v4871, %v5831
        %v5880 = vmul.f32 %v4872, %v5832
        %v5881 = vmul.f32 %v4873, %v5833
        %v5882 = vmul.f32 %v4874, %v5834
        %v5883 = vmul.f32 %v4875, %v5835
        %v5884 = vmul.f32 %v4876, %v5836
        %v5885 = vmul.f32 %v4877, %v5837
        %v5886 = vmul.f32 %v4878, %v5838
        %v5887 = vmul.f32 %v4879, %v5839
        %v5888 = vmul.f32 %v4880, %v5840
        %v5889 = vmul.f32 %v4881, %v5841
        %v5890 = vmul.f32 %v4882, %v5842
        %v5891 = vmul.f32 %v4883, %v5843
        %v5892 = vmul.f32 %v4884, %v5844
        %v5893 = vmul.f32 %v4885, %v5845
        %v5894 = vmul.f32 %v4886, %v5846
        %v5895 = vmul.f32 %v4887, %v5847
        %v5896 = vmul.f32 %v4888, %v5848
        %v5897 = vmul.f32 %v4889, %v5849
        %v5898 = vmul.f32 %v4890, %v5850
        %v5899 = vmul.f32 %v4891, %v5851
        %v5900 = vmul.f32 %v4892, %v5852
        %v5901 = vmul.f32 %v4893, %v5853
        %v5902 = vmul.f32 %v4894, %v5854
        %v5903 = vmul.f32 %v4895, %v5855
        %v5904 = vmul.f32 %v4896, %v5856
        %v5905 = vmul.f32 %v4897, %v5857
        %v5906 = vmul.f32 %v4898, %v5858
        %v5907 = vadd.f32 %v5859, 1.0
        %v5908 = vadd.f32 %v5860, 1.0
        %v5909 = vadd.f32 %v5861, 1.0
        %v5910 = vadd.f32 %v5862, 1.0
        %v5911 = vadd.f32 %v5863, 1.0
        %v5912 = vadd.f32 %v5864, 1.0
        %v5913 = vadd.f32 %v5865, 1.0
        %v5914 = vadd.f32 %v5866, 1.0
        %v5915 = vadd.f32 %v5867, 1.0
        %v5916 = vadd.f32 %v5868, 1.0
        %v5917 = vadd.f32 %v5869, 1.0
        %v5918 = vadd.f32 %v5870, 1.0
        %v5919 = vadd.f32 %v5871, 1.0
        %v5920 = vadd.f32 %v5872, 1.0
        %v5921 = vadd.f32 %v5873, 1.0
        %v5922 = vadd.f32 %v5874, 1.0
        %v5923 = vadd.f32 %v5875, 1.0
        %v5924 = vadd.f32 %v5876, 1.0
        %v5925 = vadd.f32 %v5877, 1.0
        %v5926 = vadd.f32 %v5878, 1.0
        %v5927 = vadd.f32 %v5879, 1.0
        %v5928 = vadd.f32 %v5880, 1.0
        %v5929 = vadd.f32 %v5881, 1.0
        %v5930 = vadd.f32 %v5882, 1.0
        %v5931 = vadd.f32 %v5883, 1.0
        %v5932 = vadd.f32 %v5884, 1.0
        %v5933 = vadd.f32 %v5885, 1.0
        %v5934 = vadd.f32 %v5886, 1.0
        %v5935 = vadd.f32 %v5887, 1.0
        %v5936 = vadd.f32 %v5888, 1.0
        %v5937 = vadd.f32 %v5889, 1.0
        %v5938 = vadd.f32 %v5890, 1.0
        %v5939 = vadd.f32 %v5891, 1.0
        %v5940 = vadd.f32 %v5892, 1.0
        %v5941 = vadd.f32 %v5893, 1.0
        %v5942 = vadd.f32 %v5894, 1.0
        %v5943 = vadd.f32 %v5895, 1.0
        %v5944 = vadd.f32 %v5896, 1.0
        %v5945 = vadd.f32 %v5897, 1.0
        %v5946 = vadd.f32 %v5898, 1.0
        %v5947 = vadd.f32 %v5899, 1.0
        %v5948 = vadd.f32 %v5900, 1.0
        %v5949 = vadd.f32 %v5901, 1.0
        %v5950 = vadd.f32 %v5902, 1.0
        %v5951 = vadd.f32 %v5903, 1.0
        %v5952 = vadd.f32 %v5904, 1.0
        %v5953 = vadd.f32 %v5905, 1.0
        %v5954 = vadd.f32 %v5906, 1.0
        %v5955 = vmul.f32 %v4707, %v5907
        %v5956 = vmul.f32 %v4708, %v5908
        %v5957 = vmul.f32 %v4709, %v5909
        %v5958 = vmul.f32 %v4710, %v5910
        %v5959 = vmul.f32 %v4711, %v5911
        %v5960 = vmul.f32 %v4712, %v5912
        %v5961 = vmul.f32 %v4713, %v5913
        %v5962 = vmul.f32 %v4714, %v5914
        %v5963 = vmul.f32 %v4715, %v5915
        %v5964 = vmul.f32 %v4716, %v5916
        %v5965 = vmul.f32 %v4717, %v5917
        %v5966 = vmul.f32 %v4718, %v5918
        %v5967 = vmul.f32 %v4719, %v5919
        %v5968 = vmul.f32 %v4720, %v5920
        %v5969 = vmul.f32 %v4721, %v5921
        %v5970 = vmul.f32 %v4722, %v5922
        %v5971 = vmul.f32 %v4723, %v5923
        %v5972 = vmul.f32 %v4724, %v5924
        %v5973 = vmul.f32 %v4725, %v5925
        %v5974 = vmul.f32 %v4726, %v5926
        %v5975 = vmul.f32 %v4727, %v5927
        %v5976 = vmul.f32 %v4728, %v5928
        %v5977 = vmul.f32 %v4729, %v5929
        %v5978 = vmul.f32 %v4730, %v5930
        %v5979 = vmul.f32 %v4731, %v5931
        %v5980 = vmul.f32 %v4732, %v5932
        %v5981 = vmul.f32 %v4733, %v5933
        %v5982 = vmul.f32 %v4734, %v5934
        %v5983 = vmul.f32 %v4735, %v5935
        %v5984 = vmul.f32 %v4736, %v5936
        %v5985 = vmul.f32 %v4737, %v5937
        %v5986 = vmul.f32 %v4738, %v5938
        %v5987 = vmul.f32 %v4739, %v5939
        %v5988 = vmul.f32 %v4740, %v5940
        %v5989 = vmul.f32 %v4741, %v5941
        %v5990 = vmul.f32 %v4742, %v5942
        %v5991 = vmul.f32 %v4743, %v5943
        %v5992 = vmul.f32 %v4744, %v5944
        %v5993 = vmul.f32 %v4745, %v5945
        %v5994 = vmul.f32 %v4746, %v5946
        %v5995 = vmul.f32 %v4747, %v5947
        %v5996 = vmul.f32 %v4748, %v5948
        %v5997 = vmul.f32 %v4749, %v5949
        %v5998 = vmul.f32 %v4750, %v5950
        %v5999 = vmul.f32 %v4751, %v5951
        %v6000 = vmul.f32 %v4752, %v5952
        %v6001 = vmul.f32 %v4753, %v5953
        %v6002 = vmul.f32 %v4754, %v5954
        %v6003 = vpack.c.bf16 %v5963, %v5955
        %v6004 = vpack.c.bf16 %v5964, %v5956
        %v6005 = vpack.c.bf16 %v5965, %v5957
        %v6006 = vpack.c.bf16 %v5966, %v5958
        %v6007 = vpack.c.bf16 %v5967, %v5959
        %v6008 = vpack.c.bf16 %v5968, %v5960
        %v6009 = vpack.c.bf16 %v5969, %v5961
        %v6010 = vpack.c.bf16 %v5970, %v5962
        %v6011 = vpack.c.bf16 %v5979, %v5971
        %v6012 = vpack.c.bf16 %v5980, %v5972
        %v6013 = vpack.c.bf16 %v5981, %v5973
        %v6014 = vpack.c.bf16 %v5982, %v5974
        %v6015 = vpack.c.bf16 %v5983, %v5975
        %v6016 = vpack.c.bf16 %v5984, %v5976
        %v6017 = vpack.c.bf16 %v5985, %v5977
        %v6018 = vpack.c.bf16 %v5986, %v5978
        %v6019 = vpack.c.bf16 %v5995, %v5987
        %v6020 = vpack.c.bf16 %v5996, %v5988
        %v6021 = vpack.c.bf16 %v5997, %v5989
        %v6022 = vpack.c.bf16 %v5998, %v5990
        %v6023 = vpack.c.bf16 %v5999, %v5991
        %v6024 = vpack.c.bf16 %v6000, %v5992
        %v6025 = vpack.c.bf16 %v6001, %v5993
        %v6026 = vpack.c.bf16 %v6002, %v5994
        %v6027 = vld [vmem:[%s805] sm:$0xff]
        %v6028 = vld [vmem:[%s805 + $0x8] sm:$0xff]
        %v6029 = vld [vmem:[%s805 + $0x10] sm:$0xff]
        %v6030 = vld [vmem:[%s805 + $0x18] sm:$0xff]
        %v6031 = vld [vmem:[%s805 + $0x20] sm:$0xff]
        %v6032 = vld [vmem:[%s805 + $0x28] sm:$0xff]
        %v6033 = vld [vmem:[%s805 + $0x30] sm:$0xff]
        %v6034 = vld [vmem:[%s805 + $0x38] sm:$0xff]
        %v6035 = vld [vmem:[%s805 + $0x40] sm:$0xff]
        %v6036 = vld [vmem:[%s805 + $0x48] sm:$0xff]
        %v6037 = vld [vmem:[%s805 + $0x50] sm:$0xff]
        %v6038 = vld [vmem:[%s805 + $0x58] sm:$0xff]
        %v6039 = vld [vmem:[%s805 + $0x60] sm:$0xff]
        %v6040 = vld [vmem:[%s805 + $0x68] sm:$0xff]
        %v6041 = vld [vmem:[%s805 + $0x70] sm:$0xff]
        %v6042 = vld [vmem:[%s805 + $0x78] sm:$0xff]
        %v6043 = vld [vmem:[%s805 + $0x80] sm:$0xff]
        %v6044 = vld [vmem:[%s805 + $0x88] sm:$0xff]
        %v6045 = vld [vmem:[%s805 + $0x90] sm:$0xff]
        %v6046 = vld [vmem:[%s805 + $0x98] sm:$0xff]
        %v6047 = vld [vmem:[%s805 + $0xa0] sm:$0xff]
        %v6048 = vld [vmem:[%s805 + $0xa8] sm:$0xff]
        %v6049 = vld [vmem:[%s805 + $0xb0] sm:$0xff]
        %v6050 = vld [vmem:[%s805 + $0xb8] sm:$0xff]
        %v6051 = vld [vmem:[%s805 + $0xc0] sm:$0xff]
        %v6052 = vld [vmem:[%s805 + $0xc8] sm:$0xff]
        %v6053 = vld [vmem:[%s805 + $0xd0] sm:$0xff]
        %v6054 = vld [vmem:[%s805 + $0xd8] sm:$0xff]
        %v6055 = vld [vmem:[%s805 + $0xe0] sm:$0xff]
        %v6056 = vld [vmem:[%s805 + $0xe8] sm:$0xff]
        %v6057 = vld [vmem:[%s805 + $0xf0] sm:$0xff]
        %v6058 = vld [vmem:[%s805 + $0xf8] sm:$0xff]
        %v6059 = vld [vmem:[%s805 + $0x100] sm:$0xff]
        %v6060 = vld [vmem:[%s805 + $0x108] sm:$0xff]
        %v6061 = vld [vmem:[%s805 + $0x110] sm:$0xff]
        %v6062 = vld [vmem:[%s805 + $0x118] sm:$0xff]
        %v6063 = vld [vmem:[%s805 + $0x120] sm:$0xff]
        %v6064 = vld [vmem:[%s805 + $0x128] sm:$0xff]
        %v6065 = vld [vmem:[%s805 + $0x130] sm:$0xff]
        %v6066 = vld [vmem:[%s805 + $0x138] sm:$0xff]
        %v6067 = vld [vmem:[%s805 + $0x140] sm:$0xff]
        %v6068 = vld [vmem:[%s805 + $0x148] sm:$0xff]
        %v6069 = vld [vmem:[%s805 + $0x150] sm:$0xff]
        %v6070 = vld [vmem:[%s805 + $0x158] sm:$0xff]
        %v6071 = vld [vmem:[%s805 + $0x160] sm:$0xff]
        %v6072 = vld [vmem:[%s805 + $0x168] sm:$0xff]
        %v6073 = vld [vmem:[%s805 + $0x170] sm:$0xff]
        %v6074 = vld [vmem:[%s805 + $0x178] sm:$0xff]
        %v6075 = vld [vmem:[%s805 + $0x180] sm:$0xff]
        %v6076 = vld [vmem:[%s805 + $0x188] sm:$0xff]
        %v6077 = vld [vmem:[%s805 + $0x190] sm:$0xff]
        %v6078 = vld [vmem:[%s805 + $0x198] sm:$0xff]
        %v6079 = vld [vmem:[%s805 + $0x1a0] sm:$0xff]
        %v6080 = vld [vmem:[%s805 + $0x1a8] sm:$0xff]
        %v6081 = vld [vmem:[%s805 + $0x1b0] sm:$0xff]
        %v6082 = vld [vmem:[%s805 + $0x1b8] sm:$0xff]
        %v6083 = vld [vmem:[%s805 + $0x1c0] sm:$0xff]
        %v6084 = vld [vmem:[%s805 + $0x1c8] sm:$0xff]
        %v6085 = vld [vmem:[%s805 + $0x1d0] sm:$0xff]
        %v6086 = vld [vmem:[%s805 + $0x1d8] sm:$0xff]
        %v6087 = vld [vmem:[%s805 + $0x1e0] sm:$0xff]
        %v6088 = vld [vmem:[%s805 + $0x1e8] sm:$0xff]
        %v6089 = vld [vmem:[%s805 + $0x1f0] sm:$0xff]
        %v6090 = vld [vmem:[%s805 + $0x1f8] sm:$0xff]
        %v6091 = vld [vmem:[%s805 + $0x200] sm:$0xff]
        %v6092 = vld [vmem:[%s805 + $0x208] sm:$0xff]
        %v6093 = vld [vmem:[%s805 + $0x210] sm:$0xff]
        %v6094 = vld [vmem:[%s805 + $0x218] sm:$0xff]
        %v6095 = vld [vmem:[%s805 + $0x220] sm:$0xff]
        %v6096 = vld [vmem:[%s805 + $0x228] sm:$0xff]
        %v6097 = vld [vmem:[%s805 + $0x230] sm:$0xff]
        %v6098 = vld [vmem:[%s805 + $0x238] sm:$0xff]
        %v6099 = vld [vmem:[%s805 + $0x240] sm:$0xff]
        %v6100 = vld [vmem:[%s805 + $0x248] sm:$0xff]
        %v6101 = vld [vmem:[%s805 + $0x250] sm:$0xff]
        %v6102 = vld [vmem:[%s805 + $0x258] sm:$0xff]
        %v6103 = vld [vmem:[%s805 + $0x260] sm:$0xff]
        %v6104 = vld [vmem:[%s805 + $0x268] sm:$0xff]
        %v6105 = vld [vmem:[%s805 + $0x270] sm:$0xff]
        %v6106 = vld [vmem:[%s805 + $0x278] sm:$0xff]
        %v6107 = vld [vmem:[%s805 + $0x280] sm:$0xff]
        %v6108 = vld [vmem:[%s805 + $0x288] sm:$0xff]
        %v6109 = vld [vmem:[%s805 + $0x290] sm:$0xff]
        %v6110 = vld [vmem:[%s805 + $0x298] sm:$0xff]
        %v6111 = vld [vmem:[%s805 + $0x2a0] sm:$0xff]
        %v6112 = vld [vmem:[%s805 + $0x2a8] sm:$0xff]
        %v6113 = vld [vmem:[%s805 + $0x2b0] sm:$0xff]
        %v6114 = vld [vmem:[%s805 + $0x2b8] sm:$0xff]
        %v6115 = vld [vmem:[%s805 + $0x2c0] sm:$0xff]
        %v6116 = vld [vmem:[%s805 + $0x2c8] sm:$0xff]
        %v6117 = vld [vmem:[%s805 + $0x2d0] sm:$0xff]
        %v6118 = vld [vmem:[%s805 + $0x2d8] sm:$0xff]
        %v6119 = vld [vmem:[%s805 + $0x2e0] sm:$0xff]
        %v6120 = vld [vmem:[%s805 + $0x2e8] sm:$0xff]
        %v6121 = vld [vmem:[%s805 + $0x2f0] sm:$0xff]
        %v6122 = vld [vmem:[%s805 + $0x2f8] sm:$0xff]
        %v6123 = vld [vmem:[%s805 + $0x300] sm:$0xff]
        %v6124 = vld [vmem:[%s805 + $0x308] sm:$0xff]
        %v6125 = vld [vmem:[%s805 + $0x310] sm:$0xff]
        %v6126 = vld [vmem:[%s805 + $0x318] sm:$0xff]
        %v6127 = vld [vmem:[%s805 + $0x320] sm:$0xff]
        %v6128 = vld [vmem:[%s805 + $0x328] sm:$0xff]
        %v6129 = vld [vmem:[%s805 + $0x330] sm:$0xff]
        %v6130 = vld [vmem:[%s805 + $0x338] sm:$0xff]
        %v6131 = vld [vmem:[%s805 + $0x340] sm:$0xff]
        %v6132 = vld [vmem:[%s805 + $0x348] sm:$0xff]
        %v6133 = vld [vmem:[%s805 + $0x350] sm:$0xff]
        %v6134 = vld [vmem:[%s805 + $0x358] sm:$0xff]
        %v6135 = vld [vmem:[%s805 + $0x360] sm:$0xff]
        %v6136 = vld [vmem:[%s805 + $0x368] sm:$0xff]
        %v6137 = vld [vmem:[%s805 + $0x370] sm:$0xff]
        %v6138 = vld [vmem:[%s805 + $0x378] sm:$0xff]
        %v6139 = vld [vmem:[%s805 + $0x380] sm:$0xff]
        %v6140 = vld [vmem:[%s805 + $0x388] sm:$0xff]
        %v6141 = vld [vmem:[%s805 + $0x390] sm:$0xff]
        %v6142 = vld [vmem:[%s805 + $0x398] sm:$0xff]
        %v6143 = vld [vmem:[%s805 + $0x3a0] sm:$0xff]
        %v6144 = vld [vmem:[%s805 + $0x3a8] sm:$0xff]
        %v6145 = vld [vmem:[%s805 + $0x3b0] sm:$0xff]
        %v6146 = vld [vmem:[%s805 + $0x3b8] sm:$0xff]
        %v6147 = vld [vmem:[%s805 + $0x3c0] sm:$0xff]
        %v6148 = vld [vmem:[%s805 + $0x3c8] sm:$0xff]
        %v6149 = vld [vmem:[%s805 + $0x3d0] sm:$0xff]
        %v6150 = vld [vmem:[%s805 + $0x3d8] sm:$0xff]
        %v6151 = vld [vmem:[%s805 + $0x3e0] sm:$0xff]
        %v6152 = vld [vmem:[%s805 + $0x3e8] sm:$0xff]
        %v6153 = vld [vmem:[%s805 + $0x3f0] sm:$0xff]
        %v6154 = vld [vmem:[%s805 + $0x3f8] sm:$0xff]
        %v6155 = vld [vmem:[%s675] sm:$0x3]
        %v6157 = vlaneseq
        %v6158 = vshrl.u32 %v6157, 7
        %v6159 = vsub.s32 0, %v6158
        %v6160 = vrot.slane %v6155, %v6159
        %v6161 = vlaneseq
        %v6162 = vshrl.u32 %v6161, 7
        %v6163 = vsub.s32 1, %v6162
        %v6164 = vrot.slane %v6155, %v6163
        %v6295 = vunpack.c.l.b16 %v6027
        %v6296 = vunpack.c.h.b16 %v6027
        %v6297 = vunpack.c.l.b16 %v6028
        %v6298 = vunpack.c.h.b16 %v6028
        %v6299 = vunpack.c.l.b16 %v6029
        %v6300 = vunpack.c.h.b16 %v6029
        %v6301 = vunpack.c.l.b16 %v6030
        %v6302 = vunpack.c.h.b16 %v6030
        %v6303 = vunpack.c.l.b16 %v6031
        %v6304 = vunpack.c.h.b16 %v6031
        %v6305 = vunpack.c.l.b16 %v6032
        %v6306 = vunpack.c.h.b16 %v6032
        %v6307 = vunpack.c.l.b16 %v6033
        %v6308 = vunpack.c.h.b16 %v6033
        %v6309 = vunpack.c.l.b16 %v6034
        %v6310 = vunpack.c.h.b16 %v6034
        %v6311 = vunpack.c.l.b16 %v6035
        %v6312 = vunpack.c.h.b16 %v6035
        %v6313 = vunpack.c.l.b16 %v6036
        %v6314 = vunpack.c.h.b16 %v6036
        %v6315 = vunpack.c.l.b16 %v6037
        %v6316 = vunpack.c.h.b16 %v6037
        %v6317 = vunpack.c.l.b16 %v6038
        %v6318 = vunpack.c.h.b16 %v6038
        %v6319 = vunpack.c.l.b16 %v6039
        %v6320 = vunpack.c.h.b16 %v6039
        %v6321 = vunpack.c.l.b16 %v6040
        %v6322 = vunpack.c.h.b16 %v6040
        %v6323 = vunpack.c.l.b16 %v6041
        %v6324 = vunpack.c.h.b16 %v6041
        %v6325 = vunpack.c.l.b16 %v6042
        %v6326 = vunpack.c.h.b16 %v6042
        %v6327 = vunpack.c.l.b16 %v6043
        %v6328 = vunpack.c.h.b16 %v6043
        %v6329 = vunpack.c.l.b16 %v6044
        %v6330 = vunpack.c.h.b16 %v6044
        %v6331 = vunpack.c.l.b16 %v6045
        %v6332 = vunpack.c.h.b16 %v6045
        %v6333 = vunpack.c.l.b16 %v6046
        %v6334 = vunpack.c.h.b16 %v6046
        %v6335 = vunpack.c.l.b16 %v6047
        %v6336 = vunpack.c.h.b16 %v6047
        %v6337 = vunpack.c.l.b16 %v6048
        %v6338 = vunpack.c.h.b16 %v6048
        %v6339 = vunpack.c.l.b16 %v6049
        %v6340 = vunpack.c.h.b16 %v6049
        %v6341 = vunpack.c.l.b16 %v6050
        %v6342 = vunpack.c.h.b16 %v6050
        %v6343 = vunpack.c.l.b16 %v6051
        %v6344 = vunpack.c.h.b16 %v6051
        %v6345 = vunpack.c.l.b16 %v6052
        %v6346 = vunpack.c.h.b16 %v6052
        %v6347 = vunpack.c.l.b16 %v6053
        %v6348 = vunpack.c.h.b16 %v6053
        %v6349 = vunpack.c.l.b16 %v6054
        %v6350 = vunpack.c.h.b16 %v6054
        %v6351 = vunpack.c.l.b16 %v6055
        %v6352 = vunpack.c.h.b16 %v6055
        %v6353 = vunpack.c.l.b16 %v6056
        %v6354 = vunpack.c.h.b16 %v6056
        %v6355 = vunpack.c.l.b16 %v6057
        %v6356 = vunpack.c.h.b16 %v6057
        %v6357 = vunpack.c.l.b16 %v6058
        %v6358 = vunpack.c.h.b16 %v6058
        %v6359 = vunpack.c.l.b16 %v6059
        %v6360 = vunpack.c.h.b16 %v6059
        %v6361 = vunpack.c.l.b16 %v6060
        %v6362 = vunpack.c.h.b16 %v6060
        %v6363 = vunpack.c.l.b16 %v6061
        %v6364 = vunpack.c.h.b16 %v6061
        %v6365 = vunpack.c.l.b16 %v6062
        %v6366 = vunpack.c.h.b16 %v6062
        %v6367 = vunpack.c.l.b16 %v6063
        %v6368 = vunpack.c.h.b16 %v6063
        %v6369 = vunpack.c.l.b16 %v6064
        %v6370 = vunpack.c.h.b16 %v6064
        %v6371 = vunpack.c.l.b16 %v6065
        %v6372 = vunpack.c.h.b16 %v6065
        %v6373 = vunpack.c.l.b16 %v6066
        %v6374 = vunpack.c.h.b16 %v6066
        %v6375 = vunpack.c.l.b16 %v6067
        %v6376 = vunpack.c.h.b16 %v6067
        %v6377 = vunpack.c.l.b16 %v6068
        %v6378 = vunpack.c.h.b16 %v6068
        %v6379 = vunpack.c.l.b16 %v6069
        %v6380 = vunpack.c.h.b16 %v6069
        %v6381 = vunpack.c.l.b16 %v6070
        %v6382 = vunpack.c.h.b16 %v6070
        %v6383 = vunpack.c.l.b16 %v6071
        %v6384 = vunpack.c.h.b16 %v6071
        %v6385 = vunpack.c.l.b16 %v6072
        %v6386 = vunpack.c.h.b16 %v6072
        %v6387 = vunpack.c.l.b16 %v6073
        %v6388 = vunpack.c.h.b16 %v6073
        %v6389 = vunpack.c.l.b16 %v6074
        %v6390 = vunpack.c.h.b16 %v6074
        %v6391 = vunpack.c.l.b16 %v6075
        %v6392 = vunpack.c.h.b16 %v6075
        %v6393 = vunpack.c.l.b16 %v6076
        %v6394 = vunpack.c.h.b16 %v6076
        %v6395 = vunpack.c.l.b16 %v6077
        %v6396 = vunpack.c.h.b16 %v6077
        %v6397 = vunpack.c.l.b16 %v6078
        %v6398 = vunpack.c.h.b16 %v6078
        %v6399 = vunpack.c.l.b16 %v6079
        %v6400 = vunpack.c.h.b16 %v6079
        %v6401 = vunpack.c.l.b16 %v6080
        %v6402 = vunpack.c.h.b16 %v6080
        %v6403 = vunpack.c.l.b16 %v6081
        %v6404 = vunpack.c.h.b16 %v6081
        %v6405 = vunpack.c.l.b16 %v6082
        %v6406 = vunpack.c.h.b16 %v6082
        %v6407 = vunpack.c.l.b16 %v6083
        %v6408 = vunpack.c.h.b16 %v6083
        %v6409 = vunpack.c.l.b16 %v6084
        %v6410 = vunpack.c.h.b16 %v6084
        %v6411 = vunpack.c.l.b16 %v6085
        %v6412 = vunpack.c.h.b16 %v6085
        %v6413 = vunpack.c.l.b16 %v6086
        %v6414 = vunpack.c.h.b16 %v6086
        %v6415 = vunpack.c.l.b16 %v6087
        %v6416 = vunpack.c.h.b16 %v6087
        %v6417 = vunpack.c.l.b16 %v6088
        %v6418 = vunpack.c.h.b16 %v6088
        %v6419 = vunpack.c.l.b16 %v6089
        %v6420 = vunpack.c.h.b16 %v6089
        %v6421 = vunpack.c.l.b16 %v6090
        %v6422 = vunpack.c.h.b16 %v6090
        %v6423 = vunpack.c.l.b16 %v6091
        %v6424 = vunpack.c.h.b16 %v6091
        %v6425 = vunpack.c.l.b16 %v6092
        %v6426 = vunpack.c.h.b16 %v6092
        %v6427 = vunpack.c.l.b16 %v6093
        %v6428 = vunpack.c.h.b16 %v6093
        %v6429 = vunpack.c.l.b16 %v6094
        %v6430 = vunpack.c.h.b16 %v6094
        %v6431 = vunpack.c.l.b16 %v6095
        %v6432 = vunpack.c.h.b16 %v6095
        %v6433 = vunpack.c.l.b16 %v6096
        %v6434 = vunpack.c.h.b16 %v6096
        %v6435 = vunpack.c.l.b16 %v6097
        %v6436 = vunpack.c.h.b16 %v6097
        %v6437 = vunpack.c.l.b16 %v6098
        %v6438 = vunpack.c.h.b16 %v6098
        %v6439 = vunpack.c.l.b16 %v6099
        %v6440 = vunpack.c.h.b16 %v6099
        %v6441 = vunpack.c.l.b16 %v6100
        %v6442 = vunpack.c.h.b16 %v6100
        %v6443 = vunpack.c.l.b16 %v6101
        %v6444 = vunpack.c.h.b16 %v6101
        %v6445 = vunpack.c.l.b16 %v6102
        %v6446 = vunpack.c.h.b16 %v6102
        %v6447 = vunpack.c.l.b16 %v6103
        %v6448 = vunpack.c.h.b16 %v6103
        %v6449 = vunpack.c.l.b16 %v6104
        %v6450 = vunpack.c.h.b16 %v6104
        %v6451 = vunpack.c.l.b16 %v6105
        %v6452 = vunpack.c.h.b16 %v6105
        %v6453 = vunpack.c.l.b16 %v6106
        %v6454 = vunpack.c.h.b16 %v6106
        %v6455 = vunpack.c.l.b16 %v6107
        %v6456 = vunpack.c.h.b16 %v6107
        %v6457 = vunpack.c.l.b16 %v6108
        %v6458 = vunpack.c.h.b16 %v6108
        %v6459 = vunpack.c.l.b16 %v6109
        %v6460 = vunpack.c.h.b16 %v6109
        %v6461 = vunpack.c.l.b16 %v6110
        %v6462 = vunpack.c.h.b16 %v6110
        %v6463 = vunpack.c.l.b16 %v6111
        %v6464 = vunpack.c.h.b16 %v6111
        %v6465 = vunpack.c.l.b16 %v6112
        %v6466 = vunpack.c.h.b16 %v6112
        %v6467 = vunpack.c.l.b16 %v6113
        %v6468 = vunpack.c.h.b16 %v6113
        %v6469 = vunpack.c.l.b16 %v6114
        %v6470 = vunpack.c.h.b16 %v6114
        %v6471 = vunpack.c.l.b16 %v6115
        %v6472 = vunpack.c.h.b16 %v6115
        %v6473 = vunpack.c.l.b16 %v6116
        %v6474 = vunpack.c.h.b16 %v6116
        %v6475 = vunpack.c.l.b16 %v6117
        %v6476 = vunpack.c.h.b16 %v6117
        %v6477 = vunpack.c.l.b16 %v6118
        %v6478 = vunpack.c.h.b16 %v6118
        %v6479 = vunpack.c.l.b16 %v6119
        %v6480 = vunpack.c.h.b16 %v6119
        %v6481 = vunpack.c.l.b16 %v6120
        %v6482 = vunpack.c.h.b16 %v6120
        %v6483 = vunpack.c.l.b16 %v6121
        %v6484 = vunpack.c.h.b16 %v6121
        %v6485 = vunpack.c.l.b16 %v6122
        %v6486 = vunpack.c.h.b16 %v6122
        %v6487 = vunpack.c.l.b16 %v6123
        %v6488 = vunpack.c.h.b16 %v6123
        %v6489 = vunpack.c.l.b16 %v6124
        %v6490 = vunpack.c.h.b16 %v6124
        %v6491 = vunpack.c.l.b16 %v6125
        %v6492 = vunpack.c.h.b16 %v6125
        %v6493 = vunpack.c.l.b16 %v6126
        %v6494 = vunpack.c.h.b16 %v6126
        %v6495 = vunpack.c.l.b16 %v6127
        %v6496 = vunpack.c.h.b16 %v6127
        %v6497 = vunpack.c.l.b16 %v6128
        %v6498 = vunpack.c.h.b16 %v6128
        %v6499 = vunpack.c.l.b16 %v6129
        %v6500 = vunpack.c.h.b16 %v6129
        %v6501 = vunpack.c.l.b16 %v6130
        %v6502 = vunpack.c.h.b16 %v6130
        %v6503 = vunpack.c.l.b16 %v6131
        %v6504 = vunpack.c.h.b16 %v6131
        %v6505 = vunpack.c.l.b16 %v6132
        %v6506 = vunpack.c.h.b16 %v6132
        %v6507 = vunpack.c.l.b16 %v6133
        %v6508 = vunpack.c.h.b16 %v6133
        %v6509 = vunpack.c.l.b16 %v6134
        %v6510 = vunpack.c.h.b16 %v6134
        %v6511 = vunpack.c.l.b16 %v6135
        %v6512 = vunpack.c.h.b16 %v6135
        %v6513 = vunpack.c.l.b16 %v6136
        %v6514 = vunpack.c.h.b16 %v6136
        %v6515 = vunpack.c.l.b16 %v6137
        %v6516 = vunpack.c.h.b16 %v6137
        %v6517 = vunpack.c.l.b16 %v6138
        %v6518 = vunpack.c.h.b16 %v6138
        %v6519 = vunpack.c.l.b16 %v6139
        %v6520 = vunpack.c.h.b16 %v6139
        %v6521 = vunpack.c.l.b16 %v6140
        %v6522 = vunpack.c.h.b16 %v6140
        %v6523 = vunpack.c.l.b16 %v6141
        %v6524 = vunpack.c.h.b16 %v6141
        %v6525 = vunpack.c.l.b16 %v6142
        %v6526 = vunpack.c.h.b16 %v6142
        %v6527 = vunpack.c.l.b16 %v6143
        %v6528 = vunpack.c.h.b16 %v6143
        %v6529 = vunpack.c.l.b16 %v6144
        %v6530 = vunpack.c.h.b16 %v6144
        %v6531 = vunpack.c.l.b16 %v6145
        %v6532 = vunpack.c.h.b16 %v6145
        %v6533 = vunpack.c.l.b16 %v6146
        %v6534 = vunpack.c.h.b16 %v6146
        %v6535 = vunpack.c.l.b16 %v6147
        %v6536 = vunpack.c.h.b16 %v6147
        %v6537 = vunpack.c.l.b16 %v6148
        %v6538 = vunpack.c.h.b16 %v6148
        %v6539 = vunpack.c.l.b16 %v6149
        %v6540 = vunpack.c.h.b16 %v6149
        %v6541 = vunpack.c.l.b16 %v6150
        %v6542 = vunpack.c.h.b16 %v6150
        %v6543 = vunpack.c.l.b16 %v6151
        %v6544 = vunpack.c.h.b16 %v6151
        %v6545 = vunpack.c.l.b16 %v6152
        %v6546 = vunpack.c.h.b16 %v6152
        %v6547 = vunpack.c.l.b16 %v6153
        %v6548 = vunpack.c.h.b16 %v6153
        %v6549 = vunpack.c.l.b16 %v6154
        %v6550 = vunpack.c.h.b16 %v6154
        %v6551 = vpack.c.b16 %v6297, %v6295
        %v6552 = vpack.c.b16 %v6298, %v6296
        %v6553 = vpack.c.b16 %v6301, %v6299
        %v6554 = vpack.c.b16 %v6302, %v6300
        %v6555 = vpack.c.b16 %v6305, %v6303
        %v6556 = vpack.c.b16 %v6306, %v6304
        %v6557 = vpack.c.b16 %v6309, %v6307
        %v6558 = vpack.c.b16 %v6310, %v6308
        %v6559 = vpack.c.b16 %v6313, %v6311
        %v6560 = vpack.c.b16 %v6314, %v6312
        %v6561 = vpack.c.b16 %v6317, %v6315
        %v6562 = vpack.c.b16 %v6318, %v6316
        %v6563 = vpack.c.b16 %v6321, %v6319
        %v6564 = vpack.c.b16 %v6322, %v6320
        %v6565 = vpack.c.b16 %v6325, %v6323
        %v6566 = vpack.c.b16 %v6326, %v6324
        %v6567 = vpack.c.b16 %v6329, %v6327
        %v6568 = vpack.c.b16 %v6330, %v6328
        %v6569 = vpack.c.b16 %v6333, %v6331
        %v6570 = vpack.c.b16 %v6334, %v6332
        %v6571 = vpack.c.b16 %v6337, %v6335
        %v6572 = vpack.c.b16 %v6338, %v6336
        %v6573 = vpack.c.b16 %v6341, %v6339
        %v6574 = vpack.c.b16 %v6342, %v6340
        %v6575 = vpack.c.b16 %v6345, %v6343
        %v6576 = vpack.c.b16 %v6346, %v6344
        %v6577 = vpack.c.b16 %v6349, %v6347
        %v6578 = vpack.c.b16 %v6350, %v6348
        %v6579 = vpack.c.b16 %v6353, %v6351
        %v6580 = vpack.c.b16 %v6354, %v6352
        %v6581 = vpack.c.b16 %v6357, %v6355
        %v6582 = vpack.c.b16 %v6358, %v6356
        %v6583 = vpack.c.b16 %v6361, %v6359
        %v6584 = vpack.c.b16 %v6362, %v6360
        %v6585 = vpack.c.b16 %v6365, %v6363
        %v6586 = vpack.c.b16 %v6366, %v6364
        %v6587 = vpack.c.b16 %v6369, %v6367
        %v6588 = vpack.c.b16 %v6370, %v6368
        %v6589 = vpack.c.b16 %v6373, %v6371
        %v6590 = vpack.c.b16 %v6374, %v6372
        %v6591 = vpack.c.b16 %v6377, %v6375
        %v6592 = vpack.c.b16 %v6378, %v6376
        %v6593 = vpack.c.b16 %v6381, %v6379
        %v6594 = vpack.c.b16 %v6382, %v6380
        %v6595 = vpack.c.b16 %v6385, %v6383
        %v6596 = vpack.c.b16 %v6386, %v6384
        %v6597 = vpack.c.b16 %v6389, %v6387
        %v6598 = vpack.c.b16 %v6390, %v6388
        %v6599 = vpack.c.b16 %v6393, %v6391
        %v6600 = vpack.c.b16 %v6394, %v6392
        %v6601 = vpack.c.b16 %v6397, %v6395
        %v6602 = vpack.c.b16 %v6398, %v6396
        %v6603 = vpack.c.b16 %v6401, %v6399
        %v6604 = vpack.c.b16 %v6402, %v6400
        %v6605 = vpack.c.b16 %v6405, %v6403
        %v6606 = vpack.c.b16 %v6406, %v6404
        %v6607 = vpack.c.b16 %v6409, %v6407
        %v6608 = vpack.c.b16 %v6410, %v6408
        %v6609 = vpack.c.b16 %v6413, %v6411
        %v6610 = vpack.c.b16 %v6414, %v6412
        %v6611 = vpack.c.b16 %v6417, %v6415
        %v6612 = vpack.c.b16 %v6418, %v6416
        %v6613 = vpack.c.b16 %v6421, %v6419
        %v6614 = vpack.c.b16 %v6422, %v6420
        %v6615 = vpack.c.b16 %v6425, %v6423
        %v6616 = vpack.c.b16 %v6426, %v6424
        %v6617 = vpack.c.b16 %v6429, %v6427
        %v6618 = vpack.c.b16 %v6430, %v6428
        %v6619 = vpack.c.b16 %v6433, %v6431
        %v6620 = vpack.c.b16 %v6434, %v6432
        %v6621 = vpack.c.b16 %v6437, %v6435
        %v6622 = vpack.c.b16 %v6438, %v6436
        %v6623 = vpack.c.b16 %v6441, %v6439
        %v6624 = vpack.c.b16 %v6442, %v6440
        %v6625 = vpack.c.b16 %v6445, %v6443
        %v6626 = vpack.c.b16 %v6446, %v6444
        %v6627 = vpack.c.b16 %v6449, %v6447
        %v6628 = vpack.c.b16 %v6450, %v6448
        %v6629 = vpack.c.b16 %v6453, %v6451
        %v6630 = vpack.c.b16 %v6454, %v6452
        %v6631 = vpack.c.b16 %v6457, %v6455
        %v6632 = vpack.c.b16 %v6458, %v6456
        %v6633 = vpack.c.b16 %v6461, %v6459
        %v6634 = vpack.c.b16 %v6462, %v6460
        %v6635 = vpack.c.b16 %v6465, %v6463
        %v6636 = vpack.c.b16 %v6466, %v6464
        %v6637 = vpack.c.b16 %v6469, %v6467
        %v6638 = vpack.c.b16 %v6470, %v6468
        %v6639 = vpack.c.b16 %v6473, %v6471
        %v6640 = vpack.c.b16 %v6474, %v6472
        %v6641 = vpack.c.b16 %v6477, %v6475
        %v6642 = vpack.c.b16 %v6478, %v6476
        %v6643 = vpack.c.b16 %v6481, %v6479
        %v6644 = vpack.c.b16 %v6482, %v6480
        %v6645 = vpack.c.b16 %v6485, %v6483
        %v6646 = vpack.c.b16 %v6486, %v6484
        %v6647 = vpack.c.b16 %v6489, %v6487
        %v6648 = vpack.c.b16 %v6490, %v6488
        %v6649 = vpack.c.b16 %v6493, %v6491
        %v6650 = vpack.c.b16 %v6494, %v6492
        %v6651 = vpack.c.b16 %v6497, %v6495
        %v6652 = vpack.c.b16 %v6498, %v6496
        %v6653 = vpack.c.b16 %v6501, %v6499
        %v6654 = vpack.c.b16 %v6502, %v6500
        %v6655 = vpack.c.b16 %v6505, %v6503
        %v6656 = vpack.c.b16 %v6506, %v6504
        %v6657 = vpack.c.b16 %v6509, %v6507
        %v6658 = vpack.c.b16 %v6510, %v6508
        %v6659 = vpack.c.b16 %v6513, %v6511
        %v6660 = vpack.c.b16 %v6514, %v6512
        %v6661 = vpack.c.b16 %v6517, %v6515
        %v6662 = vpack.c.b16 %v6518, %v6516
        %v6663 = vpack.c.b16 %v6521, %v6519
        %v6664 = vpack.c.b16 %v6522, %v6520
        %v6665 = vpack.c.b16 %v6525, %v6523
        %v6666 = vpack.c.b16 %v6526, %v6524
        %v6667 = vpack.c.b16 %v6529, %v6527
        %v6668 = vpack.c.b16 %v6530, %v6528
        %v6669 = vpack.c.b16 %v6533, %v6531
        %v6670 = vpack.c.b16 %v6534, %v6532
        %v6671 = vpack.c.b16 %v6537, %v6535
        %v6672 = vpack.c.b16 %v6538, %v6536
        %v6673 = vpack.c.b16 %v6541, %v6539
        %v6674 = vpack.c.b16 %v6542, %v6540
        %v6675 = vpack.c.b16 %v6545, %v6543
        %v6676 = vpack.c.b16 %v6546, %v6544
        %v6677 = vpack.c.b16 %v6549, %v6547
        %v6678 = vpack.c.b16 %v6550, %v6548
        %6807 = vmatprep.subr.bf16.mxu0 %v6566
        %6808 = vmatpush1.bf16.msra.mxu0 %v6565
        %6809 = vmatprep.subr.bf16.mxu0 %v6564
        %6810 = vmatpush1.bf16.msra.mxu0 %v6563
        %6811 = vmatprep.subr.bf16.mxu0 %v6562
        %6812 = vmatpush1.bf16.msra.mxu0 %v6561
        %6813 = vmatprep.subr.bf16.mxu0 %v6560
        %6814 = vmatpush1.bf16.msra.mxu0 %v6559
        %6815 = vmatprep.subr.bf16.mxu0 %v6558
        %6816 = vmatpush1.bf16.msra.mxu0 %v6557
        %6817 = vmatprep.subr.bf16.mxu0 %v6556
        %6818 = vmatpush1.bf16.msra.mxu0 %v6555
        %6819 = vmatprep.subr.bf16.mxu0 %v6554
        %6820 = vmatpush1.bf16.msra.mxu0 %v6553
        %6821 = vmatprep.subr.bf16.mxu0 %v6552
        %6822 = vmatpush1.bf16.msra.mxu0 %v6551
        %6823 = vmatprep.subr.bf16.mxu0 %v6582
        %6824 = vmatpush2.bf16.msra.mxu0 %v6581
        %6825 = vmatprep.subr.bf16.mxu0 %v6580
        %6826 = vmatpush2.bf16.msra.mxu0 %v6579
        %6827 = vmatprep.subr.bf16.mxu0 %v6578
        %6828 = vmatpush2.bf16.msra.mxu0 %v6577
        %6829 = vmatprep.subr.bf16.mxu0 %v6576
        %6830 = vmatpush2.bf16.msra.mxu0 %v6575
        %6831 = vmatprep.subr.bf16.mxu0 %v6574
        %6832 = vmatpush2.bf16.msra.mxu0 %v6573
        %6833 = vmatprep.subr.bf16.mxu0 %v6572
        %6834 = vmatpush2.bf16.msra.mxu0 %v6571
        %6835 = vmatprep.subr.bf16.mxu0 %v6570
        %6836 = vmatpush2.bf16.msra.mxu0 %v6569
        %6837 = vmatprep.subr.bf16.mxu0 %v6568
        %6838 = vmatpush2.bf16.msra.mxu0 %v6567
        %6839 = vmatprep.mubr.bf16.mxu0 %v6004
        %6840 = vmatmul.mubr.bf16.gmra.mxu0 %v6003
        %v6841 = vpop.f32.mrf.mxu0
        %v6842 = vadd.f32 %v6160, %v6841
        %v6843 = vpop.f32.mrf.mxu0
        %v6844 = vadd.f32 %v6164, %v6843
        %v6845 = vpop.f32.mrf.mxu0
        %v6846 = vadd.f32 %v6160, %v6845
        %v6847 = vpop.f32.mrf.mxu0
        %v6848 = vadd.f32 %v6164, %v6847
        %6849 = vmatprep.mubr.bf16.mxu0 %v6012
        %6850 = vmatmul.mubr.bf16.gmra.mxu0 %v6011
        %v6851 = vpop.f32.mrf.mxu0
        %v6852 = vadd.f32 %v6160, %v6851
        %v6853 = vpop.f32.mrf.mxu0
        %v6854 = vadd.f32 %v6164, %v6853
        %v6855 = vpop.f32.mrf.mxu0
        %v6856 = vadd.f32 %v6160, %v6855
        %v6857 = vpop.f32.mrf.mxu0
        %v6858 = vadd.f32 %v6164, %v6857
        %6859 = vmatprep.mubr.bf16.mxu0 %v6020
        %6860 = vmatmul.mubr.bf16.gmra.mxu0 %v6019
        %v6861 = vpop.f32.mrf.mxu0
        %v6862 = vadd.f32 %v6160, %v6861
        %v6863 = vpop.f32.mrf.mxu0
        %v6864 = vadd.f32 %v6164, %v6863
        %v6865 = vpop.f32.mrf.mxu0
        %v6866 = vadd.f32 %v6160, %v6865
        %v6867 = vpop.f32.mrf.mxu0
        %v6868 = vadd.f32 %v6164, %v6867
        %6869 = vdwg.mxu0
        %6870 = vmatprep.subr.bf16.mxu0 %v6598
        %6871 = vmatpush1.bf16.msra.mxu0 %v6597
        %6872 = vmatprep.subr.bf16.mxu0 %v6596
        %6873 = vmatpush1.bf16.msra.mxu0 %v6595
        %6874 = vmatprep.subr.bf16.mxu0 %v6594
        %6875 = vmatpush1.bf16.msra.mxu0 %v6593
        %6876 = vmatprep.subr.bf16.mxu0 %v6592
        %6877 = vmatpush1.bf16.msra.mxu0 %v6591
        %6878 = vmatprep.subr.bf16.mxu0 %v6590
        %6879 = vmatpush1.bf16.msra.mxu0 %v6589
        %6880 = vmatprep.subr.bf16.mxu0 %v6588
        %6881 = vmatpush1.bf16.msra.mxu0 %v6587
        %6882 = vmatprep.subr.bf16.mxu0 %v6586
        %6883 = vmatpush1.bf16.msra.mxu0 %v6585
        %6884 = vmatprep.subr.bf16.mxu0 %v6584
        %6885 = vmatpush1.bf16.msra.mxu0 %v6583
        %6886 = vmatprep.subr.bf16.mxu0 %v6614
        %6887 = vmatpush2.bf16.msra.mxu0 %v6613
        %6888 = vmatprep.subr.bf16.mxu0 %v6612
        %6889 = vmatpush2.bf16.msra.mxu0 %v6611
        %6890 = vmatprep.subr.bf16.mxu0 %v6610
        %6891 = vmatpush2.bf16.msra.mxu0 %v6609
        %6892 = vmatprep.subr.bf16.mxu0 %v6608
        %6893 = vmatpush2.bf16.msra.mxu0 %v6607
        %6894 = vmatprep.subr.bf16.mxu0 %v6606
        %6895 = vmatpush2.bf16.msra.mxu0 %v6605
        %6896 = vmatprep.subr.bf16.mxu0 %v6604
        %6897 = vmatpush2.bf16.msra.mxu0 %v6603
        %6898 = vmatprep.subr.bf16.mxu0 %v6602
        %6899 = vmatpush2.bf16.msra.mxu0 %v6601
        %6900 = vmatprep.subr.bf16.mxu0 %v6600
        %6901 = vmatpush2.bf16.msra.mxu0 %v6599
        %6902 = vmatprep.mubr.bf16.mxu0 %v6006
        %6903 = vmatmul.mubr.bf16.gmra.mxu0 %v6005
        %v6904 = vpop.f32.mrf.mxu0
        %v6905 = vadd.f32 %v6842, %v6904
        %v6906 = vpop.f32.mrf.mxu0
        %v6907 = vadd.f32 %v6844, %v6906
        %v6908 = vpop.f32.mrf.mxu0
        %v6909 = vadd.f32 %v6846, %v6908
        %v6910 = vpop.f32.mrf.mxu0
        %v6911 = vadd.f32 %v6848, %v6910
        %6912 = vmatprep.mubr.bf16.mxu0 %v6014
        %6913 = vmatmul.mubr.bf16.gmra.mxu0 %v6013
        %v6914 = vpop.f32.mrf.mxu0
        %v6915 = vadd.f32 %v6852, %v6914
        %v6916 = vpop.f32.mrf.mxu0
        %v6917 = vadd.f32 %v6854, %v6916
        %v6918 = vpop.f32.mrf.mxu0
        %v6919 = vadd.f32 %v6856, %v6918
        %v6920 = vpop.f32.mrf.mxu0
        %v6921 = vadd.f32 %v6858, %v6920
        %6922 = vmatprep.mubr.bf16.mxu0 %v6022
        %6923 = vmatmul.mubr.bf16.gmra.mxu0 %v6021
        %v6924 = vpop.f32.mrf.mxu0
        %v6925 = vadd.f32 %v6862, %v6924
        %v6926 = vpop.f32.mrf.mxu0
        %v6927 = vadd.f32 %v6864, %v6926
        %v6928 = vpop.f32.mrf.mxu0
        %v6929 = vadd.f32 %v6866, %v6928
        %v6930 = vpop.f32.mrf.mxu0
        %v6931 = vadd.f32 %v6868, %v6930
        %6932 = vdwg.mxu0
        %6933 = vmatprep.subr.bf16.mxu0 %v6630
        %6934 = vmatpush1.bf16.msra.mxu0 %v6629
        %6935 = vmatprep.subr.bf16.mxu0 %v6628
        %6936 = vmatpush1.bf16.msra.mxu0 %v6627
        %6937 = vmatprep.subr.bf16.mxu0 %v6626
        %6938 = vmatpush1.bf16.msra.mxu0 %v6625
        %6939 = vmatprep.subr.bf16.mxu0 %v6624
        %6940 = vmatpush1.bf16.msra.mxu0 %v6623
        %6941 = vmatprep.subr.bf16.mxu0 %v6622
        %6942 = vmatpush1.bf16.msra.mxu0 %v6621
        %6943 = vmatprep.subr.bf16.mxu0 %v6620
        %6944 = vmatpush1.bf16.msra.mxu0 %v6619
        %6945 = vmatprep.subr.bf16.mxu0 %v6618
        %6946 = vmatpush1.bf16.msra.mxu0 %v6617
        %6947 = vmatprep.subr.bf16.mxu0 %v6616
        %6948 = vmatpush1.bf16.msra.mxu0 %v6615
        %6949 = vmatprep.subr.bf16.mxu0 %v6646
        %6950 = vmatpush2.bf16.msra.mxu0 %v6645
        %6951 = vmatprep.subr.bf16.mxu0 %v6644
        %6952 = vmatpush2.bf16.msra.mxu0 %v6643
        %6953 = vmatprep.subr.bf16.mxu0 %v6642
        %6954 = vmatpush2.bf16.msra.mxu0 %v6641
        %6955 = vmatprep.subr.bf16.mxu0 %v6640
        %6956 = vmatpush2.bf16.msra.mxu0 %v6639
        %6957 = vmatprep.subr.bf16.mxu0 %v6638
        %6958 = vmatpush2.bf16.msra.mxu0 %v6637
        %6959 = vmatprep.subr.bf16.mxu0 %v6636
        %6960 = vmatpush2.bf16.msra.mxu0 %v6635
        %6961 = vmatprep.subr.bf16.mxu0 %v6634
        %6962 = vmatpush2.bf16.msra.mxu0 %v6633
        %6963 = vmatprep.subr.bf16.mxu0 %v6632
        %6964 = vmatpush2.bf16.msra.mxu0 %v6631
        %6965 = vmatprep.mubr.bf16.mxu0 %v6008
        %6966 = vmatmul.mubr.bf16.gmra.mxu0 %v6007
        %v6967 = vpop.f32.mrf.mxu0
        %v6968 = vadd.f32 %v6905, %v6967
        %v6969 = vpop.f32.mrf.mxu0
        %v6970 = vadd.f32 %v6907, %v6969
        %v6971 = vpop.f32.mrf.mxu0
        %v6972 = vadd.f32 %v6909, %v6971
        %v6973 = vpop.f32.mrf.mxu0
        %v6974 = vadd.f32 %v6911, %v6973
        %6975 = vmatprep.mubr.bf16.mxu0 %v6016
        %6976 = vmatmul.mubr.bf16.gmra.mxu0 %v6015
        %v6977 = vpop.f32.mrf.mxu0
        %v6978 = vadd.f32 %v6915, %v6977
        %v6979 = vpop.f32.mrf.mxu0
        %v6980 = vadd.f32 %v6917, %v6979
        %v6981 = vpop.f32.mrf.mxu0
        %v6982 = vadd.f32 %v6919, %v6981
        %v6983 = vpop.f32.mrf.mxu0
        %v6984 = vadd.f32 %v6921, %v6983
        %6985 = vmatprep.mubr.bf16.mxu0 %v6024
        %6986 = vmatmul.mubr.bf16.gmra.mxu0 %v6023
        %v6987 = vpop.f32.mrf.mxu0
        %v6988 = vadd.f32 %v6925, %v6987
        %v6989 = vpop.f32.mrf.mxu0
        %v6990 = vadd.f32 %v6927, %v6989
        %v6991 = vpop.f32.mrf.mxu0
        %v6992 = vadd.f32 %v6929, %v6991
        %v6993 = vpop.f32.mrf.mxu0
        %v6994 = vadd.f32 %v6931, %v6993
        %6995 = vdwg.mxu0
        %6996 = vmatprep.subr.bf16.mxu0 %v6662
        %6997 = vmatpush1.bf16.msra.mxu0 %v6661
        %6998 = vmatprep.subr.bf16.mxu0 %v6660
        %6999 = vmatpush1.bf16.msra.mxu0 %v6659
        %7000 = vmatprep.subr.bf16.mxu0 %v6658
        %7001 = vmatpush1.bf16.msra.mxu0 %v6657
        %7002 = vmatprep.subr.bf16.mxu0 %v6656
        %7003 = vmatpush1.bf16.msra.mxu0 %v6655
        %7004 = vmatprep.subr.bf16.mxu0 %v6654
        %7005 = vmatpush1.bf16.msra.mxu0 %v6653
        %7006 = vmatprep.subr.bf16.mxu0 %v6652
        %7007 = vmatpush1.bf16.msra.mxu0 %v6651
        %7008 = vmatprep.subr.bf16.mxu0 %v6650
        %7009 = vmatpush1.bf16.msra.mxu0 %v6649
        %7010 = vmatprep.subr.bf16.mxu0 %v6648
        %7011 = vmatpush1.bf16.msra.mxu0 %v6647
        %7012 = vmatprep.subr.bf16.mxu0 %v6678
        %7013 = vmatpush2.bf16.msra.mxu0 %v6677
        %7014 = vmatprep.subr.bf16.mxu0 %v6676
        %7015 = vmatpush2.bf16.msra.mxu0 %v6675
        %7016 = vmatprep.subr.bf16.mxu0 %v6674
        %7017 = vmatpush2.bf16.msra.mxu0 %v6673
        %7018 = vmatprep.subr.bf16.mxu0 %v6672
        %7019 = vmatpush2.bf16.msra.mxu0 %v6671
        %7020 = vmatprep.subr.bf16.mxu0 %v6670
        %7021 = vmatpush2.bf16.msra.mxu0 %v6669
        %7022 = vmatprep.subr.bf16.mxu0 %v6668
        %7023 = vmatpush2.bf16.msra.mxu0 %v6667
        %7024 = vmatprep.subr.bf16.mxu0 %v6666
        %7025 = vmatpush2.bf16.msra.mxu0 %v6665
        %7026 = vmatprep.subr.bf16.mxu0 %v6664
        %7027 = vmatpush2.bf16.msra.mxu0 %v6663
        %7028 = vmatprep.mubr.bf16.mxu0 %v6010
        %7029 = vmatmul.mubr.bf16.gmra.mxu0 %v6009
        %v7030 = vpop.f32.mrf.mxu0
        %v7031 = vadd.f32 %v6968, %v7030
        %v7032 = vpop.f32.mrf.mxu0
        %v7033 = vadd.f32 %v6970, %v7032
        %v7034 = vpop.f32.mrf.mxu0
        %v7035 = vadd.f32 %v6972, %v7034
        %v7036 = vpop.f32.mrf.mxu0
        %v7037 = vadd.f32 %v6974, %v7036
        %7038 = vmatprep.mubr.bf16.mxu0 %v6018
        %7039 = vmatmul.mubr.bf16.gmra.mxu0 %v6017
        %v7040 = vpop.f32.mrf.mxu0
        %v7041 = vadd.f32 %v6978, %v7040
        %v7042 = vpop.f32.mrf.mxu0
        %v7043 = vadd.f32 %v6980, %v7042
        %v7044 = vpop.f32.mrf.mxu0
        %v7045 = vadd.f32 %v6982, %v7044
        %v7046 = vpop.f32.mrf.mxu0
        %v7047 = vadd.f32 %v6984, %v7046
        %7048 = vmatprep.mubr.bf16.mxu0 %v6026
        %7049 = vmatmul.mubr.bf16.gmra.mxu0 %v6025
        %v7050 = vpop.f32.mrf.mxu0
        %v7051 = vadd.f32 %v6988, %v7050
        %v7052 = vpop.f32.mrf.mxu0
        %v7053 = vadd.f32 %v6990, %v7052
        %v7054 = vpop.f32.mrf.mxu0
        %v7055 = vadd.f32 %v6992, %v7054
        %v7056 = vpop.f32.mrf.mxu0
        %v7057 = vadd.f32 %v6994, %v7056
        %7058 = vdwg.mxu0
        %v7059 = vadd.f32 %v3483, %v7031
        %v7060 = vadd.f32 %v3484, %v7033
        %v7061 = vadd.f32 %v3485, %v7035
        %v7062 = vadd.f32 %v3486, %v7037
        %v7063 = vadd.f32 %v3487, %v7041
        %v7064 = vadd.f32 %v3488, %v7043
        %v7065 = vadd.f32 %v3489, %v7045
        %v7066 = vadd.f32 %v3490, %v7047
        %v7067 = vadd.f32 %v3491, %v7051
        %v7068 = vadd.f32 %v3492, %v7053
        %v7069 = vadd.f32 %v3493, %v7055
        %v7070 = vadd.f32 %v3494, %v7057
        %7071 = vst [vmem:[#allocation2] sm:$0xff] %v7059
        %7072 = vst [vmem:[#allocation2 + $0x8] sm:$0xff] %v7060
        %7073 = vst [vmem:[#allocation2 + $0x10] sm:$0xff] %v7061
        %7074 = vst [vmem:[#allocation2 + $0x18] sm:$0xff] %v7062
        %7075 = vst [vmem:[#allocation2 + $0x20] sm:$0xff] %v7063
        %7076 = vst [vmem:[#allocation2 + $0x28] sm:$0xff] %v7064
        %7077 = vst [vmem:[#allocation2 + $0x30] sm:$0xff] %v7065
        %7078 = vst [vmem:[#allocation2 + $0x38] sm:$0xff] %v7066
        %7079 = vst [vmem:[#allocation2 + $0x40] sm:$0xff] %v7067
        %7080 = vst [vmem:[#allocation2 + $0x48] sm:$0xff] %v7068
        %7081 = vst [vmem:[#allocation2 + $0x50] sm:$0xff] %v7069
        %7082 = vst [vmem:[#allocation2 + $0x58] sm:$0xff] %v7070
        %p7083 = scmp.eq.s32.totalorder %s41, 1
        // Predicated region
        $region105: #{vit_forward.4} parent=71 // pred_check
          %p7084 = pneg %p7083
        $region106: #{vit_forward.4} parent=71 // pred_check_branch
          %7086 = sbr.rel (%p7084) target = $region108
        $region107: #{vit_forward.4} parent=71 // pred_region
          %7087 = vst [vmem:[%s811] sm:$0xff] %v7059
          %7088 = vst [vmem:[%s811 + $0x8] sm:$0xff] %v7060
          %7089 = vst [vmem:[%s811 + $0x10] sm:$0xff] %v7061
          %7090 = vst [vmem:[%s811 + $0x18] sm:$0xff] %v7062
          %7091 = vst [vmem:[%s811 + $0x20] sm:$0xff] %v7063
          %7092 = vst [vmem:[%s811 + $0x28] sm:$0xff] %v7064
          %7093 = vst [vmem:[%s811 + $0x30] sm:$0xff] %v7065
          %7094 = vst [vmem:[%s811 + $0x38] sm:$0xff] %v7066
          %7095 = vst [vmem:[%s811 + $0x40] sm:$0xff] %v7067
          %7096 = vst [vmem:[%s811 + $0x48] sm:$0xff] %v7068
          %7097 = vst [vmem:[%s811 + $0x50] sm:$0xff] %v7069
          %7098 = vst [vmem:[%s811 + $0x58] sm:$0xff] %v7070
        $region108: #{vit_forward.4} parent=71 // pred_fallthru
          _
        %s7099 = smul.u32 2, %s40
        %p7100 = scmp.lt.s32.totalorder %s7099, 1
        %s7101 = scalar_select %p7100, %s7099, 1
        %s7102 = smul.addr %s7101, 6
        %s7103 = smul.addr %s7102, 8
        %s7104 = scalar_lea.vmem %s13, %s7103
        // Predicated region
        $region109: #{vit_forward.4} parent=71 // pred_check
          %p7105 = pneg %p404
        $region110: #{vit_forward.4} parent=71 // pred_check_branch
          %7107 = sbr.rel (%p7105) target = $region112
        $region111: #{vit_forward.4} parent=71 // pred_region
          %s7108 = smul.u32 2, %s40
        $region112: #{vit_forward.4} parent=71 // pred_fallthru
          _
        // Predicated region
        $region113: #{vit_forward.4} parent=71 // pred_check
          %p7109 = pneg %p404
        $region114: #{vit_forward.4} parent=71 // pred_check_branch
          %7111 = sbr.rel (%p7109) target = $region116
        $region115: #{vit_forward.4} parent=71 // pred_region
          %s7112 = smul.u32 2, %s40
          %p7113 = scmp.lt.s32.totalorder %s7112, 1
          %s7114 = scalar_select %p7113, %s7112, 1
          %s7115 = smul.addr %s7114, 6
          %s7116 = smul.addr %s7115, 8
          %s7117 = scalar_lea.vmem %s13, %s7116
        $region116: #{vit_forward.4} parent=71 // pred_fallthru
          _
      $region72: #{vit_forward.4} parent=5 // pred_fallthru
        _
      %p7118 = scmp.le.s32.totalorder 2, %s31
      // Predicated region
      $region117: #{vit_forward.4} parent=5 // pred_check
        %p7119 = pneg %p7118
      $region118: #{vit_forward.4} parent=5 // pred_check_branch
        %7121 = sbr.rel (%p7119) target = $region120
      $region119: #{vit_forward.4} parent=5 // pred_region
        %s7122 = ssub.s32 %s31, 2
      $region120: #{vit_forward.4} parent=5 // pred_fallthru
        _
    $region6: #{vit_forward.4} parent=1 // loop_footer
      %s35 = sadd.s32 1, %s31
    $region7: #{vit_forward.4} parent=1 // loop_footer_branch
      %30 = sbr.rel target = $region3
    $region8: #{vit_forward.4} parent=1 // loop_exit
      _
    %7123 = vsyncpa [#allocation5], 1
    %s7124 = scalar_lea.sflag [#allocation5], 1
    %7125 = vsyncpa %s7124, 1
    %7126 = vsyncpa [#allocation7], 1
    %s7127 = scalar_lea.sflag [#allocation7], 1
    %7128 = vsyncpa %s7127, 1
    %7129 = vsyncpa [#allocation10], 1
    %s7130 = scalar_lea.sflag [#allocation10], 1
    %7131 = vsyncpa %s7130, 1
    %7132 = vsyncpa [#allocation13], 1
    %s7133 = scalar_lea.sflag [#allocation13], 1
    %7134 = vsyncpa %s7133, 1

</llo_original>
